<compile_context>
chip_gen: v7x
topology: tpu7x:2x2x1
jax: 0.10.0
libtpu: 0.0.40
codegen_flags: <defaults>
</compile_context>

<pallas_src>
import functools

import jax
import jax.numpy as jnp
import numpy as np
from jax import lax
from jax.experimental import pallas as pl
from jax.experimental.pallas import tpu as pltpu


# ---------------------------------------------------------------------------
# Helpers
# ---------------------------------------------------------------------------

def autopad(k, p=None, d=1):
    """Pad to 'same' shape outputs (mirror of the PyTorch helper)."""
    if d > 1:
        k = d * (k - 1) + 1 if isinstance(k, int) else [d * (x - 1) + 1 for x in k]
    if p is None:
        p = k // 2 if isinstance(k, int) else [x // 2 for x in k]
    return p


def _round_up(x, m):
    return (x + m - 1) // m * m


def _device_kind():
    try:
        return jax.devices()[0].device_kind.lower()
    except Exception:
        return ""


def _vmem_limit_bytes(kind):
    # v4/v5e/v5p/v6e have 128 MiB physical VMEM per TensorCore; v7x has 64 MiB
    # (32 MiB default scoped).  Stay conservative when the chip is unknown.
    if ("v4" in kind) or ("v5" in kind) or ("v6" in kind) or ("trillium" in kind):
        return 96 * 1024 * 1024
    return 32 * 1024 * 1024


@functools.lru_cache(maxsize=None)
def _element_halo_supported():
    """One-time probe: element-offset (overlapping) row windows via pl.Element."""
    try:
        a = jnp.arange(16 * 8 * 128, dtype=jnp.float32).reshape(16, 8, 128)

        def k(x_ref, o_ref):
            o_ref[0] = x_ref[...]

        out = pl.pallas_call(
            k,
            out_shape=jax.ShapeDtypeStruct((3, 4, 8, 128), jnp.float32),
            grid_spec=pltpu.PrefetchScalarGridSpec(
                num_scalar_prefetch=0,
                grid=(3,),
                in_specs=[pl.BlockSpec((pl.Element(4), 8, 128),
                                       lambda i: (i * 2, 0, 0))],
                out_specs=pl.BlockSpec((1, 4, 8, 128), lambda i: (i, 0, 0))),
        )(a)
        expect = jnp.stack([a[0:4], a[2:6], a[4:8]])
        return bool(np.allclose(np.asarray(out), np.asarray(expect)))
    except Exception:
        return False


# ---------------------------------------------------------------------------
# Kernel
# ---------------------------------------------------------------------------

def _conv_bn_silu_kernel(x_ref, w_ref, b_ref, o_ref, *,
                         kh_sz, kw_sz, th, w_out_p, c1p, tc2, fold_kw):
    """One (c2-tile, batch, row-tile) grid step.

    x_ref: (1, th + kh_sz - 1, wpp, c1p)  NHWC input window (kh-1 halo rows included)
    w_ref: (kh_sz, kw_sz*c1p, tc2) if fold_kw else (kh_sz, kw_sz, c1p, tc2)
           conv weights (HWIO), BatchNorm scale pre-folded
    b_ref: (1, tc2)                       folded BatchNorm bias (f32)
    o_ref: (1, th, w_out_p, tc2)          output block
    """
    acc = None  # f32 accumulator, built from layout-aligned adds
    if fold_kw:
        # Small-C1 path: fold the kw taps into the contraction dim (K = kw*c1p).
        for i in range(kh_sz):
            rows = jnp.concatenate(
                [x_ref[0, i:i + th, j:j + w_out_p, :] for j in range(kw_sz)],
                axis=-1).reshape(th * w_out_p, kw_sz * c1p)
            part = jnp.dot(rows, w_ref[i], preferred_element_type=jnp.float32)
            acc = part if acc is None else acc + part
    else:
        for i in range(kh_sz):
            for j in range(kw_sz):
                rows = x_ref[0, i:i + th, j:j + w_out_p, :].reshape(th * w_out_p, c1p)
                part = jnp.dot(rows, w_ref[i, j], preferred_element_type=jnp.float32)
                acc = part if acc is None else acc + part
    y = acc + b_ref[...]                 # BatchNorm (eval) bias; scale already in w
    y = y * jax.nn.sigmoid(y)            # SiLU
    o_ref[0] = y.reshape(th, w_out_p, tc2).astype(o_ref.dtype)


# ---------------------------------------------------------------------------
# Wrapper
# ---------------------------------------------------------------------------

def conv_bn_silu(x_nchw, weight_oihw, bn_gamma, bn_beta, bn_mean, bn_var, *,
                 stride=1, padding=None, dilation=1, groups=1, eps=1e-5,
                 compute_dtype=None, row_tile=None, c2_tile=None):
    """Conv2d(bias=False) + BatchNorm2d(eval) + SiLU, matching the PyTorch Conv module.

    compute_dtype: dtype fed to the MXU (e.g. jnp.bfloat16 -- recommended on v5e,
    whose f32 matmul is emulated).  Accumulation is always f32; the output keeps
    the input dtype.  row_tile / c2_tile force the row / C2 tile sizes (test knobs).
    """
    # TODO(synk): stride>1 / dilation>1 / groups>1 conv variants are not implemented.
    assert stride == 1 and dilation == 1 and groups == 1, \
        "kernel implemented for s=1, d=1, g=1"
    c2, c1, kh, kw = weight_oihw.shape
    assert kh == kw, "module constructs square kernels from an int k"
    p = autopad(kh, padding, dilation)

    n, c1_in, h, w = x_nchw.shape
    assert c1_in == c1
    h_out = h + 2 * p - kh + 1
    w_out = w + 2 * p - kw + 1
    assert h_out > 0 and w_out > 0

    out_dtype = x_nchw.dtype
    cdt = jnp.dtype(compute_dtype) if compute_dtype is not None else jnp.dtype(out_dtype)
    in_item = cdt.itemsize
    out_item = jnp.dtype(out_dtype).itemsize
    pack = {4: 8, 2: 16, 1: 32}.get(in_item, 8)      # sublane packing multiple

    kind = _device_kind()
    vmem_limit = _vmem_limit_bytes(kind)
    budget = (vmem_limit * 3) // 4                    # headroom for compiler temps
    is_v5e = ("v5e" in kind) or ("v5 lite" in kind) or ("v5litepod" in kind)

    # Lane/sublane-dense padding.
    c1p = _round_up(c1, pack)
    c2p = _round_up(c2, 128)
    w_out_p = _round_up(w_out, pack)                  # unmasked stores, clean reshapes
    wpp = w_out_p + kw - 1                            # input window width

    # --- C2 tiling / weight residency ----------------------------------------------
    w_bytes = kh * kw * c1p * c2p * in_item
    if c2_tile is not None:
        tc2 = int(c2_tile)
        assert tc2 % 128 == 0 and c2p % tc2 == 0
    elif w_bytes <= (2 if is_v5e else 4) * 1024 * 1024:
        tc2 = c2p                                     # whole weight resident across the grid
    elif is_v5e or (c2p % 256 != 0):
        tc2 = 128                                     # v5e MXU is 128 wide
    else:
        tc2 = 256
    jgrid = c2p // tc2

    fold_kw = (kw > 1) and (c1p < 128)                # small-C1 K-folding path
    kfold = kw if fold_kw else 1

    # --- Row tile: largest th whose live VMEM (incl. f32 temporaries) fits ----------
    fixed = (2 * kh * kw * c1p * tc2 * in_item        # double-buffered weight tile
             + 2 * (kh - 1) * wpp * c1p * in_item     # halo rows of the input window
             + 2 * c2p * 4 + (256 << 10))             # bias + slack
    per_th = (2 * wpp * c1p * in_item                 # input window rows (2 buffers)
              + 2 * w_out_p * tc2 * out_item          # output block (2 buffers)
              + 2 * w_out_p * tc2 * 4                 # f32 acc + per-tap dot result
              + w_out_p * kfold * c1p * in_item)      # relayouted input-slice temp
    if row_tile is not None:
        th = max(1, min(int(row_tile), h_out))
    else:
        th = int(max(1, min(h_out, (budget - fixed) // per_th)))
        # v7x has two TensorCores: keep at least 2 parallel grid steps if possible.
        if n * jgrid * (-(-h_out // th)) < 2 and h_out >= 2:
            th = -(-h_out // 2)
    rt = -(-h_out // th)
    thk = th + kh - 1

    # --- Layout plumbing in plain JAX ------------------------------------------------
    hp = rt * th + kh - 1
    x_nhwc = jnp.transpose(x_nchw, (0, 2, 3, 1)).astype(cdt)
    x_pad = jnp.pad(x_nhwc, ((0, 0), (p, hp - h - p), (p, wpp - w - p), (0, c1p - c1)))

    # Fold BatchNorm: scale into the weights, bias kept additive.
    inv_std = 1.0 / jnp.sqrt(bn_var.astype(jnp.float32) + eps)
    scale = bn_gamma.astype(jnp.float32) * inv_std
    bias = bn_beta.astype(jnp.float32) - bn_mean.astype(jnp.float32) * scale

    w_hwio = jnp.transpose(weight_oihw, (2, 3, 1, 0)).astype(jnp.float32)
    w_hwio = w_hwio * scale[None, None, None, :]
    w_hwio = jnp.pad(w_hwio, ((0, 0), (0, 0), (0, c1p - c1), (0, c2p - c2))).astype(cdt)
    bias_pad = jnp.pad(bias, (0, c2p - c2)).reshape(1, c2p).astype(jnp.float32)

    # --- Pallas call -------------------------------------------------------------------
    out_shape = jax.ShapeDtypeStruct((n, rt * th, w_out_p, c2p), out_dtype)
    o_spec = pl.BlockSpec((1, th, w_out_p, tc2), lambda cj, b, r: (b, r, 0, cj))
    b_spec = pl.BlockSpec((1, tc2), lambda cj, b, r: (0, cj))
    cost = pl.CostEstimate(
        flops=int(2 * n * h_out * w_out * c1 * c2 * kh * kw),
        transcendentals=int(n * rt * th * w_out_p * c2p),
        bytes_accessed=int(jgrid * x_pad.size * in_item + w_hwio.size * in_item
                           + n * rt * th * w_out_p * c2p * out_item))

    def weight_variant(fold):
        if fold:
            return (w_hwio.reshape(kh, kw * c1p, c2p),
                    pl.BlockSpec((kh, kw * c1p, tc2), lambda cj, b, r: (0, 0, cj)))
        return (w_hwio,
                pl.BlockSpec((kh, kw, c1p, tc2), lambda cj, b, r: (0, 0, 0, cj)))

    def x_variant(use_element):
        if use_element:
            # Halo expressed directly: element-offset row windows over x_pad
            # (no duplicated window materialization / extra HBM pass).
            return (x_pad,
                    pl.BlockSpec((1, pl.Element(thk), wpp, c1p),
                                 lambda cj, b, r: (b, r * th, 0, 0)))
        # TODO(synk): drop this fallback once element-indexed halo windows are
        # guaranteed by the installed Pallas/Mosaic version (costs an extra HBM pass).
        x_win = jnp.stack([x_pad[:, r * th:r * th + thk] for r in range(rt)], axis=1)
        x_win = x_win.reshape(n * rt, thk, wpp, c1p)
        return (x_win,
                pl.BlockSpec((1, thk, wpp, c1p),
                             lambda cj, b, r: (b * rt + r, 0, 0, 0)))

    def run(fold, use_element):
        kernel = functools.partial(_conv_bn_silu_kernel, kh_sz=kh, kw_sz=kw, th=th,
                                   w_out_p=w_out_p, c1p=c1p, tc2=tc2, fold_kw=fold)
        x_arr, x_spec = x_variant(use_element)
        w_arr, w_spec = weight_variant(fold)
        return pl.pallas_call(
            kernel,
            out_shape=out_shape,
            grid_spec=pltpu.PrefetchScalarGridSpec(
                num_scalar_prefetch=0,
                grid=(jgrid, n, rt),               # C2 tile outermost: weights DMA'd once
                in_specs=[x_spec, w_spec, b_spec],
                out_specs=o_spec),
            compiler_params=pltpu.CompilerParams(
                dimension_semantics=("parallel", "parallel", "parallel"),
                vmem_limit_bytes=vmem_limit),
            cost_estimate=cost,
        )(x_arr, w_arr, bias_pad)

    folds = [fold_kw] + ([False] if fold_kw else [])
    attempts = ([(f, True) for f in folds] if _element_halo_supported() else [])
    attempts += [(f, False) for f in folds]

    out, last_err = None, None
    for fold, elem in attempts:
        try:
            out = run(fold, elem)
            break
        except Exception as e:            # fall back to the next configuration
            last_err = e
    if out is None:
        raise last_err

    # Strip padding: (n, rt*th, w_out_p, c2p) -> (n, h_out, w_out, c2) -> NCHW.
    out = out[:, :h_out, :w_out, :c2]
    return jnp.transpose(out, (0, 3, 1, 2))


# ---------------------------------------------------------------------------
# Reference (plain XLA) and self-test
# ---------------------------------------------------------------------------

def _reference(x_nchw, weight_oihw, bn_gamma, bn_beta, bn_mean, bn_var,
               *, padding, eps=1e-5):
    y = lax.conv_general_dilated(
        x_nchw, weight_oihw, window_strides=(1, 1),
        padding=((padding, padding), (padding, padding)),
        dimension_numbers=("NCHW", "OIHW", "NCHW"))
    scale = (bn_gamma / jnp.sqrt(bn_var + eps)).reshape(1, -1, 1, 1)
    bias = (bn_beta - bn_mean * bn_gamma / jnp.sqrt(bn_var + eps)).reshape(1, -1, 1, 1)
    y = y * scale + bias
    return y * jax.nn.sigmoid(y)


def _make_bn_conv_params(key, c1, c2, k):
    k_w, k_g, k_b, k_m, k_v = jax.random.split(key, 5)
    wgt = jax.random.normal(k_w, (c2, c1, k, k), dtype=jnp.float32) * 0.1
    gamma = 1.0 + 0.1 * jax.random.normal(k_g, (c2,), dtype=jnp.float32)
    beta = 0.1 * jax.random.normal(k_b, (c2,), dtype=jnp.float32)
    mean = 0.1 * jax.random.normal(k_m, (c2,), dtype=jnp.float32)
    var = jnp.abs(jax.random.normal(k_v, (c2,), dtype=jnp.float32)) + 0.5
    return wgt, gamma, beta, mean, var


if __name__ == "__main__":
    root = jax.random.PRNGKey(0)
    kx1, kp1, kx2, kp2, kx3, kp3 = jax.random.split(root, 6)

    # --- Test 1: Conv(c1=4, c2=8, k=3) on (2, 4, 16, 16), f32 and bf16 compute -------
    N, C1, H, W, C2, K = 2, 4, 16, 16, 8, 3
    pad = autopad(K)
    x = jax.random.normal(kx1, (N, C1, H, W), dtype=jnp.float32)
    params = _make_bn_conv_params(kp1, C1, C2, K)
    ref = _reference(x, *params, padding=pad)

    out_f32 = jax.block_until_ready(conv_bn_silu(x, *params, padding=pad))
    np.testing.assert_allclose(np.asarray(out_f32), np.asarray(ref),
                               rtol=1e-3, atol=1e-3)

    out_bf16 = jax.block_until_ready(
        conv_bn_silu(x, *params, padding=pad, compute_dtype=jnp.bfloat16))
    np.testing.assert_allclose(np.asarray(out_bf16), np.asarray(ref),
                               rtol=3e-2, atol=3e-2)

    # --- Test 2: forced multi-tile grid (4 row tiles x 2 C2 tiles, ragged edge) -------
    C2b = 256
    x2 = jax.random.normal(kx2, (1, C1, H, W), dtype=jnp.float32)
    params2 = _make_bn_conv_params(kp2, C1, C2b, K)
    ref2 = _reference(x2, *params2, padding=pad)
    out2 = jax.block_until_ready(
        conv_bn_silu(x2, *params2, padding=pad, row_tile=5, c2_tile=128))
    np.testing.assert_allclose(np.asarray(out2), np.asarray(ref2),
                               rtol=1e-3, atol=1e-3)

    # --- Test 3: 1x1 conv path ---------------------------------------------------------
    C1c, C2c, K1 = 16, 32, 1
    pad1 = autopad(K1)
    x3 = jax.random.normal(kx3, (1, C1c, H, W), dtype=jnp.float32)
    params3 = _make_bn_conv_params(kp3, C1c, C2c, K1)
    ref3 = _reference(x3, *params3, padding=pad1)
    out3 = jax.block_until_ready(conv_bn_silu(x3, *params3, padding=pad1))
    np.testing.assert_allclose(np.asarray(out3), np.asarray(ref3),
                               rtol=1e-3, atol=1e-3)

    print("KERNEL_OK")
</pallas_src>

<mosaic_0001>
module attributes {stable_mosaic.version = 11 : i64} {
  func.func @_conv_bn_silu_kernel(%arg0: i32, %arg1: i32, %arg2: i32, %arg3: memref<1x18x18x8xf32, #tpu.memory_space<vmem>>, %arg4: memref<3x24x128xf32, #tpu.memory_space<vmem>>, %arg5: memref<1x128xf32, #tpu.memory_space<vmem>>, %arg6: memref<1x16x16x128xf32, #tpu.memory_space<vmem>>) attributes {dimension_semantics = [#tpu.dimension_semantics<parallel>, #tpu.dimension_semantics<parallel>, #tpu.dimension_semantics<parallel>], iteration_bounds = array<i64: 1, 2, 1>, scalar_prefetch = 0 : i64, scratch_operands = 0 : i64, tpu.core_type = #tpu.core_type<tc>, window_params = [{transform_indices = @transform_0, window_bounds = array<i64: 1, 18, 18, 8>}, {transform_indices = @transform_1, window_bounds = array<i64: 3, 24, 128>}, {transform_indices = @transform_2, window_bounds = array<i64: 1, 128>}, {transform_indices = @transform_3, window_bounds = array<i64: 1, 16, 16, 128>}]} {
    %c0 = arith.constant 0 : index
    %c0_0 = arith.constant 0 : index
    %c0_1 = arith.constant 0 : index
    %c0_2 = arith.constant 0 : index
    %0 = vector.load %arg3[%c0, %c0_0, %c0_1, %c0_2] : memref<1x18x18x8xf32, #tpu.memory_space<vmem>>, vector<1x16x16x8xf32>
    %1 = vector.shape_cast %0 : vector<1x16x16x8xf32> to vector<16x16x8xf32>
    %c0_3 = arith.constant 0 : index
    %c0_4 = arith.constant 0 : index
    %c1 = arith.constant 1 : index
    %c0_5 = arith.constant 0 : index
    %2 = vector.load %arg3[%c0_3, %c0_4, %c1, %c0_5] : memref<1x18x18x8xf32, #tpu.memory_space<vmem>>, vector<1x16x16x8xf32>
    %3 = vector.shape_cast %2 : vector<1x16x16x8xf32> to vector<16x16x8xf32>
    %c0_6 = arith.constant 0 : index
    %c0_7 = arith.constant 0 : index
    %c2 = arith.constant 2 : index
    %c0_8 = arith.constant 0 : index
    %4 = vector.load %arg3[%c0_6, %c0_7, %c2, %c0_8] : memref<1x18x18x8xf32, #tpu.memory_space<vmem>>, vector<1x16x16x8xf32>
    %5 = vector.shape_cast %4 : vector<1x16x16x8xf32> to vector<16x16x8xf32>
    %6 = tpu.concatenate %1, %3, %5 in 2 : vector<16x16x8xf32>, vector<16x16x8xf32>, vector<16x16x8xf32> -> vector<16x16x24xf32>
    %7 = vector.shape_cast %6 : vector<16x16x24xf32> to vector<256x24xf32>
    %c0_9 = arith.constant 0 : index
    %c0_10 = arith.constant 0 : index
    %c0_11 = arith.constant 0 : index
    %8 = vector.load %arg4[%c0_9, %c0_10, %c0_11] : memref<3x24x128xf32, #tpu.memory_space<vmem>>, vector<1x24x128xf32>
    %9 = vector.shape_cast %8 : vector<1x24x128xf32> to vector<24x128xf32>
    %cst = arith.constant dense<0.000000e+00> : vector<256x128xf32>
    %10 = tpu.matmul %7, %9, %cst {dimension_numbers = #tpu.dot_dimension_numbers<[1], [0], [0], [1], [0, 0, 1, 1], [], []>} : vector<256x24xf32>, vector<24x128xf32>, vector<256x128xf32> -> vector<256x128xf32>
    %c0_12 = arith.constant 0 : index
    %c1_13 = arith.constant 1 : index
    %c0_14 = arith.constant 0 : index
    %c0_15 = arith.constant 0 : index
    %11 = vector.load %arg3[%c0_12, %c1_13, %c0_14, %c0_15] : memref<1x18x18x8xf32, #tpu.memory_space<vmem>>, vector<1x16x16x8xf32>
    %12 = vector.shape_cast %11 : vector<1x16x16x8xf32> to vector<16x16x8xf32>
    %c0_16 = arith.constant 0 : index
    %c1_17 = arith.constant 1 : index
    %c1_18 = arith.constant 1 : index
    %c0_19 = arith.constant 0 : index
    %13 = vector.load %arg3[%c0_16, %c1_17, %c1_18, %c0_19] : memref<1x18x18x8xf32, #tpu.memory_space<vmem>>, vector<1x16x16x8xf32>
    %14 = vector.shape_cast %13 : vector<1x16x16x8xf32> to vector<16x16x8xf32>
    %c0_20 = arith.constant 0 : index
    %c1_21 = arith.constant 1 : index
    %c2_22 = arith.constant 2 : index
    %c0_23 = arith.constant 0 : index
    %15 = vector.load %arg3[%c0_20, %c1_21, %c2_22, %c0_23] : memref<1x18x18x8xf32, #tpu.memory_space<vmem>>, vector<1x16x16x8xf32>
    %16 = vector.shape_cast %15 : vector<1x16x16x8xf32> to vector<16x16x8xf32>
    %17 = tpu.concatenate %12, %14, %16 in 2 : vector<16x16x8xf32>, vector<16x16x8xf32>, vector<16x16x8xf32> -> vector<16x16x24xf32>
    %18 = vector.shape_cast %17 : vector<16x16x24xf32> to vector<256x24xf32>
    %c1_24 = arith.constant 1 : index
    %c0_25 = arith.constant 0 : index
    %c0_26 = arith.constant 0 : index
    %19 = vector.load %arg4[%c1_24, %c0_25, %c0_26] : memref<3x24x128xf32, #tpu.memory_space<vmem>>, vector<1x24x128xf32>
    %20 = vector.shape_cast %19 : vector<1x24x128xf32> to vector<24x128xf32>
    %cst_27 = arith.constant dense<0.000000e+00> : vector<256x128xf32>
    %21 = tpu.matmul %18, %20, %cst_27 {dimension_numbers = #tpu.dot_dimension_numbers<[1], [0], [0], [1], [0, 0, 1, 1], [], []>} : vector<256x24xf32>, vector<24x128xf32>, vector<256x128xf32> -> vector<256x128xf32>
    %22 = arith.addf %10, %21 : vector<256x128xf32>
    %c0_28 = arith.constant 0 : index
    %c2_29 = arith.constant 2 : index
    %c0_30 = arith.constant 0 : index
    %c0_31 = arith.constant 0 : index
    %23 = vector.load %arg3[%c0_28, %c2_29, %c0_30, %c0_31] : memref<1x18x18x8xf32, #tpu.memory_space<vmem>>, vector<1x16x16x8xf32>
    %24 = vector.shape_cast %23 : vector<1x16x16x8xf32> to vector<16x16x8xf32>
    %c0_32 = arith.constant 0 : index
    %c2_33 = arith.constant 2 : index
    %c1_34 = arith.constant 1 : index
    %c0_35 = arith.constant 0 : index
    %25 = vector.load %arg3[%c0_32, %c2_33, %c1_34, %c0_35] : memref<1x18x18x8xf32, #tpu.memory_space<vmem>>, vector<1x16x16x8xf32>
    %26 = vector.shape_cast %25 : vector<1x16x16x8xf32> to vector<16x16x8xf32>
    %c0_36 = arith.constant 0 : index
    %c2_37 = arith.constant 2 : index
    %c2_38 = arith.constant 2 : index
    %c0_39 = arith.constant 0 : index
    %27 = vector.load %arg3[%c0_36, %c2_37, %c2_38, %c0_39] : memref<1x18x18x8xf32, #tpu.memory_space<vmem>>, vector<1x16x16x8xf32>
    %28 = vector.shape_cast %27 : vector<1x16x16x8xf32> to vector<16x16x8xf32>
    %29 = tpu.concatenate %24, %26, %28 in 2 : vector<16x16x8xf32>, vector<16x16x8xf32>, vector<16x16x8xf32> -> vector<16x16x24xf32>
    %30 = vector.shape_cast %29 : vector<16x16x24xf32> to vector<256x24xf32>
    %c2_40 = arith.constant 2 : index
    %c0_41 = arith.constant 0 : index
    %c0_42 = arith.constant 0 : index
    %31 = vector.load %arg4[%c2_40, %c0_41, %c0_42] : memref<3x24x128xf32, #tpu.memory_space<vmem>>, vector<1x24x128xf32>
    %32 = vector.shape_cast %31 : vector<1x24x128xf32> to vector<24x128xf32>
    %cst_43 = arith.constant dense<0.000000e+00> : vector<256x128xf32>
    %33 = tpu.matmul %30, %32, %cst_43 {dimension_numbers = #tpu.dot_dimension_numbers<[1], [0], [0], [1], [0, 0, 1, 1], [], []>} : vector<256x24xf32>, vector<24x128xf32>, vector<256x128xf32> -> vector<256x128xf32>
    %34 = arith.addf %22, %33 : vector<256x128xf32>
    %c0_44 = arith.constant 0 : index
    %c0_45 = arith.constant 0 : index
    %35 = vector.load %arg5[%c0_44, %c0_45] : memref<1x128xf32, #tpu.memory_space<vmem>>, vector<1x128xf32>
    %36 = vector.broadcast %35 : vector<1x128xf32> to vector<256x128xf32>
    %37 = arith.addf %34, %36 : vector<256x128xf32>
    %38 = arith.negf %37 : vector<256x128xf32>
    %39 = math.exp %38 : vector<256x128xf32>
    %cst_46 = arith.constant 1.000000e+00 : f32
    %40 = vector.broadcast %cst_46 : f32 to vector<256x128xf32>
    %41 = arith.addf %40, %39 : vector<256x128xf32>
    %42 = arith.divf %40, %41 : vector<256x128xf32>
    %43 = arith.mulf %37, %42 : vector<256x128xf32>
    %44 = vector.shape_cast %43 : vector<256x128xf32> to vector<16x16x128xf32>
    %c0_47 = arith.constant 0 : index
    %c0_48 = arith.constant 0 : index
    %c0_49 = arith.constant 0 : index
    %c0_50 = arith.constant 0 : index
    %45 = vector.load %arg6[%c0_47, %c0_48, %c0_49, %c0_50] : memref<1x16x16x128xf32, #tpu.memory_space<vmem>>, vector<1x16x16x128xf32>
    %46 = vector.shape_cast %45 : vector<1x16x16x128xf32> to vector<16x16x128xf32>
    %47 = vector.shape_cast %44 : vector<16x16x128xf32> to vector<1x16x16x128xf32>
    tpu.vector_store %arg6[%c0_47, %c0_48, %c0_49, %c0_50], %47 {strides = array<i32>} : memref<1x16x16x128xf32, #tpu.memory_space<vmem>>, vector<1x16x16x128xf32>,
    return
  }
  func.func @transform_0(%arg0: i32, %arg1: i32, %arg2: i32) -> (i32, i32, i32, i32) {
    %c1_i32 = arith.constant 1 : i32
    %0 = arith.muli %arg1, %c1_i32 : i32
    %1 = arith.addi %0, %arg2 : i32
    %c0_i32 = arith.constant 0 : i32
    %c0_i32_0 = arith.constant 0 : i32
    %c0_i32_1 = arith.constant 0 : i32
    %c0_i32_2 = arith.constant 0 : i32
    return %1, %c0_i32, %c0_i32_0, %c0_i32_1 : i32, i32, i32, i32
  }
  func.func @transform_1(%arg0: i32, %arg1: i32, %arg2: i32) -> (i32, i32, i32) {
    %c0_i32 = arith.constant 0 : i32
    %c0_i32_0 = arith.constant 0 : i32
    %c0_i32_1 = arith.constant 0 : i32
    return %c0_i32, %c0_i32_0, %arg0 : i32, i32, i32
  }
  func.func @transform_2(%arg0: i32, %arg1: i32, %arg2: i32) -> (i32, i32) {
    %c0_i32 = arith.constant 0 : i32
    %c0_i32_0 = arith.constant 0 : i32
    return %c0_i32, %arg0 : i32, i32
  }
  func.func @transform_3(%arg0: i32, %arg1: i32, %arg2: i32) -> (i32, i32, i32, i32) {
    %c0_i32 = arith.constant 0 : i32
    %c0_i32_0 = arith.constant 0 : i32
    return %arg1, %arg2, %c0_i32, %arg0 : i32, i32, i32, i32
  }
}

module attributes {stable_mosaic.version = 11 : i64} {
  func.func @_conv_bn_silu_kernel(%arg0: i32, %arg1: i32, %arg2: i32, %arg3: memref<1x18x18x8xf32, #tpu.memory_space<vmem>>, %arg4: memref<3x3x8x128xf32, #tpu.memory_space<vmem>>, %arg5: memref<1x128xf32, #tpu.memory_space<vmem>>, %arg6: memref<1x16x16x128xf32, #tpu.memory_space<vmem>>) attributes {dimension_semantics = [#tpu.dimension_semantics<parallel>, #tpu.dimension_semantics<parallel>, #tpu.dimension_semantics<parallel>], iteration_bounds = array<i64: 1, 2, 1>, scalar_prefetch = 0 : i64, scratch_operands = 0 : i64, tpu.core_type = #tpu.core_type<tc>, window_params = [{transform_indices = @transform_0, window_bounds = array<i64: 1, 18, 18, 8>}, {transform_indices = @transform_1, window_bounds = array<i64: 3, 3, 8, 128>}, {transform_indices = @transform_2, window_bounds = array<i64: 1, 128>}, {transform_indices = @transform_3, window_bounds = array<i64: 1, 16, 16, 128>}]} {
    %c0 = arith.constant 0 : index
    %c0_0 = arith.constant 0 : index
    %c0_1 = arith.constant 0 : index
    %c0_2 = arith.constant 0 : index
    %0 = vector.load %arg3[%c0, %c0_0, %c0_1, %c0_2] : memref<1x18x18x8xf32, #tpu.memory_space<vmem>>, vector<1x16x16x8xf32>
    %1 = vector.shape_cast %0 : vector<1x16x16x8xf32> to vector<16x16x8xf32>
    %2 = vector.shape_cast %1 : vector<16x16x8xf32> to vector<256x8xf32>
    %c0_3 = arith.constant 0 : index
    %c0_4 = arith.constant 0 : index
    %c0_5 = arith.constant 0 : index
    %c0_6 = arith.constant 0 : index
    %3 = vector.load %arg4[%c0_3, %c0_4, %c0_5, %c0_6] : memref<3x3x8x128xf32, #tpu.memory_space<vmem>>, vector<1x1x8x128xf32>
    %4 = vector.shape_cast %3 : vector<1x1x8x128xf32> to vector<8x128xf32>
    %cst = arith.constant dense<0.000000e+00> : vector<256x128xf32>
    %5 = tpu.matmul %2, %4, %cst {dimension_numbers = #tpu.dot_dimension_numbers<[1], [0], [0], [1], [0, 0, 1, 1], [], []>} : vector<256x8xf32>, vector<8x128xf32>, vector<256x128xf32> -> vector<256x128xf32>
    %c0_7 = arith.constant 0 : index
    %c0_8 = arith.constant 0 : index
    %c1 = arith.constant 1 : index
    %c0_9 = arith.constant 0 : index
    %6 = vector.load %arg3[%c0_7, %c0_8, %c1, %c0_9] : memref<1x18x18x8xf32, #tpu.memory_space<vmem>>, vector<1x16x16x8xf32>
    %7 = vector.shape_cast %6 : vector<1x16x16x8xf32> to vector<16x16x8xf32>
    %8 = vector.shape_cast %7 : vector<16x16x8xf32> to vector<256x8xf32>
    %c0_10 = arith.constant 0 : index
    %c1_11 = arith.constant 1 : index
    %c0_12 = arith.constant 0 : index
    %c0_13 = arith.constant 0 : index
    %9 = vector.load %arg4[%c0_10, %c1_11, %c0_12, %c0_13] : memref<3x3x8x128xf32, #tpu.memory_space<vmem>>, vector<1x1x8x128xf32>
    %10 = vector.shape_cast %9 : vector<1x1x8x128xf32> to vector<8x128xf32>
    %cst_14 = arith.constant dense<0.000000e+00> : vector<256x128xf32>
    %11 = tpu.matmul %8, %10, %cst_14 {dimension_numbers = #tpu.dot_dimension_numbers<[1], [0], [0], [1], [0, 0, 1, 1], [], []>} : vector<256x8xf32>, vector<8x128xf32>, vector<256x128xf32> -> vector<256x128xf32>
    %12 = arith.addf %5, %11 : vector<256x128xf32>
    %c0_15 = arith.constant 0 : index
    %c0_16 = arith.constant 0 : index
    %c2 = arith.constant 2 : index
    %c0_17 = arith.constant 0 : index
    %13 = vector.load %arg3[%c0_15, %c0_16, %c2, %c0_17] : memref<1x18x18x8xf32, #tpu.memory_space<vmem>>, vector<1x16x16x8xf32>
    %14 = vector.shape_cast %13 : vector<1x16x16x8xf32> to vector<16x16x8xf32>
    %15 = vector.shape_cast %14 : vector<16x16x8xf32> to vector<256x8xf32>
    %c0_18 = arith.constant 0 : index
    %c2_19 = arith.constant 2 : index
    %c0_20 = arith.constant 0 : index
    %c0_21 = arith.constant 0 : index
    %16 = vector.load %arg4[%c0_18, %c2_19, %c0_20, %c0_21] : memref<3x3x8x128xf32, #tpu.memory_space<vmem>>, vector<1x1x8x128xf32>
    %17 = vector.shape_cast %16 : vector<1x1x8x128xf32> to vector<8x128xf32>
    %cst_22 = arith.constant dense<0.000000e+00> : vector<256x128xf32>
    %18 = tpu.matmul %15, %17, %cst_22 {dimension_numbers = #tpu.dot_dimension_numbers<[1], [0], [0], [1], [0, 0, 1, 1], [], []>} : vector<256x8xf32>, vector<8x128xf32>, vector<256x128xf32> -> vector<256x128xf32>
    %19 = arith.addf %12, %18 : vector<256x128xf32>
    %c0_23 = arith.constant 0 : index
    %c1_24 = arith.constant 1 : index
    %c0_25 = arith.constant 0 : index
    %c0_26 = arith.constant 0 : index
    %20 = vector.load %arg3[%c0_23, %c1_24, %c0_25, %c0_26] : memref<1x18x18x8xf32, #tpu.memory_space<vmem>>, vector<1x16x16x8xf32>
    %21 = vector.shape_cast %20 : vector<1x16x16x8xf32> to vector<16x16x8xf32>
    %22 = vector.shape_cast %21 : vector<16x16x8xf32> to vector<256x8xf32>
    %c1_27 = arith.constant 1 : index
    %c0_28 = arith.constant 0 : index
    %c0_29 = arith.constant 0 : index
    %c0_30 = arith.constant 0 : index
    %23 = vector.load %arg4[%c1_27, %c0_28, %c0_29, %c0_30] : memref<3x3x8x128xf32, #tpu.memory_space<vmem>>, vector<1x1x8x128xf32>
    %24 = vector.shape_cast %23 : vector<1x1x8x128xf32> to vector<8x128xf32>
    %cst_31 = arith.constant dense<0.000000e+00> : vector<256x128xf32>
    %25 = tpu.matmul %22, %24, %cst_31 {dimension_numbers = #tpu.dot_dimension_numbers<[1], [0], [0], [1], [0, 0, 1, 1], [], []>} : vector<256x8xf32>, vector<8x128xf32>, vector<256x128xf32> -> vector<256x128xf32>
    %26 = arith.addf %19, %25 : vector<256x128xf32>
    %c0_32 = arith.constant 0 : index
    %c1_33 = arith.constant 1 : index
    %c1_34 = arith.constant 1 : index
    %c0_35 = arith.constant 0 : index
    %27 = vector.load %arg3[%c0_32, %c1_33, %c1_34, %c0_35] : memref<1x18x18x8xf32, #tpu.memory_space<vmem>>, vector<1x16x16x8xf32>
    %28 = vector.shape_cast %27 : vector<1x16x16x8xf32> to vector<16x16x8xf32>
    %29 = vector.shape_cast %28 : vector<16x16x8xf32> to vector<256x8xf32>
    %c1_36 = arith.constant 1 : index
    %c1_37 = arith.constant 1 : index
    %c0_38 = arith.constant 0 : index
    %c0_39 = arith.constant 0 : index
    %30 = vector.load %arg4[%c1_36, %c1_37, %c0_38, %c0_39] : memref<3x3x8x128xf32, #tpu.memory_space<vmem>>, vector<1x1x8x128xf32>
    %31 = vector.shape_cast %30 : vector<1x1x8x128xf32> to vector<8x128xf32>
    %cst_40 = arith.constant dense<0.000000e+00> : vector<256x128xf32>
    %32 = tpu.matmul %29, %31, %cst_40 {dimension_numbers = #tpu.dot_dimension_numbers<[1], [0], [0], [1], [0, 0, 1, 1], [], []>} : vector<256x8xf32>, vector<8x128xf32>, vector<256x128xf32> -> vector<256x128xf32>
    %33 = arith.addf %26, %32 : vector<256x128xf32>
    %c0_41 = arith.constant 0 : index
    %c1_42 = arith.constant 1 : index
    %c2_43 = arith.constant 2 : index
    %c0_44 = arith.constant 0 : index
    %34 = vector.load %arg3[%c0_41, %c1_42, %c2_43, %c0_44] : memref<1x18x18x8xf32, #tpu.memory_space<vmem>>, vector<1x16x16x8xf32>
    %35 = vector.shape_cast %34 : vector<1x16x16x8xf32> to vector<16x16x8xf32>
    %36 = vector.shape_cast %35 : vector<16x16x8xf32> to vector<256x8xf32>
    %c1_45 = arith.constant 1 : index
    %c2_46 = arith.constant 2 : index
    %c0_47 = arith.constant 0 : index
    %c0_48 = arith.constant 0 : index
    %37 = vector.load %arg4[%c1_45, %c2_46, %c0_47, %c0_48] : memref<3x3x8x128xf32, #tpu.memory_space<vmem>>, vector<1x1x8x128xf32>
    %38 = vector.shape_cast %37 : vector<1x1x8x128xf32> to vector<8x128xf32>
    %cst_49 = arith.constant dense<0.000000e+00> : vector<256x128xf32>
    %39 = tpu.matmul %36, %38, %cst_49 {dimension_numbers = #tpu.dot_dimension_numbers<[1], [0], [0], [1], [0, 0, 1, 1], [], []>} : vector<256x8xf32>, vector<8x128xf32>, vector<256x128xf32> -> vector<256x128xf32>
    %40 = arith.addf %33, %39 : vector<256x128xf32>
    %c0_50 = arith.constant 0 : index
    %c2_51 = arith.constant 2 : index
    %c0_52 = arith.constant 0 : index
    %c0_53 = arith.constant 0 : index
    %41 = vector.load %arg3[%c0_50, %c2_51, %c0_52, %c0_53] : memref<1x18x18x8xf32, #tpu.memory_space<vmem>>, vector<1x16x16x8xf32>
    %42 = vector.shape_cast %41 : vector<1x16x16x8xf32> to vector<16x16x8xf32>
    %43 = vector.shape_cast %42 : vector<16x16x8xf32> to vector<256x8xf32>
    %c2_54 = arith.constant 2 : index
    %c0_55 = arith.constant 0 : index
    %c0_56 = arith.constant 0 : index
    %c0_57 = arith.constant 0 : index
    %44 = vector.load %arg4[%c2_54, %c0_55, %c0_56, %c0_57] : memref<3x3x8x128xf32, #tpu.memory_space<vmem>>, vector<1x1x8x128xf32>
    %45 = vector.shape_cast %44 : vector<1x1x8x128xf32> to vector<8x128xf32>
    %cst_58 = arith.constant dense<0.000000e+00> : vector<256x128xf32>
    %46 = tpu.matmul %43, %45, %cst_58 {dimension_numbers = #tpu.dot_dimension_numbers<[1], [0], [0], [1], [0, 0, 1, 1], [], []>} : vector<256x8xf32>, vector<8x128xf32>, vector<256x128xf32> -> vector<256x128xf32>
    %47 = arith.addf %40, %46 : vector<256x128xf32>
    %c0_59 = arith.constant 0 : index
    %c2_60 = arith.constant 2 : index
    %c1_61 = arith.constant 1 : index
    %c0_62 = arith.constant 0 : index
    %48 = vector.load %arg3[%c0_59, %c2_60, %c1_61, %c0_62] : memref<1x18x18x8xf32, #tpu.memory_space<vmem>>, vector<1x16x16x8xf32>
    %49 = vector.shape_cast %48 : vector<1x16x16x8xf32> to vector<16x16x8xf32>
    %50 = vector.shape_cast %49 : vector<16x16x8xf32> to vector<256x8xf32>
    %c2_63 = arith.constant 2 : index
    %c1_64 = arith.constant 1 : index
    %c0_65 = arith.constant 0 : index
    %c0_66 = arith.constant 0 : index
    %51 = vector.load %arg4[%c2_63, %c1_64, %c0_65, %c0_66] : memref<3x3x8x128xf32, #tpu.memory_space<vmem>>, vector<1x1x8x128xf32>
    %52 = vector.shape_cast %51 : vector<1x1x8x128xf32> to vector<8x128xf32>
    %cst_67 = arith.constant dense<0.000000e+00> : vector<256x128xf32>
    %53 = tpu.matmul %50, %52, %cst_67 {dimension_numbers = #tpu.dot_dimension_numbers<[1], [0], [0], [1], [0, 0, 1, 1], [], []>} : vector<256x8xf32>, vector<8x128xf32>, vector<256x128xf32> -> vector<256x128xf32>
    %54 = arith.addf %47, %53 : vector<256x128xf32>
    %c0_68 = arith.constant 0 : index
    %c2_69 = arith.constant 2 : index
    %c2_70 = arith.constant 2 : index
    %c0_71 = arith.constant 0 : index
    %55 = vector.load %arg3[%c0_68, %c2_69, %c2_70, %c0_71] : memref<1x18x18x8xf32, #tpu.memory_space<vmem>>, vector<1x16x16x8xf32>
    %56 = vector.shape_cast %55 : vector<1x16x16x8xf32> to vector<16x16x8xf32>
    %57 = vector.shape_cast %56 : vector<16x16x8xf32> to vector<256x8xf32>
    %c2_72 = arith.constant 2 : index
    %c2_73 = arith.constant 2 : index
    %c0_74 = arith.constant 0 : index
    %c0_75 = arith.constant 0 : index
    %58 = vector.load %arg4[%c2_72, %c2_73, %c0_74, %c0_75] : memref<3x3x8x128xf32, #tpu.memory_space<vmem>>, vector<1x1x8x128xf32>
    %59 = vector.shape_cast %58 : vector<1x1x8x128xf32> to vector<8x128xf32>
    %cst_76 = arith.constant dense<0.000000e+00> : vector<256x128xf32>
    %60 = tpu.matmul %57, %59, %cst_76 {dimension_numbers = #tpu.dot_dimension_numbers<[1], [0], [0], [1], [0, 0, 1, 1], [], []>} : vector<256x8xf32>, vector<8x128xf32>, vector<256x128xf32> -> vector<256x128xf32>
    %61 = arith.addf %54, %60 : vector<256x128xf32>
    %c0_77 = arith.constant 0 : index
    %c0_78 = arith.constant 0 : index
    %62 = vector.load %arg5[%c0_77, %c0_78] : memref<1x128xf32, #tpu.memory_space<vmem>>, vector<1x128xf32>
    %63 = vector.broadcast %62 : vector<1x128xf32> to vector<256x128xf32>
    %64 = arith.addf %61, %63 : vector<256x128xf32>
    %65 = arith.negf %64 : vector<256x128xf32>
    %66 = math.exp %65 : vector<256x128xf32>
    %cst_79 = arith.constant 1.000000e+00 : f32
    %67 = vector.broadcast %cst_79 : f32 to vector<256x128xf32>
    %68 = arith.addf %67, %66 : vector<256x128xf32>
    %69 = arith.divf %67, %68 : vector<256x128xf32>
    %70 = arith.mulf %64, %69 : vector<256x128xf32>
    %71 = vector.shape_cast %70 : vector<256x128xf32> to vector<16x16x128xf32>
    %c0_80 = arith.constant 0 : index
    %c0_81 = arith.constant 0 : index
    %c0_82 = arith.constant 0 : index
    %c0_83 = arith.constant 0 : index
    %72 = vector.load %arg6[%c0_80, %c0_81, %c0_82, %c0_83] : memref<1x16x16x128xf32, #tpu.memory_space<vmem>>, vector<1x16x16x128xf32>
    %73 = vector.shape_cast %72 : vector<1x16x16x128xf32> to vector<16x16x128xf32>
    %74 = vector.shape_cast %71 : vector<16x16x128xf32> to vector<1x16x16x128xf32>
    tpu.vector_store %arg6[%c0_80, %c0_81, %c0_82, %c0_83], %74 {strides = array<i32>} : memref<1x16x16x128xf32, #tpu.memory_space<vmem>>, vector<1x16x16x128xf32>,
    return
  }
  func.func @transform_0(%arg0: i32, %arg1: i32, %arg2: i32) -> (i32, i32, i32, i32) {
    %c1_i32 = arith.constant 1 : i32
    %0 = arith.muli %arg1, %c1_i32 : i32
    %1 = arith.addi %0, %arg2 : i32
    %c0_i32 = arith.constant 0 : i32
    %c0_i32_0 = arith.constant 0 : i32
    %c0_i32_1 = arith.constant 0 : i32
    %c0_i32_2 = arith.constant 0 : i32
    return %1, %c0_i32, %c0_i32_0, %c0_i32_1 : i32, i32, i32, i32
  }
  func.func @transform_1(%arg0: i32, %arg1: i32, %arg2: i32) -> (i32, i32, i32, i32) {
    %c0_i32 = arith.constant 0 : i32
    %c0_i32_0 = arith.constant 0 : i32
    %c0_i32_1 = arith.constant 0 : i32
    %c0_i32_2 = arith.constant 0 : i32
    return %c0_i32, %c0_i32_0, %c0_i32_1, %arg0 : i32, i32, i32, i32
  }
  func.func @transform_2(%arg0: i32, %arg1: i32, %arg2: i32) -> (i32, i32) {
    %c0_i32 = arith.constant 0 : i32
    %c0_i32_0 = arith.constant 0 : i32
    return %c0_i32, %arg0 : i32, i32
  }
  func.func @transform_3(%arg0: i32, %arg1: i32, %arg2: i32) -> (i32, i32, i32, i32) {
    %c0_i32 = arith.constant 0 : i32
    %c0_i32_0 = arith.constant 0 : i32
    return %arg1, %arg2, %c0_i32, %arg0 : i32, i32, i32, i32
  }
}

</mosaic_0001>

<llo_original>
// kernel: tpu_custom_call.1
$region0: #{tpu_custom_call.1}
  #allocation0 [shape = 'u32[]', space=smem, size = 0x4, offset = 0x4, fixed_abs, tag = 'smem constant byte address 0x4 - core index']
  #allocation1 [shape = 'u32[144,128]{1,0:T(1,128)}', space=vmem, size = 0x12000, scoped, tag = 'internal scratch']
  %s0 = inlined_call_operand.vmem [shape: f32[2,18,18,8], index: 0, kind: input, shape index: {}]
  %s1 = inlined_call_operand.vmem [shape: f32[3,24,128], index: 1, kind: input, shape index: {}]
  %s2 = inlined_call_operand.vmem [shape: f32[1,128], index: 2, kind: input, shape index: {}]
  %s3 = inlined_call_operand.hbm [shape: f32[2,16,16,128], index: 3, kind: output, shape index: {}]
  %s4 = sld [smem:[#allocation0]]
  $region45: #{tpu_custom_call.1} parent=0
    _
  %s6 = ssub.s32 1, %s4
  %s7 = scalar_select 0, %s6, %s4
  $region1: #{tpu_custom_call.1} parent=0
    #allocation2 [shape = 'u8[262144]{0}', space=vmem, size = 0x40000, scoped, tag = 'output window, operand 0']
    #allocation3 [shape = 's32[2]{0}', space=sflag, size = 0x8, scoped, tag = 'scoped memory for tpu_custom_call.1']
    %8 = vsyncpa [#allocation3], 0
    %s9 = scalar_lea.sflag [#allocation3], 1
    %10 = vsyncpa %s9, 0
    loop: start=0, step=1, limit=4
    $region2: #{tpu_custom_call.1} parent=1 // loop_pre_header
      _
    $region3: #{tpu_custom_call.1} parent=1 // loop_header
      %s12 = sphi 0, %s16
      %p13 = scmp.ge.s32.totalorder %s12, 4
      %s19 = sphi 0, %s38
      %s20 = sphi 0, %s34
      %s21 = sphi 0, %s30
      %s22 = sphi 0, %s19
      %s23 = sphi 0, %s20
      %s24 = sphi 0, %s21
      %s25 = sphi 0, %s22
      %s26 = sphi 0, %s23
      %s27 = sphi 0, %s24
      %s43 = sphi 0, %s45
      %s46 = sphi 0, %s43
      %s47 = sphi 0, %s46
      %s63 = sphi 0, %s47
      %s69 = sphi 0, %s71
      %s72 = sphi 0, %s69
      %s73 = sphi 0, %s72
      %s89 = sphi 0, %s73
      %s95 = sphi 0, %s97
      %s98 = sphi 0, %s95
      %s99 = sphi 0, %s98
      %s115 = sphi 0, %s99
      %s125 = sphi 0, %s127
      %s128 = sphi 0, %s125
      %s129 = sphi 0, %s128
      %s145 = sphi 0, %s129
    $region4: #{tpu_custom_call.1} parent=1 // loop_header_branch
      %15 = sbr.rel (%p13) target = $region8
    $region5: #{tpu_custom_call.1} parent=1 // loop_body
      %s17 = ssub.s32 %s12, 1
      %s18 = ssub.s32 %s12, 2
      %s28 = sadd.s32 1, %s21
      %p29 = scmp.ge.s32.totalorder %s28, 1
      %s30 = scalar_select %p29, 0, %s28
      %s31 = sadd.s32 1, %s20
      %s32 = scalar_select %p29, %s31, %s20
      %p33 = scmp.ge.s32.totalorder %s32, 2
      %s34 = scalar_select %p33, 0, %s32
      %s35 = sadd.s32 1, %s19
      %s36 = scalar_select %p33, %s35, %s19
      %p37 = scmp.ge.s32.totalorder %s36, 1
      %s38 = scalar_select %p37, 0, %s36
      %s39 = sadd.s32 %s20, %s21
      %s40 = sadd.s32 %s34, %s30
      %s41 = ssub.s32 %s39, %s40
      %p42 = scmp.eq.s32.totalorder %s41, 0
      %s44 = sadd.s32 %s43, 1
      %s45 = scalar_select %p42, %s43, %s44
      %p48 = pneg %p42
      %p49 = scmp.eq.s32.totalorder %s12, 1
      %p50 = por %p48, %p49
      %p51 = scmp.ne.s32.totalorder %s43, %s46
      %p52 = scmp.eq.s32.totalorder %s12, 0
      %p53 = por %p51, %p52
      %p54 = scmp.ne.s32.totalorder %s43, %s46
      %p55 = scmp.eq.s32.totalorder %s17, 1
      %p56 = por %p54, %p55
      %p57 = scmp.ne.s32.totalorder %s46, %s47
      %p58 = scmp.eq.s32.totalorder %s17, 0
      %p59 = por %p57, %p58
      %p60 = scmp.ne.s32.totalorder %s46, %s47
      %p61 = scmp.eq.s32.totalorder %s18, 1
      %p62 = por %p60, %p61
      %p64 = scmp.ne.s32.totalorder %s47, %s63
      %p65 = scmp.eq.s32.totalorder %s18, 0
      %p66 = por %p64, %p65
      %s67 = ssub.s32 %s19, %s38
      %p68 = scmp.eq.s32.totalorder %s67, 0
      %s70 = sadd.s32 %s69, 1
      %s71 = scalar_select %p68, %s69, %s70
      %p74 = pneg %p68
      %p75 = scmp.eq.s32.totalorder %s12, 1
      %p76 = por %p74, %p75
      %p77 = scmp.ne.s32.totalorder %s69, %s72
      %p78 = scmp.eq.s32.totalorder %s12, 0
      %p79 = por %p77, %p78
      %p80 = scmp.ne.s32.totalorder %s69, %s72
      %p81 = scmp.eq.s32.totalorder %s17, 1
      %p82 = por %p80, %p81
      %p83 = scmp.ne.s32.totalorder %s72, %s73
      %p84 = scmp.eq.s32.totalorder %s17, 0
      %p85 = por %p83, %p84
      %p86 = scmp.ne.s32.totalorder %s72, %s73
      %p87 = scmp.eq.s32.totalorder %s18, 1
      %p88 = por %p86, %p87
      %p90 = scmp.ne.s32.totalorder %s73, %s89
      %p91 = scmp.eq.s32.totalorder %s18, 0
      %p92 = por %p90, %p91
      %s93 = ssub.s32 %s19, %s38
      %p94 = scmp.eq.s32.totalorder %s93, 0
      %s96 = sadd.s32 %s95, 1
      %s97 = scalar_select %p94, %s95, %s96
      %p100 = pneg %p94
      %p101 = scmp.eq.s32.totalorder %s12, 1
      %p102 = por %p100, %p101
      %p103 = scmp.ne.s32.totalorder %s95, %s98
      %p104 = scmp.eq.s32.totalorder %s12, 0
      %p105 = por %p103, %p104
      %p106 = scmp.ne.s32.totalorder %s95, %s98
      %p107 = scmp.eq.s32.totalorder %s17, 1
      %p108 = por %p106, %p107
      %p109 = scmp.ne.s32.totalorder %s98, %s99
      %p110 = scmp.eq.s32.totalorder %s17, 0
      %p111 = por %p109, %p110
      %p112 = scmp.ne.s32.totalorder %s98, %s99
      %p113 = scmp.eq.s32.totalorder %s18, 1
      %p114 = por %p112, %p113
      %p116 = scmp.ne.s32.totalorder %s99, %s115
      %p117 = scmp.eq.s32.totalorder %s18, 0
      %p118 = por %p116, %p117
      %s119 = ssub.s32 %s20, %s34
      %s120 = ssub.s32 %s21, %s30
      %s121 = sor.u32 %s119, %s120
      %s122 = ssub.s32 %s19, %s38
      %s123 = sor.u32 %s121, %s122
      %p124 = scmp.eq.s32.totalorder %s123, 0
      %s126 = sadd.s32 %s125, 1
      %s127 = scalar_select %p124, %s125, %s126
      %p130 = pneg %p124
      %p131 = scmp.eq.s32.totalorder %s12, 1
      %p132 = por %p130, %p131
      %p133 = scmp.ne.s32.totalorder %s125, %s128
      %p134 = scmp.eq.s32.totalorder %s12, 0
      %p135 = por %p133, %p134
      %p136 = scmp.ne.s32.totalorder %s125, %s128
      %p137 = scmp.eq.s32.totalorder %s17, 1
      %p138 = por %p136, %p137
      %p139 = scmp.ne.s32.totalorder %s128, %s129
      %p140 = scmp.eq.s32.totalorder %s17, 0
      %p141 = por %p139, %p140
      %p142 = scmp.ne.s32.totalorder %s128, %s129
      %p143 = scmp.eq.s32.totalorder %s18, 1
      %p144 = por %p142, %p143
      %p146 = scmp.ne.s32.totalorder %s129, %s145
      %p147 = scmp.eq.s32.totalorder %s18, 0
      %p148 = por %p146, %p147
      %p149 = scmp.le.s32.totalorder 1, %s12
      %p150 = scmp.lt.s32.totalorder %s12, 3
      %p151 = pnand %p149, %p150
      %p152 = pneg %p151
      // Predicated region
      $region9: #{tpu_custom_call.1} parent=5 // pred_check
        _
      $region10: #{tpu_custom_call.1} parent=5 // pred_check_branch
        %154 = sbr.rel (%p151) target = $region12
      $region11: #{tpu_custom_call.1} parent=5 // pred_region
        %s155 = ssub.s32 %s12, 1
        // Predicated region
        $region13: #{tpu_custom_call.1} parent=11 // pred_check
          %p156 = pneg %p85
        $region14: #{tpu_custom_call.1} parent=11 // pred_check_branch
          %158 = sbr.rel (%p156) target = $region16
        $region15: #{tpu_custom_call.1} parent=11 // pred_region
          %p159 = scmp.lt.s32.totalorder %s22, 0
          %s160 = scalar_select %p159, %s22, 0
          %s161 = smul.addr %s160, 8
          %s162 = scalar_lea.vmem %s1, %s161
        $region16: #{tpu_custom_call.1} parent=11 // pred_fallthru
          _
        // Predicated region
        $region17: #{tpu_custom_call.1} parent=11 // pred_check
          %p163 = pneg %p111
        $region18: #{tpu_custom_call.1} parent=11 // pred_check_branch
          %165 = sbr.rel (%p163) target = $region20
        $region19: #{tpu_custom_call.1} parent=11 // pred_region
          %p166 = scmp.lt.s32.totalorder %s22, 0
          %s167 = scalar_select %p166, %s22, 0
          %s168 = scalar_lea.vmem %s2, %s167
        $region20: #{tpu_custom_call.1} parent=11 // pred_fallthru
          _
      $region12: #{tpu_custom_call.1} parent=5 // pred_fallthru
        _
      %p169 = scmp.lt.s32.totalorder %s12, 2
      // Predicated region
      $region21: #{tpu_custom_call.1} parent=5 // pred_check
        %p170 = pneg %p169
      $region22: #{tpu_custom_call.1} parent=5 // pred_check_branch
        %172 = sbr.rel (%p170) target = $region24
      $region23: #{tpu_custom_call.1} parent=5 // pred_region
        // Predicated region
        $region25: #{tpu_custom_call.1} parent=23 // pred_check
          %p173 = pneg %p53
        $region26: #{tpu_custom_call.1} parent=23 // pred_check_branch
          %175 = sbr.rel (%p173) target = $region28
        $region27: #{tpu_custom_call.1} parent=23 // pred_region
          %s176 = sadd.s32 %s20, %s21
          %p177 = scmp.lt.s32.totalorder %s176, 1
          %s178 = scalar_select %p177, %s176, 1
          %s179 = smul.addr %s178, 54
          %s180 = smul.addr %s179, 8
          %s181 = scalar_lea.vmem %s0, %s180
          %s182 = sadd.s32 %s20, %s21
        $region28: #{tpu_custom_call.1} parent=23 // pred_fallthru
          _
      $region24: #{tpu_custom_call.1} parent=5 // pred_fallthru
        _
      %p183 = scmp.le.s32.totalorder 1, %s12
      %p184 = scmp.lt.s32.totalorder %s12, 3
      %p185 = pnand %p183, %p184
      %p186 = pneg %p185
      // Predicated region
      $region29: #{tpu_custom_call.1} parent=5 // pred_check
        _
      $region30: #{tpu_custom_call.1} parent=5 // pred_check_branch
        %188 = sbr.rel (%p185) target = $region32
      $region31: #{tpu_custom_call.1} parent=5 // pred_region
        %s189 = ssub.s32 %s12, 1
        %s190 = sadd.s32 %s23, %s24
        %p191 = scmp.lt.s32.totalorder %s190, 1
        %s192 = scalar_select %p191, %s190, 1
        %s193 = smul.addr %s192, 54
        %s194 = smul.addr %s193, 8
        %s195 = scalar_lea.vmem %s0, %s194
        %p196 = pneg %p59
        %p197 = pneg %p56
        %p198 = scmp.lt.s32.totalorder %s22, 0
        %s199 = scalar_select %p198, %s22, 0
        %s200 = smul.addr %s199, 8
        %s201 = scalar_lea.vmem %s1, %s200
        %p202 = pneg %p85
        %p203 = pneg %p82
        %p204 = scmp.lt.s32.totalorder %s22, 0
        %s205 = scalar_select %p204, %s22, 0
        %s206 = scalar_lea.vmem %s2, %s205
        %p207 = pneg %p111
        %p208 = pneg %p108
        %p209 = pneg %p141
        %p210 = pneg %p138
        %s211 = sand.u32 %s128, 1
        %s212 = scalar_lea.sflag [#allocation3], %s211
        %s213 = sand.u32 %s128, 1
        %s214 = smul.addr %s213, 256
        %s215 = scalar_lea.vmem [#allocation2], %s214
        %s216 = sadd.s32 %s23, %s24
        %p217 = scmp.lt.s32.totalorder %s216, 1
        %s218 = scalar_select %p217, %s216, 1
        %s219 = smul.addr %s218, 54
        %s220 = smul.addr %s219, 8
        %s221 = scalar_lea.vmem %s0, %s220
        %s222 = sadd.s32 %s23, %s24
        %p223 = scmp.lt.s32.totalorder %s22, 0
        %s224 = scalar_select %p223, %s22, 0
        %s225 = smul.addr %s224, 8
        %s226 = scalar_lea.vmem %s1, %s225
        %p227 = scmp.lt.s32.totalorder %s22, 0
        %s228 = scalar_select %p227, %s22, 0
        %s229 = scalar_lea.vmem %s2, %s228
        %s230 = smul.u32 16, %s24
        %v231 = vld [vmem:[%s221] sm:$0xff]
        %v232 = vld [vmem:[%s221 + $0x8] sm:$0xff]
        %v233 = vld [vmem:[%s221 + $0x18] sm:$0xff]
        %v234 = vld [vmem:[%s221 + $0x20] sm:$0xff]
        %v235 = vld [vmem:[%s221 + $0x30] sm:$0xff]
        %v236 = vld [vmem:[%s221 + $0x38] sm:$0xff]
        %v237 = vld [vmem:[%s221 + $0x48] sm:$0xff]
        %v238 = vld [vmem:[%s221 + $0x50] sm:$0xff]
        %v239 = vld [vmem:[%s221 + $0x60] sm:$0xff]
        %v240 = vld [vmem:[%s221 + $0x68] sm:$0xff]
        %v241 = vld [vmem:[%s221 + $0x78] sm:$0xff]
        %v242 = vld [vmem:[%s221 + $0x80] sm:$0xff]
        %v243 = vld [vmem:[%s221 + $0x90] sm:$0xff]
        %v244 = vld [vmem:[%s221 + $0x98] sm:$0xff]
        %v245 = vld [vmem:[%s221 + $0xa8] sm:$0xff]
        %v246 = vld [vmem:[%s221 + $0xb0] sm:$0xff]
        %v247 = vld [vmem:[%s221 + $0xc0] sm:$0xff]
        %v248 = vld [vmem:[%s221 + $0xc8] sm:$0xff]
        %v249 = vld [vmem:[%s221 + $0xd8] sm:$0xff]
        %v250 = vld [vmem:[%s221 + $0xe0] sm:$0xff]
        %v251 = vld [vmem:[%s221 + $0xf0] sm:$0xff]
        %v252 = vld [vmem:[%s221 + $0xf8] sm:$0xff]
        %v253 = vld [vmem:[%s221 + $0x108] sm:$0xff]
        %v254 = vld [vmem:[%s221 + $0x110] sm:$0xff]
        %v255 = vld [vmem:[%s221 + $0x120] sm:$0xff]
        %v256 = vld [vmem:[%s221 + $0x128] sm:$0xff]
        %v257 = vld [vmem:[%s221 + $0x138] sm:$0xff]
        %v258 = vld [vmem:[%s221 + $0x140] sm:$0xff]
        %v259 = vld [vmem:[%s221 + $0x150] sm:$0xff]
        %v260 = vld [vmem:[%s221 + $0x158] sm:$0xff]
        %v261 = vld [vmem:[%s221 + $0x168] sm:$0xff]
        %v262 = vld [vmem:[%s221 + $0x170] sm:$0xff]
        %v263 = vld [vmem:[%s221 + $0x1] sm:$0xff]
        %v264 = vld [vmem:[%s221 + $0x9] sm:$0xff]
        %v265 = vld [vmem:[%s221 + $0x19] sm:$0xff]
        %v266 = vld [vmem:[%s221 + $0x21] sm:$0xff]
        %v267 = vld [vmem:[%s221 + $0x31] sm:$0xff]
        %v268 = vld [vmem:[%s221 + $0x39] sm:$0xff]
        %v269 = vld [vmem:[%s221 + $0x49] sm:$0xff]
        %v270 = vld [vmem:[%s221 + $0x51] sm:$0xff]
        %v271 = vld [vmem:[%s221 + $0x61] sm:$0xff]
        %v272 = vld [vmem:[%s221 + $0x69] sm:$0xff]
        %v273 = vld [vmem:[%s221 + $0x79] sm:$0xff]
        %v274 = vld [vmem:[%s221 + $0x81] sm:$0xff]
        %v275 = vld [vmem:[%s221 + $0x91] sm:$0xff]
        %v276 = vld [vmem:[%s221 + $0x99] sm:$0xff]
        %v277 = vld [vmem:[%s221 + $0xa9] sm:$0xff]
        %v278 = vld [vmem:[%s221 + $0xb1] sm:$0xff]
        %v279 = vld [vmem:[%s221 + $0xc1] sm:$0xff]
        %v280 = vld [vmem:[%s221 + $0xc9] sm:$0xff]
        %v281 = vld [vmem:[%s221 + $0xd9] sm:$0xff]
        %v282 = vld [vmem:[%s221 + $0xe1] sm:$0xff]
        %v283 = vld [vmem:[%s221 + $0xf1] sm:$0xff]
        %v284 = vld [vmem:[%s221 + $0xf9] sm:$0xff]
        %v285 = vld [vmem:[%s221 + $0x109] sm:$0xff]
        %v286 = vld [vmem:[%s221 + $0x111] sm:$0xff]
        %v287 = vld [vmem:[%s221 + $0x121] sm:$0xff]
        %v288 = vld [vmem:[%s221 + $0x129] sm:$0xff]
        %v289 = vld [vmem:[%s221 + $0x139] sm:$0xff]
        %v290 = vld [vmem:[%s221 + $0x141] sm:$0xff]
        %v291 = vld [vmem:[%s221 + $0x151] sm:$0xff]
        %v292 = vld [vmem:[%s221 + $0x159] sm:$0xff]
        %v293 = vld [vmem:[%s221 + $0x169] sm:$0xff]
        %v294 = vld [vmem:[%s221 + $0x171] sm:$0xff]
        %v295 = vld [vmem:[%s221 + $0x2] sm:$0xff]
        %v296 = vld [vmem:[%s221 + $0xa] sm:$0xff]
        %v297 = vld [vmem:[%s221 + $0x1a] sm:$0xff]
        %v298 = vld [vmem:[%s221 + $0x22] sm:$0xff]
        %v299 = vld [vmem:[%s221 + $0x32] sm:$0xff]
        %v300 = vld [vmem:[%s221 + $0x3a] sm:$0xff]
        %v301 = vld [vmem:[%s221 + $0x4a] sm:$0xff]
        %v302 = vld [vmem:[%s221 + $0x52] sm:$0xff]
        %v303 = vld [vmem:[%s221 + $0x62] sm:$0xff]
        %v304 = vld [vmem:[%s221 + $0x6a] sm:$0xff]
        %v305 = vld [vmem:[%s221 + $0x7a] sm:$0xff]
        %v306 = vld [vmem:[%s221 + $0x82] sm:$0xff]
        %v307 = vld [vmem:[%s221 + $0x92] sm:$0xff]
        %v308 = vld [vmem:[%s221 + $0x9a] sm:$0xff]
        %v309 = vld [vmem:[%s221 + $0xaa] sm:$0xff]
        %v310 = vld [vmem:[%s221 + $0xb2] sm:$0xff]
        %v311 = vld [vmem:[%s221 + $0xc2] sm:$0xff]
        %v312 = vld [vmem:[%s221 + $0xca] sm:$0xff]
        %v313 = vld [vmem:[%s221 + $0xda] sm:$0xff]
        %v314 = vld [vmem:[%s221 + $0xe2] sm:$0xff]
        %v315 = vld [vmem:[%s221 + $0xf2] sm:$0xff]
        %v316 = vld [vmem:[%s221 + $0xfa] sm:$0xff]
        %v317 = vld [vmem:[%s221 + $0x10a] sm:$0xff]
        %v318 = vld [vmem:[%s221 + $0x112] sm:$0xff]
        %v319 = vld [vmem:[%s221 + $0x122] sm:$0xff]
        %v320 = vld [vmem:[%s221 + $0x12a] sm:$0xff]
        %v321 = vld [vmem:[%s221 + $0x13a] sm:$0xff]
        %v322 = vld [vmem:[%s221 + $0x142] sm:$0xff]
        %v323 = vld [vmem:[%s221 + $0x152] sm:$0xff]
        %v324 = vld [vmem:[%s221 + $0x15a] sm:$0xff]
        %v325 = vld [vmem:[%s221 + $0x16a] sm:$0xff]
        %v326 = vld [vmem:[%s221 + $0x172] sm:$0xff]
        %359 = vrot.lane.b32.xlu0 %v263, 8
        %v360 = vpop.permute.xlu0 %359
        %361 = vrot.lane.b32.xlu0 %v264, 8
        %v362 = vpop.permute.xlu0 %361
        %363 = vrot.lane.b32.xlu0 %v265, 8
        %v364 = vpop.permute.xlu0 %363
        %365 = vrot.lane.b32.xlu0 %v266, 8
        %v366 = vpop.permute.xlu0 %365
        %367 = vrot.lane.b32.xlu0 %v267, 8
        %v368 = vpop.permute.xlu0 %367
        %369 = vrot.lane.b32.xlu0 %v268, 8
        %v370 = vpop.permute.xlu0 %369
        %371 = vrot.lane.b32.xlu0 %v269, 8
        %v372 = vpop.permute.xlu0 %371
        %373 = vrot.lane.b32.xlu0 %v270, 8
        %v374 = vpop.permute.xlu0 %373
        %375 = vrot.lane.b32.xlu0 %v271, 8
        %v376 = vpop.permute.xlu0 %375
        %377 = vrot.lane.b32.xlu0 %v272, 8
        %v378 = vpop.permute.xlu0 %377
        %379 = vrot.lane.b32.xlu0 %v273, 8
        %v380 = vpop.permute.xlu0 %379
        %381 = vrot.lane.b32.xlu0 %v274, 8
        %v382 = vpop.permute.xlu0 %381
        %383 = vrot.lane.b32.xlu0 %v275, 8
        %v384 = vpop.permute.xlu0 %383
        %385 = vrot.lane.b32.xlu0 %v276, 8
        %v386 = vpop.permute.xlu0 %385
        %387 = vrot.lane.b32.xlu0 %v277, 8
        %v388 = vpop.permute.xlu0 %387
        %389 = vrot.lane.b32.xlu0 %v278, 8
        %v390 = vpop.permute.xlu0 %389
        %391 = vrot.lane.b32.xlu0 %v279, 8
        %v392 = vpop.permute.xlu0 %391
        %393 = vrot.lane.b32.xlu0 %v280, 8
        %v394 = vpop.permute.xlu0 %393
        %395 = vrot.lane.b32.xlu0 %v281, 8
        %v396 = vpop.permute.xlu0 %395
        %397 = vrot.lane.b32.xlu0 %v282, 8
        %v398 = vpop.permute.xlu0 %397
        %399 = vrot.lane.b32.xlu0 %v283, 8
        %v400 = vpop.permute.xlu0 %399
        %401 = vrot.lane.b32.xlu0 %v284, 8
        %v402 = vpop.permute.xlu0 %401
        %403 = vrot.lane.b32.xlu0 %v285, 8
        %v404 = vpop.permute.xlu0 %403
        %405 = vrot.lane.b32.xlu0 %v286, 8
        %v406 = vpop.permute.xlu0 %405
        %407 = vrot.lane.b32.xlu0 %v287, 8
        %v408 = vpop.permute.xlu0 %407
        %409 = vrot.lane.b32.xlu0 %v288, 8
        %v410 = vpop.permute.xlu0 %409
        %411 = vrot.lane.b32.xlu0 %v289, 8
        %v412 = vpop.permute.xlu0 %411
        %413 = vrot.lane.b32.xlu0 %v290, 8
        %v414 = vpop.permute.xlu0 %413
        %415 = vrot.lane.b32.xlu0 %v291, 8
        %v416 = vpop.permute.xlu0 %415
        %417 = vrot.lane.b32.xlu0 %v292, 8
        %v418 = vpop.permute.xlu0 %417
        %419 = vrot.lane.b32.xlu0 %v293, 8
        %v420 = vpop.permute.xlu0 %419
        %421 = vrot.lane.b32.xlu0 %v294, 8
        %v422 = vpop.permute.xlu0 %421
        %487 = vrot.lane.b32.xlu0 %v295, 16
        %v488 = vpop.permute.xlu0 %487
        %489 = vrot.lane.b32.xlu0 %v296, 16
        %v490 = vpop.permute.xlu0 %489
        %491 = vrot.lane.b32.xlu0 %v297, 16
        %v492 = vpop.permute.xlu0 %491
        %493 = vrot.lane.b32.xlu0 %v298, 16
        %v494 = vpop.permute.xlu0 %493
        %495 = vrot.lane.b32.xlu0 %v299, 16
        %v496 = vpop.permute.xlu0 %495
        %497 = vrot.lane.b32.xlu0 %v300, 16
        %v498 = vpop.permute.xlu0 %497
        %499 = vrot.lane.b32.xlu0 %v301, 16
        %v500 = vpop.permute.xlu0 %499
        %501 = vrot.lane.b32.xlu0 %v302, 16
        %v502 = vpop.permute.xlu0 %501
        %503 = vrot.lane.b32.xlu0 %v303, 16
        %v504 = vpop.permute.xlu0 %503
        %505 = vrot.lane.b32.xlu0 %v304, 16
        %v506 = vpop.permute.xlu0 %505
        %507 = vrot.lane.b32.xlu0 %v305, 16
        %v508 = vpop.permute.xlu0 %507
        %509 = vrot.lane.b32.xlu0 %v306, 16
        %v510 = vpop.permute.xlu0 %509
        %511 = vrot.lane.b32.xlu0 %v307, 16
        %v512 = vpop.permute.xlu0 %511
        %513 = vrot.lane.b32.xlu0 %v308, 16
        %v514 = vpop.permute.xlu0 %513
        %515 = vrot.lane.b32.xlu0 %v309, 16
        %v516 = vpop.permute.xlu0 %515
        %517 = vrot.lane.b32.xlu0 %v310, 16
        %v518 = vpop.permute.xlu0 %517
        %519 = vrot.lane.b32.xlu0 %v311, 16
        %v520 = vpop.permute.xlu0 %519
        %521 = vrot.lane.b32.xlu0 %v312, 16
        %v522 = vpop.permute.xlu0 %521
        %523 = vrot.lane.b32.xlu0 %v313, 16
        %v524 = vpop.permute.xlu0 %523
        %525 = vrot.lane.b32.xlu0 %v314, 16
        %v526 = vpop.permute.xlu0 %525
        %527 = vrot.lane.b32.xlu0 %v315, 16
        %v528 = vpop.permute.xlu0 %527
        %529 = vrot.lane.b32.xlu0 %v316, 16
        %v530 = vpop.permute.xlu0 %529
        %531 = vrot.lane.b32.xlu0 %v317, 16
        %v532 = vpop.permute.xlu0 %531
        %533 = vrot.lane.b32.xlu0 %v318, 16
        %v534 = vpop.permute.xlu0 %533
        %535 = vrot.lane.b32.xlu0 %v319, 16
        %v536 = vpop.permute.xlu0 %535
        %537 = vrot.lane.b32.xlu0 %v320, 16
        %v538 = vpop.permute.xlu0 %537
        %539 = vrot.lane.b32.xlu0 %v321, 16
        %v540 = vpop.permute.xlu0 %539
        %541 = vrot.lane.b32.xlu0 %v322, 16
        %v542 = vpop.permute.xlu0 %541
        %543 = vrot.lane.b32.xlu0 %v323, 16
        %v544 = vpop.permute.xlu0 %543
        %545 = vrot.lane.b32.xlu0 %v324, 16
        %v546 = vpop.permute.xlu0 %545
        %547 = vrot.lane.b32.xlu0 %v325, 16
        %v548 = vpop.permute.xlu0 %547
        %549 = vrot.lane.b32.xlu0 %v326, 16
        %v550 = vpop.permute.xlu0 %549
        %vm583 = vcmask 64512
        %v584 = vsel %vm583, %v231, %v360
        %v585 = vsel %vm583, %v232, %v362
        %v586 = vsel %vm583, %v233, %v364
        %v587 = vsel %vm583, %v234, %v366
        %v588 = vsel %vm583, %v235, %v368
        %v589 = vsel %vm583, %v236, %v370
        %v590 = vsel %vm583, %v237, %v372
        %v591 = vsel %vm583, %v238, %v374
        %v592 = vsel %vm583, %v239, %v376
        %v593 = vsel %vm583, %v240, %v378
        %v594 = vsel %vm583, %v241, %v380
        %v595 = vsel %vm583, %v242, %v382
        %v596 = vsel %vm583, %v243, %v384
        %v597 = vsel %vm583, %v244, %v386
        %v598 = vsel %vm583, %v245, %v388
        %v599 = vsel %vm583, %v246, %v390
        %v600 = vsel %vm583, %v247, %v392
        %v601 = vsel %vm583, %v248, %v394
        %v602 = vsel %vm583, %v249, %v396
        %v603 = vsel %vm583, %v250, %v398
        %v604 = vsel %vm583, %v251, %v400
        %v605 = vsel %vm583, %v252, %v402
        %v606 = vsel %vm583, %v253, %v404
        %v607 = vsel %vm583, %v254, %v406
        %v608 = vsel %vm583, %v255, %v408
        %v609 = vsel %vm583, %v256, %v410
        %v610 = vsel %vm583, %v257, %v412
        %v611 = vsel %vm583, %v258, %v414
        %v612 = vsel %vm583, %v259, %v416
        %v613 = vsel %vm583, %v260, %v418
        %v614 = vsel %vm583, %v261, %v420
        %v615 = vsel %vm583, %v262, %v422
        %vm616 = vcmask 130048
        %v617 = vsel %vm616, %v584, %v488
        %v618 = vsel %vm616, %v585, %v490
        %v619 = vsel %vm616, %v586, %v492
        %v620 = vsel %vm616, %v587, %v494
        %v621 = vsel %vm616, %v588, %v496
        %v622 = vsel %vm616, %v589, %v498
        %v623 = vsel %vm616, %v590, %v500
        %v624 = vsel %vm616, %v591, %v502
        %v625 = vsel %vm616, %v592, %v504
        %v626 = vsel %vm616, %v593, %v506
        %v627 = vsel %vm616, %v594, %v508
        %v628 = vsel %vm616, %v595, %v510
        %v629 = vsel %vm616, %v596, %v512
        %v630 = vsel %vm616, %v597, %v514
        %v631 = vsel %vm616, %v598, %v516
        %v632 = vsel %vm616, %v599, %v518
        %v633 = vsel %vm616, %v600, %v520
        %v634 = vsel %vm616, %v601, %v522
        %v635 = vsel %vm616, %v602, %v524
        %v636 = vsel %vm616, %v603, %v526
        %v637 = vsel %vm616, %v604, %v528
        %v638 = vsel %vm616, %v605, %v530
        %v639 = vsel %vm616, %v606, %v532
        %v640 = vsel %vm616, %v607, %v534
        %v641 = vsel %vm616, %v608, %v536
        %v642 = vsel %vm616, %v609, %v538
        %v643 = vsel %vm616, %v610, %v540
        %v644 = vsel %vm616, %v611, %v542
        %v645 = vsel %vm616, %v612, %v544
        %v646 = vsel %vm616, %v613, %v546
        %v647 = vsel %vm616, %v614, %v548
        %v648 = vsel %vm616, %v615, %v550
        %v649 = vld [vmem:[%s226] sm:$0xff]
        %v650 = vld [vmem:[%s226 + $0x8] sm:$0xff]
        %v651 = vld [vmem:[%s226 + $0x10] sm:$0xff]
        %s652 = scalar_lea.vmem %s221, 24
        %v653 = vld [vmem:[%s652] sm:$0xff]
        %v654 = vld [vmem:[%s652 + $0x8] sm:$0xff]
        %v655 = vld [vmem:[%s652 + $0x18] sm:$0xff]
        %v656 = vld [vmem:[%s652 + $0x20] sm:$0xff]
        %v657 = vld [vmem:[%s652 + $0x30] sm:$0xff]
        %v658 = vld [vmem:[%s652 + $0x38] sm:$0xff]
        %v659 = vld [vmem:[%s652 + $0x48] sm:$0xff]
        %v660 = vld [vmem:[%s652 + $0x50] sm:$0xff]
        %v661 = vld [vmem:[%s652 + $0x60] sm:$0xff]
        %v662 = vld [vmem:[%s652 + $0x68] sm:$0xff]
        %v663 = vld [vmem:[%s652 + $0x78] sm:$0xff]
        %v664 = vld [vmem:[%s652 + $0x80] sm:$0xff]
        %v665 = vld [vmem:[%s652 + $0x90] sm:$0xff]
        %v666 = vld [vmem:[%s652 + $0x98] sm:$0xff]
        %v667 = vld [vmem:[%s652 + $0xa8] sm:$0xff]
        %v668 = vld [vmem:[%s652 + $0xb0] sm:$0xff]
        %v669 = vld [vmem:[%s652 + $0xc0] sm:$0xff]
        %v670 = vld [vmem:[%s652 + $0xc8] sm:$0xff]
        %v671 = vld [vmem:[%s652 + $0xd8] sm:$0xff]
        %v672 = vld [vmem:[%s652 + $0xe0] sm:$0xff]
        %v673 = vld [vmem:[%s652 + $0xf0] sm:$0xff]
        %v674 = vld [vmem:[%s652 + $0xf8] sm:$0xff]
        %v675 = vld [vmem:[%s652 + $0x108] sm:$0xff]
        %v676 = vld [vmem:[%s652 + $0x110] sm:$0xff]
        %v677 = vld [vmem:[%s652 + $0x120] sm:$0xff]
        %v678 = vld [vmem:[%s652 + $0x128] sm:$0xff]
        %v679 = vld [vmem:[%s652 + $0x138] sm:$0xff]
        %v680 = vld [vmem:[%s652 + $0x140] sm:$0xff]
        %v681 = vld [vmem:[%s652 + $0x150] sm:$0xff]
        %v682 = vld [vmem:[%s652 + $0x158] sm:$0xff]
        %v683 = vld [vmem:[%s652 + $0x168] sm:$0xff]
        %v684 = vld [vmem:[%s652 + $0x170] sm:$0xff]
        %v685 = vld [vmem:[%s652 + $0x1] sm:$0xff]
        %v686 = vld [vmem:[%s652 + $0x9] sm:$0xff]
        %v687 = vld [vmem:[%s652 + $0x19] sm:$0xff]
        %v688 = vld [vmem:[%s652 + $0x21] sm:$0xff]
        %v689 = vld [vmem:[%s652 + $0x31] sm:$0xff]
        %v690 = vld [vmem:[%s652 + $0x39] sm:$0xff]
        %v691 = vld [vmem:[%s652 + $0x49] sm:$0xff]
        %v692 = vld [vmem:[%s652 + $0x51] sm:$0xff]
        %v693 = vld [vmem:[%s652 + $0x61] sm:$0xff]
        %v694 = vld [vmem:[%s652 + $0x69] sm:$0xff]
        %v695 = vld [vmem:[%s652 + $0x79] sm:$0xff]
        %v696 = vld [vmem:[%s652 + $0x81] sm:$0xff]
        %v697 = vld [vmem:[%s652 + $0x91] sm:$0xff]
        %v698 = vld [vmem:[%s652 + $0x99] sm:$0xff]
        %v699 = vld [vmem:[%s652 + $0xa9] sm:$0xff]
        %v700 = vld [vmem:[%s652 + $0xb1] sm:$0xff]
        %v701 = vld [vmem:[%s652 + $0xc1] sm:$0xff]
        %v702 = vld [vmem:[%s652 + $0xc9] sm:$0xff]
        %v703 = vld [vmem:[%s652 + $0xd9] sm:$0xff]
        %v704 = vld [vmem:[%s652 + $0xe1] sm:$0xff]
        %v705 = vld [vmem:[%s652 + $0xf1] sm:$0xff]
        %v706 = vld [vmem:[%s652 + $0xf9] sm:$0xff]
        %v707 = vld [vmem:[%s652 + $0x109] sm:$0xff]
        %v708 = vld [vmem:[%s652 + $0x111] sm:$0xff]
        %v709 = vld [vmem:[%s652 + $0x121] sm:$0xff]
        %v710 = vld [vmem:[%s652 + $0x129] sm:$0xff]
        %v711 = vld [vmem:[%s652 + $0x139] sm:$0xff]
        %v712 = vld [vmem:[%s652 + $0x141] sm:$0xff]
        %v713 = vld [vmem:[%s652 + $0x151] sm:$0xff]
        %v714 = vld [vmem:[%s652 + $0x159] sm:$0xff]
        %v715 = vld [vmem:[%s652 + $0x169] sm:$0xff]
        %v716 = vld [vmem:[%s652 + $0x171] sm:$0xff]
        %v717 = vld [vmem:[%s652 + $0x2] sm:$0xff]
        %v718 = vld [vmem:[%s652 + $0xa] sm:$0xff]
        %v719 = vld [vmem:[%s652 + $0x1a] sm:$0xff]
        %v720 = vld [vmem:[%s652 + $0x22] sm:$0xff]
        %v721 = vld [vmem:[%s652 + $0x32] sm:$0xff]
        %v722 = vld [vmem:[%s652 + $0x3a] sm:$0xff]
        %v723 = vld [vmem:[%s652 + $0x4a] sm:$0xff]
        %v724 = vld [vmem:[%s652 + $0x52] sm:$0xff]
        %v725 = vld [vmem:[%s652 + $0x62] sm:$0xff]
        %v726 = vld [vmem:[%s652 + $0x6a] sm:$0xff]
        %v727 = vld [vmem:[%s652 + $0x7a] sm:$0xff]
        %v728 = vld [vmem:[%s652 + $0x82] sm:$0xff]
        %v729 = vld [vmem:[%s652 + $0x92] sm:$0xff]
        %v730 = vld [vmem:[%s652 + $0x9a] sm:$0xff]
        %v731 = vld [vmem:[%s652 + $0xaa] sm:$0xff]
        %v732 = vld [vmem:[%s652 + $0xb2] sm:$0xff]
        %v733 = vld [vmem:[%s652 + $0xc2] sm:$0xff]
        %v734 = vld [vmem:[%s652 + $0xca] sm:$0xff]
        %v735 = vld [vmem:[%s652 + $0xda] sm:$0xff]
        %v736 = vld [vmem:[%s652 + $0xe2] sm:$0xff]
        %v737 = vld [vmem:[%s652 + $0xf2] sm:$0xff]
        %v738 = vld [vmem:[%s652 + $0xfa] sm:$0xff]
        %v739 = vld [vmem:[%s652 + $0x10a] sm:$0xff]
        %v740 = vld [vmem:[%s652 + $0x112] sm:$0xff]
        %v741 = vld [vmem:[%s652 + $0x122] sm:$0xff]
        %v742 = vld [vmem:[%s652 + $0x12a] sm:$0xff]
        %v743 = vld [vmem:[%s652 + $0x13a] sm:$0xff]
        %v744 = vld [vmem:[%s652 + $0x142] sm:$0xff]
        %v745 = vld [vmem:[%s652 + $0x152] sm:$0xff]
        %v746 = vld [vmem:[%s652 + $0x15a] sm:$0xff]
        %v747 = vld [vmem:[%s652 + $0x16a] sm:$0xff]
        %v748 = vld [vmem:[%s652 + $0x172] sm:$0xff]
        %781 = vrot.lane.b32.xlu0 %v685, 8
        %v782 = vpop.permute.xlu0 %781
        %783 = vrot.lane.b32.xlu0 %v686, 8
        %v784 = vpop.permute.xlu0 %783
        %785 = vrot.lane.b32.xlu0 %v687, 8
        %v786 = vpop.permute.xlu0 %785
        %787 = vrot.lane.b32.xlu0 %v688, 8
        %v788 = vpop.permute.xlu0 %787
        %789 = vrot.lane.b32.xlu0 %v689, 8
        %v790 = vpop.permute.xlu0 %789
        %791 = vrot.lane.b32.xlu0 %v690, 8
        %v792 = vpop.permute.xlu0 %791
        %793 = vrot.lane.b32.xlu0 %v691, 8
        %v794 = vpop.permute.xlu0 %793
        %795 = vrot.lane.b32.xlu0 %v692, 8
        %v796 = vpop.permute.xlu0 %795
        %797 = vrot.lane.b32.xlu0 %v693, 8
        %v798 = vpop.permute.xlu0 %797
        %799 = vrot.lane.b32.xlu0 %v694, 8
        %v800 = vpop.permute.xlu0 %799
        %801 = vrot.lane.b32.xlu0 %v695, 8
        %v802 = vpop.permute.xlu0 %801
        %803 = vrot.lane.b32.xlu0 %v696, 8
        %v804 = vpop.permute.xlu0 %803
        %805 = vrot.lane.b32.xlu0 %v697, 8
        %v806 = vpop.permute.xlu0 %805
        %807 = vrot.lane.b32.xlu0 %v698, 8
        %v808 = vpop.permute.xlu0 %807
        %809 = vrot.lane.b32.xlu0 %v699, 8
        %v810 = vpop.permute.xlu0 %809
        %811 = vrot.lane.b32.xlu0 %v700, 8
        %v812 = vpop.permute.xlu0 %811
        %813 = vrot.lane.b32.xlu0 %v701, 8
        %v814 = vpop.permute.xlu0 %813
        %815 = vrot.lane.b32.xlu0 %v702, 8
        %v816 = vpop.permute.xlu0 %815
        %817 = vrot.lane.b32.xlu0 %v703, 8
        %v818 = vpop.permute.xlu0 %817
        %819 = vrot.lane.b32.xlu0 %v704, 8
        %v820 = vpop.permute.xlu0 %819
        %821 = vrot.lane.b32.xlu0 %v705, 8
        %v822 = vpop.permute.xlu0 %821
        %823 = vrot.lane.b32.xlu0 %v706, 8
        %v824 = vpop.permute.xlu0 %823
        %825 = vrot.lane.b32.xlu0 %v707, 8
        %v826 = vpop.permute.xlu0 %825
        %827 = vrot.lane.b32.xlu0 %v708, 8
        %v828 = vpop.permute.xlu0 %827
        %829 = vrot.lane.b32.xlu0 %v709, 8
        %v830 = vpop.permute.xlu0 %829
        %831 = vrot.lane.b32.xlu0 %v710, 8
        %v832 = vpop.permute.xlu0 %831
        %833 = vrot.lane.b32.xlu0 %v711, 8
        %v834 = vpop.permute.xlu0 %833
        %835 = vrot.lane.b32.xlu0 %v712, 8
        %v836 = vpop.permute.xlu0 %835
        %837 = vrot.lane.b32.xlu0 %v713, 8
        %v838 = vpop.permute.xlu0 %837
        %839 = vrot.lane.b32.xlu0 %v714, 8
        %v840 = vpop.permute.xlu0 %839
        %841 = vrot.lane.b32.xlu0 %v715, 8
        %v842 = vpop.permute.xlu0 %841
        %843 = vrot.lane.b32.xlu0 %v716, 8
        %v844 = vpop.permute.xlu0 %843
        %909 = vrot.lane.b32.xlu0 %v717, 16
        %v910 = vpop.permute.xlu0 %909
        %911 = vrot.lane.b32.xlu0 %v718, 16
        %v912 = vpop.permute.xlu0 %911
        %913 = vrot.lane.b32.xlu0 %v719, 16
        %v914 = vpop.permute.xlu0 %913
        %915 = vrot.lane.b32.xlu0 %v720, 16
        %v916 = vpop.permute.xlu0 %915
        %917 = vrot.lane.b32.xlu0 %v721, 16
        %v918 = vpop.permute.xlu0 %917
        %919 = vrot.lane.b32.xlu0 %v722, 16
        %v920 = vpop.permute.xlu0 %919
        %921 = vrot.lane.b32.xlu0 %v723, 16
        %v922 = vpop.permute.xlu0 %921
        %923 = vrot.lane.b32.xlu0 %v724, 16
        %v924 = vpop.permute.xlu0 %923
        %925 = vrot.lane.b32.xlu0 %v725, 16
        %v926 = vpop.permute.xlu0 %925
        %927 = vrot.lane.b32.xlu0 %v726, 16
        %v928 = vpop.permute.xlu0 %927
        %929 = vrot.lane.b32.xlu0 %v727, 16
        %v930 = vpop.permute.xlu0 %929
        %931 = vrot.lane.b32.xlu0 %v728, 16
        %v932 = vpop.permute.xlu0 %931
        %933 = vrot.lane.b32.xlu0 %v729, 16
        %v934 = vpop.permute.xlu0 %933
        %935 = vrot.lane.b32.xlu0 %v730, 16
        %v936 = vpop.permute.xlu0 %935
        %937 = vrot.lane.b32.xlu0 %v731, 16
        %v938 = vpop.permute.xlu0 %937
        %939 = vrot.lane.b32.xlu0 %v732, 16
        %v940 = vpop.permute.xlu0 %939
        %941 = vrot.lane.b32.xlu0 %v733, 16
        %v942 = vpop.permute.xlu0 %941
        %943 = vrot.lane.b32.xlu0 %v734, 16
        %v944 = vpop.permute.xlu0 %943
        %945 = vrot.lane.b32.xlu0 %v735, 16
        %v946 = vpop.permute.xlu0 %945
        %947 = vrot.lane.b32.xlu0 %v736, 16
        %v948 = vpop.permute.xlu0 %947
        %949 = vrot.lane.b32.xlu0 %v737, 16
        %v950 = vpop.permute.xlu0 %949
        %951 = vrot.lane.b32.xlu0 %v738, 16
        %v952 = vpop.permute.xlu0 %951
        %953 = vrot.lane.b32.xlu0 %v739, 16
        %v954 = vpop.permute.xlu0 %953
        %955 = vrot.lane.b32.xlu0 %v740, 16
        %v956 = vpop.permute.xlu0 %955
        %957 = vrot.lane.b32.xlu0 %v741, 16
        %v958 = vpop.permute.xlu0 %957
        %959 = vrot.lane.b32.xlu0 %v742, 16
        %v960 = vpop.permute.xlu0 %959
        %961 = vrot.lane.b32.xlu0 %v743, 16
        %v962 = vpop.permute.xlu0 %961
        %963 = vrot.lane.b32.xlu0 %v744, 16
        %v964 = vpop.permute.xlu0 %963
        %965 = vrot.lane.b32.xlu0 %v745, 16
        %v966 = vpop.permute.xlu0 %965
        %967 = vrot.lane.b32.xlu0 %v746, 16
        %v968 = vpop.permute.xlu0 %967
        %969 = vrot.lane.b32.xlu0 %v747, 16
        %v970 = vpop.permute.xlu0 %969
        %971 = vrot.lane.b32.xlu0 %v748, 16
        %v972 = vpop.permute.xlu0 %971
        %v1005 = vsel %vm583, %v653, %v782
        %v1006 = vsel %vm583, %v654, %v784
        %v1007 = vsel %vm583, %v655, %v786
        %v1008 = vsel %vm583, %v656, %v788
        %v1009 = vsel %vm583, %v657, %v790
        %v1010 = vsel %vm583, %v658, %v792
        %v1011 = vsel %vm583, %v659, %v794
        %v1012 = vsel %vm583, %v660, %v796
        %v1013 = vsel %vm583, %v661, %v798
        %v1014 = vsel %vm583, %v662, %v800
        %v1015 = vsel %vm583, %v663, %v802
        %v1016 = vsel %vm583, %v664, %v804
        %v1017 = vsel %vm583, %v665, %v806
        %v1018 = vsel %vm583, %v666, %v808
        %v1019 = vsel %vm583, %v667, %v810
        %v1020 = vsel %vm583, %v668, %v812
        %v1021 = vsel %vm583, %v669, %v814
        %v1022 = vsel %vm583, %v670, %v816
        %v1023 = vsel %vm583, %v671, %v818
        %v1024 = vsel %vm583, %v672, %v820
        %v1025 = vsel %vm583, %v673, %v822
        %v1026 = vsel %vm583, %v674, %v824
        %v1027 = vsel %vm583, %v675, %v826
        %v1028 = vsel %vm583, %v676, %v828
        %v1029 = vsel %vm583, %v677, %v830
        %v1030 = vsel %vm583, %v678, %v832
        %v1031 = vsel %vm583, %v679, %v834
        %v1032 = vsel %vm583, %v680, %v836
        %v1033 = vsel %vm583, %v681, %v838
        %v1034 = vsel %vm583, %v682, %v840
        %v1035 = vsel %vm583, %v683, %v842
        %v1036 = vsel %vm583, %v684, %v844
        %v1037 = vsel %vm616, %v1005, %v910
        %v1038 = vsel %vm616, %v1006, %v912
        %v1039 = vsel %vm616, %v1007, %v914
        %v1040 = vsel %vm616, %v1008, %v916
        %v1041 = vsel %vm616, %v1009, %v918
        %v1042 = vsel %vm616, %v1010, %v920
        %v1043 = vsel %vm616, %v1011, %v922
        %v1044 = vsel %vm616, %v1012, %v924
        %v1045 = vsel %vm616, %v1013, %v926
        %v1046 = vsel %vm616, %v1014, %v928
        %v1047 = vsel %vm616, %v1015, %v930
        %v1048 = vsel %vm616, %v1016, %v932
        %v1049 = vsel %vm616, %v1017, %v934
        %v1050 = vsel %vm616, %v1018, %v936
        %v1051 = vsel %vm616, %v1019, %v938
        %v1052 = vsel %vm616, %v1020, %v940
        %v1053 = vsel %vm616, %v1021, %v942
        %v1054 = vsel %vm616, %v1022, %v944
        %v1055 = vsel %vm616, %v1023, %v946
        %v1056 = vsel %vm616, %v1024, %v948
        %v1057 = vsel %vm616, %v1025, %v950
        %v1058 = vsel %vm616, %v1026, %v952
        %v1059 = vsel %vm616, %v1027, %v954
        %v1060 = vsel %vm616, %v1028, %v956
        %v1061 = vsel %vm616, %v1029, %v958
        %v1062 = vsel %vm616, %v1030, %v960
        %v1063 = vsel %vm616, %v1031, %v962
        %v1064 = vsel %vm616, %v1032, %v964
        %v1065 = vsel %vm616, %v1033, %v966
        %v1066 = vsel %vm616, %v1034, %v968
        %v1067 = vsel %vm616, %v1035, %v970
        %v1068 = vsel %vm616, %v1036, %v972
        %s1069 = scalar_lea.vmem %s226, 24
        %v1070 = vld [vmem:[%s1069] sm:$0xff]
        %v1071 = vld [vmem:[%s1069 + $0x8] sm:$0xff]
        %v1072 = vld [vmem:[%s1069 + $0x10] sm:$0xff]
        %vm1073 = vcmask 195584
        %v1075 = vsel %vm1073, %v1037, 0
        %v1078 = vsel %vm1073, %v1038, 0
        %v1081 = vsel %vm1073, %v1039, 0
        %v1084 = vsel %vm1073, %v1040, 0
        %v1087 = vsel %vm1073, %v1041, 0
        %v1090 = vsel %vm1073, %v1042, 0
        %v1093 = vsel %vm1073, %v1043, 0
        %v1096 = vsel %vm1073, %v1044, 0
        %v1099 = vsel %vm1073, %v1045, 0
        %v1102 = vsel %vm1073, %v1046, 0
        %v1105 = vsel %vm1073, %v1047, 0
        %v1108 = vsel %vm1073, %v1048, 0
        %v1111 = vsel %vm1073, %v1049, 0
        %v1114 = vsel %vm1073, %v1050, 0
        %v1117 = vsel %vm1073, %v1051, 0
        %v1120 = vsel %vm1073, %v1052, 0
        %v1123 = vsel %vm1073, %v1053, 0
        %v1126 = vsel %vm1073, %v1054, 0
        %v1129 = vsel %vm1073, %v1055, 0
        %v1132 = vsel %vm1073, %v1056, 0
        %v1135 = vsel %vm1073, %v1057, 0
        %v1138 = vsel %vm1073, %v1058, 0
        %v1141 = vsel %vm1073, %v1059, 0
        %v1144 = vsel %vm1073, %v1060, 0
        %v1147 = vsel %vm1073, %v1061, 0
        %v1150 = vsel %vm1073, %v1062, 0
        %v1153 = vsel %vm1073, %v1063, 0
        %v1156 = vsel %vm1073, %v1064, 0
        %v1159 = vsel %vm1073, %v1065, 0
        %v1162 = vsel %vm1073, %v1066, 0
        %v1165 = vsel %vm1073, %v1067, 0
        %v1168 = vsel %vm1073, %v1068, 0
        %1170 = vmatprep.subr.mxu0 0.0
        %1171 = vmatpush1.msra.mxu0 %v1070
        %1172 = vmatprep.subr.mxu0 0.0
        %1173 = vmatpush1.msra.mxu0 %v1071
        %1174 = vmatprep.subr.mxu0 0.0
        %1175 = vmatpush1.msra.mxu0 %v1072
        %1176 = vmatprep.subr.mxu0 0.0
        %1177 = vmatpush1.msra.mxu0 0.0
        %1178 = vmatprep.subr.mxu0 0.0
        %1179 = vmatpush1.msra.mxu0 0.0
        %1180 = vmatprep.subr.mxu0 0.0
        %1181 = vmatpush1.msra.mxu0 0.0
        %1182 = vmatprep.subr.mxu0 0.0
        %1183 = vmatpush1.msra.mxu0 0.0
        %1184 = vmatprep.subr.mxu0 0.0
        %1185 = vmatpush1.msra.mxu0 0.0
        %1186 = vmatprep.subr.mxu0 0.0
        %1187 = vmatpush1.msra.mxu0 0.0
        %1188 = vmatprep.subr.mxu0 0.0
        %1189 = vmatpush1.msra.mxu0 0.0
        %1190 = vmatprep.subr.mxu0 0.0
        %1191 = vmatpush1.msra.mxu0 0.0
        %1192 = vmatprep.subr.mxu0 0.0
        %1193 = vmatpush1.msra.mxu0 0.0
        %1194 = vmatprep.subr.mxu0 0.0
        %1195 = vmatpush1.msra.mxu0 0.0
        %1196 = vmatprep.subr.mxu0 0.0
        %1197 = vmatpush1.msra.mxu0 0.0
        %1198 = vmatprep.subr.mxu0 0.0
        %1199 = vmatpush1.msra.mxu0 0.0
        %1200 = vmatprep.subr.mxu0 0.0
        %1201 = vmatpush1.msra.mxu0 0.0
        %1202 = vmatprep.subr.mxu0 0.0
        %1203 = vmatpush1.msra.mxu0 0.0
        %1204 = vmatprep.subr.mxu0 0.0
        %1205 = vmatpush1.msra.mxu0 0.0
        %1206 = vmatprep.subr.mxu0 0.0
        %1207 = vmatpush1.msra.mxu0 0.0
        %1208 = vmatprep.subr.mxu0 0.0
        %1209 = vmatpush1.msra.mxu0 0.0
        %1210 = vmatprep.subr.mxu0 0.0
        %1211 = vmatpush1.msra.mxu0 0.0
        %1212 = vmatprep.subr.mxu0 0.0
        %1213 = vmatpush1.msra.mxu0 0.0
        %1214 = vmatprep.subr.mxu0 0.0
        %1215 = vmatpush1.msra.mxu0 0.0
        %1216 = vmatprep.subr.mxu0 0.0
        %1217 = vmatpush1.msra.mxu0 0.0
        %1218 = vmatprep.subr.mxu0 0.0
        %1219 = vmatpush1.msra.mxu0 0.0
        %1220 = vmatprep.subr.mxu0 0.0
        %1221 = vmatpush1.msra.mxu0 0.0
        %1222 = vmatprep.subr.mxu0 0.0
        %1223 = vmatpush1.msra.mxu0 0.0
        %1224 = vmatprep.subr.mxu0 0.0
        %1225 = vmatpush1.msra.mxu0 0.0
        %1226 = vmatprep.subr.mxu0 0.0
        %1227 = vmatpush1.msra.mxu0 0.0
        %1228 = vmatprep.subr.mxu0 0.0
        %1229 = vmatpush1.msra.mxu0 0.0
        %1230 = vmatprep.subr.mxu0 0.0
        %1231 = vmatpush1.msra.mxu0 0.0
        %1232 = vmatprep.subr.mxu0 0.0
        %1233 = vmatpush1.msra.mxu0 0.0
        %1234 = vmatprep.mubr.f32.mxu0 0.0
        %1235 = vmatmul.mubr.f32.gmra.mrb[0].mxu0 %v1075
        %v1236 = vpop.f32.mrb[0].mxu0
        %v1237 = vadd.f32 0.0, %v1236
        %v1238 = vpop.f32.mrb[0].mxu0
        %1239 = vmatprep.mubr.f32.mxu0 0.0
        %1240 = vmatmul.mubr.f32.gmra.mrb[0].mxu0 %v1078
        %v1241 = vpop.f32.mrb[0].mxu0
        %v1242 = vadd.f32 0.0, %v1241
        %v1243 = vpop.f32.mrb[0].mxu0
        %1244 = vmatprep.mubr.f32.mxu0 0.0
        %1245 = vmatmul.mubr.f32.gmra.mrb[0].mxu0 %v1081
        %v1246 = vpop.f32.mrb[0].mxu0
        %v1247 = vadd.f32 0.0, %v1246
        %v1248 = vpop.f32.mrb[0].mxu0
        %1249 = vmatprep.mubr.f32.mxu0 0.0
        %1250 = vmatmul.mubr.f32.gmra.mrb[0].mxu0 %v1084
        %v1251 = vpop.f32.mrb[0].mxu0
        %v1252 = vadd.f32 0.0, %v1251
        %v1253 = vpop.f32.mrb[0].mxu0
        %1254 = vmatprep.mubr.f32.mxu0 0.0
        %1255 = vmatmul.mubr.f32.gmra.mrb[0].mxu0 %v1087
        %v1256 = vpop.f32.mrb[0].mxu0
        %v1257 = vadd.f32 0.0, %v1256
        %v1258 = vpop.f32.mrb[0].mxu0
        %1259 = vmatprep.mubr.f32.mxu0 0.0
        %1260 = vmatmul.mubr.f32.gmra.mrb[0].mxu0 %v1090
        %v1261 = vpop.f32.mrb[0].mxu0
        %v1262 = vadd.f32 0.0, %v1261
        %v1263 = vpop.f32.mrb[0].mxu0
        %1264 = vmatprep.mubr.f32.mxu0 0.0
        %1265 = vmatmul.mubr.f32.gmra.mrb[0].mxu0 %v1093
        %v1266 = vpop.f32.mrb[0].mxu0
        %v1267 = vadd.f32 0.0, %v1266
        %v1268 = vpop.f32.mrb[0].mxu0
        %1269 = vmatprep.mubr.f32.mxu0 0.0
        %1270 = vmatmul.mubr.f32.gmra.mrb[0].mxu0 %v1096
        %v1271 = vpop.f32.mrb[0].mxu0
        %v1272 = vadd.f32 0.0, %v1271
        %v1273 = vpop.f32.mrb[0].mxu0
        %1274 = vmatprep.mubr.f32.mxu0 0.0
        %1275 = vmatmul.mubr.f32.gmra.mrb[0].mxu0 %v1099
        %v1276 = vpop.f32.mrb[0].mxu0
        %v1277 = vadd.f32 0.0, %v1276
        %v1278 = vpop.f32.mrb[0].mxu0
        %1279 = vmatprep.mubr.f32.mxu0 0.0
        %1280 = vmatmul.mubr.f32.gmra.mrb[0].mxu0 %v1102
        %v1281 = vpop.f32.mrb[0].mxu0
        %v1282 = vadd.f32 0.0, %v1281
        %v1283 = vpop.f32.mrb[0].mxu0
        %1284 = vmatprep.mubr.f32.mxu0 0.0
        %1285 = vmatmul.mubr.f32.gmra.mrb[0].mxu0 %v1105
        %v1286 = vpop.f32.mrb[0].mxu0
        %v1287 = vadd.f32 0.0, %v1286
        %v1288 = vpop.f32.mrb[0].mxu0
        %1289 = vmatprep.mubr.f32.mxu0 0.0
        %1290 = vmatmul.mubr.f32.gmra.mrb[0].mxu0 %v1108
        %v1291 = vpop.f32.mrb[0].mxu0
        %v1292 = vadd.f32 0.0, %v1291
        %v1293 = vpop.f32.mrb[0].mxu0
        %1294 = vmatprep.mubr.f32.mxu0 0.0
        %1295 = vmatmul.mubr.f32.gmra.mrb[0].mxu0 %v1111
        %v1296 = vpop.f32.mrb[0].mxu0
        %v1297 = vadd.f32 0.0, %v1296
        %v1298 = vpop.f32.mrb[0].mxu0
        %1299 = vmatprep.mubr.f32.mxu0 0.0
        %1300 = vmatmul.mubr.f32.gmra.mrb[0].mxu0 %v1114
        %v1301 = vpop.f32.mrb[0].mxu0
        %v1302 = vadd.f32 0.0, %v1301
        %v1303 = vpop.f32.mrb[0].mxu0
        %1304 = vmatprep.mubr.f32.mxu0 0.0
        %1305 = vmatmul.mubr.f32.gmra.mrb[0].mxu0 %v1117
        %v1306 = vpop.f32.mrb[0].mxu0
        %v1307 = vadd.f32 0.0, %v1306
        %v1308 = vpop.f32.mrb[0].mxu0
        %1309 = vmatprep.mubr.f32.mxu0 0.0
        %1310 = vmatmul.mubr.f32.gmra.mrb[0].mxu0 %v1120
        %v1311 = vpop.f32.mrb[0].mxu0
        %v1312 = vadd.f32 0.0, %v1311
        %v1313 = vpop.f32.mrb[0].mxu0
        %1314 = vmatprep.mubr.f32.mxu0 0.0
        %1315 = vmatmul.mubr.f32.gmra.mrb[0].mxu0 %v1123
        %v1316 = vpop.f32.mrb[0].mxu0
        %v1317 = vadd.f32 0.0, %v1316
        %v1318 = vpop.f32.mrb[0].mxu0
        %1319 = vmatprep.mubr.f32.mxu0 0.0
        %1320 = vmatmul.mubr.f32.gmra.mrb[0].mxu0 %v1126
        %v1321 = vpop.f32.mrb[0].mxu0
        %v1322 = vadd.f32 0.0, %v1321
        %v1323 = vpop.f32.mrb[0].mxu0
        %1324 = vmatprep.mubr.f32.mxu0 0.0
        %1325 = vmatmul.mubr.f32.gmra.mrb[0].mxu0 %v1129
        %v1326 = vpop.f32.mrb[0].mxu0
        %v1327 = vadd.f32 0.0, %v1326
        %v1328 = vpop.f32.mrb[0].mxu0
        %1329 = vmatprep.mubr.f32.mxu0 0.0
        %1330 = vmatmul.mubr.f32.gmra.mrb[0].mxu0 %v1132
        %v1331 = vpop.f32.mrb[0].mxu0
        %v1332 = vadd.f32 0.0, %v1331
        %v1333 = vpop.f32.mrb[0].mxu0
        %1334 = vmatprep.mubr.f32.mxu0 0.0
        %1335 = vmatmul.mubr.f32.gmra.mrb[0].mxu0 %v1135
        %v1336 = vpop.f32.mrb[0].mxu0
        %v1337 = vadd.f32 0.0, %v1336
        %v1338 = vpop.f32.mrb[0].mxu0
        %1339 = vmatprep.mubr.f32.mxu0 0.0
        %1340 = vmatmul.mubr.f32.gmra.mrb[0].mxu0 %v1138
        %v1341 = vpop.f32.mrb[0].mxu0
        %v1342 = vadd.f32 0.0, %v1341
        %v1343 = vpop.f32.mrb[0].mxu0
        %1344 = vmatprep.mubr.f32.mxu0 0.0
        %1345 = vmatmul.mubr.f32.gmra.mrb[0].mxu0 %v1141
        %v1346 = vpop.f32.mrb[0].mxu0
        %v1347 = vadd.f32 0.0, %v1346
        %v1348 = vpop.f32.mrb[0].mxu0
        %1349 = vmatprep.mubr.f32.mxu0 0.0
        %1350 = vmatmul.mubr.f32.gmra.mrb[0].mxu0 %v1144
        %v1351 = vpop.f32.mrb[0].mxu0
        %v1352 = vadd.f32 0.0, %v1351
        %v1353 = vpop.f32.mrb[0].mxu0
        %1354 = vmatprep.mubr.f32.mxu0 0.0
        %1355 = vmatmul.mubr.f32.gmra.mrb[0].mxu0 %v1147
        %v1356 = vpop.f32.mrb[0].mxu0
        %v1357 = vadd.f32 0.0, %v1356
        %v1358 = vpop.f32.mrb[0].mxu0
        %1359 = vmatprep.mubr.f32.mxu0 0.0
        %1360 = vmatmul.mubr.f32.gmra.mrb[0].mxu0 %v1150
        %v1361 = vpop.f32.mrb[0].mxu0
        %v1362 = vadd.f32 0.0, %v1361
        %v1363 = vpop.f32.mrb[0].mxu0
        %1364 = vmatprep.mubr.f32.mxu0 0.0
        %1365 = vmatmul.mubr.f32.gmra.mrb[0].mxu0 %v1153
        %v1366 = vpop.f32.mrb[0].mxu0
        %v1367 = vadd.f32 0.0, %v1366
        %v1368 = vpop.f32.mrb[0].mxu0
        %1369 = vmatprep.mubr.f32.mxu0 0.0
        %1370 = vmatmul.mubr.f32.gmra.mrb[0].mxu0 %v1156
        %v1371 = vpop.f32.mrb[0].mxu0
        %v1372 = vadd.f32 0.0, %v1371
        %v1373 = vpop.f32.mrb[0].mxu0
        %1374 = vmatprep.mubr.f32.mxu0 0.0
        %1375 = vmatmul.mubr.f32.gmra.mrb[0].mxu0 %v1159
        %v1376 = vpop.f32.mrb[0].mxu0
        %v1377 = vadd.f32 0.0, %v1376
        %v1378 = vpop.f32.mrb[0].mxu0
        %1379 = vmatprep.mubr.f32.mxu0 0.0
        %1380 = vmatmul.mubr.f32.gmra.mrb[0].mxu0 %v1162
        %v1381 = vpop.f32.mrb[0].mxu0
        %v1382 = vadd.f32 0.0, %v1381
        %v1383 = vpop.f32.mrb[0].mxu0
        %1384 = vmatprep.mubr.f32.mxu0 0.0
        %1385 = vmatmul.mubr.f32.gmra.mrb[0].mxu0 %v1165
        %v1386 = vpop.f32.mrb[0].mxu0
        %v1387 = vadd.f32 0.0, %v1386
        %v1388 = vpop.f32.mrb[0].mxu0
        %1389 = vmatprep.mubr.f32.mxu0 0.0
        %1390 = vmatmul.mubr.f32.gmra.mrb[0].mxu0 %v1168
        %v1391 = vpop.f32.mrb[0].mxu0
        %v1392 = vadd.f32 0.0, %v1391
        %v1393 = vpop.f32.mrb[0].mxu0
        %1394 = vdwg.mxu0
        %v1396 = vsel %vm1073, %v617, 0
        %v1399 = vsel %vm1073, %v618, 0
        %v1402 = vsel %vm1073, %v619, 0
        %v1405 = vsel %vm1073, %v620, 0
        %v1408 = vsel %vm1073, %v621, 0
        %v1411 = vsel %vm1073, %v622, 0
        %v1414 = vsel %vm1073, %v623, 0
        %v1417 = vsel %vm1073, %v624, 0
        %v1420 = vsel %vm1073, %v625, 0
        %v1423 = vsel %vm1073, %v626, 0
        %v1426 = vsel %vm1073, %v627, 0
        %v1429 = vsel %vm1073, %v628, 0
        %v1432 = vsel %vm1073, %v629, 0
        %v1435 = vsel %vm1073, %v630, 0
        %v1438 = vsel %vm1073, %v631, 0
        %v1441 = vsel %vm1073, %v632, 0
        %v1444 = vsel %vm1073, %v633, 0
        %v1447 = vsel %vm1073, %v634, 0
        %v1450 = vsel %vm1073, %v635, 0
        %v1453 = vsel %vm1073, %v636, 0
        %v1456 = vsel %vm1073, %v637, 0
        %v1459 = vsel %vm1073, %v638, 0
        %v1462 = vsel %vm1073, %v639, 0
        %v1465 = vsel %vm1073, %v640, 0
        %v1468 = vsel %vm1073, %v641, 0
        %v1471 = vsel %vm1073, %v642, 0
        %v1474 = vsel %vm1073, %v643, 0
        %v1477 = vsel %vm1073, %v644, 0
        %v1480 = vsel %vm1073, %v645, 0
        %v1483 = vsel %vm1073, %v646, 0
        %v1486 = vsel %vm1073, %v647, 0
        %v1489 = vsel %vm1073, %v648, 0
        %1491 = vmatprep.subr.mxu0 0.0
        %1492 = vmatpush1.msra.mxu0 %v649
        %1493 = vmatprep.subr.mxu0 0.0
        %1494 = vmatpush1.msra.mxu0 %v650
        %1495 = vmatprep.subr.mxu0 0.0
        %1496 = vmatpush1.msra.mxu0 %v651
        %1497 = vmatprep.subr.mxu0 0.0
        %1498 = vmatpush1.msra.mxu0 0.0
        %1499 = vmatprep.subr.mxu0 0.0
        %1500 = vmatpush1.msra.mxu0 0.0
        %1501 = vmatprep.subr.mxu0 0.0
        %1502 = vmatpush1.msra.mxu0 0.0
        %1503 = vmatprep.subr.mxu0 0.0
        %1504 = vmatpush1.msra.mxu0 0.0
        %1505 = vmatprep.subr.mxu0 0.0
        %1506 = vmatpush1.msra.mxu0 0.0
        %1507 = vmatprep.subr.mxu0 0.0
        %1508 = vmatpush1.msra.mxu0 0.0
        %1509 = vmatprep.subr.mxu0 0.0
        %1510 = vmatpush1.msra.mxu0 0.0
        %1511 = vmatprep.subr.mxu0 0.0
        %1512 = vmatpush1.msra.mxu0 0.0
        %1513 = vmatprep.subr.mxu0 0.0
        %1514 = vmatpush1.msra.mxu0 0.0
        %1515 = vmatprep.subr.mxu0 0.0
        %1516 = vmatpush1.msra.mxu0 0.0
        %1517 = vmatprep.subr.mxu0 0.0
        %1518 = vmatpush1.msra.mxu0 0.0
        %1519 = vmatprep.subr.mxu0 0.0
        %1520 = vmatpush1.msra.mxu0 0.0
        %1521 = vmatprep.subr.mxu0 0.0
        %1522 = vmatpush1.msra.mxu0 0.0
        %1523 = vmatprep.subr.mxu0 0.0
        %1524 = vmatpush1.msra.mxu0 0.0
        %1525 = vmatprep.subr.mxu0 0.0
        %1526 = vmatpush1.msra.mxu0 0.0
        %1527 = vmatprep.subr.mxu0 0.0
        %1528 = vmatpush1.msra.mxu0 0.0
        %1529 = vmatprep.subr.mxu0 0.0
        %1530 = vmatpush1.msra.mxu0 0.0
        %1531 = vmatprep.subr.mxu0 0.0
        %1532 = vmatpush1.msra.mxu0 0.0
        %1533 = vmatprep.subr.mxu0 0.0
        %1534 = vmatpush1.msra.mxu0 0.0
        %1535 = vmatprep.subr.mxu0 0.0
        %1536 = vmatpush1.msra.mxu0 0.0
        %1537 = vmatprep.subr.mxu0 0.0
        %1538 = vmatpush1.msra.mxu0 0.0
        %1539 = vmatprep.subr.mxu0 0.0
        %1540 = vmatpush1.msra.mxu0 0.0
        %1541 = vmatprep.subr.mxu0 0.0
        %1542 = vmatpush1.msra.mxu0 0.0
        %1543 = vmatprep.subr.mxu0 0.0
        %1544 = vmatpush1.msra.mxu0 0.0
        %1545 = vmatprep.subr.mxu0 0.0
        %1546 = vmatpush1.msra.mxu0 0.0
        %1547 = vmatprep.subr.mxu0 0.0
        %1548 = vmatpush1.msra.mxu0 0.0
        %1549 = vmatprep.subr.mxu0 0.0
        %1550 = vmatpush1.msra.mxu0 0.0
        %1551 = vmatprep.subr.mxu0 0.0
        %1552 = vmatpush1.msra.mxu0 0.0
        %1553 = vmatprep.subr.mxu0 0.0
        %1554 = vmatpush1.msra.mxu0 0.0
        %1555 = vmatprep.mubr.f32.mxu0 0.0
        %1556 = vmatmul.mubr.f32.gmra.mrb[0].mxu0 %v1396
        %v1557 = vpop.f32.mrb[0].mxu0
        %v1558 = vadd.f32 %v1237, %v1557
        %v1559 = vpop.f32.mrb[0].mxu0
        %1560 = vmatprep.mubr.f32.mxu0 0.0
        %1561 = vmatmul.mubr.f32.gmra.mrb[0].mxu0 %v1399
        %v1562 = vpop.f32.mrb[0].mxu0
        %v1563 = vadd.f32 %v1242, %v1562
        %v1564 = vpop.f32.mrb[0].mxu0
        %1565 = vmatprep.mubr.f32.mxu0 0.0
        %1566 = vmatmul.mubr.f32.gmra.mrb[0].mxu0 %v1402
        %v1567 = vpop.f32.mrb[0].mxu0
        %v1568 = vadd.f32 %v1247, %v1567
        %v1569 = vpop.f32.mrb[0].mxu0
        %1570 = vmatprep.mubr.f32.mxu0 0.0
        %1571 = vmatmul.mubr.f32.gmra.mrb[0].mxu0 %v1405
        %v1572 = vpop.f32.mrb[0].mxu0
        %v1573 = vadd.f32 %v1252, %v1572
        %v1574 = vpop.f32.mrb[0].mxu0
        %1575 = vmatprep.mubr.f32.mxu0 0.0
        %1576 = vmatmul.mubr.f32.gmra.mrb[0].mxu0 %v1408
        %v1577 = vpop.f32.mrb[0].mxu0
        %v1578 = vadd.f32 %v1257, %v1577
        %v1579 = vpop.f32.mrb[0].mxu0
        %1580 = vmatprep.mubr.f32.mxu0 0.0
        %1581 = vmatmul.mubr.f32.gmra.mrb[0].mxu0 %v1411
        %v1582 = vpop.f32.mrb[0].mxu0
        %v1583 = vadd.f32 %v1262, %v1582
        %v1584 = vpop.f32.mrb[0].mxu0
        %1585 = vmatprep.mubr.f32.mxu0 0.0
        %1586 = vmatmul.mubr.f32.gmra.mrb[0].mxu0 %v1414
        %v1587 = vpop.f32.mrb[0].mxu0
        %v1588 = vadd.f32 %v1267, %v1587
        %v1589 = vpop.f32.mrb[0].mxu0
        %1590 = vmatprep.mubr.f32.mxu0 0.0
        %1591 = vmatmul.mubr.f32.gmra.mrb[0].mxu0 %v1417
        %v1592 = vpop.f32.mrb[0].mxu0
        %v1593 = vadd.f32 %v1272, %v1592
        %v1594 = vpop.f32.mrb[0].mxu0
        %1595 = vmatprep.mubr.f32.mxu0 0.0
        %1596 = vmatmul.mubr.f32.gmra.mrb[0].mxu0 %v1420
        %v1597 = vpop.f32.mrb[0].mxu0
        %v1598 = vadd.f32 %v1277, %v1597
        %v1599 = vpop.f32.mrb[0].mxu0
        %1600 = vmatprep.mubr.f32.mxu0 0.0
        %1601 = vmatmul.mubr.f32.gmra.mrb[0].mxu0 %v1423
        %v1602 = vpop.f32.mrb[0].mxu0
        %v1603 = vadd.f32 %v1282, %v1602
        %v1604 = vpop.f32.mrb[0].mxu0
        %1605 = vmatprep.mubr.f32.mxu0 0.0
        %1606 = vmatmul.mubr.f32.gmra.mrb[0].mxu0 %v1426
        %v1607 = vpop.f32.mrb[0].mxu0
        %v1608 = vadd.f32 %v1287, %v1607
        %v1609 = vpop.f32.mrb[0].mxu0
        %1610 = vmatprep.mubr.f32.mxu0 0.0
        %1611 = vmatmul.mubr.f32.gmra.mrb[0].mxu0 %v1429
        %v1612 = vpop.f32.mrb[0].mxu0
        %v1613 = vadd.f32 %v1292, %v1612
        %v1614 = vpop.f32.mrb[0].mxu0
        %1615 = vmatprep.mubr.f32.mxu0 0.0
        %1616 = vmatmul.mubr.f32.gmra.mrb[0].mxu0 %v1432
        %v1617 = vpop.f32.mrb[0].mxu0
        %v1618 = vadd.f32 %v1297, %v1617
        %v1619 = vpop.f32.mrb[0].mxu0
        %1620 = vmatprep.mubr.f32.mxu0 0.0
        %1621 = vmatmul.mubr.f32.gmra.mrb[0].mxu0 %v1435
        %v1622 = vpop.f32.mrb[0].mxu0
        %v1623 = vadd.f32 %v1302, %v1622
        %v1624 = vpop.f32.mrb[0].mxu0
        %1625 = vmatprep.mubr.f32.mxu0 0.0
        %1626 = vmatmul.mubr.f32.gmra.mrb[0].mxu0 %v1438
        %v1627 = vpop.f32.mrb[0].mxu0
        %v1628 = vadd.f32 %v1307, %v1627
        %v1629 = vpop.f32.mrb[0].mxu0
        %1630 = vmatprep.mubr.f32.mxu0 0.0
        %1631 = vmatmul.mubr.f32.gmra.mrb[0].mxu0 %v1441
        %v1632 = vpop.f32.mrb[0].mxu0
        %v1633 = vadd.f32 %v1312, %v1632
        %v1634 = vpop.f32.mrb[0].mxu0
        %1635 = vmatprep.mubr.f32.mxu0 0.0
        %1636 = vmatmul.mubr.f32.gmra.mrb[0].mxu0 %v1444
        %v1637 = vpop.f32.mrb[0].mxu0
        %v1638 = vadd.f32 %v1317, %v1637
        %v1639 = vpop.f32.mrb[0].mxu0
        %1640 = vmatprep.mubr.f32.mxu0 0.0
        %1641 = vmatmul.mubr.f32.gmra.mrb[0].mxu0 %v1447
        %v1642 = vpop.f32.mrb[0].mxu0
        %v1643 = vadd.f32 %v1322, %v1642
        %v1644 = vpop.f32.mrb[0].mxu0
        %1645 = vmatprep.mubr.f32.mxu0 0.0
        %1646 = vmatmul.mubr.f32.gmra.mrb[0].mxu0 %v1450
        %v1647 = vpop.f32.mrb[0].mxu0
        %v1648 = vadd.f32 %v1327, %v1647
        %v1649 = vpop.f32.mrb[0].mxu0
        %1650 = vmatprep.mubr.f32.mxu0 0.0
        %1651 = vmatmul.mubr.f32.gmra.mrb[0].mxu0 %v1453
        %v1652 = vpop.f32.mrb[0].mxu0
        %v1653 = vadd.f32 %v1332, %v1652
        %v1654 = vpop.f32.mrb[0].mxu0
        %1655 = vmatprep.mubr.f32.mxu0 0.0
        %1656 = vmatmul.mubr.f32.gmra.mrb[0].mxu0 %v1456
        %v1657 = vpop.f32.mrb[0].mxu0
        %v1658 = vadd.f32 %v1337, %v1657
        %v1659 = vpop.f32.mrb[0].mxu0
        %1660 = vmatprep.mubr.f32.mxu0 0.0
        %1661 = vmatmul.mubr.f32.gmra.mrb[0].mxu0 %v1459
        %v1662 = vpop.f32.mrb[0].mxu0
        %v1663 = vadd.f32 %v1342, %v1662
        %v1664 = vpop.f32.mrb[0].mxu0
        %1665 = vmatprep.mubr.f32.mxu0 0.0
        %1666 = vmatmul.mubr.f32.gmra.mrb[0].mxu0 %v1462
        %v1667 = vpop.f32.mrb[0].mxu0
        %v1668 = vadd.f32 %v1347, %v1667
        %v1669 = vpop.f32.mrb[0].mxu0
        %1670 = vmatprep.mubr.f32.mxu0 0.0
        %1671 = vmatmul.mubr.f32.gmra.mrb[0].mxu0 %v1465
        %v1672 = vpop.f32.mrb[0].mxu0
        %v1673 = vadd.f32 %v1352, %v1672
        %v1674 = vpop.f32.mrb[0].mxu0
        %1675 = vmatprep.mubr.f32.mxu0 0.0
        %1676 = vmatmul.mubr.f32.gmra.mrb[0].mxu0 %v1468
        %v1677 = vpop.f32.mrb[0].mxu0
        %v1678 = vadd.f32 %v1357, %v1677
        %v1679 = vpop.f32.mrb[0].mxu0
        %1680 = vmatprep.mubr.f32.mxu0 0.0
        %1681 = vmatmul.mubr.f32.gmra.mrb[0].mxu0 %v1471
        %v1682 = vpop.f32.mrb[0].mxu0
        %v1683 = vadd.f32 %v1362, %v1682
        %v1684 = vpop.f32.mrb[0].mxu0
        %1685 = vmatprep.mubr.f32.mxu0 0.0
        %1686 = vmatmul.mubr.f32.gmra.mrb[0].mxu0 %v1474
        %v1687 = vpop.f32.mrb[0].mxu0
        %v1688 = vadd.f32 %v1367, %v1687
        %v1689 = vpop.f32.mrb[0].mxu0
        %1690 = vmatprep.mubr.f32.mxu0 0.0
        %1691 = vmatmul.mubr.f32.gmra.mrb[0].mxu0 %v1477
        %v1692 = vpop.f32.mrb[0].mxu0
        %v1693 = vadd.f32 %v1372, %v1692
        %v1694 = vpop.f32.mrb[0].mxu0
        %1695 = vmatprep.mubr.f32.mxu0 0.0
        %1696 = vmatmul.mubr.f32.gmra.mrb[0].mxu0 %v1480
        %v1697 = vpop.f32.mrb[0].mxu0
        %v1698 = vadd.f32 %v1377, %v1697
        %v1699 = vpop.f32.mrb[0].mxu0
        %1700 = vmatprep.mubr.f32.mxu0 0.0
        %1701 = vmatmul.mubr.f32.gmra.mrb[0].mxu0 %v1483
        %v1702 = vpop.f32.mrb[0].mxu0
        %v1703 = vadd.f32 %v1382, %v1702
        %v1704 = vpop.f32.mrb[0].mxu0
        %1705 = vmatprep.mubr.f32.mxu0 0.0
        %1706 = vmatmul.mubr.f32.gmra.mrb[0].mxu0 %v1486
        %v1707 = vpop.f32.mrb[0].mxu0
        %v1708 = vadd.f32 %v1387, %v1707
        %v1709 = vpop.f32.mrb[0].mxu0
        %1710 = vmatprep.mubr.f32.mxu0 0.0
        %1711 = vmatmul.mubr.f32.gmra.mrb[0].mxu0 %v1489
        %v1712 = vpop.f32.mrb[0].mxu0
        %v1713 = vadd.f32 %v1392, %v1712
        %v1714 = vpop.f32.mrb[0].mxu0
        %1715 = vdwg.mxu0
        %s1716 = scalar_lea.vmem %s221, 48
        %v1717 = vld [vmem:[%s1716] sm:$0xff]
        %v1718 = vld [vmem:[%s1716 + $0x8] sm:$0xff]
        %v1719 = vld [vmem:[%s1716 + $0x18] sm:$0xff]
        %v1720 = vld [vmem:[%s1716 + $0x20] sm:$0xff]
        %v1721 = vld [vmem:[%s1716 + $0x30] sm:$0xff]
        %v1722 = vld [vmem:[%s1716 + $0x38] sm:$0xff]
        %v1723 = vld [vmem:[%s1716 + $0x48] sm:$0xff]
        %v1724 = vld [vmem:[%s1716 + $0x50] sm:$0xff]
        %v1725 = vld [vmem:[%s1716 + $0x60] sm:$0xff]
        %v1726 = vld [vmem:[%s1716 + $0x68] sm:$0xff]
        %v1727 = vld [vmem:[%s1716 + $0x78] sm:$0xff]
        %v1728 = vld [vmem:[%s1716 + $0x80] sm:$0xff]
        %v1729 = vld [vmem:[%s1716 + $0x90] sm:$0xff]
        %v1730 = vld [vmem:[%s1716 + $0x98] sm:$0xff]
        %v1731 = vld [vmem:[%s1716 + $0xa8] sm:$0xff]
        %v1732 = vld [vmem:[%s1716 + $0xb0] sm:$0xff]
        %v1733 = vld [vmem:[%s1716 + $0xc0] sm:$0xff]
        %v1734 = vld [vmem:[%s1716 + $0xc8] sm:$0xff]
        %v1735 = vld [vmem:[%s1716 + $0xd8] sm:$0xff]
        %v1736 = vld [vmem:[%s1716 + $0xe0] sm:$0xff]
        %v1737 = vld [vmem:[%s1716 + $0xf0] sm:$0xff]
        %v1738 = vld [vmem:[%s1716 + $0xf8] sm:$0xff]
        %v1739 = vld [vmem:[%s1716 + $0x108] sm:$0xff]
        %v1740 = vld [vmem:[%s1716 + $0x110] sm:$0xff]
        %v1741 = vld [vmem:[%s1716 + $0x120] sm:$0xff]
        %v1742 = vld [vmem:[%s1716 + $0x128] sm:$0xff]
        %v1743 = vld [vmem:[%s1716 + $0x138] sm:$0xff]
        %v1744 = vld [vmem:[%s1716 + $0x140] sm:$0xff]
        %v1745 = vld [vmem:[%s1716 + $0x150] sm:$0xff]
        %v1746 = vld [vmem:[%s1716 + $0x158] sm:$0xff]
        %v1747 = vld [vmem:[%s1716 + $0x168] sm:$0xff]
        %v1748 = vld [vmem:[%s1716 + $0x170] sm:$0xff]
        %v1749 = vld [vmem:[%s1716 + $0x1] sm:$0xff]
        %v1750 = vld [vmem:[%s1716 + $0x9] sm:$0xff]
        %v1751 = vld [vmem:[%s1716 + $0x19] sm:$0xff]
        %v1752 = vld [vmem:[%s1716 + $0x21] sm:$0xff]
        %v1753 = vld [vmem:[%s1716 + $0x31] sm:$0xff]
        %v1754 = vld [vmem:[%s1716 + $0x39] sm:$0xff]
        %v1755 = vld [vmem:[%s1716 + $0x49] sm:$0xff]
        %v1756 = vld [vmem:[%s1716 + $0x51] sm:$0xff]
        %v1757 = vld [vmem:[%s1716 + $0x61] sm:$0xff]
        %v1758 = vld [vmem:[%s1716 + $0x69] sm:$0xff]
        %v1759 = vld [vmem:[%s1716 + $0x79] sm:$0xff]
        %v1760 = vld [vmem:[%s1716 + $0x81] sm:$0xff]
        %v1761 = vld [vmem:[%s1716 + $0x91] sm:$0xff]
        %v1762 = vld [vmem:[%s1716 + $0x99] sm:$0xff]
        %v1763 = vld [vmem:[%s1716 + $0xa9] sm:$0xff]
        %v1764 = vld [vmem:[%s1716 + $0xb1] sm:$0xff]
        %v1765 = vld [vmem:[%s1716 + $0xc1] sm:$0xff]
        %v1766 = vld [vmem:[%s1716 + $0xc9] sm:$0xff]
        %v1767 = vld [vmem:[%s1716 + $0xd9] sm:$0xff]
        %v1768 = vld [vmem:[%s1716 + $0xe1] sm:$0xff]
        %v1769 = vld [vmem:[%s1716 + $0xf1] sm:$0xff]
        %v1770 = vld [vmem:[%s1716 + $0xf9] sm:$0xff]
        %v1771 = vld [vmem:[%s1716 + $0x109] sm:$0xff]
        %v1772 = vld [vmem:[%s1716 + $0x111] sm:$0xff]
        %v1773 = vld [vmem:[%s1716 + $0x121] sm:$0xff]
        %v1774 = vld [vmem:[%s1716 + $0x129] sm:$0xff]
        %v1775 = vld [vmem:[%s1716 + $0x139] sm:$0xff]
        %v1776 = vld [vmem:[%s1716 + $0x141] sm:$0xff]
        %v1777 = vld [vmem:[%s1716 + $0x151] sm:$0xff]
        %v1778 = vld [vmem:[%s1716 + $0x159] sm:$0xff]
        %v1779 = vld [vmem:[%s1716 + $0x169] sm:$0xff]
        %v1780 = vld [vmem:[%s1716 + $0x171] sm:$0xff]
        %v1781 = vld [vmem:[%s1716 + $0x2] sm:$0xff]
        %v1782 = vld [vmem:[%s1716 + $0xa] sm:$0xff]
        %v1783 = vld [vmem:[%s1716 + $0x1a] sm:$0xff]
        %v1784 = vld [vmem:[%s1716 + $0x22] sm:$0xff]
        %v1785 = vld [vmem:[%s1716 + $0x32] sm:$0xff]
        %v1786 = vld [vmem:[%s1716 + $0x3a] sm:$0xff]
        %v1787 = vld [vmem:[%s1716 + $0x4a] sm:$0xff]
        %v1788 = vld [vmem:[%s1716 + $0x52] sm:$0xff]
        %v1789 = vld [vmem:[%s1716 + $0x62] sm:$0xff]
        %v1790 = vld [vmem:[%s1716 + $0x6a] sm:$0xff]
        %v1791 = vld [vmem:[%s1716 + $0x7a] sm:$0xff]
        %v1792 = vld [vmem:[%s1716 + $0x82] sm:$0xff]
        %v1793 = vld [vmem:[%s1716 + $0x92] sm:$0xff]
        %v1794 = vld [vmem:[%s1716 + $0x9a] sm:$0xff]
        %v1795 = vld [vmem:[%s1716 + $0xaa] sm:$0xff]
        %v1796 = vld [vmem:[%s1716 + $0xb2] sm:$0xff]
        %v1797 = vld [vmem:[%s1716 + $0xc2] sm:$0xff]
        %v1798 = vld [vmem:[%s1716 + $0xca] sm:$0xff]
        %v1799 = vld [vmem:[%s1716 + $0xda] sm:$0xff]
        %v1800 = vld [vmem:[%s1716 + $0xe2] sm:$0xff]
        %v1801 = vld [vmem:[%s1716 + $0xf2] sm:$0xff]
        %v1802 = vld [vmem:[%s1716 + $0xfa] sm:$0xff]
        %v1803 = vld [vmem:[%s1716 + $0x10a] sm:$0xff]
        %v1804 = vld [vmem:[%s1716 + $0x112] sm:$0xff]
        %v1805 = vld [vmem:[%s1716 + $0x122] sm:$0xff]
        %v1806 = vld [vmem:[%s1716 + $0x12a] sm:$0xff]
        %v1807 = vld [vmem:[%s1716 + $0x13a] sm:$0xff]
        %v1808 = vld [vmem:[%s1716 + $0x142] sm:$0xff]
        %v1809 = vld [vmem:[%s1716 + $0x152] sm:$0xff]
        %v1810 = vld [vmem:[%s1716 + $0x15a] sm:$0xff]
        %v1811 = vld [vmem:[%s1716 + $0x16a] sm:$0xff]
        %v1812 = vld [vmem:[%s1716 + $0x172] sm:$0xff]
        %1845 = vrot.lane.b32.xlu0 %v1749, 8
        %v1846 = vpop.permute.xlu0 %1845
        %1847 = vrot.lane.b32.xlu0 %v1750, 8
        %v1848 = vpop.permute.xlu0 %1847
        %1849 = vrot.lane.b32.xlu0 %v1751, 8
        %v1850 = vpop.permute.xlu0 %1849
        %1851 = vrot.lane.b32.xlu0 %v1752, 8
        %v1852 = vpop.permute.xlu0 %1851
        %1853 = vrot.lane.b32.xlu0 %v1753, 8
        %v1854 = vpop.permute.xlu0 %1853
        %1855 = vrot.lane.b32.xlu0 %v1754, 8
        %v1856 = vpop.permute.xlu0 %1855
        %1857 = vrot.lane.b32.xlu0 %v1755, 8
        %v1858 = vpop.permute.xlu0 %1857
        %1859 = vrot.lane.b32.xlu0 %v1756, 8
        %v1860 = vpop.permute.xlu0 %1859
        %1861 = vrot.lane.b32.xlu0 %v1757, 8
        %v1862 = vpop.permute.xlu0 %1861
        %1863 = vrot.lane.b32.xlu0 %v1758, 8
        %v1864 = vpop.permute.xlu0 %1863
        %1865 = vrot.lane.b32.xlu0 %v1759, 8
        %v1866 = vpop.permute.xlu0 %1865
        %1867 = vrot.lane.b32.xlu0 %v1760, 8
        %v1868 = vpop.permute.xlu0 %1867
        %1869 = vrot.lane.b32.xlu0 %v1761, 8
        %v1870 = vpop.permute.xlu0 %1869
        %1871 = vrot.lane.b32.xlu0 %v1762, 8
        %v1872 = vpop.permute.xlu0 %1871
        %1873 = vrot.lane.b32.xlu0 %v1763, 8
        %v1874 = vpop.permute.xlu0 %1873
        %1875 = vrot.lane.b32.xlu0 %v1764, 8
        %v1876 = vpop.permute.xlu0 %1875
        %1877 = vrot.lane.b32.xlu0 %v1765, 8
        %v1878 = vpop.permute.xlu0 %1877
        %1879 = vrot.lane.b32.xlu0 %v1766, 8
        %v1880 = vpop.permute.xlu0 %1879
        %1881 = vrot.lane.b32.xlu0 %v1767, 8
        %v1882 = vpop.permute.xlu0 %1881
        %1883 = vrot.lane.b32.xlu0 %v1768, 8
        %v1884 = vpop.permute.xlu0 %1883
        %1885 = vrot.lane.b32.xlu0 %v1769, 8
        %v1886 = vpop.permute.xlu0 %1885
        %1887 = vrot.lane.b32.xlu0 %v1770, 8
        %v1888 = vpop.permute.xlu0 %1887
        %1889 = vrot.lane.b32.xlu0 %v1771, 8
        %v1890 = vpop.permute.xlu0 %1889
        %1891 = vrot.lane.b32.xlu0 %v1772, 8
        %v1892 = vpop.permute.xlu0 %1891
        %1893 = vrot.lane.b32.xlu0 %v1773, 8
        %v1894 = vpop.permute.xlu0 %1893
        %1895 = vrot.lane.b32.xlu0 %v1774, 8
        %v1896 = vpop.permute.xlu0 %1895
        %1897 = vrot.lane.b32.xlu0 %v1775, 8
        %v1898 = vpop.permute.xlu0 %1897
        %1899 = vrot.lane.b32.xlu0 %v1776, 8
        %v1900 = vpop.permute.xlu0 %1899
        %1901 = vrot.lane.b32.xlu0 %v1777, 8
        %v1902 = vpop.permute.xlu0 %1901
        %1903 = vrot.lane.b32.xlu0 %v1778, 8
        %v1904 = vpop.permute.xlu0 %1903
        %1905 = vrot.lane.b32.xlu0 %v1779, 8
        %v1906 = vpop.permute.xlu0 %1905
        %1907 = vrot.lane.b32.xlu0 %v1780, 8
        %v1908 = vpop.permute.xlu0 %1907
        %1973 = vrot.lane.b32.xlu0 %v1781, 16
        %v1974 = vpop.permute.xlu0 %1973
        %1975 = vrot.lane.b32.xlu0 %v1782, 16
        %v1976 = vpop.permute.xlu0 %1975
        %1977 = vrot.lane.b32.xlu0 %v1783, 16
        %v1978 = vpop.permute.xlu0 %1977
        %1979 = vrot.lane.b32.xlu0 %v1784, 16
        %v1980 = vpop.permute.xlu0 %1979
        %1981 = vrot.lane.b32.xlu0 %v1785, 16
        %v1982 = vpop.permute.xlu0 %1981
        %1983 = vrot.lane.b32.xlu0 %v1786, 16
        %v1984 = vpop.permute.xlu0 %1983
        %1985 = vrot.lane.b32.xlu0 %v1787, 16
        %v1986 = vpop.permute.xlu0 %1985
        %1987 = vrot.lane.b32.xlu0 %v1788, 16
        %v1988 = vpop.permute.xlu0 %1987
        %1989 = vrot.lane.b32.xlu0 %v1789, 16
        %v1990 = vpop.permute.xlu0 %1989
        %1991 = vrot.lane.b32.xlu0 %v1790, 16
        %v1992 = vpop.permute.xlu0 %1991
        %1993 = vrot.lane.b32.xlu0 %v1791, 16
        %v1994 = vpop.permute.xlu0 %1993
        %1995 = vrot.lane.b32.xlu0 %v1792, 16
        %v1996 = vpop.permute.xlu0 %1995
        %1997 = vrot.lane.b32.xlu0 %v1793, 16
        %v1998 = vpop.permute.xlu0 %1997
        %1999 = vrot.lane.b32.xlu0 %v1794, 16
        %v2000 = vpop.permute.xlu0 %1999
        %2001 = vrot.lane.b32.xlu0 %v1795, 16
        %v2002 = vpop.permute.xlu0 %2001
        %2003 = vrot.lane.b32.xlu0 %v1796, 16
        %v2004 = vpop.permute.xlu0 %2003
        %2005 = vrot.lane.b32.xlu0 %v1797, 16
        %v2006 = vpop.permute.xlu0 %2005
        %2007 = vrot.lane.b32.xlu0 %v1798, 16
        %v2008 = vpop.permute.xlu0 %2007
        %2009 = vrot.lane.b32.xlu0 %v1799, 16
        %v2010 = vpop.permute.xlu0 %2009
        %2011 = vrot.lane.b32.xlu0 %v1800, 16
        %v2012 = vpop.permute.xlu0 %2011
        %2013 = vrot.lane.b32.xlu0 %v1801, 16
        %v2014 = vpop.permute.xlu0 %2013
        %2015 = vrot.lane.b32.xlu0 %v1802, 16
        %v2016 = vpop.permute.xlu0 %2015
        %2017 = vrot.lane.b32.xlu0 %v1803, 16
        %v2018 = vpop.permute.xlu0 %2017
        %2019 = vrot.lane.b32.xlu0 %v1804, 16
        %v2020 = vpop.permute.xlu0 %2019
        %2021 = vrot.lane.b32.xlu0 %v1805, 16
        %v2022 = vpop.permute.xlu0 %2021
        %2023 = vrot.lane.b32.xlu0 %v1806, 16
        %v2024 = vpop.permute.xlu0 %2023
        %2025 = vrot.lane.b32.xlu0 %v1807, 16
        %v2026 = vpop.permute.xlu0 %2025
        %2027 = vrot.lane.b32.xlu0 %v1808, 16
        %v2028 = vpop.permute.xlu0 %2027
        %2029 = vrot.lane.b32.xlu0 %v1809, 16
        %v2030 = vpop.permute.xlu0 %2029
        %2031 = vrot.lane.b32.xlu0 %v1810, 16
        %v2032 = vpop.permute.xlu0 %2031
        %2033 = vrot.lane.b32.xlu0 %v1811, 16
        %v2034 = vpop.permute.xlu0 %2033
        %2035 = vrot.lane.b32.xlu0 %v1812, 16
        %v2036 = vpop.permute.xlu0 %2035
        %v2069 = vsel %vm583, %v1717, %v1846
        %v2070 = vsel %vm583, %v1718, %v1848
        %v2071 = vsel %vm583, %v1719, %v1850
        %v2072 = vsel %vm583, %v1720, %v1852
        %v2073 = vsel %vm583, %v1721, %v1854
        %v2074 = vsel %vm583, %v1722, %v1856
        %v2075 = vsel %vm583, %v1723, %v1858
        %v2076 = vsel %vm583, %v1724, %v1860
        %v2077 = vsel %vm583, %v1725, %v1862
        %v2078 = vsel %vm583, %v1726, %v1864
        %v2079 = vsel %vm583, %v1727, %v1866
        %v2080 = vsel %vm583, %v1728, %v1868
        %v2081 = vsel %vm583, %v1729, %v1870
        %v2082 = vsel %vm583, %v1730, %v1872
        %v2083 = vsel %vm583, %v1731, %v1874
        %v2084 = vsel %vm583, %v1732, %v1876
        %v2085 = vsel %vm583, %v1733, %v1878
        %v2086 = vsel %vm583, %v1734, %v1880
        %v2087 = vsel %vm583, %v1735, %v1882
        %v2088 = vsel %vm583, %v1736, %v1884
        %v2089 = vsel %vm583, %v1737, %v1886
        %v2090 = vsel %vm583, %v1738, %v1888
        %v2091 = vsel %vm583, %v1739, %v1890
        %v2092 = vsel %vm583, %v1740, %v1892
        %v2093 = vsel %vm583, %v1741, %v1894
        %v2094 = vsel %vm583, %v1742, %v1896
        %v2095 = vsel %vm583, %v1743, %v1898
        %v2096 = vsel %vm583, %v1744, %v1900
        %v2097 = vsel %vm583, %v1745, %v1902
        %v2098 = vsel %vm583, %v1746, %v1904
        %v2099 = vsel %vm583, %v1747, %v1906
        %v2100 = vsel %vm583, %v1748, %v1908
        %v2101 = vsel %vm616, %v2069, %v1974
        %v2102 = vsel %vm616, %v2070, %v1976
        %v2103 = vsel %vm616, %v2071, %v1978
        %v2104 = vsel %vm616, %v2072, %v1980
        %v2105 = vsel %vm616, %v2073, %v1982
        %v2106 = vsel %vm616, %v2074, %v1984
        %v2107 = vsel %vm616, %v2075, %v1986
        %v2108 = vsel %vm616, %v2076, %v1988
        %v2109 = vsel %vm616, %v2077, %v1990
        %v2110 = vsel %vm616, %v2078, %v1992
        %v2111 = vsel %vm616, %v2079, %v1994
        %v2112 = vsel %vm616, %v2080, %v1996
        %v2113 = vsel %vm616, %v2081, %v1998
        %v2114 = vsel %vm616, %v2082, %v2000
        %v2115 = vsel %vm616, %v2083, %v2002
        %v2116 = vsel %vm616, %v2084, %v2004
        %v2117 = vsel %vm616, %v2085, %v2006
        %v2118 = vsel %vm616, %v2086, %v2008
        %v2119 = vsel %vm616, %v2087, %v2010
        %v2120 = vsel %vm616, %v2088, %v2012
        %v2121 = vsel %vm616, %v2089, %v2014
        %v2122 = vsel %vm616, %v2090, %v2016
        %v2123 = vsel %vm616, %v2091, %v2018
        %v2124 = vsel %vm616, %v2092, %v2020
        %v2125 = vsel %vm616, %v2093, %v2022
        %v2126 = vsel %vm616, %v2094, %v2024
        %v2127 = vsel %vm616, %v2095, %v2026
        %v2128 = vsel %vm616, %v2096, %v2028
        %v2129 = vsel %vm616, %v2097, %v2030
        %v2130 = vsel %vm616, %v2098, %v2032
        %v2131 = vsel %vm616, %v2099, %v2034
        %v2132 = vsel %vm616, %v2100, %v2036
        %s2133 = scalar_lea.vmem %s226, 48
        %v2134 = vld [vmem:[%s2133] sm:$0xff]
        %v2135 = vld [vmem:[%s2133 + $0x8] sm:$0xff]
        %v2136 = vld [vmem:[%s2133 + $0x10] sm:$0xff]
        %v2138 = vsel %vm1073, %v2101, 0
        %v2141 = vsel %vm1073, %v2102, 0
        %v2144 = vsel %vm1073, %v2103, 0
        %v2147 = vsel %vm1073, %v2104, 0
        %v2150 = vsel %vm1073, %v2105, 0
        %v2153 = vsel %vm1073, %v2106, 0
        %v2156 = vsel %vm1073, %v2107, 0
        %v2159 = vsel %vm1073, %v2108, 0
        %v2162 = vsel %vm1073, %v2109, 0
        %v2165 = vsel %vm1073, %v2110, 0
        %v2168 = vsel %vm1073, %v2111, 0
        %v2171 = vsel %vm1073, %v2112, 0
        %v2174 = vsel %vm1073, %v2113, 0
        %v2177 = vsel %vm1073, %v2114, 0
        %v2180 = vsel %vm1073, %v2115, 0
        %v2183 = vsel %vm1073, %v2116, 0
        %v2186 = vsel %vm1073, %v2117, 0
        %v2189 = vsel %vm1073, %v2118, 0
        %v2192 = vsel %vm1073, %v2119, 0
        %v2195 = vsel %vm1073, %v2120, 0
        %v2198 = vsel %vm1073, %v2121, 0
        %v2201 = vsel %vm1073, %v2122, 0
        %v2204 = vsel %vm1073, %v2123, 0
        %v2207 = vsel %vm1073, %v2124, 0
        %v2210 = vsel %vm1073, %v2125, 0
        %v2213 = vsel %vm1073, %v2126, 0
        %v2216 = vsel %vm1073, %v2127, 0
        %v2219 = vsel %vm1073, %v2128, 0
        %v2222 = vsel %vm1073, %v2129, 0
        %v2225 = vsel %vm1073, %v2130, 0
        %v2228 = vsel %vm1073, %v2131, 0
        %v2231 = vsel %vm1073, %v2132, 0
        %2233 = vmatprep.subr.mxu0 0.0
        %2234 = vmatpush1.msra.mxu0 %v2134
        %2235 = vmatprep.subr.mxu0 0.0
        %2236 = vmatpush1.msra.mxu0 %v2135
        %2237 = vmatprep.subr.mxu0 0.0
        %2238 = vmatpush1.msra.mxu0 %v2136
        %2239 = vmatprep.subr.mxu0 0.0
        %2240 = vmatpush1.msra.mxu0 0.0
        %2241 = vmatprep.subr.mxu0 0.0
        %2242 = vmatpush1.msra.mxu0 0.0
        %2243 = vmatprep.subr.mxu0 0.0
        %2244 = vmatpush1.msra.mxu0 0.0
        %2245 = vmatprep.subr.mxu0 0.0
        %2246 = vmatpush1.msra.mxu0 0.0
        %2247 = vmatprep.subr.mxu0 0.0
        %2248 = vmatpush1.msra.mxu0 0.0
        %2249 = vmatprep.subr.mxu0 0.0
        %2250 = vmatpush1.msra.mxu0 0.0
        %2251 = vmatprep.subr.mxu0 0.0
        %2252 = vmatpush1.msra.mxu0 0.0
        %2253 = vmatprep.subr.mxu0 0.0
        %2254 = vmatpush1.msra.mxu0 0.0
        %2255 = vmatprep.subr.mxu0 0.0
        %2256 = vmatpush1.msra.mxu0 0.0
        %2257 = vmatprep.subr.mxu0 0.0
        %2258 = vmatpush1.msra.mxu0 0.0
        %2259 = vmatprep.subr.mxu0 0.0
        %2260 = vmatpush1.msra.mxu0 0.0
        %2261 = vmatprep.subr.mxu0 0.0
        %2262 = vmatpush1.msra.mxu0 0.0
        %2263 = vmatprep.subr.mxu0 0.0
        %2264 = vmatpush1.msra.mxu0 0.0
        %2265 = vmatprep.subr.mxu0 0.0
        %2266 = vmatpush1.msra.mxu0 0.0
        %2267 = vmatprep.subr.mxu0 0.0
        %2268 = vmatpush1.msra.mxu0 0.0
        %2269 = vmatprep.subr.mxu0 0.0
        %2270 = vmatpush1.msra.mxu0 0.0
        %2271 = vmatprep.subr.mxu0 0.0
        %2272 = vmatpush1.msra.mxu0 0.0
        %2273 = vmatprep.subr.mxu0 0.0
        %2274 = vmatpush1.msra.mxu0 0.0
        %2275 = vmatprep.subr.mxu0 0.0
        %2276 = vmatpush1.msra.mxu0 0.0
        %2277 = vmatprep.subr.mxu0 0.0
        %2278 = vmatpush1.msra.mxu0 0.0
        %2279 = vmatprep.subr.mxu0 0.0
        %2280 = vmatpush1.msra.mxu0 0.0
        %2281 = vmatprep.subr.mxu0 0.0
        %2282 = vmatpush1.msra.mxu0 0.0
        %2283 = vmatprep.subr.mxu0 0.0
        %2284 = vmatpush1.msra.mxu0 0.0
        %2285 = vmatprep.subr.mxu0 0.0
        %2286 = vmatpush1.msra.mxu0 0.0
        %2287 = vmatprep.subr.mxu0 0.0
        %2288 = vmatpush1.msra.mxu0 0.0
        %2289 = vmatprep.subr.mxu0 0.0
        %2290 = vmatpush1.msra.mxu0 0.0
        %2291 = vmatprep.subr.mxu0 0.0
        %2292 = vmatpush1.msra.mxu0 0.0
        %2293 = vmatprep.subr.mxu0 0.0
        %2294 = vmatpush1.msra.mxu0 0.0
        %2295 = vmatprep.subr.mxu0 0.0
        %2296 = vmatpush1.msra.mxu0 0.0
        %2297 = vmatprep.mubr.f32.mxu0 0.0
        %2298 = vmatmul.mubr.f32.gmra.mrb[0].mxu0 %v2138
        %v2299 = vpop.f32.mrb[0].mxu0
        %v2300 = vadd.f32 0.0, %v2299
        %v2301 = vpop.f32.mrb[0].mxu0
        %2302 = vmatprep.mubr.f32.mxu0 0.0
        %2303 = vmatmul.mubr.f32.gmra.mrb[0].mxu0 %v2141
        %v2304 = vpop.f32.mrb[0].mxu0
        %v2305 = vadd.f32 0.0, %v2304
        %v2306 = vpop.f32.mrb[0].mxu0
        %2307 = vmatprep.mubr.f32.mxu0 0.0
        %2308 = vmatmul.mubr.f32.gmra.mrb[0].mxu0 %v2144
        %v2309 = vpop.f32.mrb[0].mxu0
        %v2310 = vadd.f32 0.0, %v2309
        %v2311 = vpop.f32.mrb[0].mxu0
        %2312 = vmatprep.mubr.f32.mxu0 0.0
        %2313 = vmatmul.mubr.f32.gmra.mrb[0].mxu0 %v2147
        %v2314 = vpop.f32.mrb[0].mxu0
        %v2315 = vadd.f32 0.0, %v2314
        %v2316 = vpop.f32.mrb[0].mxu0
        %2317 = vmatprep.mubr.f32.mxu0 0.0
        %2318 = vmatmul.mubr.f32.gmra.mrb[0].mxu0 %v2150
        %v2319 = vpop.f32.mrb[0].mxu0
        %v2320 = vadd.f32 0.0, %v2319
        %v2321 = vpop.f32.mrb[0].mxu0
        %2322 = vmatprep.mubr.f32.mxu0 0.0
        %2323 = vmatmul.mubr.f32.gmra.mrb[0].mxu0 %v2153
        %v2324 = vpop.f32.mrb[0].mxu0
        %v2325 = vadd.f32 0.0, %v2324
        %v2326 = vpop.f32.mrb[0].mxu0
        %2327 = vmatprep.mubr.f32.mxu0 0.0
        %2328 = vmatmul.mubr.f32.gmra.mrb[0].mxu0 %v2156
        %v2329 = vpop.f32.mrb[0].mxu0
        %v2330 = vadd.f32 0.0, %v2329
        %v2331 = vpop.f32.mrb[0].mxu0
        %2332 = vmatprep.mubr.f32.mxu0 0.0
        %2333 = vmatmul.mubr.f32.gmra.mrb[0].mxu0 %v2159
        %v2334 = vpop.f32.mrb[0].mxu0
        %v2335 = vadd.f32 0.0, %v2334
        %v2336 = vpop.f32.mrb[0].mxu0
        %2337 = vmatprep.mubr.f32.mxu0 0.0
        %2338 = vmatmul.mubr.f32.gmra.mrb[0].mxu0 %v2162
        %v2339 = vpop.f32.mrb[0].mxu0
        %v2340 = vadd.f32 0.0, %v2339
        %v2341 = vpop.f32.mrb[0].mxu0
        %2342 = vmatprep.mubr.f32.mxu0 0.0
        %2343 = vmatmul.mubr.f32.gmra.mrb[0].mxu0 %v2165
        %v2344 = vpop.f32.mrb[0].mxu0
        %v2345 = vadd.f32 0.0, %v2344
        %v2346 = vpop.f32.mrb[0].mxu0
        %2347 = vmatprep.mubr.f32.mxu0 0.0
        %2348 = vmatmul.mubr.f32.gmra.mrb[0].mxu0 %v2168
        %v2349 = vpop.f32.mrb[0].mxu0
        %v2350 = vadd.f32 0.0, %v2349
        %v2351 = vpop.f32.mrb[0].mxu0
        %2352 = vmatprep.mubr.f32.mxu0 0.0
        %2353 = vmatmul.mubr.f32.gmra.mrb[0].mxu0 %v2171
        %v2354 = vpop.f32.mrb[0].mxu0
        %v2355 = vadd.f32 0.0, %v2354
        %v2356 = vpop.f32.mrb[0].mxu0
        %2357 = vmatprep.mubr.f32.mxu0 0.0
        %2358 = vmatmul.mubr.f32.gmra.mrb[0].mxu0 %v2174
        %v2359 = vpop.f32.mrb[0].mxu0
        %v2360 = vadd.f32 0.0, %v2359
        %v2361 = vpop.f32.mrb[0].mxu0
        %2362 = vmatprep.mubr.f32.mxu0 0.0
        %2363 = vmatmul.mubr.f32.gmra.mrb[0].mxu0 %v2177
        %v2364 = vpop.f32.mrb[0].mxu0
        %v2365 = vadd.f32 0.0, %v2364
        %v2366 = vpop.f32.mrb[0].mxu0
        %2367 = vmatprep.mubr.f32.mxu0 0.0
        %2368 = vmatmul.mubr.f32.gmra.mrb[0].mxu0 %v2180
        %v2369 = vpop.f32.mrb[0].mxu0
        %v2370 = vadd.f32 0.0, %v2369
        %v2371 = vpop.f32.mrb[0].mxu0
        %2372 = vmatprep.mubr.f32.mxu0 0.0
        %2373 = vmatmul.mubr.f32.gmra.mrb[0].mxu0 %v2183
        %v2374 = vpop.f32.mrb[0].mxu0
        %v2375 = vadd.f32 0.0, %v2374
        %v2376 = vpop.f32.mrb[0].mxu0
        %2377 = vmatprep.mubr.f32.mxu0 0.0
        %2378 = vmatmul.mubr.f32.gmra.mrb[0].mxu0 %v2186
        %v2379 = vpop.f32.mrb[0].mxu0
        %v2380 = vadd.f32 0.0, %v2379
        %v2381 = vpop.f32.mrb[0].mxu0
        %2382 = vmatprep.mubr.f32.mxu0 0.0
        %2383 = vmatmul.mubr.f32.gmra.mrb[0].mxu0 %v2189
        %v2384 = vpop.f32.mrb[0].mxu0
        %v2385 = vadd.f32 0.0, %v2384
        %v2386 = vpop.f32.mrb[0].mxu0
        %2387 = vmatprep.mubr.f32.mxu0 0.0
        %2388 = vmatmul.mubr.f32.gmra.mrb[0].mxu0 %v2192
        %v2389 = vpop.f32.mrb[0].mxu0
        %v2390 = vadd.f32 0.0, %v2389
        %v2391 = vpop.f32.mrb[0].mxu0
        %2392 = vmatprep.mubr.f32.mxu0 0.0
        %2393 = vmatmul.mubr.f32.gmra.mrb[0].mxu0 %v2195
        %v2394 = vpop.f32.mrb[0].mxu0
        %v2395 = vadd.f32 0.0, %v2394
        %v2396 = vpop.f32.mrb[0].mxu0
        %2397 = vmatprep.mubr.f32.mxu0 0.0
        %2398 = vmatmul.mubr.f32.gmra.mrb[0].mxu0 %v2198
        %v2399 = vpop.f32.mrb[0].mxu0
        %v2400 = vadd.f32 0.0, %v2399
        %v2401 = vpop.f32.mrb[0].mxu0
        %2402 = vmatprep.mubr.f32.mxu0 0.0
        %2403 = vmatmul.mubr.f32.gmra.mrb[0].mxu0 %v2201
        %v2404 = vpop.f32.mrb[0].mxu0
        %v2405 = vadd.f32 0.0, %v2404
        %v2406 = vpop.f32.mrb[0].mxu0
        %2407 = vmatprep.mubr.f32.mxu0 0.0
        %2408 = vmatmul.mubr.f32.gmra.mrb[0].mxu0 %v2204
        %v2409 = vpop.f32.mrb[0].mxu0
        %v2410 = vadd.f32 0.0, %v2409
        %v2411 = vpop.f32.mrb[0].mxu0
        %2412 = vmatprep.mubr.f32.mxu0 0.0
        %2413 = vmatmul.mubr.f32.gmra.mrb[0].mxu0 %v2207
        %v2414 = vpop.f32.mrb[0].mxu0
        %v2415 = vadd.f32 0.0, %v2414
        %v2416 = vpop.f32.mrb[0].mxu0
        %2417 = vmatprep.mubr.f32.mxu0 0.0
        %2418 = vmatmul.mubr.f32.gmra.mrb[0].mxu0 %v2210
        %v2419 = vpop.f32.mrb[0].mxu0
        %v2420 = vadd.f32 0.0, %v2419
        %v2421 = vpop.f32.mrb[0].mxu0
        %2422 = vmatprep.mubr.f32.mxu0 0.0
        %2423 = vmatmul.mubr.f32.gmra.mrb[0].mxu0 %v2213
        %v2424 = vpop.f32.mrb[0].mxu0
        %v2425 = vadd.f32 0.0, %v2424
        %v2426 = vpop.f32.mrb[0].mxu0
        %2427 = vmatprep.mubr.f32.mxu0 0.0
        %2428 = vmatmul.mubr.f32.gmra.mrb[0].mxu0 %v2216
        %v2429 = vpop.f32.mrb[0].mxu0
        %v2430 = vadd.f32 0.0, %v2429
        %v2431 = vpop.f32.mrb[0].mxu0
        %2432 = vmatprep.mubr.f32.mxu0 0.0
        %2433 = vmatmul.mubr.f32.gmra.mrb[0].mxu0 %v2219
        %v2434 = vpop.f32.mrb[0].mxu0
        %v2435 = vadd.f32 0.0, %v2434
        %v2436 = vpop.f32.mrb[0].mxu0
        %2437 = vmatprep.mubr.f32.mxu0 0.0
        %2438 = vmatmul.mubr.f32.gmra.mrb[0].mxu0 %v2222
        %v2439 = vpop.f32.mrb[0].mxu0
        %v2440 = vadd.f32 0.0, %v2439
        %v2441 = vpop.f32.mrb[0].mxu0
        %2442 = vmatprep.mubr.f32.mxu0 0.0
        %2443 = vmatmul.mubr.f32.gmra.mrb[0].mxu0 %v2225
        %v2444 = vpop.f32.mrb[0].mxu0
        %v2445 = vadd.f32 0.0, %v2444
        %v2446 = vpop.f32.mrb[0].mxu0
        %2447 = vmatprep.mubr.f32.mxu0 0.0
        %2448 = vmatmul.mubr.f32.gmra.mrb[0].mxu0 %v2228
        %v2449 = vpop.f32.mrb[0].mxu0
        %v2450 = vadd.f32 0.0, %v2449
        %v2451 = vpop.f32.mrb[0].mxu0
        %2452 = vmatprep.mubr.f32.mxu0 0.0
        %2453 = vmatmul.mubr.f32.gmra.mrb[0].mxu0 %v2231
        %v2454 = vpop.f32.mrb[0].mxu0
        %v2455 = vadd.f32 0.0, %v2454
        %v2456 = vpop.f32.mrb[0].mxu0
        %2457 = vdwg.mxu0
        %v2458 = vadd.f32 %v1558, %v2300
        %v2459 = vadd.f32 %v1563, %v2305
        %v2460 = vadd.f32 %v1568, %v2310
        %v2461 = vadd.f32 %v1573, %v2315
        %v2462 = vadd.f32 %v1578, %v2320
        %v2463 = vadd.f32 %v1583, %v2325
        %v2464 = vadd.f32 %v1588, %v2330
        %v2465 = vadd.f32 %v1593, %v2335
        %v2466 = vadd.f32 %v1598, %v2340
        %v2467 = vadd.f32 %v1603, %v2345
        %v2468 = vadd.f32 %v1608, %v2350
        %v2469 = vadd.f32 %v1613, %v2355
        %v2470 = vadd.f32 %v1618, %v2360
        %v2471 = vadd.f32 %v1623, %v2365
        %v2472 = vadd.f32 %v1628, %v2370
        %v2473 = vadd.f32 %v1633, %v2375
        %v2474 = vadd.f32 %v1638, %v2380
        %v2475 = vadd.f32 %v1643, %v2385
        %v2476 = vadd.f32 %v1648, %v2390
        %v2477 = vadd.f32 %v1653, %v2395
        %v2478 = vadd.f32 %v1658, %v2400
        %v2479 = vadd.f32 %v1663, %v2405
        %v2480 = vadd.f32 %v1668, %v2410
        %v2481 = vadd.f32 %v1673, %v2415
        %v2482 = vadd.f32 %v1678, %v2420
        %v2483 = vadd.f32 %v1683, %v2425
        %v2484 = vadd.f32 %v1688, %v2430
        %v2485 = vadd.f32 %v1693, %v2435
        %v2486 = vadd.f32 %v1698, %v2440
        %v2487 = vadd.f32 %v1703, %v2445
        %v2488 = vadd.f32 %v1708, %v2450
        %v2489 = vadd.f32 %v1713, %v2455
        %v2490 = vld [vmem:[%s229] sm:$0x1]
        %v2492 = vlaneseq
        %v2493 = vshrl.u32 %v2492, 7
        %v2494 = vsub.s32 0, %v2493
        %v2495 = vrot.slane %v2490, %v2494
        %v2497 = vadd.f32 %v2458, %v2495
        %v2498 = vadd.f32 %v2459, %v2495
        %v2499 = vadd.f32 %v2460, %v2495
        %v2500 = vadd.f32 %v2461, %v2495
        %v2501 = vadd.f32 %v2462, %v2495
        %v2502 = vadd.f32 %v2463, %v2495
        %v2503 = vadd.f32 %v2464, %v2495
        %v2504 = vadd.f32 %v2465, %v2495
        %v2505 = vadd.f32 %v2466, %v2495
        %v2506 = vadd.f32 %v2467, %v2495
        %v2507 = vadd.f32 %v2468, %v2495
        %v2508 = vadd.f32 %v2469, %v2495
        %v2509 = vadd.f32 %v2470, %v2495
        %v2510 = vadd.f32 %v2471, %v2495
        %v2511 = vadd.f32 %v2472, %v2495
        %v2512 = vadd.f32 %v2473, %v2495
        %v2513 = vadd.f32 %v2474, %v2495
        %v2514 = vadd.f32 %v2475, %v2495
        %v2515 = vadd.f32 %v2476, %v2495
        %v2516 = vadd.f32 %v2477, %v2495
        %v2517 = vadd.f32 %v2478, %v2495
        %v2518 = vadd.f32 %v2479, %v2495
        %v2519 = vadd.f32 %v2480, %v2495
        %v2520 = vadd.f32 %v2481, %v2495
        %v2521 = vadd.f32 %v2482, %v2495
        %v2522 = vadd.f32 %v2483, %v2495
        %v2523 = vadd.f32 %v2484, %v2495
        %v2524 = vadd.f32 %v2485, %v2495
        %v2525 = vadd.f32 %v2486, %v2495
        %v2526 = vadd.f32 %v2487, %v2495
        %v2527 = vadd.f32 %v2488, %v2495
        %v2528 = vadd.f32 %v2489, %v2495
        %v2529 = vxor.u32 %v2497, 2147483648
        %v2530 = vxor.u32 %v2498, 2147483648
        %v2531 = vxor.u32 %v2499, 2147483648
        %v2532 = vxor.u32 %v2500, 2147483648
        %v2533 = vxor.u32 %v2501, 2147483648
        %v2534 = vxor.u32 %v2502, 2147483648
        %v2535 = vxor.u32 %v2503, 2147483648
        %v2536 = vxor.u32 %v2504, 2147483648
        %v2537 = vxor.u32 %v2505, 2147483648
        %v2538 = vxor.u32 %v2506, 2147483648
        %v2539 = vxor.u32 %v2507, 2147483648
        %v2540 = vxor.u32 %v2508, 2147483648
        %v2541 = vxor.u32 %v2509, 2147483648
        %v2542 = vxor.u32 %v2510, 2147483648
        %v2543 = vxor.u32 %v2511, 2147483648
        %v2544 = vxor.u32 %v2512, 2147483648
        %v2545 = vxor.u32 %v2513, 2147483648
        %v2546 = vxor.u32 %v2514, 2147483648
        %v2547 = vxor.u32 %v2515, 2147483648
        %v2548 = vxor.u32 %v2516, 2147483648
        %v2549 = vxor.u32 %v2517, 2147483648
        %v2550 = vxor.u32 %v2518, 2147483648
        %v2551 = vxor.u32 %v2519, 2147483648
        %v2552 = vxor.u32 %v2520, 2147483648
        %v2553 = vxor.u32 %v2521, 2147483648
        %v2554 = vxor.u32 %v2522, 2147483648
        %v2555 = vxor.u32 %v2523, 2147483648
        %v2556 = vxor.u32 %v2524, 2147483648
        %v2557 = vxor.u32 %v2525, 2147483648
        %v2558 = vxor.u32 %v2526, 2147483648
        %v2559 = vxor.u32 %v2527, 2147483648
        %v2560 = vxor.u32 %v2528, 2147483648
        %v2561 = vmul.f32 %v2529, 1.442695
        %v2562 = vpow.pop %v2561
        %v2563 = vmul.f32 %v2530, 1.442695
        %v2564 = vpow.pop %v2563
        %v2565 = vmul.f32 %v2531, 1.442695
        %v2566 = vpow.pop %v2565
        %v2567 = vmul.f32 %v2532, 1.442695
        %v2568 = vpow.pop %v2567
        %v2569 = vmul.f32 %v2533, 1.442695
        %v2570 = vpow.pop %v2569
        %v2571 = vmul.f32 %v2534, 1.442695
        %v2572 = vpow.pop %v2571
        %v2573 = vmul.f32 %v2535, 1.442695
        %v2574 = vpow.pop %v2573
        %v2575 = vmul.f32 %v2536, 1.442695
        %v2576 = vpow.pop %v2575
        %v2577 = vmul.f32 %v2537, 1.442695
        %v2578 = vpow.pop %v2577
        %v2579 = vmul.f32 %v2538, 1.442695
        %v2580 = vpow.pop %v2579
        %v2581 = vmul.f32 %v2539, 1.442695
        %v2582 = vpow.pop %v2581
        %v2583 = vmul.f32 %v2540, 1.442695
        %v2584 = vpow.pop %v2583
        %v2585 = vmul.f32 %v2541, 1.442695
        %v2586 = vpow.pop %v2585
        %v2587 = vmul.f32 %v2542, 1.442695
        %v2588 = vpow.pop %v2587
        %v2589 = vmul.f32 %v2543, 1.442695
        %v2590 = vpow.pop %v2589
        %v2591 = vmul.f32 %v2544, 1.442695
        %v2592 = vpow.pop %v2591
        %v2593 = vmul.f32 %v2545, 1.442695
        %v2594 = vpow.pop %v2593
        %v2595 = vmul.f32 %v2546, 1.442695
        %v2596 = vpow.pop %v2595
        %v2597 = vmul.f32 %v2547, 1.442695
        %v2598 = vpow.pop %v2597
        %v2599 = vmul.f32 %v2548, 1.442695
        %v2600 = vpow.pop %v2599
        %v2601 = vmul.f32 %v2549, 1.442695
        %v2602 = vpow.pop %v2601
        %v2603 = vmul.f32 %v2550, 1.442695
        %v2604 = vpow.pop %v2603
        %v2605 = vmul.f32 %v2551, 1.442695
        %v2606 = vpow.pop %v2605
        %v2607 = vmul.f32 %v2552, 1.442695
        %v2608 = vpow.pop %v2607
        %v2609 = vmul.f32 %v2553, 1.442695
        %v2610 = vpow.pop %v2609
        %v2611 = vmul.f32 %v2554, 1.442695
        %v2612 = vpow.pop %v2611
        %v2613 = vmul.f32 %v2555, 1.442695
        %v2614 = vpow.pop %v2613
        %v2615 = vmul.f32 %v2556, 1.442695
        %v2616 = vpow.pop %v2615
        %v2617 = vmul.f32 %v2557, 1.442695
        %v2618 = vpow.pop %v2617
        %v2619 = vmul.f32 %v2558, 1.442695
        %v2620 = vpow.pop %v2619
        %v2621 = vmul.f32 %v2559, 1.442695
        %v2622 = vpow.pop %v2621
        %v2623 = vmul.f32 %v2560, 1.442695
        %v2624 = vpow.pop %v2623
        %v2625 = vadd.f32 %v2562, 1.0
        %v2626 = vadd.f32 %v2564, 1.0
        %v2627 = vadd.f32 %v2566, 1.0
        %v2628 = vadd.f32 %v2568, 1.0
        %v2629 = vadd.f32 %v2570, 1.0
        %v2630 = vadd.f32 %v2572, 1.0
        %v2631 = vadd.f32 %v2574, 1.0
        %v2632 = vadd.f32 %v2576, 1.0
        %v2633 = vadd.f32 %v2578, 1.0
        %v2634 = vadd.f32 %v2580, 1.0
        %v2635 = vadd.f32 %v2582, 1.0
        %v2636 = vadd.f32 %v2584, 1.0
        %v2637 = vadd.f32 %v2586, 1.0
        %v2638 = vadd.f32 %v2588, 1.0
        %v2639 = vadd.f32 %v2590, 1.0
        %v2640 = vadd.f32 %v2592, 1.0
        %v2641 = vadd.f32 %v2594, 1.0
        %v2642 = vadd.f32 %v2596, 1.0
        %v2643 = vadd.f32 %v2598, 1.0
        %v2644 = vadd.f32 %v2600, 1.0
        %v2645 = vadd.f32 %v2602, 1.0
        %v2646 = vadd.f32 %v2604, 1.0
        %v2647 = vadd.f32 %v2606, 1.0
        %v2648 = vadd.f32 %v2608, 1.0
        %v2649 = vadd.f32 %v2610, 1.0
        %v2650 = vadd.f32 %v2612, 1.0
        %v2651 = vadd.f32 %v2614, 1.0
        %v2652 = vadd.f32 %v2616, 1.0
        %v2653 = vadd.f32 %v2618, 1.0
        %v2654 = vadd.f32 %v2620, 1.0
        %v2655 = vadd.f32 %v2622, 1.0
        %v2656 = vadd.f32 %v2624, 1.0
        %v2657 = vrcp.pop %v2625
        %v2658 = vmul.f32 1.0, %v2657
        %v2659 = vrcp.pop %v2626
        %v2660 = vmul.f32 1.0, %v2659
        %v2661 = vrcp.pop %v2627
        %v2662 = vmul.f32 1.0, %v2661
        %v2663 = vrcp.pop %v2628
        %v2664 = vmul.f32 1.0, %v2663
        %v2665 = vrcp.pop %v2629
        %v2666 = vmul.f32 1.0, %v2665
        %v2667 = vrcp.pop %v2630
        %v2668 = vmul.f32 1.0, %v2667
        %v2669 = vrcp.pop %v2631
        %v2670 = vmul.f32 1.0, %v2669
        %v2671 = vrcp.pop %v2632
        %v2672 = vmul.f32 1.0, %v2671
        %v2673 = vrcp.pop %v2633
        %v2674 = vmul.f32 1.0, %v2673
        %v2675 = vrcp.pop %v2634
        %v2676 = vmul.f32 1.0, %v2675
        %v2677 = vrcp.pop %v2635
        %v2678 = vmul.f32 1.0, %v2677
        %v2679 = vrcp.pop %v2636
        %v2680 = vmul.f32 1.0, %v2679
        %v2681 = vrcp.pop %v2637
        %v2682 = vmul.f32 1.0, %v2681
        %v2683 = vrcp.pop %v2638
        %v2684 = vmul.f32 1.0, %v2683
        %v2685 = vrcp.pop %v2639
        %v2686 = vmul.f32 1.0, %v2685
        %v2687 = vrcp.pop %v2640
        %v2688 = vmul.f32 1.0, %v2687
        %v2689 = vrcp.pop %v2641
        %v2690 = vmul.f32 1.0, %v2689
        %v2691 = vrcp.pop %v2642
        %v2692 = vmul.f32 1.0, %v2691
        %v2693 = vrcp.pop %v2643
        %v2694 = vmul.f32 1.0, %v2693
        %v2695 = vrcp.pop %v2644
        %v2696 = vmul.f32 1.0, %v2695
        %v2697 = vrcp.pop %v2645
        %v2698 = vmul.f32 1.0, %v2697
        %v2699 = vrcp.pop %v2646
        %v2700 = vmul.f32 1.0, %v2699
        %v2701 = vrcp.pop %v2647
        %v2702 = vmul.f32 1.0, %v2701
        %v2703 = vrcp.pop %v2648
        %v2704 = vmul.f32 1.0, %v2703
        %v2705 = vrcp.pop %v2649
        %v2706 = vmul.f32 1.0, %v2705
        %v2707 = vrcp.pop %v2650
        %v2708 = vmul.f32 1.0, %v2707
        %v2709 = vrcp.pop %v2651
        %v2710 = vmul.f32 1.0, %v2709
        %v2711 = vrcp.pop %v2652
        %v2712 = vmul.f32 1.0, %v2711
        %v2713 = vrcp.pop %v2653
        %v2714 = vmul.f32 1.0, %v2713
        %v2715 = vrcp.pop %v2654
        %v2716 = vmul.f32 1.0, %v2715
        %v2717 = vrcp.pop %v2655
        %v2718 = vmul.f32 1.0, %v2717
        %v2719 = vrcp.pop %v2656
        %v2720 = vmul.f32 1.0, %v2719
        %v2721 = vmul.f32 %v2497, %v2658
        %v2722 = vmul.f32 %v2498, %v2660
        %v2723 = vmul.f32 %v2499, %v2662
        %v2724 = vmul.f32 %v2500, %v2664
        %v2725 = vmul.f32 %v2501, %v2666
        %v2726 = vmul.f32 %v2502, %v2668
        %v2727 = vmul.f32 %v2503, %v2670
        %v2728 = vmul.f32 %v2504, %v2672
        %v2729 = vmul.f32 %v2505, %v2674
        %v2730 = vmul.f32 %v2506, %v2676
        %v2731 = vmul.f32 %v2507, %v2678
        %v2732 = vmul.f32 %v2508, %v2680
        %v2733 = vmul.f32 %v2509, %v2682
        %v2734 = vmul.f32 %v2510, %v2684
        %v2735 = vmul.f32 %v2511, %v2686
        %v2736 = vmul.f32 %v2512, %v2688
        %v2737 = vmul.f32 %v2513, %v2690
        %v2738 = vmul.f32 %v2514, %v2692
        %v2739 = vmul.f32 %v2515, %v2694
        %v2740 = vmul.f32 %v2516, %v2696
        %v2741 = vmul.f32 %v2517, %v2698
        %v2742 = vmul.f32 %v2518, %v2700
        %v2743 = vmul.f32 %v2519, %v2702
        %v2744 = vmul.f32 %v2520, %v2704
        %v2745 = vmul.f32 %v2521, %v2706
        %v2746 = vmul.f32 %v2522, %v2708
        %v2747 = vmul.f32 %v2523, %v2710
        %v2748 = vmul.f32 %v2524, %v2712
        %v2749 = vmul.f32 %v2525, %v2714
        %v2750 = vmul.f32 %v2526, %v2716
        %v2751 = vmul.f32 %v2527, %v2718
        %v2752 = vmul.f32 %v2528, %v2720
        %2753 = vst [vmem:[%s215] sm:$0xff] %v2721
        %2754 = vst [vmem:[%s215 + $0x8] sm:$0xff] %v2722
        %2755 = vst [vmem:[%s215 + $0x10] sm:$0xff] %v2723
        %2756 = vst [vmem:[%s215 + $0x18] sm:$0xff] %v2724
        %2757 = vst [vmem:[%s215 + $0x20] sm:$0xff] %v2725
        %2758 = vst [vmem:[%s215 + $0x28] sm:$0xff] %v2726
        %2759 = vst [vmem:[%s215 + $0x30] sm:$0xff] %v2727
        %2760 = vst [vmem:[%s215 + $0x38] sm:$0xff] %v2728
        %2761 = vst [vmem:[%s215 + $0x40] sm:$0xff] %v2729
        %2762 = vst [vmem:[%s215 + $0x48] sm:$0xff] %v2730
        %2763 = vst [vmem:[%s215 + $0x50] sm:$0xff] %v2731
        %2764 = vst [vmem:[%s215 + $0x58] sm:$0xff] %v2732
        %2765 = vst [vmem:[%s215 + $0x60] sm:$0xff] %v2733
        %2766 = vst [vmem:[%s215 + $0x68] sm:$0xff] %v2734
        %2767 = vst [vmem:[%s215 + $0x70] sm:$0xff] %v2735
        %2768 = vst [vmem:[%s215 + $0x78] sm:$0xff] %v2736
        %2769 = vst [vmem:[%s215 + $0x80] sm:$0xff] %v2737
        %2770 = vst [vmem:[%s215 + $0x88] sm:$0xff] %v2738
        %2771 = vst [vmem:[%s215 + $0x90] sm:$0xff] %v2739
        %2772 = vst [vmem:[%s215 + $0x98] sm:$0xff] %v2740
        %2773 = vst [vmem:[%s215 + $0xa0] sm:$0xff] %v2741
        %2774 = vst [vmem:[%s215 + $0xa8] sm:$0xff] %v2742
        %2775 = vst [vmem:[%s215 + $0xb0] sm:$0xff] %v2743
        %2776 = vst [vmem:[%s215 + $0xb8] sm:$0xff] %v2744
        %2777 = vst [vmem:[%s215 + $0xc0] sm:$0xff] %v2745
        %2778 = vst [vmem:[%s215 + $0xc8] sm:$0xff] %v2746
        %2779 = vst [vmem:[%s215 + $0xd0] sm:$0xff] %v2747
        %2780 = vst [vmem:[%s215 + $0xd8] sm:$0xff] %v2748
        %2781 = vst [vmem:[%s215 + $0xe0] sm:$0xff] %v2749
        %2782 = vst [vmem:[%s215 + $0xe8] sm:$0xff] %v2750
        %2783 = vst [vmem:[%s215 + $0xf0] sm:$0xff] %v2751
        %2784 = vst [vmem:[%s215 + $0xf8] sm:$0xff] %v2752
        %s2785 = sand.u32 %s128, 1
        %s2786 = scalar_lea.sflag [#allocation3], %s2785
        %s2787 = sand.u32 %s128, 1
        %s2788 = smul.addr %s2787, 256
        %s2789 = scalar_lea.vmem [#allocation2], %s2788
        // Predicated region
        $region33: #{tpu_custom_call.1} parent=31 // pred_check
          %p2790 = pneg %p138
        $region34: #{tpu_custom_call.1} parent=31 // pred_check_branch
          %2792 = sbr.rel (%p2790) target = $region36
        $region35: #{tpu_custom_call.1} parent=31 // pred_region
          %s2793 = smul.u32 16, %s24
          %s2795 = ssub.s32 4096, 4096
          %2796 = vsyncadd %s2786, %s2795
          %s2797 = smul.addr %s2793, 2
          %s2798 = sadd.s32 %s22, %s2797
          %s2799 = smul.addr %s23, 32
          %s2800 = sadd.s32 %s2798, %s2799
          %s2801 = smul.addr %s2800, 128
          %s2802 = scalar_lea.hbm %s3, %s2801
          %s2803 = sshll.u32 %s2789, 4
          %s2804 = int_to_ptr.vmem [resolvable:$true] %s2803
          %2809 = dma.vmem_to_hbm [thread:$0]  %s2804, 4096, %s2802, %s2786, 128, 128, 8
        $region36: #{tpu_custom_call.1} parent=31 // pred_fallthru
          _
      $region32: #{tpu_custom_call.1} parent=5 // pred_fallthru
        _
      %p2810 = scmp.le.s32.totalorder 2, %s12
      // Predicated region
      $region37: #{tpu_custom_call.1} parent=5 // pred_check
        %p2811 = pneg %p2810
      $region38: #{tpu_custom_call.1} parent=5 // pred_check_branch
        %2813 = sbr.rel (%p2811) target = $region40
      $region39: #{tpu_custom_call.1} parent=5 // pred_region
        %s2814 = ssub.s32 %s12, 2
        // Predicated region
        $region41: #{tpu_custom_call.1} parent=39 // pred_check
          %p2815 = pneg %p144
        $region42: #{tpu_custom_call.1} parent=39 // pred_check_branch
          %2817 = sbr.rel (%p2815) target = $region44
        $region43: #{tpu_custom_call.1} parent=39 // pred_region
          %s2818 = sand.u32 %s129, 1
          %s2819 = scalar_lea.sflag [#allocation3], %s2818
          %s2820 = sand.u32 %s129, 1
          %s2821 = smul.addr %s2820, 256
          %s2822 = scalar_lea.vmem [#allocation2], %s2821
          %2823 = dma.done %s2819, 4096
        $region44: #{tpu_custom_call.1} parent=39 // pred_fallthru
          _
      $region40: #{tpu_custom_call.1} parent=5 // pred_fallthru
        _
    $region6: #{tpu_custom_call.1} parent=1 // loop_footer
      %s16 = sadd.s32 1, %s12
    $region7: #{tpu_custom_call.1} parent=1 // loop_footer_branch
      %11 = sbr.rel target = $region3
    $region8: #{tpu_custom_call.1} parent=1 // loop_exit
      _
    %2824 = vsyncpa [#allocation3], 1
    %s2825 = scalar_lea.sflag [#allocation3], 1
    %2826 = vsyncpa %s2825, 1

// kernel: tpu_custom_call.1
$region0: #{tpu_custom_call.1}
  #allocation0 [shape = 'u32[]', space=smem, size = 0x4, offset = 0x4, fixed_abs, tag = 'smem constant byte address 0x4 - core index']
  #allocation1 [shape = 'u32[144,128]{1,0:T(1,128)}', space=vmem, size = 0x12000, scoped, tag = 'internal scratch']
  %s0 = inlined_call_operand.vmem [shape: f32[2,18,18,8], index: 0, kind: input, shape index: {}]
  %s1 = inlined_call_operand.vmem [shape: f32[3,3,8,128], index: 1, kind: input, shape index: {}]
  %s2 = inlined_call_operand.vmem [shape: f32[1,128], index: 2, kind: input, shape index: {}]
  %s3 = inlined_call_operand.hbm [shape: f32[2,16,16,128], index: 3, kind: output, shape index: {}]
  %s4 = sld [smem:[#allocation0]]
  $region45: #{tpu_custom_call.1} parent=0
    _
  %s6 = ssub.s32 1, %s4
  %s7 = scalar_select 0, %s6, %s4
  $region1: #{tpu_custom_call.1} parent=0
    #allocation2 [shape = 'u8[262144]{0}', space=vmem, size = 0x40000, scoped, tag = 'output window, operand 0']
    #allocation3 [shape = 's32[2]{0}', space=sflag, size = 0x8, scoped, tag = 'scoped memory for tpu_custom_call.1']
    %8 = vsyncpa [#allocation3], 0
    %s9 = scalar_lea.sflag [#allocation3], 1
    %10 = vsyncpa %s9, 0
    loop: start=0, step=1, limit=4
    $region2: #{tpu_custom_call.1} parent=1 // loop_pre_header
      _
    $region3: #{tpu_custom_call.1} parent=1 // loop_header
      %s12 = sphi 0, %s16
      %p13 = scmp.ge.s32.totalorder %s12, 4
      %s19 = sphi 0, %s38
      %s20 = sphi 0, %s34
      %s21 = sphi 0, %s30
      %s22 = sphi 0, %s19
      %s23 = sphi 0, %s20
      %s24 = sphi 0, %s21
      %s25 = sphi 0, %s22
      %s26 = sphi 0, %s23
      %s27 = sphi 0, %s24
      %s43 = sphi 0, %s45
      %s46 = sphi 0, %s43
      %s47 = sphi 0, %s46
      %s63 = sphi 0, %s47
      %s69 = sphi 0, %s71
      %s72 = sphi 0, %s69
      %s73 = sphi 0, %s72
      %s89 = sphi 0, %s73
      %s95 = sphi 0, %s97
      %s98 = sphi 0, %s95
      %s99 = sphi 0, %s98
      %s115 = sphi 0, %s99
      %s125 = sphi 0, %s127
      %s128 = sphi 0, %s125
      %s129 = sphi 0, %s128
      %s145 = sphi 0, %s129
    $region4: #{tpu_custom_call.1} parent=1 // loop_header_branch
      %15 = sbr.rel (%p13) target = $region8
    $region5: #{tpu_custom_call.1} parent=1 // loop_body
      %s17 = ssub.s32 %s12, 1
      %s18 = ssub.s32 %s12, 2
      %s28 = sadd.s32 1, %s21
      %p29 = scmp.ge.s32.totalorder %s28, 1
      %s30 = scalar_select %p29, 0, %s28
      %s31 = sadd.s32 1, %s20
      %s32 = scalar_select %p29, %s31, %s20
      %p33 = scmp.ge.s32.totalorder %s32, 2
      %s34 = scalar_select %p33, 0, %s32
      %s35 = sadd.s32 1, %s19
      %s36 = scalar_select %p33, %s35, %s19
      %p37 = scmp.ge.s32.totalorder %s36, 1
      %s38 = scalar_select %p37, 0, %s36
      %s39 = sadd.s32 %s20, %s21
      %s40 = sadd.s32 %s34, %s30
      %s41 = ssub.s32 %s39, %s40
      %p42 = scmp.eq.s32.totalorder %s41, 0
      %s44 = sadd.s32 %s43, 1
      %s45 = scalar_select %p42, %s43, %s44
      %p48 = pneg %p42
      %p49 = scmp.eq.s32.totalorder %s12, 1
      %p50 = por %p48, %p49
      %p51 = scmp.ne.s32.totalorder %s43, %s46
      %p52 = scmp.eq.s32.totalorder %s12, 0
      %p53 = por %p51, %p52
      %p54 = scmp.ne.s32.totalorder %s43, %s46
      %p55 = scmp.eq.s32.totalorder %s17, 1
      %p56 = por %p54, %p55
      %p57 = scmp.ne.s32.totalorder %s46, %s47
      %p58 = scmp.eq.s32.totalorder %s17, 0
      %p59 = por %p57, %p58
      %p60 = scmp.ne.s32.totalorder %s46, %s47
      %p61 = scmp.eq.s32.totalorder %s18, 1
      %p62 = por %p60, %p61
      %p64 = scmp.ne.s32.totalorder %s47, %s63
      %p65 = scmp.eq.s32.totalorder %s18, 0
      %p66 = por %p64, %p65
      %s67 = ssub.s32 %s19, %s38
      %p68 = scmp.eq.s32.totalorder %s67, 0
      %s70 = sadd.s32 %s69, 1
      %s71 = scalar_select %p68, %s69, %s70
      %p74 = pneg %p68
      %p75 = scmp.eq.s32.totalorder %s12, 1
      %p76 = por %p74, %p75
      %p77 = scmp.ne.s32.totalorder %s69, %s72
      %p78 = scmp.eq.s32.totalorder %s12, 0
      %p79 = por %p77, %p78
      %p80 = scmp.ne.s32.totalorder %s69, %s72
      %p81 = scmp.eq.s32.totalorder %s17, 1
      %p82 = por %p80, %p81
      %p83 = scmp.ne.s32.totalorder %s72, %s73
      %p84 = scmp.eq.s32.totalorder %s17, 0
      %p85 = por %p83, %p84
      %p86 = scmp.ne.s32.totalorder %s72, %s73
      %p87 = scmp.eq.s32.totalorder %s18, 1
      %p88 = por %p86, %p87
      %p90 = scmp.ne.s32.totalorder %s73, %s89
      %p91 = scmp.eq.s32.totalorder %s18, 0
      %p92 = por %p90, %p91
      %s93 = ssub.s32 %s19, %s38
      %p94 = scmp.eq.s32.totalorder %s93, 0
      %s96 = sadd.s32 %s95, 1
      %s97 = scalar_select %p94, %s95, %s96
      %p100 = pneg %p94
      %p101 = scmp.eq.s32.totalorder %s12, 1
      %p102 = por %p100, %p101
      %p103 = scmp.ne.s32.totalorder %s95, %s98
      %p104 = scmp.eq.s32.totalorder %s12, 0
      %p105 = por %p103, %p104
      %p106 = scmp.ne.s32.totalorder %s95, %s98
      %p107 = scmp.eq.s32.totalorder %s17, 1
      %p108 = por %p106, %p107
      %p109 = scmp.ne.s32.totalorder %s98, %s99
      %p110 = scmp.eq.s32.totalorder %s17, 0
      %p111 = por %p109, %p110
      %p112 = scmp.ne.s32.totalorder %s98, %s99
      %p113 = scmp.eq.s32.totalorder %s18, 1
      %p114 = por %p112, %p113
      %p116 = scmp.ne.s32.totalorder %s99, %s115
      %p117 = scmp.eq.s32.totalorder %s18, 0
      %p118 = por %p116, %p117
      %s119 = ssub.s32 %s20, %s34
      %s120 = ssub.s32 %s21, %s30
      %s121 = sor.u32 %s119, %s120
      %s122 = ssub.s32 %s19, %s38
      %s123 = sor.u32 %s121, %s122
      %p124 = scmp.eq.s32.totalorder %s123, 0
      %s126 = sadd.s32 %s125, 1
      %s127 = scalar_select %p124, %s125, %s126
      %p130 = pneg %p124
      %p131 = scmp.eq.s32.totalorder %s12, 1
      %p132 = por %p130, %p131
      %p133 = scmp.ne.s32.totalorder %s125, %s128
      %p134 = scmp.eq.s32.totalorder %s12, 0
      %p135 = por %p133, %p134
      %p136 = scmp.ne.s32.totalorder %s125, %s128
      %p137 = scmp.eq.s32.totalorder %s17, 1
      %p138 = por %p136, %p137
      %p139 = scmp.ne.s32.totalorder %s128, %s129
      %p140 = scmp.eq.s32.totalorder %s17, 0
      %p141 = por %p139, %p140
      %p142 = scmp.ne.s32.totalorder %s128, %s129
      %p143 = scmp.eq.s32.totalorder %s18, 1
      %p144 = por %p142, %p143
      %p146 = scmp.ne.s32.totalorder %s129, %s145
      %p147 = scmp.eq.s32.totalorder %s18, 0
      %p148 = por %p146, %p147
      %p149 = scmp.le.s32.totalorder 1, %s12
      %p150 = scmp.lt.s32.totalorder %s12, 3
      %p151 = pnand %p149, %p150
      %p152 = pneg %p151
      // Predicated region
      $region9: #{tpu_custom_call.1} parent=5 // pred_check
        _
      $region10: #{tpu_custom_call.1} parent=5 // pred_check_branch
        %154 = sbr.rel (%p151) target = $region12
      $region11: #{tpu_custom_call.1} parent=5 // pred_region
        %s155 = ssub.s32 %s12, 1
        // Predicated region
        $region13: #{tpu_custom_call.1} parent=11 // pred_check
          %p156 = pneg %p85
        $region14: #{tpu_custom_call.1} parent=11 // pred_check_branch
          %158 = sbr.rel (%p156) target = $region16
        $region15: #{tpu_custom_call.1} parent=11 // pred_region
          %p159 = scmp.lt.s32.totalorder %s22, 0
          %s160 = scalar_select %p159, %s22, 0
          %s161 = smul.addr %s160, 8
          %s162 = scalar_lea.vmem %s1, %s161
        $region16: #{tpu_custom_call.1} parent=11 // pred_fallthru
          _
        // Predicated region
        $region17: #{tpu_custom_call.1} parent=11 // pred_check
          %p163 = pneg %p111
        $region18: #{tpu_custom_call.1} parent=11 // pred_check_branch
          %165 = sbr.rel (%p163) target = $region20
        $region19: #{tpu_custom_call.1} parent=11 // pred_region
          %p166 = scmp.lt.s32.totalorder %s22, 0
          %s167 = scalar_select %p166, %s22, 0
          %s168 = scalar_lea.vmem %s2, %s167
        $region20: #{tpu_custom_call.1} parent=11 // pred_fallthru
          _
      $region12: #{tpu_custom_call.1} parent=5 // pred_fallthru
        _
      %p169 = scmp.lt.s32.totalorder %s12, 2
      // Predicated region
      $region21: #{tpu_custom_call.1} parent=5 // pred_check
        %p170 = pneg %p169
      $region22: #{tpu_custom_call.1} parent=5 // pred_check_branch
        %172 = sbr.rel (%p170) target = $region24
      $region23: #{tpu_custom_call.1} parent=5 // pred_region
        // Predicated region
        $region25: #{tpu_custom_call.1} parent=23 // pred_check
          %p173 = pneg %p53
        $region26: #{tpu_custom_call.1} parent=23 // pred_check_branch
          %175 = sbr.rel (%p173) target = $region28
        $region27: #{tpu_custom_call.1} parent=23 // pred_region
          %s176 = sadd.s32 %s20, %s21
          %p177 = scmp.lt.s32.totalorder %s176, 1
          %s178 = scalar_select %p177, %s176, 1
          %s179 = smul.addr %s178, 54
          %s180 = smul.addr %s179, 8
          %s181 = scalar_lea.vmem %s0, %s180
          %s182 = sadd.s32 %s20, %s21
        $region28: #{tpu_custom_call.1} parent=23 // pred_fallthru
          _
      $region24: #{tpu_custom_call.1} parent=5 // pred_fallthru
        _
      %p183 = scmp.le.s32.totalorder 1, %s12
      %p184 = scmp.lt.s32.totalorder %s12, 3
      %p185 = pnand %p183, %p184
      %p186 = pneg %p185
      // Predicated region
      $region29: #{tpu_custom_call.1} parent=5 // pred_check
        _
      $region30: #{tpu_custom_call.1} parent=5 // pred_check_branch
        %188 = sbr.rel (%p185) target = $region32
      $region31: #{tpu_custom_call.1} parent=5 // pred_region
        %s189 = ssub.s32 %s12, 1
        %s190 = sadd.s32 %s23, %s24
        %p191 = scmp.lt.s32.totalorder %s190, 1
        %s192 = scalar_select %p191, %s190, 1
        %s193 = smul.addr %s192, 54
        %s194 = smul.addr %s193, 8
        %s195 = scalar_lea.vmem %s0, %s194
        %p196 = pneg %p59
        %p197 = pneg %p56
        %p198 = scmp.lt.s32.totalorder %s22, 0
        %s199 = scalar_select %p198, %s22, 0
        %s200 = smul.addr %s199, 8
        %s201 = scalar_lea.vmem %s1, %s200
        %p202 = pneg %p85
        %p203 = pneg %p82
        %p204 = scmp.lt.s32.totalorder %s22, 0
        %s205 = scalar_select %p204, %s22, 0
        %s206 = scalar_lea.vmem %s2, %s205
        %p207 = pneg %p111
        %p208 = pneg %p108
        %p209 = pneg %p141
        %p210 = pneg %p138
        %s211 = sand.u32 %s128, 1
        %s212 = scalar_lea.sflag [#allocation3], %s211
        %s213 = sand.u32 %s128, 1
        %s214 = smul.addr %s213, 256
        %s215 = scalar_lea.vmem [#allocation2], %s214
        %s216 = sadd.s32 %s23, %s24
        %p217 = scmp.lt.s32.totalorder %s216, 1
        %s218 = scalar_select %p217, %s216, 1
        %s219 = smul.addr %s218, 54
        %s220 = smul.addr %s219, 8
        %s221 = scalar_lea.vmem %s0, %s220
        %s222 = sadd.s32 %s23, %s24
        %p223 = scmp.lt.s32.totalorder %s22, 0
        %s224 = scalar_select %p223, %s22, 0
        %s225 = smul.addr %s224, 8
        %s226 = scalar_lea.vmem %s1, %s225
        %p227 = scmp.lt.s32.totalorder %s22, 0
        %s228 = scalar_select %p227, %s22, 0
        %s229 = scalar_lea.vmem %s2, %s228
        %s230 = smul.u32 16, %s24
        %v231 = vld [vmem:[%s221] sm:$0xff]
        %v232 = vld [vmem:[%s221 + $0x8] sm:$0xff]
        %v233 = vld [vmem:[%s221 + $0x18] sm:$0xff]
        %v234 = vld [vmem:[%s221 + $0x20] sm:$0xff]
        %v235 = vld [vmem:[%s221 + $0x30] sm:$0xff]
        %v236 = vld [vmem:[%s221 + $0x38] sm:$0xff]
        %v237 = vld [vmem:[%s221 + $0x48] sm:$0xff]
        %v238 = vld [vmem:[%s221 + $0x50] sm:$0xff]
        %v239 = vld [vmem:[%s221 + $0x60] sm:$0xff]
        %v240 = vld [vmem:[%s221 + $0x68] sm:$0xff]
        %v241 = vld [vmem:[%s221 + $0x78] sm:$0xff]
        %v242 = vld [vmem:[%s221 + $0x80] sm:$0xff]
        %v243 = vld [vmem:[%s221 + $0x90] sm:$0xff]
        %v244 = vld [vmem:[%s221 + $0x98] sm:$0xff]
        %v245 = vld [vmem:[%s221 + $0xa8] sm:$0xff]
        %v246 = vld [vmem:[%s221 + $0xb0] sm:$0xff]
        %v247 = vld [vmem:[%s221 + $0xc0] sm:$0xff]
        %v248 = vld [vmem:[%s221 + $0xc8] sm:$0xff]
        %v249 = vld [vmem:[%s221 + $0xd8] sm:$0xff]
        %v250 = vld [vmem:[%s221 + $0xe0] sm:$0xff]
        %v251 = vld [vmem:[%s221 + $0xf0] sm:$0xff]
        %v252 = vld [vmem:[%s221 + $0xf8] sm:$0xff]
        %v253 = vld [vmem:[%s221 + $0x108] sm:$0xff]
        %v254 = vld [vmem:[%s221 + $0x110] sm:$0xff]
        %v255 = vld [vmem:[%s221 + $0x120] sm:$0xff]
        %v256 = vld [vmem:[%s221 + $0x128] sm:$0xff]
        %v257 = vld [vmem:[%s221 + $0x138] sm:$0xff]
        %v258 = vld [vmem:[%s221 + $0x140] sm:$0xff]
        %v259 = vld [vmem:[%s221 + $0x150] sm:$0xff]
        %v260 = vld [vmem:[%s221 + $0x158] sm:$0xff]
        %v261 = vld [vmem:[%s221 + $0x168] sm:$0xff]
        %v262 = vld [vmem:[%s221 + $0x170] sm:$0xff]
        %v263 = vld [vmem:[%s226] sm:$0xff]
        %v264 = vld [vmem:[%s221 + $0x1] sm:$0xff]
        %v265 = vld [vmem:[%s221 + $0x9] sm:$0xff]
        %v266 = vld [vmem:[%s221 + $0x19] sm:$0xff]
        %v267 = vld [vmem:[%s221 + $0x21] sm:$0xff]
        %v268 = vld [vmem:[%s221 + $0x31] sm:$0xff]
        %v269 = vld [vmem:[%s221 + $0x39] sm:$0xff]
        %v270 = vld [vmem:[%s221 + $0x49] sm:$0xff]
        %v271 = vld [vmem:[%s221 + $0x51] sm:$0xff]
        %v272 = vld [vmem:[%s221 + $0x61] sm:$0xff]
        %v273 = vld [vmem:[%s221 + $0x69] sm:$0xff]
        %v274 = vld [vmem:[%s221 + $0x79] sm:$0xff]
        %v275 = vld [vmem:[%s221 + $0x81] sm:$0xff]
        %v276 = vld [vmem:[%s221 + $0x91] sm:$0xff]
        %v277 = vld [vmem:[%s221 + $0x99] sm:$0xff]
        %v278 = vld [vmem:[%s221 + $0xa9] sm:$0xff]
        %v279 = vld [vmem:[%s221 + $0xb1] sm:$0xff]
        %v280 = vld [vmem:[%s221 + $0xc1] sm:$0xff]
        %v281 = vld [vmem:[%s221 + $0xc9] sm:$0xff]
        %v282 = vld [vmem:[%s221 + $0xd9] sm:$0xff]
        %v283 = vld [vmem:[%s221 + $0xe1] sm:$0xff]
        %v284 = vld [vmem:[%s221 + $0xf1] sm:$0xff]
        %v285 = vld [vmem:[%s221 + $0xf9] sm:$0xff]
        %v286 = vld [vmem:[%s221 + $0x109] sm:$0xff]
        %v287 = vld [vmem:[%s221 + $0x111] sm:$0xff]
        %v288 = vld [vmem:[%s221 + $0x121] sm:$0xff]
        %v289 = vld [vmem:[%s221 + $0x129] sm:$0xff]
        %v290 = vld [vmem:[%s221 + $0x139] sm:$0xff]
        %v291 = vld [vmem:[%s221 + $0x141] sm:$0xff]
        %v292 = vld [vmem:[%s221 + $0x151] sm:$0xff]
        %v293 = vld [vmem:[%s221 + $0x159] sm:$0xff]
        %v294 = vld [vmem:[%s221 + $0x169] sm:$0xff]
        %v295 = vld [vmem:[%s221 + $0x171] sm:$0xff]
        %s296 = scalar_lea.vmem %s226, 8
        %v297 = vld [vmem:[%s296] sm:$0xff]
        %vm298 = vcmask 64512
        %v300 = vsel %vm298, %v264, 0
        %v303 = vsel %vm298, %v265, 0
        %v306 = vsel %vm298, %v266, 0
        %v309 = vsel %vm298, %v267, 0
        %v312 = vsel %vm298, %v268, 0
        %v315 = vsel %vm298, %v269, 0
        %v318 = vsel %vm298, %v270, 0
        %v321 = vsel %vm298, %v271, 0
        %v324 = vsel %vm298, %v272, 0
        %v327 = vsel %vm298, %v273, 0
        %v330 = vsel %vm298, %v274, 0
        %v333 = vsel %vm298, %v275, 0
        %v336 = vsel %vm298, %v276, 0
        %v339 = vsel %vm298, %v277, 0
        %v342 = vsel %vm298, %v278, 0
        %v345 = vsel %vm298, %v279, 0
        %v348 = vsel %vm298, %v280, 0
        %v351 = vsel %vm298, %v281, 0
        %v354 = vsel %vm298, %v282, 0
        %v357 = vsel %vm298, %v283, 0
        %v360 = vsel %vm298, %v284, 0
        %v363 = vsel %vm298, %v285, 0
        %v366 = vsel %vm298, %v286, 0
        %v369 = vsel %vm298, %v287, 0
        %v372 = vsel %vm298, %v288, 0
        %v375 = vsel %vm298, %v289, 0
        %v378 = vsel %vm298, %v290, 0
        %v381 = vsel %vm298, %v291, 0
        %v384 = vsel %vm298, %v292, 0
        %v387 = vsel %vm298, %v293, 0
        %v390 = vsel %vm298, %v294, 0
        %v393 = vsel %vm298, %v295, 0
        %395 = vmatprep.subr.mxu0 0.0
        %396 = vmatpush1.msra.mxu0 %v297
        %397 = vmatprep.subr.mxu0 0.0
        %398 = vmatpush1.msra.mxu0 0.0
        %399 = vmatprep.subr.mxu0 0.0
        %400 = vmatpush1.msra.mxu0 0.0
        %401 = vmatprep.subr.mxu0 0.0
        %402 = vmatpush1.msra.mxu0 0.0
        %403 = vmatprep.subr.mxu0 0.0
        %404 = vmatpush1.msra.mxu0 0.0
        %405 = vmatprep.subr.mxu0 0.0
        %406 = vmatpush1.msra.mxu0 0.0
        %407 = vmatprep.subr.mxu0 0.0
        %408 = vmatpush1.msra.mxu0 0.0
        %409 = vmatprep.subr.mxu0 0.0
        %410 = vmatpush1.msra.mxu0 0.0
        %411 = vmatprep.subr.mxu0 0.0
        %412 = vmatpush1.msra.mxu0 0.0
        %413 = vmatprep.subr.mxu0 0.0
        %414 = vmatpush1.msra.mxu0 0.0
        %415 = vmatprep.subr.mxu0 0.0
        %416 = vmatpush1.msra.mxu0 0.0
        %417 = vmatprep.subr.mxu0 0.0
        %418 = vmatpush1.msra.mxu0 0.0
        %419 = vmatprep.subr.mxu0 0.0
        %420 = vmatpush1.msra.mxu0 0.0
        %421 = vmatprep.subr.mxu0 0.0
        %422 = vmatpush1.msra.mxu0 0.0
        %423 = vmatprep.subr.mxu0 0.0
        %424 = vmatpush1.msra.mxu0 0.0
        %425 = vmatprep.subr.mxu0 0.0
        %426 = vmatpush1.msra.mxu0 0.0
        %427 = vmatprep.subr.mxu0 0.0
        %428 = vmatpush1.msra.mxu0 0.0
        %429 = vmatprep.subr.mxu0 0.0
        %430 = vmatpush1.msra.mxu0 0.0
        %431 = vmatprep.subr.mxu0 0.0
        %432 = vmatpush1.msra.mxu0 0.0
        %433 = vmatprep.subr.mxu0 0.0
        %434 = vmatpush1.msra.mxu0 0.0
        %435 = vmatprep.subr.mxu0 0.0
        %436 = vmatpush1.msra.mxu0 0.0
        %437 = vmatprep.subr.mxu0 0.0
        %438 = vmatpush1.msra.mxu0 0.0
        %439 = vmatprep.subr.mxu0 0.0
        %440 = vmatpush1.msra.mxu0 0.0
        %441 = vmatprep.subr.mxu0 0.0
        %442 = vmatpush1.msra.mxu0 0.0
        %443 = vmatprep.subr.mxu0 0.0
        %444 = vmatpush1.msra.mxu0 0.0
        %445 = vmatprep.subr.mxu0 0.0
        %446 = vmatpush1.msra.mxu0 0.0
        %447 = vmatprep.subr.mxu0 0.0
        %448 = vmatpush1.msra.mxu0 0.0
        %449 = vmatprep.subr.mxu0 0.0
        %450 = vmatpush1.msra.mxu0 0.0
        %451 = vmatprep.subr.mxu0 0.0
        %452 = vmatpush1.msra.mxu0 0.0
        %453 = vmatprep.subr.mxu0 0.0
        %454 = vmatpush1.msra.mxu0 0.0
        %455 = vmatprep.subr.mxu0 0.0
        %456 = vmatpush1.msra.mxu0 0.0
        %457 = vmatprep.subr.mxu0 0.0
        %458 = vmatpush1.msra.mxu0 0.0
        %459 = vmatprep.mubr.f32.mxu0 0.0
        %460 = vmatmul.mubr.f32.gmra.mrb[0].mxu0 %v300
        %v461 = vpop.f32.mrb[0].mxu0
        %v462 = vadd.f32 0.0, %v461
        %v463 = vpop.f32.mrb[0].mxu0
        %464 = vmatprep.mubr.f32.mxu0 0.0
        %465 = vmatmul.mubr.f32.gmra.mrb[0].mxu0 %v303
        %v466 = vpop.f32.mrb[0].mxu0
        %v467 = vadd.f32 0.0, %v466
        %v468 = vpop.f32.mrb[0].mxu0
        %469 = vmatprep.mubr.f32.mxu0 0.0
        %470 = vmatmul.mubr.f32.gmra.mrb[0].mxu0 %v306
        %v471 = vpop.f32.mrb[0].mxu0
        %v472 = vadd.f32 0.0, %v471
        %v473 = vpop.f32.mrb[0].mxu0
        %474 = vmatprep.mubr.f32.mxu0 0.0
        %475 = vmatmul.mubr.f32.gmra.mrb[0].mxu0 %v309
        %v476 = vpop.f32.mrb[0].mxu0
        %v477 = vadd.f32 0.0, %v476
        %v478 = vpop.f32.mrb[0].mxu0
        %479 = vmatprep.mubr.f32.mxu0 0.0
        %480 = vmatmul.mubr.f32.gmra.mrb[0].mxu0 %v312
        %v481 = vpop.f32.mrb[0].mxu0
        %v482 = vadd.f32 0.0, %v481
        %v483 = vpop.f32.mrb[0].mxu0
        %484 = vmatprep.mubr.f32.mxu0 0.0
        %485 = vmatmul.mubr.f32.gmra.mrb[0].mxu0 %v315
        %v486 = vpop.f32.mrb[0].mxu0
        %v487 = vadd.f32 0.0, %v486
        %v488 = vpop.f32.mrb[0].mxu0
        %489 = vmatprep.mubr.f32.mxu0 0.0
        %490 = vmatmul.mubr.f32.gmra.mrb[0].mxu0 %v318
        %v491 = vpop.f32.mrb[0].mxu0
        %v492 = vadd.f32 0.0, %v491
        %v493 = vpop.f32.mrb[0].mxu0
        %494 = vmatprep.mubr.f32.mxu0 0.0
        %495 = vmatmul.mubr.f32.gmra.mrb[0].mxu0 %v321
        %v496 = vpop.f32.mrb[0].mxu0
        %v497 = vadd.f32 0.0, %v496
        %v498 = vpop.f32.mrb[0].mxu0
        %499 = vmatprep.mubr.f32.mxu0 0.0
        %500 = vmatmul.mubr.f32.gmra.mrb[0].mxu0 %v324
        %v501 = vpop.f32.mrb[0].mxu0
        %v502 = vadd.f32 0.0, %v501
        %v503 = vpop.f32.mrb[0].mxu0
        %504 = vmatprep.mubr.f32.mxu0 0.0
        %505 = vmatmul.mubr.f32.gmra.mrb[0].mxu0 %v327
        %v506 = vpop.f32.mrb[0].mxu0
        %v507 = vadd.f32 0.0, %v506
        %v508 = vpop.f32.mrb[0].mxu0
        %509 = vmatprep.mubr.f32.mxu0 0.0
        %510 = vmatmul.mubr.f32.gmra.mrb[0].mxu0 %v330
        %v511 = vpop.f32.mrb[0].mxu0
        %v512 = vadd.f32 0.0, %v511
        %v513 = vpop.f32.mrb[0].mxu0
        %514 = vmatprep.mubr.f32.mxu0 0.0
        %515 = vmatmul.mubr.f32.gmra.mrb[0].mxu0 %v333
        %v516 = vpop.f32.mrb[0].mxu0
        %v517 = vadd.f32 0.0, %v516
        %v518 = vpop.f32.mrb[0].mxu0
        %519 = vmatprep.mubr.f32.mxu0 0.0
        %520 = vmatmul.mubr.f32.gmra.mrb[0].mxu0 %v336
        %v521 = vpop.f32.mrb[0].mxu0
        %v522 = vadd.f32 0.0, %v521
        %v523 = vpop.f32.mrb[0].mxu0
        %524 = vmatprep.mubr.f32.mxu0 0.0
        %525 = vmatmul.mubr.f32.gmra.mrb[0].mxu0 %v339
        %v526 = vpop.f32.mrb[0].mxu0
        %v527 = vadd.f32 0.0, %v526
        %v528 = vpop.f32.mrb[0].mxu0
        %529 = vmatprep.mubr.f32.mxu0 0.0
        %530 = vmatmul.mubr.f32.gmra.mrb[0].mxu0 %v342
        %v531 = vpop.f32.mrb[0].mxu0
        %v532 = vadd.f32 0.0, %v531
        %v533 = vpop.f32.mrb[0].mxu0
        %534 = vmatprep.mubr.f32.mxu0 0.0
        %535 = vmatmul.mubr.f32.gmra.mrb[0].mxu0 %v345
        %v536 = vpop.f32.mrb[0].mxu0
        %v537 = vadd.f32 0.0, %v536
        %v538 = vpop.f32.mrb[0].mxu0
        %539 = vmatprep.mubr.f32.mxu0 0.0
        %540 = vmatmul.mubr.f32.gmra.mrb[0].mxu0 %v348
        %v541 = vpop.f32.mrb[0].mxu0
        %v542 = vadd.f32 0.0, %v541
        %v543 = vpop.f32.mrb[0].mxu0
        %544 = vmatprep.mubr.f32.mxu0 0.0
        %545 = vmatmul.mubr.f32.gmra.mrb[0].mxu0 %v351
        %v546 = vpop.f32.mrb[0].mxu0
        %v547 = vadd.f32 0.0, %v546
        %v548 = vpop.f32.mrb[0].mxu0
        %549 = vmatprep.mubr.f32.mxu0 0.0
        %550 = vmatmul.mubr.f32.gmra.mrb[0].mxu0 %v354
        %v551 = vpop.f32.mrb[0].mxu0
        %v552 = vadd.f32 0.0, %v551
        %v553 = vpop.f32.mrb[0].mxu0
        %554 = vmatprep.mubr.f32.mxu0 0.0
        %555 = vmatmul.mubr.f32.gmra.mrb[0].mxu0 %v357
        %v556 = vpop.f32.mrb[0].mxu0
        %v557 = vadd.f32 0.0, %v556
        %v558 = vpop.f32.mrb[0].mxu0
        %559 = vmatprep.mubr.f32.mxu0 0.0
        %560 = vmatmul.mubr.f32.gmra.mrb[0].mxu0 %v360
        %v561 = vpop.f32.mrb[0].mxu0
        %v562 = vadd.f32 0.0, %v561
        %v563 = vpop.f32.mrb[0].mxu0
        %564 = vmatprep.mubr.f32.mxu0 0.0
        %565 = vmatmul.mubr.f32.gmra.mrb[0].mxu0 %v363
        %v566 = vpop.f32.mrb[0].mxu0
        %v567 = vadd.f32 0.0, %v566
        %v568 = vpop.f32.mrb[0].mxu0
        %569 = vmatprep.mubr.f32.mxu0 0.0
        %570 = vmatmul.mubr.f32.gmra.mrb[0].mxu0 %v366
        %v571 = vpop.f32.mrb[0].mxu0
        %v572 = vadd.f32 0.0, %v571
        %v573 = vpop.f32.mrb[0].mxu0
        %574 = vmatprep.mubr.f32.mxu0 0.0
        %575 = vmatmul.mubr.f32.gmra.mrb[0].mxu0 %v369
        %v576 = vpop.f32.mrb[0].mxu0
        %v577 = vadd.f32 0.0, %v576
        %v578 = vpop.f32.mrb[0].mxu0
        %579 = vmatprep.mubr.f32.mxu0 0.0
        %580 = vmatmul.mubr.f32.gmra.mrb[0].mxu0 %v372
        %v581 = vpop.f32.mrb[0].mxu0
        %v582 = vadd.f32 0.0, %v581
        %v583 = vpop.f32.mrb[0].mxu0
        %584 = vmatprep.mubr.f32.mxu0 0.0
        %585 = vmatmul.mubr.f32.gmra.mrb[0].mxu0 %v375
        %v586 = vpop.f32.mrb[0].mxu0
        %v587 = vadd.f32 0.0, %v586
        %v588 = vpop.f32.mrb[0].mxu0
        %589 = vmatprep.mubr.f32.mxu0 0.0
        %590 = vmatmul.mubr.f32.gmra.mrb[0].mxu0 %v378
        %v591 = vpop.f32.mrb[0].mxu0
        %v592 = vadd.f32 0.0, %v591
        %v593 = vpop.f32.mrb[0].mxu0
        %594 = vmatprep.mubr.f32.mxu0 0.0
        %595 = vmatmul.mubr.f32.gmra.mrb[0].mxu0 %v381
        %v596 = vpop.f32.mrb[0].mxu0
        %v597 = vadd.f32 0.0, %v596
        %v598 = vpop.f32.mrb[0].mxu0
        %599 = vmatprep.mubr.f32.mxu0 0.0
        %600 = vmatmul.mubr.f32.gmra.mrb[0].mxu0 %v384
        %v601 = vpop.f32.mrb[0].mxu0
        %v602 = vadd.f32 0.0, %v601
        %v603 = vpop.f32.mrb[0].mxu0
        %604 = vmatprep.mubr.f32.mxu0 0.0
        %605 = vmatmul.mubr.f32.gmra.mrb[0].mxu0 %v387
        %v606 = vpop.f32.mrb[0].mxu0
        %v607 = vadd.f32 0.0, %v606
        %v608 = vpop.f32.mrb[0].mxu0
        %609 = vmatprep.mubr.f32.mxu0 0.0
        %610 = vmatmul.mubr.f32.gmra.mrb[0].mxu0 %v390
        %v611 = vpop.f32.mrb[0].mxu0
        %v612 = vadd.f32 0.0, %v611
        %v613 = vpop.f32.mrb[0].mxu0
        %614 = vmatprep.mubr.f32.mxu0 0.0
        %615 = vmatmul.mubr.f32.gmra.mrb[0].mxu0 %v393
        %v616 = vpop.f32.mrb[0].mxu0
        %v617 = vadd.f32 0.0, %v616
        %v618 = vpop.f32.mrb[0].mxu0
        %619 = vdwg.mxu0
        %v621 = vsel %vm298, %v231, 0
        %v624 = vsel %vm298, %v232, 0
        %v627 = vsel %vm298, %v233, 0
        %v630 = vsel %vm298, %v234, 0
        %v633 = vsel %vm298, %v235, 0
        %v636 = vsel %vm298, %v236, 0
        %v639 = vsel %vm298, %v237, 0
        %v642 = vsel %vm298, %v238, 0
        %v645 = vsel %vm298, %v239, 0
        %v648 = vsel %vm298, %v240, 0
        %v651 = vsel %vm298, %v241, 0
        %v654 = vsel %vm298, %v242, 0
        %v657 = vsel %vm298, %v243, 0
        %v660 = vsel %vm298, %v244, 0
        %v663 = vsel %vm298, %v245, 0
        %v666 = vsel %vm298, %v246, 0
        %v669 = vsel %vm298, %v247, 0
        %v672 = vsel %vm298, %v248, 0
        %v675 = vsel %vm298, %v249, 0
        %v678 = vsel %vm298, %v250, 0
        %v681 = vsel %vm298, %v251, 0
        %v684 = vsel %vm298, %v252, 0
        %v687 = vsel %vm298, %v253, 0
        %v690 = vsel %vm298, %v254, 0
        %v693 = vsel %vm298, %v255, 0
        %v696 = vsel %vm298, %v256, 0
        %v699 = vsel %vm298, %v257, 0
        %v702 = vsel %vm298, %v258, 0
        %v705 = vsel %vm298, %v259, 0
        %v708 = vsel %vm298, %v260, 0
        %v711 = vsel %vm298, %v261, 0
        %v714 = vsel %vm298, %v262, 0
        %716 = vmatprep.subr.mxu0 0.0
        %717 = vmatpush1.msra.mxu0 %v263
        %718 = vmatprep.subr.mxu0 0.0
        %719 = vmatpush1.msra.mxu0 0.0
        %720 = vmatprep.subr.mxu0 0.0
        %721 = vmatpush1.msra.mxu0 0.0
        %722 = vmatprep.subr.mxu0 0.0
        %723 = vmatpush1.msra.mxu0 0.0
        %724 = vmatprep.subr.mxu0 0.0
        %725 = vmatpush1.msra.mxu0 0.0
        %726 = vmatprep.subr.mxu0 0.0
        %727 = vmatpush1.msra.mxu0 0.0
        %728 = vmatprep.subr.mxu0 0.0
        %729 = vmatpush1.msra.mxu0 0.0
        %730 = vmatprep.subr.mxu0 0.0
        %731 = vmatpush1.msra.mxu0 0.0
        %732 = vmatprep.subr.mxu0 0.0
        %733 = vmatpush1.msra.mxu0 0.0
        %734 = vmatprep.subr.mxu0 0.0
        %735 = vmatpush1.msra.mxu0 0.0
        %736 = vmatprep.subr.mxu0 0.0
        %737 = vmatpush1.msra.mxu0 0.0
        %738 = vmatprep.subr.mxu0 0.0
        %739 = vmatpush1.msra.mxu0 0.0
        %740 = vmatprep.subr.mxu0 0.0
        %741 = vmatpush1.msra.mxu0 0.0
        %742 = vmatprep.subr.mxu0 0.0
        %743 = vmatpush1.msra.mxu0 0.0
        %744 = vmatprep.subr.mxu0 0.0
        %745 = vmatpush1.msra.mxu0 0.0
        %746 = vmatprep.subr.mxu0 0.0
        %747 = vmatpush1.msra.mxu0 0.0
        %748 = vmatprep.subr.mxu0 0.0
        %749 = vmatpush1.msra.mxu0 0.0
        %750 = vmatprep.subr.mxu0 0.0
        %751 = vmatpush1.msra.mxu0 0.0
        %752 = vmatprep.subr.mxu0 0.0
        %753 = vmatpush1.msra.mxu0 0.0
        %754 = vmatprep.subr.mxu0 0.0
        %755 = vmatpush1.msra.mxu0 0.0
        %756 = vmatprep.subr.mxu0 0.0
        %757 = vmatpush1.msra.mxu0 0.0
        %758 = vmatprep.subr.mxu0 0.0
        %759 = vmatpush1.msra.mxu0 0.0
        %760 = vmatprep.subr.mxu0 0.0
        %761 = vmatpush1.msra.mxu0 0.0
        %762 = vmatprep.subr.mxu0 0.0
        %763 = vmatpush1.msra.mxu0 0.0
        %764 = vmatprep.subr.mxu0 0.0
        %765 = vmatpush1.msra.mxu0 0.0
        %766 = vmatprep.subr.mxu0 0.0
        %767 = vmatpush1.msra.mxu0 0.0
        %768 = vmatprep.subr.mxu0 0.0
        %769 = vmatpush1.msra.mxu0 0.0
        %770 = vmatprep.subr.mxu0 0.0
        %771 = vmatpush1.msra.mxu0 0.0
        %772 = vmatprep.subr.mxu0 0.0
        %773 = vmatpush1.msra.mxu0 0.0
        %774 = vmatprep.subr.mxu0 0.0
        %775 = vmatpush1.msra.mxu0 0.0
        %776 = vmatprep.subr.mxu0 0.0
        %777 = vmatpush1.msra.mxu0 0.0
        %778 = vmatprep.subr.mxu0 0.0
        %779 = vmatpush1.msra.mxu0 0.0
        %780 = vmatprep.mubr.f32.mxu0 0.0
        %781 = vmatmul.mubr.f32.gmra.mrb[0].mxu0 %v621
        %v782 = vpop.f32.mrb[0].mxu0
        %v783 = vadd.f32 %v462, %v782
        %v784 = vpop.f32.mrb[0].mxu0
        %785 = vmatprep.mubr.f32.mxu0 0.0
        %786 = vmatmul.mubr.f32.gmra.mrb[0].mxu0 %v624
        %v787 = vpop.f32.mrb[0].mxu0
        %v788 = vadd.f32 %v467, %v787
        %v789 = vpop.f32.mrb[0].mxu0
        %790 = vmatprep.mubr.f32.mxu0 0.0
        %791 = vmatmul.mubr.f32.gmra.mrb[0].mxu0 %v627
        %v792 = vpop.f32.mrb[0].mxu0
        %v793 = vadd.f32 %v472, %v792
        %v794 = vpop.f32.mrb[0].mxu0
        %795 = vmatprep.mubr.f32.mxu0 0.0
        %796 = vmatmul.mubr.f32.gmra.mrb[0].mxu0 %v630
        %v797 = vpop.f32.mrb[0].mxu0
        %v798 = vadd.f32 %v477, %v797
        %v799 = vpop.f32.mrb[0].mxu0
        %800 = vmatprep.mubr.f32.mxu0 0.0
        %801 = vmatmul.mubr.f32.gmra.mrb[0].mxu0 %v633
        %v802 = vpop.f32.mrb[0].mxu0
        %v803 = vadd.f32 %v482, %v802
        %v804 = vpop.f32.mrb[0].mxu0
        %805 = vmatprep.mubr.f32.mxu0 0.0
        %806 = vmatmul.mubr.f32.gmra.mrb[0].mxu0 %v636
        %v807 = vpop.f32.mrb[0].mxu0
        %v808 = vadd.f32 %v487, %v807
        %v809 = vpop.f32.mrb[0].mxu0
        %810 = vmatprep.mubr.f32.mxu0 0.0
        %811 = vmatmul.mubr.f32.gmra.mrb[0].mxu0 %v639
        %v812 = vpop.f32.mrb[0].mxu0
        %v813 = vadd.f32 %v492, %v812
        %v814 = vpop.f32.mrb[0].mxu0
        %815 = vmatprep.mubr.f32.mxu0 0.0
        %816 = vmatmul.mubr.f32.gmra.mrb[0].mxu0 %v642
        %v817 = vpop.f32.mrb[0].mxu0
        %v818 = vadd.f32 %v497, %v817
        %v819 = vpop.f32.mrb[0].mxu0
        %820 = vmatprep.mubr.f32.mxu0 0.0
        %821 = vmatmul.mubr.f32.gmra.mrb[0].mxu0 %v645
        %v822 = vpop.f32.mrb[0].mxu0
        %v823 = vadd.f32 %v502, %v822
        %v824 = vpop.f32.mrb[0].mxu0
        %825 = vmatprep.mubr.f32.mxu0 0.0
        %826 = vmatmul.mubr.f32.gmra.mrb[0].mxu0 %v648
        %v827 = vpop.f32.mrb[0].mxu0
        %v828 = vadd.f32 %v507, %v827
        %v829 = vpop.f32.mrb[0].mxu0
        %830 = vmatprep.mubr.f32.mxu0 0.0
        %831 = vmatmul.mubr.f32.gmra.mrb[0].mxu0 %v651
        %v832 = vpop.f32.mrb[0].mxu0
        %v833 = vadd.f32 %v512, %v832
        %v834 = vpop.f32.mrb[0].mxu0
        %835 = vmatprep.mubr.f32.mxu0 0.0
        %836 = vmatmul.mubr.f32.gmra.mrb[0].mxu0 %v654
        %v837 = vpop.f32.mrb[0].mxu0
        %v838 = vadd.f32 %v517, %v837
        %v839 = vpop.f32.mrb[0].mxu0
        %840 = vmatprep.mubr.f32.mxu0 0.0
        %841 = vmatmul.mubr.f32.gmra.mrb[0].mxu0 %v657
        %v842 = vpop.f32.mrb[0].mxu0
        %v843 = vadd.f32 %v522, %v842
        %v844 = vpop.f32.mrb[0].mxu0
        %845 = vmatprep.mubr.f32.mxu0 0.0
        %846 = vmatmul.mubr.f32.gmra.mrb[0].mxu0 %v660
        %v847 = vpop.f32.mrb[0].mxu0
        %v848 = vadd.f32 %v527, %v847
        %v849 = vpop.f32.mrb[0].mxu0
        %850 = vmatprep.mubr.f32.mxu0 0.0
        %851 = vmatmul.mubr.f32.gmra.mrb[0].mxu0 %v663
        %v852 = vpop.f32.mrb[0].mxu0
        %v853 = vadd.f32 %v532, %v852
        %v854 = vpop.f32.mrb[0].mxu0
        %855 = vmatprep.mubr.f32.mxu0 0.0
        %856 = vmatmul.mubr.f32.gmra.mrb[0].mxu0 %v666
        %v857 = vpop.f32.mrb[0].mxu0
        %v858 = vadd.f32 %v537, %v857
        %v859 = vpop.f32.mrb[0].mxu0
        %860 = vmatprep.mubr.f32.mxu0 0.0
        %861 = vmatmul.mubr.f32.gmra.mrb[0].mxu0 %v669
        %v862 = vpop.f32.mrb[0].mxu0
        %v863 = vadd.f32 %v542, %v862
        %v864 = vpop.f32.mrb[0].mxu0
        %865 = vmatprep.mubr.f32.mxu0 0.0
        %866 = vmatmul.mubr.f32.gmra.mrb[0].mxu0 %v672
        %v867 = vpop.f32.mrb[0].mxu0
        %v868 = vadd.f32 %v547, %v867
        %v869 = vpop.f32.mrb[0].mxu0
        %870 = vmatprep.mubr.f32.mxu0 0.0
        %871 = vmatmul.mubr.f32.gmra.mrb[0].mxu0 %v675
        %v872 = vpop.f32.mrb[0].mxu0
        %v873 = vadd.f32 %v552, %v872
        %v874 = vpop.f32.mrb[0].mxu0
        %875 = vmatprep.mubr.f32.mxu0 0.0
        %876 = vmatmul.mubr.f32.gmra.mrb[0].mxu0 %v678
        %v877 = vpop.f32.mrb[0].mxu0
        %v878 = vadd.f32 %v557, %v877
        %v879 = vpop.f32.mrb[0].mxu0
        %880 = vmatprep.mubr.f32.mxu0 0.0
        %881 = vmatmul.mubr.f32.gmra.mrb[0].mxu0 %v681
        %v882 = vpop.f32.mrb[0].mxu0
        %v883 = vadd.f32 %v562, %v882
        %v884 = vpop.f32.mrb[0].mxu0
        %885 = vmatprep.mubr.f32.mxu0 0.0
        %886 = vmatmul.mubr.f32.gmra.mrb[0].mxu0 %v684
        %v887 = vpop.f32.mrb[0].mxu0
        %v888 = vadd.f32 %v567, %v887
        %v889 = vpop.f32.mrb[0].mxu0
        %890 = vmatprep.mubr.f32.mxu0 0.0
        %891 = vmatmul.mubr.f32.gmra.mrb[0].mxu0 %v687
        %v892 = vpop.f32.mrb[0].mxu0
        %v893 = vadd.f32 %v572, %v892
        %v894 = vpop.f32.mrb[0].mxu0
        %895 = vmatprep.mubr.f32.mxu0 0.0
        %896 = vmatmul.mubr.f32.gmra.mrb[0].mxu0 %v690
        %v897 = vpop.f32.mrb[0].mxu0
        %v898 = vadd.f32 %v577, %v897
        %v899 = vpop.f32.mrb[0].mxu0
        %900 = vmatprep.mubr.f32.mxu0 0.0
        %901 = vmatmul.mubr.f32.gmra.mrb[0].mxu0 %v693
        %v902 = vpop.f32.mrb[0].mxu0
        %v903 = vadd.f32 %v582, %v902
        %v904 = vpop.f32.mrb[0].mxu0
        %905 = vmatprep.mubr.f32.mxu0 0.0
        %906 = vmatmul.mubr.f32.gmra.mrb[0].mxu0 %v696
        %v907 = vpop.f32.mrb[0].mxu0
        %v908 = vadd.f32 %v587, %v907
        %v909 = vpop.f32.mrb[0].mxu0
        %910 = vmatprep.mubr.f32.mxu0 0.0
        %911 = vmatmul.mubr.f32.gmra.mrb[0].mxu0 %v699
        %v912 = vpop.f32.mrb[0].mxu0
        %v913 = vadd.f32 %v592, %v912
        %v914 = vpop.f32.mrb[0].mxu0
        %915 = vmatprep.mubr.f32.mxu0 0.0
        %916 = vmatmul.mubr.f32.gmra.mrb[0].mxu0 %v702
        %v917 = vpop.f32.mrb[0].mxu0
        %v918 = vadd.f32 %v597, %v917
        %v919 = vpop.f32.mrb[0].mxu0
        %920 = vmatprep.mubr.f32.mxu0 0.0
        %921 = vmatmul.mubr.f32.gmra.mrb[0].mxu0 %v705
        %v922 = vpop.f32.mrb[0].mxu0
        %v923 = vadd.f32 %v602, %v922
        %v924 = vpop.f32.mrb[0].mxu0
        %925 = vmatprep.mubr.f32.mxu0 0.0
        %926 = vmatmul.mubr.f32.gmra.mrb[0].mxu0 %v708
        %v927 = vpop.f32.mrb[0].mxu0
        %v928 = vadd.f32 %v607, %v927
        %v929 = vpop.f32.mrb[0].mxu0
        %930 = vmatprep.mubr.f32.mxu0 0.0
        %931 = vmatmul.mubr.f32.gmra.mrb[0].mxu0 %v711
        %v932 = vpop.f32.mrb[0].mxu0
        %v933 = vadd.f32 %v612, %v932
        %v934 = vpop.f32.mrb[0].mxu0
        %935 = vmatprep.mubr.f32.mxu0 0.0
        %936 = vmatmul.mubr.f32.gmra.mrb[0].mxu0 %v714
        %v937 = vpop.f32.mrb[0].mxu0
        %v938 = vadd.f32 %v617, %v937
        %v939 = vpop.f32.mrb[0].mxu0
        %940 = vdwg.mxu0
        %v941 = vld [vmem:[%s221 + $0x2] sm:$0xff]
        %v942 = vld [vmem:[%s221 + $0xa] sm:$0xff]
        %v943 = vld [vmem:[%s221 + $0x1a] sm:$0xff]
        %v944 = vld [vmem:[%s221 + $0x22] sm:$0xff]
        %v945 = vld [vmem:[%s221 + $0x32] sm:$0xff]
        %v946 = vld [vmem:[%s221 + $0x3a] sm:$0xff]
        %v947 = vld [vmem:[%s221 + $0x4a] sm:$0xff]
        %v948 = vld [vmem:[%s221 + $0x52] sm:$0xff]
        %v949 = vld [vmem:[%s221 + $0x62] sm:$0xff]
        %v950 = vld [vmem:[%s221 + $0x6a] sm:$0xff]
        %v951 = vld [vmem:[%s221 + $0x7a] sm:$0xff]
        %v952 = vld [vmem:[%s221 + $0x82] sm:$0xff]
        %v953 = vld [vmem:[%s221 + $0x92] sm:$0xff]
        %v954 = vld [vmem:[%s221 + $0x9a] sm:$0xff]
        %v955 = vld [vmem:[%s221 + $0xaa] sm:$0xff]
        %v956 = vld [vmem:[%s221 + $0xb2] sm:$0xff]
        %v957 = vld [vmem:[%s221 + $0xc2] sm:$0xff]
        %v958 = vld [vmem:[%s221 + $0xca] sm:$0xff]
        %v959 = vld [vmem:[%s221 + $0xda] sm:$0xff]
        %v960 = vld [vmem:[%s221 + $0xe2] sm:$0xff]
        %v961 = vld [vmem:[%s221 + $0xf2] sm:$0xff]
        %v962 = vld [vmem:[%s221 + $0xfa] sm:$0xff]
        %v963 = vld [vmem:[%s221 + $0x10a] sm:$0xff]
        %v964 = vld [vmem:[%s221 + $0x112] sm:$0xff]
        %v965 = vld [vmem:[%s221 + $0x122] sm:$0xff]
        %v966 = vld [vmem:[%s221 + $0x12a] sm:$0xff]
        %v967 = vld [vmem:[%s221 + $0x13a] sm:$0xff]
        %v968 = vld [vmem:[%s221 + $0x142] sm:$0xff]
        %v969 = vld [vmem:[%s221 + $0x152] sm:$0xff]
        %v970 = vld [vmem:[%s221 + $0x15a] sm:$0xff]
        %v971 = vld [vmem:[%s221 + $0x16a] sm:$0xff]
        %v972 = vld [vmem:[%s221 + $0x172] sm:$0xff]
        %s973 = scalar_lea.vmem %s226, 16
        %v974 = vld [vmem:[%s973] sm:$0xff]
        %v976 = vsel %vm298, %v941, 0
        %v979 = vsel %vm298, %v942, 0
        %v982 = vsel %vm298, %v943, 0
        %v985 = vsel %vm298, %v944, 0
        %v988 = vsel %vm298, %v945, 0
        %v991 = vsel %vm298, %v946, 0
        %v994 = vsel %vm298, %v947, 0
        %v997 = vsel %vm298, %v948, 0
        %v1000 = vsel %vm298, %v949, 0
        %v1003 = vsel %vm298, %v950, 0
        %v1006 = vsel %vm298, %v951, 0
        %v1009 = vsel %vm298, %v952, 0
        %v1012 = vsel %vm298, %v953, 0
        %v1015 = vsel %vm298, %v954, 0
        %v1018 = vsel %vm298, %v955, 0
        %v1021 = vsel %vm298, %v956, 0
        %v1024 = vsel %vm298, %v957, 0
        %v1027 = vsel %vm298, %v958, 0
        %v1030 = vsel %vm298, %v959, 0
        %v1033 = vsel %vm298, %v960, 0
        %v1036 = vsel %vm298, %v961, 0
        %v1039 = vsel %vm298, %v962, 0
        %v1042 = vsel %vm298, %v963, 0
        %v1045 = vsel %vm298, %v964, 0
        %v1048 = vsel %vm298, %v965, 0
        %v1051 = vsel %vm298, %v966, 0
        %v1054 = vsel %vm298, %v967, 0
        %v1057 = vsel %vm298, %v968, 0
        %v1060 = vsel %vm298, %v969, 0
        %v1063 = vsel %vm298, %v970, 0
        %v1066 = vsel %vm298, %v971, 0
        %v1069 = vsel %vm298, %v972, 0
        %1071 = vmatprep.subr.mxu0 0.0
        %1072 = vmatpush1.msra.mxu0 %v974
        %1073 = vmatprep.subr.mxu0 0.0
        %1074 = vmatpush1.msra.mxu0 0.0
        %1075 = vmatprep.subr.mxu0 0.0
        %1076 = vmatpush1.msra.mxu0 0.0
        %1077 = vmatprep.subr.mxu0 0.0
        %1078 = vmatpush1.msra.mxu0 0.0
        %1079 = vmatprep.subr.mxu0 0.0
        %1080 = vmatpush1.msra.mxu0 0.0
        %1081 = vmatprep.subr.mxu0 0.0
        %1082 = vmatpush1.msra.mxu0 0.0
        %1083 = vmatprep.subr.mxu0 0.0
        %1084 = vmatpush1.msra.mxu0 0.0
        %1085 = vmatprep.subr.mxu0 0.0
        %1086 = vmatpush1.msra.mxu0 0.0
        %1087 = vmatprep.subr.mxu0 0.0
        %1088 = vmatpush1.msra.mxu0 0.0
        %1089 = vmatprep.subr.mxu0 0.0
        %1090 = vmatpush1.msra.mxu0 0.0
        %1091 = vmatprep.subr.mxu0 0.0
        %1092 = vmatpush1.msra.mxu0 0.0
        %1093 = vmatprep.subr.mxu0 0.0
        %1094 = vmatpush1.msra.mxu0 0.0
        %1095 = vmatprep.subr.mxu0 0.0
        %1096 = vmatpush1.msra.mxu0 0.0
        %1097 = vmatprep.subr.mxu0 0.0
        %1098 = vmatpush1.msra.mxu0 0.0
        %1099 = vmatprep.subr.mxu0 0.0
        %1100 = vmatpush1.msra.mxu0 0.0
        %1101 = vmatprep.subr.mxu0 0.0
        %1102 = vmatpush1.msra.mxu0 0.0
        %1103 = vmatprep.subr.mxu0 0.0
        %1104 = vmatpush1.msra.mxu0 0.0
        %1105 = vmatprep.subr.mxu0 0.0
        %1106 = vmatpush1.msra.mxu0 0.0
        %1107 = vmatprep.subr.mxu0 0.0
        %1108 = vmatpush1.msra.mxu0 0.0
        %1109 = vmatprep.subr.mxu0 0.0
        %1110 = vmatpush1.msra.mxu0 0.0
        %1111 = vmatprep.subr.mxu0 0.0
        %1112 = vmatpush1.msra.mxu0 0.0
        %1113 = vmatprep.subr.mxu0 0.0
        %1114 = vmatpush1.msra.mxu0 0.0
        %1115 = vmatprep.subr.mxu0 0.0
        %1116 = vmatpush1.msra.mxu0 0.0
        %1117 = vmatprep.subr.mxu0 0.0
        %1118 = vmatpush1.msra.mxu0 0.0
        %1119 = vmatprep.subr.mxu0 0.0
        %1120 = vmatpush1.msra.mxu0 0.0
        %1121 = vmatprep.subr.mxu0 0.0
        %1122 = vmatpush1.msra.mxu0 0.0
        %1123 = vmatprep.subr.mxu0 0.0
        %1124 = vmatpush1.msra.mxu0 0.0
        %1125 = vmatprep.subr.mxu0 0.0
        %1126 = vmatpush1.msra.mxu0 0.0
        %1127 = vmatprep.subr.mxu0 0.0
        %1128 = vmatpush1.msra.mxu0 0.0
        %1129 = vmatprep.subr.mxu0 0.0
        %1130 = vmatpush1.msra.mxu0 0.0
        %1131 = vmatprep.subr.mxu0 0.0
        %1132 = vmatpush1.msra.mxu0 0.0
        %1133 = vmatprep.subr.mxu0 0.0
        %1134 = vmatpush1.msra.mxu0 0.0
        %1135 = vmatprep.mubr.f32.mxu0 0.0
        %1136 = vmatmul.mubr.f32.gmra.mrb[0].mxu0 %v976
        %v1137 = vpop.f32.mrb[0].mxu0
        %v1138 = vadd.f32 0.0, %v1137
        %v1139 = vpop.f32.mrb[0].mxu0
        %1140 = vmatprep.mubr.f32.mxu0 0.0
        %1141 = vmatmul.mubr.f32.gmra.mrb[0].mxu0 %v979
        %v1142 = vpop.f32.mrb[0].mxu0
        %v1143 = vadd.f32 0.0, %v1142
        %v1144 = vpop.f32.mrb[0].mxu0
        %1145 = vmatprep.mubr.f32.mxu0 0.0
        %1146 = vmatmul.mubr.f32.gmra.mrb[0].mxu0 %v982
        %v1147 = vpop.f32.mrb[0].mxu0
        %v1148 = vadd.f32 0.0, %v1147
        %v1149 = vpop.f32.mrb[0].mxu0
        %1150 = vmatprep.mubr.f32.mxu0 0.0
        %1151 = vmatmul.mubr.f32.gmra.mrb[0].mxu0 %v985
        %v1152 = vpop.f32.mrb[0].mxu0
        %v1153 = vadd.f32 0.0, %v1152
        %v1154 = vpop.f32.mrb[0].mxu0
        %1155 = vmatprep.mubr.f32.mxu0 0.0
        %1156 = vmatmul.mubr.f32.gmra.mrb[0].mxu0 %v988
        %v1157 = vpop.f32.mrb[0].mxu0
        %v1158 = vadd.f32 0.0, %v1157
        %v1159 = vpop.f32.mrb[0].mxu0
        %1160 = vmatprep.mubr.f32.mxu0 0.0
        %1161 = vmatmul.mubr.f32.gmra.mrb[0].mxu0 %v991
        %v1162 = vpop.f32.mrb[0].mxu0
        %v1163 = vadd.f32 0.0, %v1162
        %v1164 = vpop.f32.mrb[0].mxu0
        %1165 = vmatprep.mubr.f32.mxu0 0.0
        %1166 = vmatmul.mubr.f32.gmra.mrb[0].mxu0 %v994
        %v1167 = vpop.f32.mrb[0].mxu0
        %v1168 = vadd.f32 0.0, %v1167
        %v1169 = vpop.f32.mrb[0].mxu0
        %1170 = vmatprep.mubr.f32.mxu0 0.0
        %1171 = vmatmul.mubr.f32.gmra.mrb[0].mxu0 %v997
        %v1172 = vpop.f32.mrb[0].mxu0
        %v1173 = vadd.f32 0.0, %v1172
        %v1174 = vpop.f32.mrb[0].mxu0
        %1175 = vmatprep.mubr.f32.mxu0 0.0
        %1176 = vmatmul.mubr.f32.gmra.mrb[0].mxu0 %v1000
        %v1177 = vpop.f32.mrb[0].mxu0
        %v1178 = vadd.f32 0.0, %v1177
        %v1179 = vpop.f32.mrb[0].mxu0
        %1180 = vmatprep.mubr.f32.mxu0 0.0
        %1181 = vmatmul.mubr.f32.gmra.mrb[0].mxu0 %v1003
        %v1182 = vpop.f32.mrb[0].mxu0
        %v1183 = vadd.f32 0.0, %v1182
        %v1184 = vpop.f32.mrb[0].mxu0
        %1185 = vmatprep.mubr.f32.mxu0 0.0
        %1186 = vmatmul.mubr.f32.gmra.mrb[0].mxu0 %v1006
        %v1187 = vpop.f32.mrb[0].mxu0
        %v1188 = vadd.f32 0.0, %v1187
        %v1189 = vpop.f32.mrb[0].mxu0
        %1190 = vmatprep.mubr.f32.mxu0 0.0
        %1191 = vmatmul.mubr.f32.gmra.mrb[0].mxu0 %v1009
        %v1192 = vpop.f32.mrb[0].mxu0
        %v1193 = vadd.f32 0.0, %v1192
        %v1194 = vpop.f32.mrb[0].mxu0
        %1195 = vmatprep.mubr.f32.mxu0 0.0
        %1196 = vmatmul.mubr.f32.gmra.mrb[0].mxu0 %v1012
        %v1197 = vpop.f32.mrb[0].mxu0
        %v1198 = vadd.f32 0.0, %v1197
        %v1199 = vpop.f32.mrb[0].mxu0
        %1200 = vmatprep.mubr.f32.mxu0 0.0
        %1201 = vmatmul.mubr.f32.gmra.mrb[0].mxu0 %v1015
        %v1202 = vpop.f32.mrb[0].mxu0
        %v1203 = vadd.f32 0.0, %v1202
        %v1204 = vpop.f32.mrb[0].mxu0
        %1205 = vmatprep.mubr.f32.mxu0 0.0
        %1206 = vmatmul.mubr.f32.gmra.mrb[0].mxu0 %v1018
        %v1207 = vpop.f32.mrb[0].mxu0
        %v1208 = vadd.f32 0.0, %v1207
        %v1209 = vpop.f32.mrb[0].mxu0
        %1210 = vmatprep.mubr.f32.mxu0 0.0
        %1211 = vmatmul.mubr.f32.gmra.mrb[0].mxu0 %v1021
        %v1212 = vpop.f32.mrb[0].mxu0
        %v1213 = vadd.f32 0.0, %v1212
        %v1214 = vpop.f32.mrb[0].mxu0
        %1215 = vmatprep.mubr.f32.mxu0 0.0
        %1216 = vmatmul.mubr.f32.gmra.mrb[0].mxu0 %v1024
        %v1217 = vpop.f32.mrb[0].mxu0
        %v1218 = vadd.f32 0.0, %v1217
        %v1219 = vpop.f32.mrb[0].mxu0
        %1220 = vmatprep.mubr.f32.mxu0 0.0
        %1221 = vmatmul.mubr.f32.gmra.mrb[0].mxu0 %v1027
        %v1222 = vpop.f32.mrb[0].mxu0
        %v1223 = vadd.f32 0.0, %v1222
        %v1224 = vpop.f32.mrb[0].mxu0
        %1225 = vmatprep.mubr.f32.mxu0 0.0
        %1226 = vmatmul.mubr.f32.gmra.mrb[0].mxu0 %v1030
        %v1227 = vpop.f32.mrb[0].mxu0
        %v1228 = vadd.f32 0.0, %v1227
        %v1229 = vpop.f32.mrb[0].mxu0
        %1230 = vmatprep.mubr.f32.mxu0 0.0
        %1231 = vmatmul.mubr.f32.gmra.mrb[0].mxu0 %v1033
        %v1232 = vpop.f32.mrb[0].mxu0
        %v1233 = vadd.f32 0.0, %v1232
        %v1234 = vpop.f32.mrb[0].mxu0
        %1235 = vmatprep.mubr.f32.mxu0 0.0
        %1236 = vmatmul.mubr.f32.gmra.mrb[0].mxu0 %v1036
        %v1237 = vpop.f32.mrb[0].mxu0
        %v1238 = vadd.f32 0.0, %v1237
        %v1239 = vpop.f32.mrb[0].mxu0
        %1240 = vmatprep.mubr.f32.mxu0 0.0
        %1241 = vmatmul.mubr.f32.gmra.mrb[0].mxu0 %v1039
        %v1242 = vpop.f32.mrb[0].mxu0
        %v1243 = vadd.f32 0.0, %v1242
        %v1244 = vpop.f32.mrb[0].mxu0
        %1245 = vmatprep.mubr.f32.mxu0 0.0
        %1246 = vmatmul.mubr.f32.gmra.mrb[0].mxu0 %v1042
        %v1247 = vpop.f32.mrb[0].mxu0
        %v1248 = vadd.f32 0.0, %v1247
        %v1249 = vpop.f32.mrb[0].mxu0
        %1250 = vmatprep.mubr.f32.mxu0 0.0
        %1251 = vmatmul.mubr.f32.gmra.mrb[0].mxu0 %v1045
        %v1252 = vpop.f32.mrb[0].mxu0
        %v1253 = vadd.f32 0.0, %v1252
        %v1254 = vpop.f32.mrb[0].mxu0
        %1255 = vmatprep.mubr.f32.mxu0 0.0
        %1256 = vmatmul.mubr.f32.gmra.mrb[0].mxu0 %v1048
        %v1257 = vpop.f32.mrb[0].mxu0
        %v1258 = vadd.f32 0.0, %v1257
        %v1259 = vpop.f32.mrb[0].mxu0
        %1260 = vmatprep.mubr.f32.mxu0 0.0
        %1261 = vmatmul.mubr.f32.gmra.mrb[0].mxu0 %v1051
        %v1262 = vpop.f32.mrb[0].mxu0
        %v1263 = vadd.f32 0.0, %v1262
        %v1264 = vpop.f32.mrb[0].mxu0
        %1265 = vmatprep.mubr.f32.mxu0 0.0
        %1266 = vmatmul.mubr.f32.gmra.mrb[0].mxu0 %v1054
        %v1267 = vpop.f32.mrb[0].mxu0
        %v1268 = vadd.f32 0.0, %v1267
        %v1269 = vpop.f32.mrb[0].mxu0
        %1270 = vmatprep.mubr.f32.mxu0 0.0
        %1271 = vmatmul.mubr.f32.gmra.mrb[0].mxu0 %v1057
        %v1272 = vpop.f32.mrb[0].mxu0
        %v1273 = vadd.f32 0.0, %v1272
        %v1274 = vpop.f32.mrb[0].mxu0
        %1275 = vmatprep.mubr.f32.mxu0 0.0
        %1276 = vmatmul.mubr.f32.gmra.mrb[0].mxu0 %v1060
        %v1277 = vpop.f32.mrb[0].mxu0
        %v1278 = vadd.f32 0.0, %v1277
        %v1279 = vpop.f32.mrb[0].mxu0
        %1280 = vmatprep.mubr.f32.mxu0 0.0
        %1281 = vmatmul.mubr.f32.gmra.mrb[0].mxu0 %v1063
        %v1282 = vpop.f32.mrb[0].mxu0
        %v1283 = vadd.f32 0.0, %v1282
        %v1284 = vpop.f32.mrb[0].mxu0
        %1285 = vmatprep.mubr.f32.mxu0 0.0
        %1286 = vmatmul.mubr.f32.gmra.mrb[0].mxu0 %v1066
        %v1287 = vpop.f32.mrb[0].mxu0
        %v1288 = vadd.f32 0.0, %v1287
        %v1289 = vpop.f32.mrb[0].mxu0
        %1290 = vmatprep.mubr.f32.mxu0 0.0
        %1291 = vmatmul.mubr.f32.gmra.mrb[0].mxu0 %v1069
        %v1292 = vpop.f32.mrb[0].mxu0
        %v1293 = vadd.f32 0.0, %v1292
        %v1294 = vpop.f32.mrb[0].mxu0
        %1295 = vdwg.mxu0
        %v1296 = vadd.f32 %v783, %v1138
        %v1297 = vadd.f32 %v788, %v1143
        %v1298 = vadd.f32 %v793, %v1148
        %v1299 = vadd.f32 %v798, %v1153
        %v1300 = vadd.f32 %v803, %v1158
        %v1301 = vadd.f32 %v808, %v1163
        %v1302 = vadd.f32 %v813, %v1168
        %v1303 = vadd.f32 %v818, %v1173
        %v1304 = vadd.f32 %v823, %v1178
        %v1305 = vadd.f32 %v828, %v1183
        %v1306 = vadd.f32 %v833, %v1188
        %v1307 = vadd.f32 %v838, %v1193
        %v1308 = vadd.f32 %v843, %v1198
        %v1309 = vadd.f32 %v848, %v1203
        %v1310 = vadd.f32 %v853, %v1208
        %v1311 = vadd.f32 %v858, %v1213
        %v1312 = vadd.f32 %v863, %v1218
        %v1313 = vadd.f32 %v868, %v1223
        %v1314 = vadd.f32 %v873, %v1228
        %v1315 = vadd.f32 %v878, %v1233
        %v1316 = vadd.f32 %v883, %v1238
        %v1317 = vadd.f32 %v888, %v1243
        %v1318 = vadd.f32 %v893, %v1248
        %v1319 = vadd.f32 %v898, %v1253
        %v1320 = vadd.f32 %v903, %v1258
        %v1321 = vadd.f32 %v908, %v1263
        %v1322 = vadd.f32 %v913, %v1268
        %v1323 = vadd.f32 %v918, %v1273
        %v1324 = vadd.f32 %v923, %v1278
        %v1325 = vadd.f32 %v928, %v1283
        %v1326 = vadd.f32 %v933, %v1288
        %v1327 = vadd.f32 %v938, %v1293
        %s1328 = scalar_lea.vmem %s221, 24
        %v1329 = vld [vmem:[%s1328] sm:$0xff]
        %v1330 = vld [vmem:[%s1328 + $0x8] sm:$0xff]
        %v1331 = vld [vmem:[%s1328 + $0x18] sm:$0xff]
        %v1332 = vld [vmem:[%s1328 + $0x20] sm:$0xff]
        %v1333 = vld [vmem:[%s1328 + $0x30] sm:$0xff]
        %v1334 = vld [vmem:[%s1328 + $0x38] sm:$0xff]
        %v1335 = vld [vmem:[%s1328 + $0x48] sm:$0xff]
        %v1336 = vld [vmem:[%s1328 + $0x50] sm:$0xff]
        %v1337 = vld [vmem:[%s1328 + $0x60] sm:$0xff]
        %v1338 = vld [vmem:[%s1328 + $0x68] sm:$0xff]
        %v1339 = vld [vmem:[%s1328 + $0x78] sm:$0xff]
        %v1340 = vld [vmem:[%s1328 + $0x80] sm:$0xff]
        %v1341 = vld [vmem:[%s1328 + $0x90] sm:$0xff]
        %v1342 = vld [vmem:[%s1328 + $0x98] sm:$0xff]
        %v1343 = vld [vmem:[%s1328 + $0xa8] sm:$0xff]
        %v1344 = vld [vmem:[%s1328 + $0xb0] sm:$0xff]
        %v1345 = vld [vmem:[%s1328 + $0xc0] sm:$0xff]
        %v1346 = vld [vmem:[%s1328 + $0xc8] sm:$0xff]
        %v1347 = vld [vmem:[%s1328 + $0xd8] sm:$0xff]
        %v1348 = vld [vmem:[%s1328 + $0xe0] sm:$0xff]
        %v1349 = vld [vmem:[%s1328 + $0xf0] sm:$0xff]
        %v1350 = vld [vmem:[%s1328 + $0xf8] sm:$0xff]
        %v1351 = vld [vmem:[%s1328 + $0x108] sm:$0xff]
        %v1352 = vld [vmem:[%s1328 + $0x110] sm:$0xff]
        %v1353 = vld [vmem:[%s1328 + $0x120] sm:$0xff]
        %v1354 = vld [vmem:[%s1328 + $0x128] sm:$0xff]
        %v1355 = vld [vmem:[%s1328 + $0x138] sm:$0xff]
        %v1356 = vld [vmem:[%s1328 + $0x140] sm:$0xff]
        %v1357 = vld [vmem:[%s1328 + $0x150] sm:$0xff]
        %v1358 = vld [vmem:[%s1328 + $0x158] sm:$0xff]
        %v1359 = vld [vmem:[%s1328 + $0x168] sm:$0xff]
        %v1360 = vld [vmem:[%s1328 + $0x170] sm:$0xff]
        %s1361 = scalar_lea.vmem %s226, 24
        %v1362 = vld [vmem:[%s1361] sm:$0xff]
        %v1364 = vsel %vm298, %v1329, 0
        %v1367 = vsel %vm298, %v1330, 0
        %v1370 = vsel %vm298, %v1331, 0
        %v1373 = vsel %vm298, %v1332, 0
        %v1376 = vsel %vm298, %v1333, 0
        %v1379 = vsel %vm298, %v1334, 0
        %v1382 = vsel %vm298, %v1335, 0
        %v1385 = vsel %vm298, %v1336, 0
        %v1388 = vsel %vm298, %v1337, 0
        %v1391 = vsel %vm298, %v1338, 0
        %v1394 = vsel %vm298, %v1339, 0
        %v1397 = vsel %vm298, %v1340, 0
        %v1400 = vsel %vm298, %v1341, 0
        %v1403 = vsel %vm298, %v1342, 0
        %v1406 = vsel %vm298, %v1343, 0
        %v1409 = vsel %vm298, %v1344, 0
        %v1412 = vsel %vm298, %v1345, 0
        %v1415 = vsel %vm298, %v1346, 0
        %v1418 = vsel %vm298, %v1347, 0
        %v1421 = vsel %vm298, %v1348, 0
        %v1424 = vsel %vm298, %v1349, 0
        %v1427 = vsel %vm298, %v1350, 0
        %v1430 = vsel %vm298, %v1351, 0
        %v1433 = vsel %vm298, %v1352, 0
        %v1436 = vsel %vm298, %v1353, 0
        %v1439 = vsel %vm298, %v1354, 0
        %v1442 = vsel %vm298, %v1355, 0
        %v1445 = vsel %vm298, %v1356, 0
        %v1448 = vsel %vm298, %v1357, 0
        %v1451 = vsel %vm298, %v1358, 0
        %v1454 = vsel %vm298, %v1359, 0
        %v1457 = vsel %vm298, %v1360, 0
        %1459 = vmatprep.subr.mxu0 0.0
        %1460 = vmatpush1.msra.mxu0 %v1362
        %1461 = vmatprep.subr.mxu0 0.0
        %1462 = vmatpush1.msra.mxu0 0.0
        %1463 = vmatprep.subr.mxu0 0.0
        %1464 = vmatpush1.msra.mxu0 0.0
        %1465 = vmatprep.subr.mxu0 0.0
        %1466 = vmatpush1.msra.mxu0 0.0
        %1467 = vmatprep.subr.mxu0 0.0
        %1468 = vmatpush1.msra.mxu0 0.0
        %1469 = vmatprep.subr.mxu0 0.0
        %1470 = vmatpush1.msra.mxu0 0.0
        %1471 = vmatprep.subr.mxu0 0.0
        %1472 = vmatpush1.msra.mxu0 0.0
        %1473 = vmatprep.subr.mxu0 0.0
        %1474 = vmatpush1.msra.mxu0 0.0
        %1475 = vmatprep.subr.mxu0 0.0
        %1476 = vmatpush1.msra.mxu0 0.0
        %1477 = vmatprep.subr.mxu0 0.0
        %1478 = vmatpush1.msra.mxu0 0.0
        %1479 = vmatprep.subr.mxu0 0.0
        %1480 = vmatpush1.msra.mxu0 0.0
        %1481 = vmatprep.subr.mxu0 0.0
        %1482 = vmatpush1.msra.mxu0 0.0
        %1483 = vmatprep.subr.mxu0 0.0
        %1484 = vmatpush1.msra.mxu0 0.0
        %1485 = vmatprep.subr.mxu0 0.0
        %1486 = vmatpush1.msra.mxu0 0.0
        %1487 = vmatprep.subr.mxu0 0.0
        %1488 = vmatpush1.msra.mxu0 0.0
        %1489 = vmatprep.subr.mxu0 0.0
        %1490 = vmatpush1.msra.mxu0 0.0
        %1491 = vmatprep.subr.mxu0 0.0
        %1492 = vmatpush1.msra.mxu0 0.0
        %1493 = vmatprep.subr.mxu0 0.0
        %1494 = vmatpush1.msra.mxu0 0.0
        %1495 = vmatprep.subr.mxu0 0.0
        %1496 = vmatpush1.msra.mxu0 0.0
        %1497 = vmatprep.subr.mxu0 0.0
        %1498 = vmatpush1.msra.mxu0 0.0
        %1499 = vmatprep.subr.mxu0 0.0
        %1500 = vmatpush1.msra.mxu0 0.0
        %1501 = vmatprep.subr.mxu0 0.0
        %1502 = vmatpush1.msra.mxu0 0.0
        %1503 = vmatprep.subr.mxu0 0.0
        %1504 = vmatpush1.msra.mxu0 0.0
        %1505 = vmatprep.subr.mxu0 0.0
        %1506 = vmatpush1.msra.mxu0 0.0
        %1507 = vmatprep.subr.mxu0 0.0
        %1508 = vmatpush1.msra.mxu0 0.0
        %1509 = vmatprep.subr.mxu0 0.0
        %1510 = vmatpush1.msra.mxu0 0.0
        %1511 = vmatprep.subr.mxu0 0.0
        %1512 = vmatpush1.msra.mxu0 0.0
        %1513 = vmatprep.subr.mxu0 0.0
        %1514 = vmatpush1.msra.mxu0 0.0
        %1515 = vmatprep.subr.mxu0 0.0
        %1516 = vmatpush1.msra.mxu0 0.0
        %1517 = vmatprep.subr.mxu0 0.0
        %1518 = vmatpush1.msra.mxu0 0.0
        %1519 = vmatprep.subr.mxu0 0.0
        %1520 = vmatpush1.msra.mxu0 0.0
        %1521 = vmatprep.subr.mxu0 0.0
        %1522 = vmatpush1.msra.mxu0 0.0
        %1523 = vmatprep.mubr.f32.mxu0 0.0
        %1524 = vmatmul.mubr.f32.gmra.mrb[0].mxu0 %v1364
        %v1525 = vpop.f32.mrb[0].mxu0
        %v1526 = vadd.f32 0.0, %v1525
        %v1527 = vpop.f32.mrb[0].mxu0
        %1528 = vmatprep.mubr.f32.mxu0 0.0
        %1529 = vmatmul.mubr.f32.gmra.mrb[0].mxu0 %v1367
        %v1530 = vpop.f32.mrb[0].mxu0
        %v1531 = vadd.f32 0.0, %v1530
        %v1532 = vpop.f32.mrb[0].mxu0
        %1533 = vmatprep.mubr.f32.mxu0 0.0
        %1534 = vmatmul.mubr.f32.gmra.mrb[0].mxu0 %v1370
        %v1535 = vpop.f32.mrb[0].mxu0
        %v1536 = vadd.f32 0.0, %v1535
        %v1537 = vpop.f32.mrb[0].mxu0
        %1538 = vmatprep.mubr.f32.mxu0 0.0
        %1539 = vmatmul.mubr.f32.gmra.mrb[0].mxu0 %v1373
        %v1540 = vpop.f32.mrb[0].mxu0
        %v1541 = vadd.f32 0.0, %v1540
        %v1542 = vpop.f32.mrb[0].mxu0
        %1543 = vmatprep.mubr.f32.mxu0 0.0
        %1544 = vmatmul.mubr.f32.gmra.mrb[0].mxu0 %v1376
        %v1545 = vpop.f32.mrb[0].mxu0
        %v1546 = vadd.f32 0.0, %v1545
        %v1547 = vpop.f32.mrb[0].mxu0
        %1548 = vmatprep.mubr.f32.mxu0 0.0
        %1549 = vmatmul.mubr.f32.gmra.mrb[0].mxu0 %v1379
        %v1550 = vpop.f32.mrb[0].mxu0
        %v1551 = vadd.f32 0.0, %v1550
        %v1552 = vpop.f32.mrb[0].mxu0
        %1553 = vmatprep.mubr.f32.mxu0 0.0
        %1554 = vmatmul.mubr.f32.gmra.mrb[0].mxu0 %v1382
        %v1555 = vpop.f32.mrb[0].mxu0
        %v1556 = vadd.f32 0.0, %v1555
        %v1557 = vpop.f32.mrb[0].mxu0
        %1558 = vmatprep.mubr.f32.mxu0 0.0
        %1559 = vmatmul.mubr.f32.gmra.mrb[0].mxu0 %v1385
        %v1560 = vpop.f32.mrb[0].mxu0
        %v1561 = vadd.f32 0.0, %v1560
        %v1562 = vpop.f32.mrb[0].mxu0
        %1563 = vmatprep.mubr.f32.mxu0 0.0
        %1564 = vmatmul.mubr.f32.gmra.mrb[0].mxu0 %v1388
        %v1565 = vpop.f32.mrb[0].mxu0
        %v1566 = vadd.f32 0.0, %v1565
        %v1567 = vpop.f32.mrb[0].mxu0
        %1568 = vmatprep.mubr.f32.mxu0 0.0
        %1569 = vmatmul.mubr.f32.gmra.mrb[0].mxu0 %v1391
        %v1570 = vpop.f32.mrb[0].mxu0
        %v1571 = vadd.f32 0.0, %v1570
        %v1572 = vpop.f32.mrb[0].mxu0
        %1573 = vmatprep.mubr.f32.mxu0 0.0
        %1574 = vmatmul.mubr.f32.gmra.mrb[0].mxu0 %v1394
        %v1575 = vpop.f32.mrb[0].mxu0
        %v1576 = vadd.f32 0.0, %v1575
        %v1577 = vpop.f32.mrb[0].mxu0
        %1578 = vmatprep.mubr.f32.mxu0 0.0
        %1579 = vmatmul.mubr.f32.gmra.mrb[0].mxu0 %v1397
        %v1580 = vpop.f32.mrb[0].mxu0
        %v1581 = vadd.f32 0.0, %v1580
        %v1582 = vpop.f32.mrb[0].mxu0
        %1583 = vmatprep.mubr.f32.mxu0 0.0
        %1584 = vmatmul.mubr.f32.gmra.mrb[0].mxu0 %v1400
        %v1585 = vpop.f32.mrb[0].mxu0
        %v1586 = vadd.f32 0.0, %v1585
        %v1587 = vpop.f32.mrb[0].mxu0
        %1588 = vmatprep.mubr.f32.mxu0 0.0
        %1589 = vmatmul.mubr.f32.gmra.mrb[0].mxu0 %v1403
        %v1590 = vpop.f32.mrb[0].mxu0
        %v1591 = vadd.f32 0.0, %v1590
        %v1592 = vpop.f32.mrb[0].mxu0
        %1593 = vmatprep.mubr.f32.mxu0 0.0
        %1594 = vmatmul.mubr.f32.gmra.mrb[0].mxu0 %v1406
        %v1595 = vpop.f32.mrb[0].mxu0
        %v1596 = vadd.f32 0.0, %v1595
        %v1597 = vpop.f32.mrb[0].mxu0
        %1598 = vmatprep.mubr.f32.mxu0 0.0
        %1599 = vmatmul.mubr.f32.gmra.mrb[0].mxu0 %v1409
        %v1600 = vpop.f32.mrb[0].mxu0
        %v1601 = vadd.f32 0.0, %v1600
        %v1602 = vpop.f32.mrb[0].mxu0
        %1603 = vmatprep.mubr.f32.mxu0 0.0
        %1604 = vmatmul.mubr.f32.gmra.mrb[0].mxu0 %v1412
        %v1605 = vpop.f32.mrb[0].mxu0
        %v1606 = vadd.f32 0.0, %v1605
        %v1607 = vpop.f32.mrb[0].mxu0
        %1608 = vmatprep.mubr.f32.mxu0 0.0
        %1609 = vmatmul.mubr.f32.gmra.mrb[0].mxu0 %v1415
        %v1610 = vpop.f32.mrb[0].mxu0
        %v1611 = vadd.f32 0.0, %v1610
        %v1612 = vpop.f32.mrb[0].mxu0
        %1613 = vmatprep.mubr.f32.mxu0 0.0
        %1614 = vmatmul.mubr.f32.gmra.mrb[0].mxu0 %v1418
        %v1615 = vpop.f32.mrb[0].mxu0
        %v1616 = vadd.f32 0.0, %v1615
        %v1617 = vpop.f32.mrb[0].mxu0
        %1618 = vmatprep.mubr.f32.mxu0 0.0
        %1619 = vmatmul.mubr.f32.gmra.mrb[0].mxu0 %v1421
        %v1620 = vpop.f32.mrb[0].mxu0
        %v1621 = vadd.f32 0.0, %v1620
        %v1622 = vpop.f32.mrb[0].mxu0
        %1623 = vmatprep.mubr.f32.mxu0 0.0
        %1624 = vmatmul.mubr.f32.gmra.mrb[0].mxu0 %v1424
        %v1625 = vpop.f32.mrb[0].mxu0
        %v1626 = vadd.f32 0.0, %v1625
        %v1627 = vpop.f32.mrb[0].mxu0
        %1628 = vmatprep.mubr.f32.mxu0 0.0
        %1629 = vmatmul.mubr.f32.gmra.mrb[0].mxu0 %v1427
        %v1630 = vpop.f32.mrb[0].mxu0
        %v1631 = vadd.f32 0.0, %v1630
        %v1632 = vpop.f32.mrb[0].mxu0
        %1633 = vmatprep.mubr.f32.mxu0 0.0
        %1634 = vmatmul.mubr.f32.gmra.mrb[0].mxu0 %v1430
        %v1635 = vpop.f32.mrb[0].mxu0
        %v1636 = vadd.f32 0.0, %v1635
        %v1637 = vpop.f32.mrb[0].mxu0
        %1638 = vmatprep.mubr.f32.mxu0 0.0
        %1639 = vmatmul.mubr.f32.gmra.mrb[0].mxu0 %v1433
        %v1640 = vpop.f32.mrb[0].mxu0
        %v1641 = vadd.f32 0.0, %v1640
        %v1642 = vpop.f32.mrb[0].mxu0
        %1643 = vmatprep.mubr.f32.mxu0 0.0
        %1644 = vmatmul.mubr.f32.gmra.mrb[0].mxu0 %v1436
        %v1645 = vpop.f32.mrb[0].mxu0
        %v1646 = vadd.f32 0.0, %v1645
        %v1647 = vpop.f32.mrb[0].mxu0
        %1648 = vmatprep.mubr.f32.mxu0 0.0
        %1649 = vmatmul.mubr.f32.gmra.mrb[0].mxu0 %v1439
        %v1650 = vpop.f32.mrb[0].mxu0
        %v1651 = vadd.f32 0.0, %v1650
        %v1652 = vpop.f32.mrb[0].mxu0
        %1653 = vmatprep.mubr.f32.mxu0 0.0
        %1654 = vmatmul.mubr.f32.gmra.mrb[0].mxu0 %v1442
        %v1655 = vpop.f32.mrb[0].mxu0
        %v1656 = vadd.f32 0.0, %v1655
        %v1657 = vpop.f32.mrb[0].mxu0
        %1658 = vmatprep.mubr.f32.mxu0 0.0
        %1659 = vmatmul.mubr.f32.gmra.mrb[0].mxu0 %v1445
        %v1660 = vpop.f32.mrb[0].mxu0
        %v1661 = vadd.f32 0.0, %v1660
        %v1662 = vpop.f32.mrb[0].mxu0
        %1663 = vmatprep.mubr.f32.mxu0 0.0
        %1664 = vmatmul.mubr.f32.gmra.mrb[0].mxu0 %v1448
        %v1665 = vpop.f32.mrb[0].mxu0
        %v1666 = vadd.f32 0.0, %v1665
        %v1667 = vpop.f32.mrb[0].mxu0
        %1668 = vmatprep.mubr.f32.mxu0 0.0
        %1669 = vmatmul.mubr.f32.gmra.mrb[0].mxu0 %v1451
        %v1670 = vpop.f32.mrb[0].mxu0
        %v1671 = vadd.f32 0.0, %v1670
        %v1672 = vpop.f32.mrb[0].mxu0
        %1673 = vmatprep.mubr.f32.mxu0 0.0
        %1674 = vmatmul.mubr.f32.gmra.mrb[0].mxu0 %v1454
        %v1675 = vpop.f32.mrb[0].mxu0
        %v1676 = vadd.f32 0.0, %v1675
        %v1677 = vpop.f32.mrb[0].mxu0
        %1678 = vmatprep.mubr.f32.mxu0 0.0
        %1679 = vmatmul.mubr.f32.gmra.mrb[0].mxu0 %v1457
        %v1680 = vpop.f32.mrb[0].mxu0
        %v1681 = vadd.f32 0.0, %v1680
        %v1682 = vpop.f32.mrb[0].mxu0
        %1683 = vdwg.mxu0
        %v1684 = vadd.f32 %v1296, %v1526
        %v1685 = vadd.f32 %v1297, %v1531
        %v1686 = vadd.f32 %v1298, %v1536
        %v1687 = vadd.f32 %v1299, %v1541
        %v1688 = vadd.f32 %v1300, %v1546
        %v1689 = vadd.f32 %v1301, %v1551
        %v1690 = vadd.f32 %v1302, %v1556
        %v1691 = vadd.f32 %v1303, %v1561
        %v1692 = vadd.f32 %v1304, %v1566
        %v1693 = vadd.f32 %v1305, %v1571
        %v1694 = vadd.f32 %v1306, %v1576
        %v1695 = vadd.f32 %v1307, %v1581
        %v1696 = vadd.f32 %v1308, %v1586
        %v1697 = vadd.f32 %v1309, %v1591
        %v1698 = vadd.f32 %v1310, %v1596
        %v1699 = vadd.f32 %v1311, %v1601
        %v1700 = vadd.f32 %v1312, %v1606
        %v1701 = vadd.f32 %v1313, %v1611
        %v1702 = vadd.f32 %v1314, %v1616
        %v1703 = vadd.f32 %v1315, %v1621
        %v1704 = vadd.f32 %v1316, %v1626
        %v1705 = vadd.f32 %v1317, %v1631
        %v1706 = vadd.f32 %v1318, %v1636
        %v1707 = vadd.f32 %v1319, %v1641
        %v1708 = vadd.f32 %v1320, %v1646
        %v1709 = vadd.f32 %v1321, %v1651
        %v1710 = vadd.f32 %v1322, %v1656
        %v1711 = vadd.f32 %v1323, %v1661
        %v1712 = vadd.f32 %v1324, %v1666
        %v1713 = vadd.f32 %v1325, %v1671
        %v1714 = vadd.f32 %v1326, %v1676
        %v1715 = vadd.f32 %v1327, %v1681
        %v1716 = vld [vmem:[%s1328 + $0x1] sm:$0xff]
        %v1717 = vld [vmem:[%s1328 + $0x9] sm:$0xff]
        %v1718 = vld [vmem:[%s1328 + $0x19] sm:$0xff]
        %v1719 = vld [vmem:[%s1328 + $0x21] sm:$0xff]
        %v1720 = vld [vmem:[%s1328 + $0x31] sm:$0xff]
        %v1721 = vld [vmem:[%s1328 + $0x39] sm:$0xff]
        %v1722 = vld [vmem:[%s1328 + $0x49] sm:$0xff]
        %v1723 = vld [vmem:[%s1328 + $0x51] sm:$0xff]
        %v1724 = vld [vmem:[%s1328 + $0x61] sm:$0xff]
        %v1725 = vld [vmem:[%s1328 + $0x69] sm:$0xff]
        %v1726 = vld [vmem:[%s1328 + $0x79] sm:$0xff]
        %v1727 = vld [vmem:[%s1328 + $0x81] sm:$0xff]
        %v1728 = vld [vmem:[%s1328 + $0x91] sm:$0xff]
        %v1729 = vld [vmem:[%s1328 + $0x99] sm:$0xff]
        %v1730 = vld [vmem:[%s1328 + $0xa9] sm:$0xff]
        %v1731 = vld [vmem:[%s1328 + $0xb1] sm:$0xff]
        %v1732 = vld [vmem:[%s1328 + $0xc1] sm:$0xff]
        %v1733 = vld [vmem:[%s1328 + $0xc9] sm:$0xff]
        %v1734 = vld [vmem:[%s1328 + $0xd9] sm:$0xff]
        %v1735 = vld [vmem:[%s1328 + $0xe1] sm:$0xff]
        %v1736 = vld [vmem:[%s1328 + $0xf1] sm:$0xff]
        %v1737 = vld [vmem:[%s1328 + $0xf9] sm:$0xff]
        %v1738 = vld [vmem:[%s1328 + $0x109] sm:$0xff]
        %v1739 = vld [vmem:[%s1328 + $0x111] sm:$0xff]
        %v1740 = vld [vmem:[%s1328 + $0x121] sm:$0xff]
        %v1741 = vld [vmem:[%s1328 + $0x129] sm:$0xff]
        %v1742 = vld [vmem:[%s1328 + $0x139] sm:$0xff]
        %v1743 = vld [vmem:[%s1328 + $0x141] sm:$0xff]
        %v1744 = vld [vmem:[%s1328 + $0x151] sm:$0xff]
        %v1745 = vld [vmem:[%s1328 + $0x159] sm:$0xff]
        %v1746 = vld [vmem:[%s1328 + $0x169] sm:$0xff]
        %v1747 = vld [vmem:[%s1328 + $0x171] sm:$0xff]
        %s1748 = scalar_lea.vmem %s226, 32
        %v1749 = vld [vmem:[%s1748] sm:$0xff]
        %v1751 = vsel %vm298, %v1716, 0
        %v1754 = vsel %vm298, %v1717, 0
        %v1757 = vsel %vm298, %v1718, 0
        %v1760 = vsel %vm298, %v1719, 0
        %v1763 = vsel %vm298, %v1720, 0
        %v1766 = vsel %vm298, %v1721, 0
        %v1769 = vsel %vm298, %v1722, 0
        %v1772 = vsel %vm298, %v1723, 0
        %v1775 = vsel %vm298, %v1724, 0
        %v1778 = vsel %vm298, %v1725, 0
        %v1781 = vsel %vm298, %v1726, 0
        %v1784 = vsel %vm298, %v1727, 0
        %v1787 = vsel %vm298, %v1728, 0
        %v1790 = vsel %vm298, %v1729, 0
        %v1793 = vsel %vm298, %v1730, 0
        %v1796 = vsel %vm298, %v1731, 0
        %v1799 = vsel %vm298, %v1732, 0
        %v1802 = vsel %vm298, %v1733, 0
        %v1805 = vsel %vm298, %v1734, 0
        %v1808 = vsel %vm298, %v1735, 0
        %v1811 = vsel %vm298, %v1736, 0
        %v1814 = vsel %vm298, %v1737, 0
        %v1817 = vsel %vm298, %v1738, 0
        %v1820 = vsel %vm298, %v1739, 0
        %v1823 = vsel %vm298, %v1740, 0
        %v1826 = vsel %vm298, %v1741, 0
        %v1829 = vsel %vm298, %v1742, 0
        %v1832 = vsel %vm298, %v1743, 0
        %v1835 = vsel %vm298, %v1744, 0
        %v1838 = vsel %vm298, %v1745, 0
        %v1841 = vsel %vm298, %v1746, 0
        %v1844 = vsel %vm298, %v1747, 0
        %1846 = vmatprep.subr.mxu0 0.0
        %1847 = vmatpush1.msra.mxu0 %v1749
        %1848 = vmatprep.subr.mxu0 0.0
        %1849 = vmatpush1.msra.mxu0 0.0
        %1850 = vmatprep.subr.mxu0 0.0
        %1851 = vmatpush1.msra.mxu0 0.0
        %1852 = vmatprep.subr.mxu0 0.0
        %1853 = vmatpush1.msra.mxu0 0.0
        %1854 = vmatprep.subr.mxu0 0.0
        %1855 = vmatpush1.msra.mxu0 0.0
        %1856 = vmatprep.subr.mxu0 0.0
        %1857 = vmatpush1.msra.mxu0 0.0
        %1858 = vmatprep.subr.mxu0 0.0
        %1859 = vmatpush1.msra.mxu0 0.0
        %1860 = vmatprep.subr.mxu0 0.0
        %1861 = vmatpush1.msra.mxu0 0.0
        %1862 = vmatprep.subr.mxu0 0.0
        %1863 = vmatpush1.msra.mxu0 0.0
        %1864 = vmatprep.subr.mxu0 0.0
        %1865 = vmatpush1.msra.mxu0 0.0
        %1866 = vmatprep.subr.mxu0 0.0
        %1867 = vmatpush1.msra.mxu0 0.0
        %1868 = vmatprep.subr.mxu0 0.0
        %1869 = vmatpush1.msra.mxu0 0.0
        %1870 = vmatprep.subr.mxu0 0.0
        %1871 = vmatpush1.msra.mxu0 0.0
        %1872 = vmatprep.subr.mxu0 0.0
        %1873 = vmatpush1.msra.mxu0 0.0
        %1874 = vmatprep.subr.mxu0 0.0
        %1875 = vmatpush1.msra.mxu0 0.0
        %1876 = vmatprep.subr.mxu0 0.0
        %1877 = vmatpush1.msra.mxu0 0.0
        %1878 = vmatprep.subr.mxu0 0.0
        %1879 = vmatpush1.msra.mxu0 0.0
        %1880 = vmatprep.subr.mxu0 0.0
        %1881 = vmatpush1.msra.mxu0 0.0
        %1882 = vmatprep.subr.mxu0 0.0
        %1883 = vmatpush1.msra.mxu0 0.0
        %1884 = vmatprep.subr.mxu0 0.0
        %1885 = vmatpush1.msra.mxu0 0.0
        %1886 = vmatprep.subr.mxu0 0.0
        %1887 = vmatpush1.msra.mxu0 0.0
        %1888 = vmatprep.subr.mxu0 0.0
        %1889 = vmatpush1.msra.mxu0 0.0
        %1890 = vmatprep.subr.mxu0 0.0
        %1891 = vmatpush1.msra.mxu0 0.0
        %1892 = vmatprep.subr.mxu0 0.0
        %1893 = vmatpush1.msra.mxu0 0.0
        %1894 = vmatprep.subr.mxu0 0.0
        %1895 = vmatpush1.msra.mxu0 0.0
        %1896 = vmatprep.subr.mxu0 0.0
        %1897 = vmatpush1.msra.mxu0 0.0
        %1898 = vmatprep.subr.mxu0 0.0
        %1899 = vmatpush1.msra.mxu0 0.0
        %1900 = vmatprep.subr.mxu0 0.0
        %1901 = vmatpush1.msra.mxu0 0.0
        %1902 = vmatprep.subr.mxu0 0.0
        %1903 = vmatpush1.msra.mxu0 0.0
        %1904 = vmatprep.subr.mxu0 0.0
        %1905 = vmatpush1.msra.mxu0 0.0
        %1906 = vmatprep.subr.mxu0 0.0
        %1907 = vmatpush1.msra.mxu0 0.0
        %1908 = vmatprep.subr.mxu0 0.0
        %1909 = vmatpush1.msra.mxu0 0.0
        %1910 = vmatprep.mubr.f32.mxu0 0.0
        %1911 = vmatmul.mubr.f32.gmra.mrb[0].mxu0 %v1751
        %v1912 = vpop.f32.mrb[0].mxu0
        %v1913 = vadd.f32 0.0, %v1912
        %v1914 = vpop.f32.mrb[0].mxu0
        %1915 = vmatprep.mubr.f32.mxu0 0.0
        %1916 = vmatmul.mubr.f32.gmra.mrb[0].mxu0 %v1754
        %v1917 = vpop.f32.mrb[0].mxu0
        %v1918 = vadd.f32 0.0, %v1917
        %v1919 = vpop.f32.mrb[0].mxu0
        %1920 = vmatprep.mubr.f32.mxu0 0.0
        %1921 = vmatmul.mubr.f32.gmra.mrb[0].mxu0 %v1757
        %v1922 = vpop.f32.mrb[0].mxu0
        %v1923 = vadd.f32 0.0, %v1922
        %v1924 = vpop.f32.mrb[0].mxu0
        %1925 = vmatprep.mubr.f32.mxu0 0.0
        %1926 = vmatmul.mubr.f32.gmra.mrb[0].mxu0 %v1760
        %v1927 = vpop.f32.mrb[0].mxu0
        %v1928 = vadd.f32 0.0, %v1927
        %v1929 = vpop.f32.mrb[0].mxu0
        %1930 = vmatprep.mubr.f32.mxu0 0.0
        %1931 = vmatmul.mubr.f32.gmra.mrb[0].mxu0 %v1763
        %v1932 = vpop.f32.mrb[0].mxu0
        %v1933 = vadd.f32 0.0, %v1932
        %v1934 = vpop.f32.mrb[0].mxu0
        %1935 = vmatprep.mubr.f32.mxu0 0.0
        %1936 = vmatmul.mubr.f32.gmra.mrb[0].mxu0 %v1766
        %v1937 = vpop.f32.mrb[0].mxu0
        %v1938 = vadd.f32 0.0, %v1937
        %v1939 = vpop.f32.mrb[0].mxu0
        %1940 = vmatprep.mubr.f32.mxu0 0.0
        %1941 = vmatmul.mubr.f32.gmra.mrb[0].mxu0 %v1769
        %v1942 = vpop.f32.mrb[0].mxu0
        %v1943 = vadd.f32 0.0, %v1942
        %v1944 = vpop.f32.mrb[0].mxu0
        %1945 = vmatprep.mubr.f32.mxu0 0.0
        %1946 = vmatmul.mubr.f32.gmra.mrb[0].mxu0 %v1772
        %v1947 = vpop.f32.mrb[0].mxu0
        %v1948 = vadd.f32 0.0, %v1947
        %v1949 = vpop.f32.mrb[0].mxu0
        %1950 = vmatprep.mubr.f32.mxu0 0.0
        %1951 = vmatmul.mubr.f32.gmra.mrb[0].mxu0 %v1775
        %v1952 = vpop.f32.mrb[0].mxu0
        %v1953 = vadd.f32 0.0, %v1952
        %v1954 = vpop.f32.mrb[0].mxu0
        %1955 = vmatprep.mubr.f32.mxu0 0.0
        %1956 = vmatmul.mubr.f32.gmra.mrb[0].mxu0 %v1778
        %v1957 = vpop.f32.mrb[0].mxu0
        %v1958 = vadd.f32 0.0, %v1957
        %v1959 = vpop.f32.mrb[0].mxu0
        %1960 = vmatprep.mubr.f32.mxu0 0.0
        %1961 = vmatmul.mubr.f32.gmra.mrb[0].mxu0 %v1781
        %v1962 = vpop.f32.mrb[0].mxu0
        %v1963 = vadd.f32 0.0, %v1962
        %v1964 = vpop.f32.mrb[0].mxu0
        %1965 = vmatprep.mubr.f32.mxu0 0.0
        %1966 = vmatmul.mubr.f32.gmra.mrb[0].mxu0 %v1784
        %v1967 = vpop.f32.mrb[0].mxu0
        %v1968 = vadd.f32 0.0, %v1967
        %v1969 = vpop.f32.mrb[0].mxu0
        %1970 = vmatprep.mubr.f32.mxu0 0.0
        %1971 = vmatmul.mubr.f32.gmra.mrb[0].mxu0 %v1787
        %v1972 = vpop.f32.mrb[0].mxu0
        %v1973 = vadd.f32 0.0, %v1972
        %v1974 = vpop.f32.mrb[0].mxu0
        %1975 = vmatprep.mubr.f32.mxu0 0.0
        %1976 = vmatmul.mubr.f32.gmra.mrb[0].mxu0 %v1790
        %v1977 = vpop.f32.mrb[0].mxu0
        %v1978 = vadd.f32 0.0, %v1977
        %v1979 = vpop.f32.mrb[0].mxu0
        %1980 = vmatprep.mubr.f32.mxu0 0.0
        %1981 = vmatmul.mubr.f32.gmra.mrb[0].mxu0 %v1793
        %v1982 = vpop.f32.mrb[0].mxu0
        %v1983 = vadd.f32 0.0, %v1982
        %v1984 = vpop.f32.mrb[0].mxu0
        %1985 = vmatprep.mubr.f32.mxu0 0.0
        %1986 = vmatmul.mubr.f32.gmra.mrb[0].mxu0 %v1796
        %v1987 = vpop.f32.mrb[0].mxu0
        %v1988 = vadd.f32 0.0, %v1987
        %v1989 = vpop.f32.mrb[0].mxu0
        %1990 = vmatprep.mubr.f32.mxu0 0.0
        %1991 = vmatmul.mubr.f32.gmra.mrb[0].mxu0 %v1799
        %v1992 = vpop.f32.mrb[0].mxu0
        %v1993 = vadd.f32 0.0, %v1992
        %v1994 = vpop.f32.mrb[0].mxu0
        %1995 = vmatprep.mubr.f32.mxu0 0.0
        %1996 = vmatmul.mubr.f32.gmra.mrb[0].mxu0 %v1802
        %v1997 = vpop.f32.mrb[0].mxu0
        %v1998 = vadd.f32 0.0, %v1997
        %v1999 = vpop.f32.mrb[0].mxu0
        %2000 = vmatprep.mubr.f32.mxu0 0.0
        %2001 = vmatmul.mubr.f32.gmra.mrb[0].mxu0 %v1805
        %v2002 = vpop.f32.mrb[0].mxu0
        %v2003 = vadd.f32 0.0, %v2002
        %v2004 = vpop.f32.mrb[0].mxu0
        %2005 = vmatprep.mubr.f32.mxu0 0.0
        %2006 = vmatmul.mubr.f32.gmra.mrb[0].mxu0 %v1808
        %v2007 = vpop.f32.mrb[0].mxu0
        %v2008 = vadd.f32 0.0, %v2007
        %v2009 = vpop.f32.mrb[0].mxu0
        %2010 = vmatprep.mubr.f32.mxu0 0.0
        %2011 = vmatmul.mubr.f32.gmra.mrb[0].mxu0 %v1811
        %v2012 = vpop.f32.mrb[0].mxu0
        %v2013 = vadd.f32 0.0, %v2012
        %v2014 = vpop.f32.mrb[0].mxu0
        %2015 = vmatprep.mubr.f32.mxu0 0.0
        %2016 = vmatmul.mubr.f32.gmra.mrb[0].mxu0 %v1814
        %v2017 = vpop.f32.mrb[0].mxu0
        %v2018 = vadd.f32 0.0, %v2017
        %v2019 = vpop.f32.mrb[0].mxu0
        %2020 = vmatprep.mubr.f32.mxu0 0.0
        %2021 = vmatmul.mubr.f32.gmra.mrb[0].mxu0 %v1817
        %v2022 = vpop.f32.mrb[0].mxu0
        %v2023 = vadd.f32 0.0, %v2022
        %v2024 = vpop.f32.mrb[0].mxu0
        %2025 = vmatprep.mubr.f32.mxu0 0.0
        %2026 = vmatmul.mubr.f32.gmra.mrb[0].mxu0 %v1820
        %v2027 = vpop.f32.mrb[0].mxu0
        %v2028 = vadd.f32 0.0, %v2027
        %v2029 = vpop.f32.mrb[0].mxu0
        %2030 = vmatprep.mubr.f32.mxu0 0.0
        %2031 = vmatmul.mubr.f32.gmra.mrb[0].mxu0 %v1823
        %v2032 = vpop.f32.mrb[0].mxu0
        %v2033 = vadd.f32 0.0, %v2032
        %v2034 = vpop.f32.mrb[0].mxu0
        %2035 = vmatprep.mubr.f32.mxu0 0.0
        %2036 = vmatmul.mubr.f32.gmra.mrb[0].mxu0 %v1826
        %v2037 = vpop.f32.mrb[0].mxu0
        %v2038 = vadd.f32 0.0, %v2037
        %v2039 = vpop.f32.mrb[0].mxu0
        %2040 = vmatprep.mubr.f32.mxu0 0.0
        %2041 = vmatmul.mubr.f32.gmra.mrb[0].mxu0 %v1829
        %v2042 = vpop.f32.mrb[0].mxu0
        %v2043 = vadd.f32 0.0, %v2042
        %v2044 = vpop.f32.mrb[0].mxu0
        %2045 = vmatprep.mubr.f32.mxu0 0.0
        %2046 = vmatmul.mubr.f32.gmra.mrb[0].mxu0 %v1832
        %v2047 = vpop.f32.mrb[0].mxu0
        %v2048 = vadd.f32 0.0, %v2047
        %v2049 = vpop.f32.mrb[0].mxu0
        %2050 = vmatprep.mubr.f32.mxu0 0.0
        %2051 = vmatmul.mubr.f32.gmra.mrb[0].mxu0 %v1835
        %v2052 = vpop.f32.mrb[0].mxu0
        %v2053 = vadd.f32 0.0, %v2052
        %v2054 = vpop.f32.mrb[0].mxu0
        %2055 = vmatprep.mubr.f32.mxu0 0.0
        %2056 = vmatmul.mubr.f32.gmra.mrb[0].mxu0 %v1838
        %v2057 = vpop.f32.mrb[0].mxu0
        %v2058 = vadd.f32 0.0, %v2057
        %v2059 = vpop.f32.mrb[0].mxu0
        %2060 = vmatprep.mubr.f32.mxu0 0.0
        %2061 = vmatmul.mubr.f32.gmra.mrb[0].mxu0 %v1841
        %v2062 = vpop.f32.mrb[0].mxu0
        %v2063 = vadd.f32 0.0, %v2062
        %v2064 = vpop.f32.mrb[0].mxu0
        %2065 = vmatprep.mubr.f32.mxu0 0.0
        %2066 = vmatmul.mubr.f32.gmra.mrb[0].mxu0 %v1844
        %v2067 = vpop.f32.mrb[0].mxu0
        %v2068 = vadd.f32 0.0, %v2067
        %v2069 = vpop.f32.mrb[0].mxu0
        %2070 = vdwg.mxu0
        %v2071 = vadd.f32 %v1684, %v1913
        %v2072 = vadd.f32 %v1685, %v1918
        %v2073 = vadd.f32 %v1686, %v1923
        %v2074 = vadd.f32 %v1687, %v1928
        %v2075 = vadd.f32 %v1688, %v1933
        %v2076 = vadd.f32 %v1689, %v1938
        %v2077 = vadd.f32 %v1690, %v1943
        %v2078 = vadd.f32 %v1691, %v1948
        %v2079 = vadd.f32 %v1692, %v1953
        %v2080 = vadd.f32 %v1693, %v1958
        %v2081 = vadd.f32 %v1694, %v1963
        %v2082 = vadd.f32 %v1695, %v1968
        %v2083 = vadd.f32 %v1696, %v1973
        %v2084 = vadd.f32 %v1697, %v1978
        %v2085 = vadd.f32 %v1698, %v1983
        %v2086 = vadd.f32 %v1699, %v1988
        %v2087 = vadd.f32 %v1700, %v1993
        %v2088 = vadd.f32 %v1701, %v1998
        %v2089 = vadd.f32 %v1702, %v2003
        %v2090 = vadd.f32 %v1703, %v2008
        %v2091 = vadd.f32 %v1704, %v2013
        %v2092 = vadd.f32 %v1705, %v2018
        %v2093 = vadd.f32 %v1706, %v2023
        %v2094 = vadd.f32 %v1707, %v2028
        %v2095 = vadd.f32 %v1708, %v2033
        %v2096 = vadd.f32 %v1709, %v2038
        %v2097 = vadd.f32 %v1710, %v2043
        %v2098 = vadd.f32 %v1711, %v2048
        %v2099 = vadd.f32 %v1712, %v2053
        %v2100 = vadd.f32 %v1713, %v2058
        %v2101 = vadd.f32 %v1714, %v2063
        %v2102 = vadd.f32 %v1715, %v2068
        %v2103 = vld [vmem:[%s1328 + $0x2] sm:$0xff]
        %v2104 = vld [vmem:[%s1328 + $0xa] sm:$0xff]
        %v2105 = vld [vmem:[%s1328 + $0x1a] sm:$0xff]
        %v2106 = vld [vmem:[%s1328 + $0x22] sm:$0xff]
        %v2107 = vld [vmem:[%s1328 + $0x32] sm:$0xff]
        %v2108 = vld [vmem:[%s1328 + $0x3a] sm:$0xff]
        %v2109 = vld [vmem:[%s1328 + $0x4a] sm:$0xff]
        %v2110 = vld [vmem:[%s1328 + $0x52] sm:$0xff]
        %v2111 = vld [vmem:[%s1328 + $0x62] sm:$0xff]
        %v2112 = vld [vmem:[%s1328 + $0x6a] sm:$0xff]
        %v2113 = vld [vmem:[%s1328 + $0x7a] sm:$0xff]
        %v2114 = vld [vmem:[%s1328 + $0x82] sm:$0xff]
        %v2115 = vld [vmem:[%s1328 + $0x92] sm:$0xff]
        %v2116 = vld [vmem:[%s1328 + $0x9a] sm:$0xff]
        %v2117 = vld [vmem:[%s1328 + $0xaa] sm:$0xff]
        %v2118 = vld [vmem:[%s1328 + $0xb2] sm:$0xff]
        %v2119 = vld [vmem:[%s1328 + $0xc2] sm:$0xff]
        %v2120 = vld [vmem:[%s1328 + $0xca] sm:$0xff]
        %v2121 = vld [vmem:[%s1328 + $0xda] sm:$0xff]
        %v2122 = vld [vmem:[%s1328 + $0xe2] sm:$0xff]
        %v2123 = vld [vmem:[%s1328 + $0xf2] sm:$0xff]
        %v2124 = vld [vmem:[%s1328 + $0xfa] sm:$0xff]
        %v2125 = vld [vmem:[%s1328 + $0x10a] sm:$0xff]
        %v2126 = vld [vmem:[%s1328 + $0x112] sm:$0xff]
        %v2127 = vld [vmem:[%s1328 + $0x122] sm:$0xff]
        %v2128 = vld [vmem:[%s1328 + $0x12a] sm:$0xff]
        %v2129 = vld [vmem:[%s1328 + $0x13a] sm:$0xff]
        %v2130 = vld [vmem:[%s1328 + $0x142] sm:$0xff]
        %v2131 = vld [vmem:[%s1328 + $0x152] sm:$0xff]
        %v2132 = vld [vmem:[%s1328 + $0x15a] sm:$0xff]
        %v2133 = vld [vmem:[%s1328 + $0x16a] sm:$0xff]
        %v2134 = vld [vmem:[%s1328 + $0x172] sm:$0xff]
        %s2135 = scalar_lea.vmem %s226, 40
        %v2136 = vld [vmem:[%s2135] sm:$0xff]
        %v2138 = vsel %vm298, %v2103, 0
        %v2141 = vsel %vm298, %v2104, 0
        %v2144 = vsel %vm298, %v2105, 0
        %v2147 = vsel %vm298, %v2106, 0
        %v2150 = vsel %vm298, %v2107, 0
        %v2153 = vsel %vm298, %v2108, 0
        %v2156 = vsel %vm298, %v2109, 0
        %v2159 = vsel %vm298, %v2110, 0
        %v2162 = vsel %vm298, %v2111, 0
        %v2165 = vsel %vm298, %v2112, 0
        %v2168 = vsel %vm298, %v2113, 0
        %v2171 = vsel %vm298, %v2114, 0
        %v2174 = vsel %vm298, %v2115, 0
        %v2177 = vsel %vm298, %v2116, 0
        %v2180 = vsel %vm298, %v2117, 0
        %v2183 = vsel %vm298, %v2118, 0
        %v2186 = vsel %vm298, %v2119, 0
        %v2189 = vsel %vm298, %v2120, 0
        %v2192 = vsel %vm298, %v2121, 0
        %v2195 = vsel %vm298, %v2122, 0
        %v2198 = vsel %vm298, %v2123, 0
        %v2201 = vsel %vm298, %v2124, 0
        %v2204 = vsel %vm298, %v2125, 0
        %v2207 = vsel %vm298, %v2126, 0
        %v2210 = vsel %vm298, %v2127, 0
        %v2213 = vsel %vm298, %v2128, 0
        %v2216 = vsel %vm298, %v2129, 0
        %v2219 = vsel %vm298, %v2130, 0
        %v2222 = vsel %vm298, %v2131, 0
        %v2225 = vsel %vm298, %v2132, 0
        %v2228 = vsel %vm298, %v2133, 0
        %v2231 = vsel %vm298, %v2134, 0
        %2233 = vmatprep.subr.mxu0 0.0
        %2234 = vmatpush1.msra.mxu0 %v2136
        %2235 = vmatprep.subr.mxu0 0.0
        %2236 = vmatpush1.msra.mxu0 0.0
        %2237 = vmatprep.subr.mxu0 0.0
        %2238 = vmatpush1.msra.mxu0 0.0
        %2239 = vmatprep.subr.mxu0 0.0
        %2240 = vmatpush1.msra.mxu0 0.0
        %2241 = vmatprep.subr.mxu0 0.0
        %2242 = vmatpush1.msra.mxu0 0.0
        %2243 = vmatprep.subr.mxu0 0.0
        %2244 = vmatpush1.msra.mxu0 0.0
        %2245 = vmatprep.subr.mxu0 0.0
        %2246 = vmatpush1.msra.mxu0 0.0
        %2247 = vmatprep.subr.mxu0 0.0
        %2248 = vmatpush1.msra.mxu0 0.0
        %2249 = vmatprep.subr.mxu0 0.0
        %2250 = vmatpush1.msra.mxu0 0.0
        %2251 = vmatprep.subr.mxu0 0.0
        %2252 = vmatpush1.msra.mxu0 0.0
        %2253 = vmatprep.subr.mxu0 0.0
        %2254 = vmatpush1.msra.mxu0 0.0
        %2255 = vmatprep.subr.mxu0 0.0
        %2256 = vmatpush1.msra.mxu0 0.0
        %2257 = vmatprep.subr.mxu0 0.0
        %2258 = vmatpush1.msra.mxu0 0.0
        %2259 = vmatprep.subr.mxu0 0.0
        %2260 = vmatpush1.msra.mxu0 0.0
        %2261 = vmatprep.subr.mxu0 0.0
        %2262 = vmatpush1.msra.mxu0 0.0
        %2263 = vmatprep.subr.mxu0 0.0
        %2264 = vmatpush1.msra.mxu0 0.0
        %2265 = vmatprep.subr.mxu0 0.0
        %2266 = vmatpush1.msra.mxu0 0.0
        %2267 = vmatprep.subr.mxu0 0.0
        %2268 = vmatpush1.msra.mxu0 0.0
        %2269 = vmatprep.subr.mxu0 0.0
        %2270 = vmatpush1.msra.mxu0 0.0
        %2271 = vmatprep.subr.mxu0 0.0
        %2272 = vmatpush1.msra.mxu0 0.0
        %2273 = vmatprep.subr.mxu0 0.0
        %2274 = vmatpush1.msra.mxu0 0.0
        %2275 = vmatprep.subr.mxu0 0.0
        %2276 = vmatpush1.msra.mxu0 0.0
        %2277 = vmatprep.subr.mxu0 0.0
        %2278 = vmatpush1.msra.mxu0 0.0
        %2279 = vmatprep.subr.mxu0 0.0
        %2280 = vmatpush1.msra.mxu0 0.0
        %2281 = vmatprep.subr.mxu0 0.0
        %2282 = vmatpush1.msra.mxu0 0.0
        %2283 = vmatprep.subr.mxu0 0.0
        %2284 = vmatpush1.msra.mxu0 0.0
        %2285 = vmatprep.subr.mxu0 0.0
        %2286 = vmatpush1.msra.mxu0 0.0
        %2287 = vmatprep.subr.mxu0 0.0
        %2288 = vmatpush1.msra.mxu0 0.0
        %2289 = vmatprep.subr.mxu0 0.0
        %2290 = vmatpush1.msra.mxu0 0.0
        %2291 = vmatprep.subr.mxu0 0.0
        %2292 = vmatpush1.msra.mxu0 0.0
        %2293 = vmatprep.subr.mxu0 0.0
        %2294 = vmatpush1.msra.mxu0 0.0
        %2295 = vmatprep.subr.mxu0 0.0
        %2296 = vmatpush1.msra.mxu0 0.0
        %2297 = vmatprep.mubr.f32.mxu0 0.0
        %2298 = vmatmul.mubr.f32.gmra.mrb[0].mxu0 %v2138
        %v2299 = vpop.f32.mrb[0].mxu0
        %v2300 = vadd.f32 0.0, %v2299
        %v2301 = vpop.f32.mrb[0].mxu0
        %2302 = vmatprep.mubr.f32.mxu0 0.0
        %2303 = vmatmul.mubr.f32.gmra.mrb[0].mxu0 %v2141
        %v2304 = vpop.f32.mrb[0].mxu0
        %v2305 = vadd.f32 0.0, %v2304
        %v2306 = vpop.f32.mrb[0].mxu0
        %2307 = vmatprep.mubr.f32.mxu0 0.0
        %2308 = vmatmul.mubr.f32.gmra.mrb[0].mxu0 %v2144
        %v2309 = vpop.f32.mrb[0].mxu0
        %v2310 = vadd.f32 0.0, %v2309
        %v2311 = vpop.f32.mrb[0].mxu0
        %2312 = vmatprep.mubr.f32.mxu0 0.0
        %2313 = vmatmul.mubr.f32.gmra.mrb[0].mxu0 %v2147
        %v2314 = vpop.f32.mrb[0].mxu0
        %v2315 = vadd.f32 0.0, %v2314
        %v2316 = vpop.f32.mrb[0].mxu0
        %2317 = vmatprep.mubr.f32.mxu0 0.0
        %2318 = vmatmul.mubr.f32.gmra.mrb[0].mxu0 %v2150
        %v2319 = vpop.f32.mrb[0].mxu0
        %v2320 = vadd.f32 0.0, %v2319
        %v2321 = vpop.f32.mrb[0].mxu0
        %2322 = vmatprep.mubr.f32.mxu0 0.0
        %2323 = vmatmul.mubr.f32.gmra.mrb[0].mxu0 %v2153
        %v2324 = vpop.f32.mrb[0].mxu0
        %v2325 = vadd.f32 0.0, %v2324
        %v2326 = vpop.f32.mrb[0].mxu0
        %2327 = vmatprep.mubr.f32.mxu0 0.0
        %2328 = vmatmul.mubr.f32.gmra.mrb[0].mxu0 %v2156
        %v2329 = vpop.f32.mrb[0].mxu0
        %v2330 = vadd.f32 0.0, %v2329
        %v2331 = vpop.f32.mrb[0].mxu0
        %2332 = vmatprep.mubr.f32.mxu0 0.0
        %2333 = vmatmul.mubr.f32.gmra.mrb[0].mxu0 %v2159
        %v2334 = vpop.f32.mrb[0].mxu0
        %v2335 = vadd.f32 0.0, %v2334
        %v2336 = vpop.f32.mrb[0].mxu0
        %2337 = vmatprep.mubr.f32.mxu0 0.0
        %2338 = vmatmul.mubr.f32.gmra.mrb[0].mxu0 %v2162
        %v2339 = vpop.f32.mrb[0].mxu0
        %v2340 = vadd.f32 0.0, %v2339
        %v2341 = vpop.f32.mrb[0].mxu0
        %2342 = vmatprep.mubr.f32.mxu0 0.0
        %2343 = vmatmul.mubr.f32.gmra.mrb[0].mxu0 %v2165
        %v2344 = vpop.f32.mrb[0].mxu0
        %v2345 = vadd.f32 0.0, %v2344
        %v2346 = vpop.f32.mrb[0].mxu0
        %2347 = vmatprep.mubr.f32.mxu0 0.0
        %2348 = vmatmul.mubr.f32.gmra.mrb[0].mxu0 %v2168
        %v2349 = vpop.f32.mrb[0].mxu0
        %v2350 = vadd.f32 0.0, %v2349
        %v2351 = vpop.f32.mrb[0].mxu0
        %2352 = vmatprep.mubr.f32.mxu0 0.0
        %2353 = vmatmul.mubr.f32.gmra.mrb[0].mxu0 %v2171
        %v2354 = vpop.f32.mrb[0].mxu0
        %v2355 = vadd.f32 0.0, %v2354
        %v2356 = vpop.f32.mrb[0].mxu0
        %2357 = vmatprep.mubr.f32.mxu0 0.0
        %2358 = vmatmul.mubr.f32.gmra.mrb[0].mxu0 %v2174
        %v2359 = vpop.f32.mrb[0].mxu0
        %v2360 = vadd.f32 0.0, %v2359
        %v2361 = vpop.f32.mrb[0].mxu0
        %2362 = vmatprep.mubr.f32.mxu0 0.0
        %2363 = vmatmul.mubr.f32.gmra.mrb[0].mxu0 %v2177
        %v2364 = vpop.f32.mrb[0].mxu0
        %v2365 = vadd.f32 0.0, %v2364
        %v2366 = vpop.f32.mrb[0].mxu0
        %2367 = vmatprep.mubr.f32.mxu0 0.0
        %2368 = vmatmul.mubr.f32.gmra.mrb[0].mxu0 %v2180
        %v2369 = vpop.f32.mrb[0].mxu0
        %v2370 = vadd.f32 0.0, %v2369
        %v2371 = vpop.f32.mrb[0].mxu0
        %2372 = vmatprep.mubr.f32.mxu0 0.0
        %2373 = vmatmul.mubr.f32.gmra.mrb[0].mxu0 %v2183
        %v2374 = vpop.f32.mrb[0].mxu0
        %v2375 = vadd.f32 0.0, %v2374
        %v2376 = vpop.f32.mrb[0].mxu0
        %2377 = vmatprep.mubr.f32.mxu0 0.0
        %2378 = vmatmul.mubr.f32.gmra.mrb[0].mxu0 %v2186
        %v2379 = vpop.f32.mrb[0].mxu0
        %v2380 = vadd.f32 0.0, %v2379
        %v2381 = vpop.f32.mrb[0].mxu0
        %2382 = vmatprep.mubr.f32.mxu0 0.0
        %2383 = vmatmul.mubr.f32.gmra.mrb[0].mxu0 %v2189
        %v2384 = vpop.f32.mrb[0].mxu0
        %v2385 = vadd.f32 0.0, %v2384
        %v2386 = vpop.f32.mrb[0].mxu0
        %2387 = vmatprep.mubr.f32.mxu0 0.0
        %2388 = vmatmul.mubr.f32.gmra.mrb[0].mxu0 %v2192
        %v2389 = vpop.f32.mrb[0].mxu0
        %v2390 = vadd.f32 0.0, %v2389
        %v2391 = vpop.f32.mrb[0].mxu0
        %2392 = vmatprep.mubr.f32.mxu0 0.0
        %2393 = vmatmul.mubr.f32.gmra.mrb[0].mxu0 %v2195
        %v2394 = vpop.f32.mrb[0].mxu0
        %v2395 = vadd.f32 0.0, %v2394
        %v2396 = vpop.f32.mrb[0].mxu0
        %2397 = vmatprep.mubr.f32.mxu0 0.0
        %2398 = vmatmul.mubr.f32.gmra.mrb[0].mxu0 %v2198
        %v2399 = vpop.f32.mrb[0].mxu0
        %v2400 = vadd.f32 0.0, %v2399
        %v2401 = vpop.f32.mrb[0].mxu0
        %2402 = vmatprep.mubr.f32.mxu0 0.0
        %2403 = vmatmul.mubr.f32.gmra.mrb[0].mxu0 %v2201
        %v2404 = vpop.f32.mrb[0].mxu0
        %v2405 = vadd.f32 0.0, %v2404
        %v2406 = vpop.f32.mrb[0].mxu0
        %2407 = vmatprep.mubr.f32.mxu0 0.0
        %2408 = vmatmul.mubr.f32.gmra.mrb[0].mxu0 %v2204
        %v2409 = vpop.f32.mrb[0].mxu0
        %v2410 = vadd.f32 0.0, %v2409
        %v2411 = vpop.f32.mrb[0].mxu0
        %2412 = vmatprep.mubr.f32.mxu0 0.0
        %2413 = vmatmul.mubr.f32.gmra.mrb[0].mxu0 %v2207
        %v2414 = vpop.f32.mrb[0].mxu0
        %v2415 = vadd.f32 0.0, %v2414
        %v2416 = vpop.f32.mrb[0].mxu0
        %2417 = vmatprep.mubr.f32.mxu0 0.0
        %2418 = vmatmul.mubr.f32.gmra.mrb[0].mxu0 %v2210
        %v2419 = vpop.f32.mrb[0].mxu0
        %v2420 = vadd.f32 0.0, %v2419
        %v2421 = vpop.f32.mrb[0].mxu0
        %2422 = vmatprep.mubr.f32.mxu0 0.0
        %2423 = vmatmul.mubr.f32.gmra.mrb[0].mxu0 %v2213
        %v2424 = vpop.f32.mrb[0].mxu0
        %v2425 = vadd.f32 0.0, %v2424
        %v2426 = vpop.f32.mrb[0].mxu0
        %2427 = vmatprep.mubr.f32.mxu0 0.0
        %2428 = vmatmul.mubr.f32.gmra.mrb[0].mxu0 %v2216
        %v2429 = vpop.f32.mrb[0].mxu0
        %v2430 = vadd.f32 0.0, %v2429
        %v2431 = vpop.f32.mrb[0].mxu0
        %2432 = vmatprep.mubr.f32.mxu0 0.0
        %2433 = vmatmul.mubr.f32.gmra.mrb[0].mxu0 %v2219
        %v2434 = vpop.f32.mrb[0].mxu0
        %v2435 = vadd.f32 0.0, %v2434
        %v2436 = vpop.f32.mrb[0].mxu0
        %2437 = vmatprep.mubr.f32.mxu0 0.0
        %2438 = vmatmul.mubr.f32.gmra.mrb[0].mxu0 %v2222
        %v2439 = vpop.f32.mrb[0].mxu0
        %v2440 = vadd.f32 0.0, %v2439
        %v2441 = vpop.f32.mrb[0].mxu0
        %2442 = vmatprep.mubr.f32.mxu0 0.0
        %2443 = vmatmul.mubr.f32.gmra.mrb[0].mxu0 %v2225
        %v2444 = vpop.f32.mrb[0].mxu0
        %v2445 = vadd.f32 0.0, %v2444
        %v2446 = vpop.f32.mrb[0].mxu0
        %2447 = vmatprep.mubr.f32.mxu0 0.0
        %2448 = vmatmul.mubr.f32.gmra.mrb[0].mxu0 %v2228
        %v2449 = vpop.f32.mrb[0].mxu0
        %v2450 = vadd.f32 0.0, %v2449
        %v2451 = vpop.f32.mrb[0].mxu0
        %2452 = vmatprep.mubr.f32.mxu0 0.0
        %2453 = vmatmul.mubr.f32.gmra.mrb[0].mxu0 %v2231
        %v2454 = vpop.f32.mrb[0].mxu0
        %v2455 = vadd.f32 0.0, %v2454
        %v2456 = vpop.f32.mrb[0].mxu0
        %2457 = vdwg.mxu0
        %v2458 = vadd.f32 %v2071, %v2300
        %v2459 = vadd.f32 %v2072, %v2305
        %v2460 = vadd.f32 %v2073, %v2310
        %v2461 = vadd.f32 %v2074, %v2315
        %v2462 = vadd.f32 %v2075, %v2320
        %v2463 = vadd.f32 %v2076, %v2325
        %v2464 = vadd.f32 %v2077, %v2330
        %v2465 = vadd.f32 %v2078, %v2335
        %v2466 = vadd.f32 %v2079, %v2340
        %v2467 = vadd.f32 %v2080, %v2345
        %v2468 = vadd.f32 %v2081, %v2350
        %v2469 = vadd.f32 %v2082, %v2355
        %v2470 = vadd.f32 %v2083, %v2360
        %v2471 = vadd.f32 %v2084, %v2365
        %v2472 = vadd.f32 %v2085, %v2370
        %v2473 = vadd.f32 %v2086, %v2375
        %v2474 = vadd.f32 %v2087, %v2380
        %v2475 = vadd.f32 %v2088, %v2385
        %v2476 = vadd.f32 %v2089, %v2390
        %v2477 = vadd.f32 %v2090, %v2395
        %v2478 = vadd.f32 %v2091, %v2400
        %v2479 = vadd.f32 %v2092, %v2405
        %v2480 = vadd.f32 %v2093, %v2410
        %v2481 = vadd.f32 %v2094, %v2415
        %v2482 = vadd.f32 %v2095, %v2420
        %v2483 = vadd.f32 %v2096, %v2425
        %v2484 = vadd.f32 %v2097, %v2430
        %v2485 = vadd.f32 %v2098, %v2435
        %v2486 = vadd.f32 %v2099, %v2440
        %v2487 = vadd.f32 %v2100, %v2445
        %v2488 = vadd.f32 %v2101, %v2450
        %v2489 = vadd.f32 %v2102, %v2455
        %s2490 = scalar_lea.vmem %s221, 48
        %v2491 = vld [vmem:[%s2490] sm:$0xff]
        %v2492 = vld [vmem:[%s2490 + $0x8] sm:$0xff]
        %v2493 = vld [vmem:[%s2490 + $0x18] sm:$0xff]
        %v2494 = vld [vmem:[%s2490 + $0x20] sm:$0xff]
        %v2495 = vld [vmem:[%s2490 + $0x30] sm:$0xff]
        %v2496 = vld [vmem:[%s2490 + $0x38] sm:$0xff]
        %v2497 = vld [vmem:[%s2490 + $0x48] sm:$0xff]
        %v2498 = vld [vmem:[%s2490 + $0x50] sm:$0xff]
        %v2499 = vld [vmem:[%s2490 + $0x60] sm:$0xff]
        %v2500 = vld [vmem:[%s2490 + $0x68] sm:$0xff]
        %v2501 = vld [vmem:[%s2490 + $0x78] sm:$0xff]
        %v2502 = vld [vmem:[%s2490 + $0x80] sm:$0xff]
        %v2503 = vld [vmem:[%s2490 + $0x90] sm:$0xff]
        %v2504 = vld [vmem:[%s2490 + $0x98] sm:$0xff]
        %v2505 = vld [vmem:[%s2490 + $0xa8] sm:$0xff]
        %v2506 = vld [vmem:[%s2490 + $0xb0] sm:$0xff]
        %v2507 = vld [vmem:[%s2490 + $0xc0] sm:$0xff]
        %v2508 = vld [vmem:[%s2490 + $0xc8] sm:$0xff]
        %v2509 = vld [vmem:[%s2490 + $0xd8] sm:$0xff]
        %v2510 = vld [vmem:[%s2490 + $0xe0] sm:$0xff]
        %v2511 = vld [vmem:[%s2490 + $0xf0] sm:$0xff]
        %v2512 = vld [vmem:[%s2490 + $0xf8] sm:$0xff]
        %v2513 = vld [vmem:[%s2490 + $0x108] sm:$0xff]
        %v2514 = vld [vmem:[%s2490 + $0x110] sm:$0xff]
        %v2515 = vld [vmem:[%s2490 + $0x120] sm:$0xff]
        %v2516 = vld [vmem:[%s2490 + $0x128] sm:$0xff]
        %v2517 = vld [vmem:[%s2490 + $0x138] sm:$0xff]
        %v2518 = vld [vmem:[%s2490 + $0x140] sm:$0xff]
        %v2519 = vld [vmem:[%s2490 + $0x150] sm:$0xff]
        %v2520 = vld [vmem:[%s2490 + $0x158] sm:$0xff]
        %v2521 = vld [vmem:[%s2490 + $0x168] sm:$0xff]
        %v2522 = vld [vmem:[%s2490 + $0x170] sm:$0xff]
        %s2523 = scalar_lea.vmem %s226, 48
        %v2524 = vld [vmem:[%s2523] sm:$0xff]
        %v2526 = vsel %vm298, %v2491, 0
        %v2529 = vsel %vm298, %v2492, 0
        %v2532 = vsel %vm298, %v2493, 0
        %v2535 = vsel %vm298, %v2494, 0
        %v2538 = vsel %vm298, %v2495, 0
        %v2541 = vsel %vm298, %v2496, 0
        %v2544 = vsel %vm298, %v2497, 0
        %v2547 = vsel %vm298, %v2498, 0
        %v2550 = vsel %vm298, %v2499, 0
        %v2553 = vsel %vm298, %v2500, 0
        %v2556 = vsel %vm298, %v2501, 0
        %v2559 = vsel %vm298, %v2502, 0
        %v2562 = vsel %vm298, %v2503, 0
        %v2565 = vsel %vm298, %v2504, 0
        %v2568 = vsel %vm298, %v2505, 0
        %v2571 = vsel %vm298, %v2506, 0
        %v2574 = vsel %vm298, %v2507, 0
        %v2577 = vsel %vm298, %v2508, 0
        %v2580 = vsel %vm298, %v2509, 0
        %v2583 = vsel %vm298, %v2510, 0
        %v2586 = vsel %vm298, %v2511, 0
        %v2589 = vsel %vm298, %v2512, 0
        %v2592 = vsel %vm298, %v2513, 0
        %v2595 = vsel %vm298, %v2514, 0
        %v2598 = vsel %vm298, %v2515, 0
        %v2601 = vsel %vm298, %v2516, 0
        %v2604 = vsel %vm298, %v2517, 0
        %v2607 = vsel %vm298, %v2518, 0
        %v2610 = vsel %vm298, %v2519, 0
        %v2613 = vsel %vm298, %v2520, 0
        %v2616 = vsel %vm298, %v2521, 0
        %v2619 = vsel %vm298, %v2522, 0
        %2621 = vmatprep.subr.mxu0 0.0
        %2622 = vmatpush1.msra.mxu0 %v2524
        %2623 = vmatprep.subr.mxu0 0.0
        %2624 = vmatpush1.msra.mxu0 0.0
        %2625 = vmatprep.subr.mxu0 0.0
        %2626 = vmatpush1.msra.mxu0 0.0
        %2627 = vmatprep.subr.mxu0 0.0
        %2628 = vmatpush1.msra.mxu0 0.0
        %2629 = vmatprep.subr.mxu0 0.0
        %2630 = vmatpush1.msra.mxu0 0.0
        %2631 = vmatprep.subr.mxu0 0.0
        %2632 = vmatpush1.msra.mxu0 0.0
        %2633 = vmatprep.subr.mxu0 0.0
        %2634 = vmatpush1.msra.mxu0 0.0
        %2635 = vmatprep.subr.mxu0 0.0
        %2636 = vmatpush1.msra.mxu0 0.0
        %2637 = vmatprep.subr.mxu0 0.0
        %2638 = vmatpush1.msra.mxu0 0.0
        %2639 = vmatprep.subr.mxu0 0.0
        %2640 = vmatpush1.msra.mxu0 0.0
        %2641 = vmatprep.subr.mxu0 0.0
        %2642 = vmatpush1.msra.mxu0 0.0
        %2643 = vmatprep.subr.mxu0 0.0
        %2644 = vmatpush1.msra.mxu0 0.0
        %2645 = vmatprep.subr.mxu0 0.0
        %2646 = vmatpush1.msra.mxu0 0.0
        %2647 = vmatprep.subr.mxu0 0.0
        %2648 = vmatpush1.msra.mxu0 0.0
        %2649 = vmatprep.subr.mxu0 0.0
        %2650 = vmatpush1.msra.mxu0 0.0
        %2651 = vmatprep.subr.mxu0 0.0
        %2652 = vmatpush1.msra.mxu0 0.0
        %2653 = vmatprep.subr.mxu0 0.0
        %2654 = vmatpush1.msra.mxu0 0.0
        %2655 = vmatprep.subr.mxu0 0.0
        %2656 = vmatpush1.msra.mxu0 0.0
        %2657 = vmatprep.subr.mxu0 0.0
        %2658 = vmatpush1.msra.mxu0 0.0
        %2659 = vmatprep.subr.mxu0 0.0
        %2660 = vmatpush1.msra.mxu0 0.0
        %2661 = vmatprep.subr.mxu0 0.0
        %2662 = vmatpush1.msra.mxu0 0.0
        %2663 = vmatprep.subr.mxu0 0.0
        %2664 = vmatpush1.msra.mxu0 0.0
        %2665 = vmatprep.subr.mxu0 0.0
        %2666 = vmatpush1.msra.mxu0 0.0
        %2667 = vmatprep.subr.mxu0 0.0
        %2668 = vmatpush1.msra.mxu0 0.0
        %2669 = vmatprep.subr.mxu0 0.0
        %2670 = vmatpush1.msra.mxu0 0.0
        %2671 = vmatprep.subr.mxu0 0.0
        %2672 = vmatpush1.msra.mxu0 0.0
        %2673 = vmatprep.subr.mxu0 0.0
        %2674 = vmatpush1.msra.mxu0 0.0
        %2675 = vmatprep.subr.mxu0 0.0
        %2676 = vmatpush1.msra.mxu0 0.0
        %2677 = vmatprep.subr.mxu0 0.0
        %2678 = vmatpush1.msra.mxu0 0.0
        %2679 = vmatprep.subr.mxu0 0.0
        %2680 = vmatpush1.msra.mxu0 0.0
        %2681 = vmatprep.subr.mxu0 0.0
        %2682 = vmatpush1.msra.mxu0 0.0
        %2683 = vmatprep.subr.mxu0 0.0
        %2684 = vmatpush1.msra.mxu0 0.0
        %2685 = vmatprep.mubr.f32.mxu0 0.0
        %2686 = vmatmul.mubr.f32.gmra.mrb[0].mxu0 %v2526
        %v2687 = vpop.f32.mrb[0].mxu0
        %v2688 = vadd.f32 0.0, %v2687
        %v2689 = vpop.f32.mrb[0].mxu0
        %2690 = vmatprep.mubr.f32.mxu0 0.0
        %2691 = vmatmul.mubr.f32.gmra.mrb[0].mxu0 %v2529
        %v2692 = vpop.f32.mrb[0].mxu0
        %v2693 = vadd.f32 0.0, %v2692
        %v2694 = vpop.f32.mrb[0].mxu0
        %2695 = vmatprep.mubr.f32.mxu0 0.0
        %2696 = vmatmul.mubr.f32.gmra.mrb[0].mxu0 %v2532
        %v2697 = vpop.f32.mrb[0].mxu0
        %v2698 = vadd.f32 0.0, %v2697
        %v2699 = vpop.f32.mrb[0].mxu0
        %2700 = vmatprep.mubr.f32.mxu0 0.0
        %2701 = vmatmul.mubr.f32.gmra.mrb[0].mxu0 %v2535
        %v2702 = vpop.f32.mrb[0].mxu0
        %v2703 = vadd.f32 0.0, %v2702
        %v2704 = vpop.f32.mrb[0].mxu0
        %2705 = vmatprep.mubr.f32.mxu0 0.0
        %2706 = vmatmul.mubr.f32.gmra.mrb[0].mxu0 %v2538
        %v2707 = vpop.f32.mrb[0].mxu0
        %v2708 = vadd.f32 0.0, %v2707
        %v2709 = vpop.f32.mrb[0].mxu0
        %2710 = vmatprep.mubr.f32.mxu0 0.0
        %2711 = vmatmul.mubr.f32.gmra.mrb[0].mxu0 %v2541
        %v2712 = vpop.f32.mrb[0].mxu0
        %v2713 = vadd.f32 0.0, %v2712
        %v2714 = vpop.f32.mrb[0].mxu0
        %2715 = vmatprep.mubr.f32.mxu0 0.0
        %2716 = vmatmul.mubr.f32.gmra.mrb[0].mxu0 %v2544
        %v2717 = vpop.f32.mrb[0].mxu0
        %v2718 = vadd.f32 0.0, %v2717
        %v2719 = vpop.f32.mrb[0].mxu0
        %2720 = vmatprep.mubr.f32.mxu0 0.0
        %2721 = vmatmul.mubr.f32.gmra.mrb[0].mxu0 %v2547
        %v2722 = vpop.f32.mrb[0].mxu0
        %v2723 = vadd.f32 0.0, %v2722
        %v2724 = vpop.f32.mrb[0].mxu0
        %2725 = vmatprep.mubr.f32.mxu0 0.0
        %2726 = vmatmul.mubr.f32.gmra.mrb[0].mxu0 %v2550
        %v2727 = vpop.f32.mrb[0].mxu0
        %v2728 = vadd.f32 0.0, %v2727
        %v2729 = vpop.f32.mrb[0].mxu0
        %2730 = vmatprep.mubr.f32.mxu0 0.0
        %2731 = vmatmul.mubr.f32.gmra.mrb[0].mxu0 %v2553
        %v2732 = vpop.f32.mrb[0].mxu0
        %v2733 = vadd.f32 0.0, %v2732
        %v2734 = vpop.f32.mrb[0].mxu0
        %2735 = vmatprep.mubr.f32.mxu0 0.0
        %2736 = vmatmul.mubr.f32.gmra.mrb[0].mxu0 %v2556
        %v2737 = vpop.f32.mrb[0].mxu0
        %v2738 = vadd.f32 0.0, %v2737
        %v2739 = vpop.f32.mrb[0].mxu0
        %2740 = vmatprep.mubr.f32.mxu0 0.0
        %2741 = vmatmul.mubr.f32.gmra.mrb[0].mxu0 %v2559
        %v2742 = vpop.f32.mrb[0].mxu0
        %v2743 = vadd.f32 0.0, %v2742
        %v2744 = vpop.f32.mrb[0].mxu0
        %2745 = vmatprep.mubr.f32.mxu0 0.0
        %2746 = vmatmul.mubr.f32.gmra.mrb[0].mxu0 %v2562
        %v2747 = vpop.f32.mrb[0].mxu0
        %v2748 = vadd.f32 0.0, %v2747
        %v2749 = vpop.f32.mrb[0].mxu0
        %2750 = vmatprep.mubr.f32.mxu0 0.0
        %2751 = vmatmul.mubr.f32.gmra.mrb[0].mxu0 %v2565
        %v2752 = vpop.f32.mrb[0].mxu0
        %v2753 = vadd.f32 0.0, %v2752
        %v2754 = vpop.f32.mrb[0].mxu0
        %2755 = vmatprep.mubr.f32.mxu0 0.0
        %2756 = vmatmul.mubr.f32.gmra.mrb[0].mxu0 %v2568
        %v2757 = vpop.f32.mrb[0].mxu0
        %v2758 = vadd.f32 0.0, %v2757
        %v2759 = vpop.f32.mrb[0].mxu0
        %2760 = vmatprep.mubr.f32.mxu0 0.0
        %2761 = vmatmul.mubr.f32.gmra.mrb[0].mxu0 %v2571
        %v2762 = vpop.f32.mrb[0].mxu0
        %v2763 = vadd.f32 0.0, %v2762
        %v2764 = vpop.f32.mrb[0].mxu0
        %2765 = vmatprep.mubr.f32.mxu0 0.0
        %2766 = vmatmul.mubr.f32.gmra.mrb[0].mxu0 %v2574
        %v2767 = vpop.f32.mrb[0].mxu0
        %v2768 = vadd.f32 0.0, %v2767
        %v2769 = vpop.f32.mrb[0].mxu0
        %2770 = vmatprep.mubr.f32.mxu0 0.0
        %2771 = vmatmul.mubr.f32.gmra.mrb[0].mxu0 %v2577
        %v2772 = vpop.f32.mrb[0].mxu0
        %v2773 = vadd.f32 0.0, %v2772
        %v2774 = vpop.f32.mrb[0].mxu0
        %2775 = vmatprep.mubr.f32.mxu0 0.0
        %2776 = vmatmul.mubr.f32.gmra.mrb[0].mxu0 %v2580
        %v2777 = vpop.f32.mrb[0].mxu0
        %v2778 = vadd.f32 0.0, %v2777
        %v2779 = vpop.f32.mrb[0].mxu0
        %2780 = vmatprep.mubr.f32.mxu0 0.0
        %2781 = vmatmul.mubr.f32.gmra.mrb[0].mxu0 %v2583
        %v2782 = vpop.f32.mrb[0].mxu0
        %v2783 = vadd.f32 0.0, %v2782
        %v2784 = vpop.f32.mrb[0].mxu0
        %2785 = vmatprep.mubr.f32.mxu0 0.0
        %2786 = vmatmul.mubr.f32.gmra.mrb[0].mxu0 %v2586
        %v2787 = vpop.f32.mrb[0].mxu0
        %v2788 = vadd.f32 0.0, %v2787
        %v2789 = vpop.f32.mrb[0].mxu0
        %2790 = vmatprep.mubr.f32.mxu0 0.0
        %2791 = vmatmul.mubr.f32.gmra.mrb[0].mxu0 %v2589
        %v2792 = vpop.f32.mrb[0].mxu0
        %v2793 = vadd.f32 0.0, %v2792
        %v2794 = vpop.f32.mrb[0].mxu0
        %2795 = vmatprep.mubr.f32.mxu0 0.0
        %2796 = vmatmul.mubr.f32.gmra.mrb[0].mxu0 %v2592
        %v2797 = vpop.f32.mrb[0].mxu0
        %v2798 = vadd.f32 0.0, %v2797
        %v2799 = vpop.f32.mrb[0].mxu0
        %2800 = vmatprep.mubr.f32.mxu0 0.0
        %2801 = vmatmul.mubr.f32.gmra.mrb[0].mxu0 %v2595
        %v2802 = vpop.f32.mrb[0].mxu0
        %v2803 = vadd.f32 0.0, %v2802
        %v2804 = vpop.f32.mrb[0].mxu0
        %2805 = vmatprep.mubr.f32.mxu0 0.0
        %2806 = vmatmul.mubr.f32.gmra.mrb[0].mxu0 %v2598
        %v2807 = vpop.f32.mrb[0].mxu0
        %v2808 = vadd.f32 0.0, %v2807
        %v2809 = vpop.f32.mrb[0].mxu0
        %2810 = vmatprep.mubr.f32.mxu0 0.0
        %2811 = vmatmul.mubr.f32.gmra.mrb[0].mxu0 %v2601
        %v2812 = vpop.f32.mrb[0].mxu0
        %v2813 = vadd.f32 0.0, %v2812
        %v2814 = vpop.f32.mrb[0].mxu0
        %2815 = vmatprep.mubr.f32.mxu0 0.0
        %2816 = vmatmul.mubr.f32.gmra.mrb[0].mxu0 %v2604
        %v2817 = vpop.f32.mrb[0].mxu0
        %v2818 = vadd.f32 0.0, %v2817
        %v2819 = vpop.f32.mrb[0].mxu0
        %2820 = vmatprep.mubr.f32.mxu0 0.0
        %2821 = vmatmul.mubr.f32.gmra.mrb[0].mxu0 %v2607
        %v2822 = vpop.f32.mrb[0].mxu0
        %v2823 = vadd.f32 0.0, %v2822
        %v2824 = vpop.f32.mrb[0].mxu0
        %2825 = vmatprep.mubr.f32.mxu0 0.0
        %2826 = vmatmul.mubr.f32.gmra.mrb[0].mxu0 %v2610
        %v2827 = vpop.f32.mrb[0].mxu0
        %v2828 = vadd.f32 0.0, %v2827
        %v2829 = vpop.f32.mrb[0].mxu0
        %2830 = vmatprep.mubr.f32.mxu0 0.0
        %2831 = vmatmul.mubr.f32.gmra.mrb[0].mxu0 %v2613
        %v2832 = vpop.f32.mrb[0].mxu0
        %v2833 = vadd.f32 0.0, %v2832
        %v2834 = vpop.f32.mrb[0].mxu0
        %2835 = vmatprep.mubr.f32.mxu0 0.0
        %2836 = vmatmul.mubr.f32.gmra.mrb[0].mxu0 %v2616
        %v2837 = vpop.f32.mrb[0].mxu0
        %v2838 = vadd.f32 0.0, %v2837
        %v2839 = vpop.f32.mrb[0].mxu0
        %2840 = vmatprep.mubr.f32.mxu0 0.0
        %2841 = vmatmul.mubr.f32.gmra.mrb[0].mxu0 %v2619
        %v2842 = vpop.f32.mrb[0].mxu0
        %v2843 = vadd.f32 0.0, %v2842
        %v2844 = vpop.f32.mrb[0].mxu0
        %2845 = vdwg.mxu0
        %v2846 = vadd.f32 %v2458, %v2688
        %v2847 = vadd.f32 %v2459, %v2693
        %v2848 = vadd.f32 %v2460, %v2698
        %v2849 = vadd.f32 %v2461, %v2703
        %v2850 = vadd.f32 %v2462, %v2708
        %v2851 = vadd.f32 %v2463, %v2713
        %v2852 = vadd.f32 %v2464, %v2718
        %v2853 = vadd.f32 %v2465, %v2723
        %v2854 = vadd.f32 %v2466, %v2728
        %v2855 = vadd.f32 %v2467, %v2733
        %v2856 = vadd.f32 %v2468, %v2738
        %v2857 = vadd.f32 %v2469, %v2743
        %v2858 = vadd.f32 %v2470, %v2748
        %v2859 = vadd.f32 %v2471, %v2753
        %v2860 = vadd.f32 %v2472, %v2758
        %v2861 = vadd.f32 %v2473, %v2763
        %v2862 = vadd.f32 %v2474, %v2768
        %v2863 = vadd.f32 %v2475, %v2773
        %v2864 = vadd.f32 %v2476, %v2778
        %v2865 = vadd.f32 %v2477, %v2783
        %v2866 = vadd.f32 %v2478, %v2788
        %v2867 = vadd.f32 %v2479, %v2793
        %v2868 = vadd.f32 %v2480, %v2798
        %v2869 = vadd.f32 %v2481, %v2803
        %v2870 = vadd.f32 %v2482, %v2808
        %v2871 = vadd.f32 %v2483, %v2813
        %v2872 = vadd.f32 %v2484, %v2818
        %v2873 = vadd.f32 %v2485, %v2823
        %v2874 = vadd.f32 %v2486, %v2828
        %v2875 = vadd.f32 %v2487, %v2833
        %v2876 = vadd.f32 %v2488, %v2838
        %v2877 = vadd.f32 %v2489, %v2843
        %v2878 = vld [vmem:[%s2490 + $0x1] sm:$0xff]
        %v2879 = vld [vmem:[%s2490 + $0x9] sm:$0xff]
        %v2880 = vld [vmem:[%s2490 + $0x19] sm:$0xff]
        %v2881 = vld [vmem:[%s2490 + $0x21] sm:$0xff]
        %v2882 = vld [vmem:[%s2490 + $0x31] sm:$0xff]
        %v2883 = vld [vmem:[%s2490 + $0x39] sm:$0xff]
        %v2884 = vld [vmem:[%s2490 + $0x49] sm:$0xff]
        %v2885 = vld [vmem:[%s2490 + $0x51] sm:$0xff]
        %v2886 = vld [vmem:[%s2490 + $0x61] sm:$0xff]
        %v2887 = vld [vmem:[%s2490 + $0x69] sm:$0xff]
        %v2888 = vld [vmem:[%s2490 + $0x79] sm:$0xff]
        %v2889 = vld [vmem:[%s2490 + $0x81] sm:$0xff]
        %v2890 = vld [vmem:[%s2490 + $0x91] sm:$0xff]
        %v2891 = vld [vmem:[%s2490 + $0x99] sm:$0xff]
        %v2892 = vld [vmem:[%s2490 + $0xa9] sm:$0xff]
        %v2893 = vld [vmem:[%s2490 + $0xb1] sm:$0xff]
        %v2894 = vld [vmem:[%s2490 + $0xc1] sm:$0xff]
        %v2895 = vld [vmem:[%s2490 + $0xc9] sm:$0xff]
        %v2896 = vld [vmem:[%s2490 + $0xd9] sm:$0xff]
        %v2897 = vld [vmem:[%s2490 + $0xe1] sm:$0xff]
        %v2898 = vld [vmem:[%s2490 + $0xf1] sm:$0xff]
        %v2899 = vld [vmem:[%s2490 + $0xf9] sm:$0xff]
        %v2900 = vld [vmem:[%s2490 + $0x109] sm:$0xff]
        %v2901 = vld [vmem:[%s2490 + $0x111] sm:$0xff]
        %v2902 = vld [vmem:[%s2490 + $0x121] sm:$0xff]
        %v2903 = vld [vmem:[%s2490 + $0x129] sm:$0xff]
        %v2904 = vld [vmem:[%s2490 + $0x139] sm:$0xff]
        %v2905 = vld [vmem:[%s2490 + $0x141] sm:$0xff]
        %v2906 = vld [vmem:[%s2490 + $0x151] sm:$0xff]
        %v2907 = vld [vmem:[%s2490 + $0x159] sm:$0xff]
        %v2908 = vld [vmem:[%s2490 + $0x169] sm:$0xff]
        %v2909 = vld [vmem:[%s2490 + $0x171] sm:$0xff]
        %s2910 = scalar_lea.vmem %s226, 56
        %v2911 = vld [vmem:[%s2910] sm:$0xff]
        %v2913 = vsel %vm298, %v2878, 0
        %v2916 = vsel %vm298, %v2879, 0
        %v2919 = vsel %vm298, %v2880, 0
        %v2922 = vsel %vm298, %v2881, 0
        %v2925 = vsel %vm298, %v2882, 0
        %v2928 = vsel %vm298, %v2883, 0
        %v2931 = vsel %vm298, %v2884, 0
        %v2934 = vsel %vm298, %v2885, 0
        %v2937 = vsel %vm298, %v2886, 0
        %v2940 = vsel %vm298, %v2887, 0
        %v2943 = vsel %vm298, %v2888, 0
        %v2946 = vsel %vm298, %v2889, 0
        %v2949 = vsel %vm298, %v2890, 0
        %v2952 = vsel %vm298, %v2891, 0
        %v2955 = vsel %vm298, %v2892, 0
        %v2958 = vsel %vm298, %v2893, 0
        %v2961 = vsel %vm298, %v2894, 0
        %v2964 = vsel %vm298, %v2895, 0
        %v2967 = vsel %vm298, %v2896, 0
        %v2970 = vsel %vm298, %v2897, 0
        %v2973 = vsel %vm298, %v2898, 0
        %v2976 = vsel %vm298, %v2899, 0
        %v2979 = vsel %vm298, %v2900, 0
        %v2982 = vsel %vm298, %v2901, 0
        %v2985 = vsel %vm298, %v2902, 0
        %v2988 = vsel %vm298, %v2903, 0
        %v2991 = vsel %vm298, %v2904, 0
        %v2994 = vsel %vm298, %v2905, 0
        %v2997 = vsel %vm298, %v2906, 0
        %v3000 = vsel %vm298, %v2907, 0
        %v3003 = vsel %vm298, %v2908, 0
        %v3006 = vsel %vm298, %v2909, 0
        %3008 = vmatprep.subr.mxu0 0.0
        %3009 = vmatpush1.msra.mxu0 %v2911
        %3010 = vmatprep.subr.mxu0 0.0
        %3011 = vmatpush1.msra.mxu0 0.0
        %3012 = vmatprep.subr.mxu0 0.0
        %3013 = vmatpush1.msra.mxu0 0.0
        %3014 = vmatprep.subr.mxu0 0.0
        %3015 = vmatpush1.msra.mxu0 0.0
        %3016 = vmatprep.subr.mxu0 0.0
        %3017 = vmatpush1.msra.mxu0 0.0
        %3018 = vmatprep.subr.mxu0 0.0
        %3019 = vmatpush1.msra.mxu0 0.0
        %3020 = vmatprep.subr.mxu0 0.0
        %3021 = vmatpush1.msra.mxu0 0.0
        %3022 = vmatprep.subr.mxu0 0.0
        %3023 = vmatpush1.msra.mxu0 0.0
        %3024 = vmatprep.subr.mxu0 0.0
        %3025 = vmatpush1.msra.mxu0 0.0
        %3026 = vmatprep.subr.mxu0 0.0
        %3027 = vmatpush1.msra.mxu0 0.0
        %3028 = vmatprep.subr.mxu0 0.0
        %3029 = vmatpush1.msra.mxu0 0.0
        %3030 = vmatprep.subr.mxu0 0.0
        %3031 = vmatpush1.msra.mxu0 0.0
        %3032 = vmatprep.subr.mxu0 0.0
        %3033 = vmatpush1.msra.mxu0 0.0
        %3034 = vmatprep.subr.mxu0 0.0
        %3035 = vmatpush1.msra.mxu0 0.0
        %3036 = vmatprep.subr.mxu0 0.0
        %3037 = vmatpush1.msra.mxu0 0.0
        %3038 = vmatprep.subr.mxu0 0.0
        %3039 = vmatpush1.msra.mxu0 0.0
        %3040 = vmatprep.subr.mxu0 0.0
        %3041 = vmatpush1.msra.mxu0 0.0
        %3042 = vmatprep.subr.mxu0 0.0
        %3043 = vmatpush1.msra.mxu0 0.0
        %3044 = vmatprep.subr.mxu0 0.0
        %3045 = vmatpush1.msra.mxu0 0.0
        %3046 = vmatprep.subr.mxu0 0.0
        %3047 = vmatpush1.msra.mxu0 0.0
        %3048 = vmatprep.subr.mxu0 0.0
        %3049 = vmatpush1.msra.mxu0 0.0
        %3050 = vmatprep.subr.mxu0 0.0
        %3051 = vmatpush1.msra.mxu0 0.0
        %3052 = vmatprep.subr.mxu0 0.0
        %3053 = vmatpush1.msra.mxu0 0.0
        %3054 = vmatprep.subr.mxu0 0.0
        %3055 = vmatpush1.msra.mxu0 0.0
        %3056 = vmatprep.subr.mxu0 0.0
        %3057 = vmatpush1.msra.mxu0 0.0
        %3058 = vmatprep.subr.mxu0 0.0
        %3059 = vmatpush1.msra.mxu0 0.0
        %3060 = vmatprep.subr.mxu0 0.0
        %3061 = vmatpush1.msra.mxu0 0.0
        %3062 = vmatprep.subr.mxu0 0.0
        %3063 = vmatpush1.msra.mxu0 0.0
        %3064 = vmatprep.subr.mxu0 0.0
        %3065 = vmatpush1.msra.mxu0 0.0
        %3066 = vmatprep.subr.mxu0 0.0
        %3067 = vmatpush1.msra.mxu0 0.0
        %3068 = vmatprep.subr.mxu0 0.0
        %3069 = vmatpush1.msra.mxu0 0.0
        %3070 = vmatprep.subr.mxu0 0.0
        %3071 = vmatpush1.msra.mxu0 0.0
        %3072 = vmatprep.mubr.f32.mxu0 0.0
        %3073 = vmatmul.mubr.f32.gmra.mrb[0].mxu0 %v2913
        %v3074 = vpop.f32.mrb[0].mxu0
        %v3075 = vadd.f32 0.0, %v3074
        %v3076 = vpop.f32.mrb[0].mxu0
        %3077 = vmatprep.mubr.f32.mxu0 0.0
        %3078 = vmatmul.mubr.f32.gmra.mrb[0].mxu0 %v2916
        %v3079 = vpop.f32.mrb[0].mxu0
        %v3080 = vadd.f32 0.0, %v3079
        %v3081 = vpop.f32.mrb[0].mxu0
        %3082 = vmatprep.mubr.f32.mxu0 0.0
        %3083 = vmatmul.mubr.f32.gmra.mrb[0].mxu0 %v2919
        %v3084 = vpop.f32.mrb[0].mxu0
        %v3085 = vadd.f32 0.0, %v3084
        %v3086 = vpop.f32.mrb[0].mxu0
        %3087 = vmatprep.mubr.f32.mxu0 0.0
        %3088 = vmatmul.mubr.f32.gmra.mrb[0].mxu0 %v2922
        %v3089 = vpop.f32.mrb[0].mxu0
        %v3090 = vadd.f32 0.0, %v3089
        %v3091 = vpop.f32.mrb[0].mxu0
        %3092 = vmatprep.mubr.f32.mxu0 0.0
        %3093 = vmatmul.mubr.f32.gmra.mrb[0].mxu0 %v2925
        %v3094 = vpop.f32.mrb[0].mxu0
        %v3095 = vadd.f32 0.0, %v3094
        %v3096 = vpop.f32.mrb[0].mxu0
        %3097 = vmatprep.mubr.f32.mxu0 0.0
        %3098 = vmatmul.mubr.f32.gmra.mrb[0].mxu0 %v2928
        %v3099 = vpop.f32.mrb[0].mxu0
        %v3100 = vadd.f32 0.0, %v3099
        %v3101 = vpop.f32.mrb[0].mxu0
        %3102 = vmatprep.mubr.f32.mxu0 0.0
        %3103 = vmatmul.mubr.f32.gmra.mrb[0].mxu0 %v2931
        %v3104 = vpop.f32.mrb[0].mxu0
        %v3105 = vadd.f32 0.0, %v3104
        %v3106 = vpop.f32.mrb[0].mxu0
        %3107 = vmatprep.mubr.f32.mxu0 0.0
        %3108 = vmatmul.mubr.f32.gmra.mrb[0].mxu0 %v2934
        %v3109 = vpop.f32.mrb[0].mxu0
        %v3110 = vadd.f32 0.0, %v3109
        %v3111 = vpop.f32.mrb[0].mxu0
        %3112 = vmatprep.mubr.f32.mxu0 0.0
        %3113 = vmatmul.mubr.f32.gmra.mrb[0].mxu0 %v2937
        %v3114 = vpop.f32.mrb[0].mxu0
        %v3115 = vadd.f32 0.0, %v3114
        %v3116 = vpop.f32.mrb[0].mxu0
        %3117 = vmatprep.mubr.f32.mxu0 0.0
        %3118 = vmatmul.mubr.f32.gmra.mrb[0].mxu0 %v2940
        %v3119 = vpop.f32.mrb[0].mxu0
        %v3120 = vadd.f32 0.0, %v3119
        %v3121 = vpop.f32.mrb[0].mxu0
        %3122 = vmatprep.mubr.f32.mxu0 0.0
        %3123 = vmatmul.mubr.f32.gmra.mrb[0].mxu0 %v2943
        %v3124 = vpop.f32.mrb[0].mxu0
        %v3125 = vadd.f32 0.0, %v3124
        %v3126 = vpop.f32.mrb[0].mxu0
        %3127 = vmatprep.mubr.f32.mxu0 0.0
        %3128 = vmatmul.mubr.f32.gmra.mrb[0].mxu0 %v2946
        %v3129 = vpop.f32.mrb[0].mxu0
        %v3130 = vadd.f32 0.0, %v3129
        %v3131 = vpop.f32.mrb[0].mxu0
        %3132 = vmatprep.mubr.f32.mxu0 0.0
        %3133 = vmatmul.mubr.f32.gmra.mrb[0].mxu0 %v2949
        %v3134 = vpop.f32.mrb[0].mxu0
        %v3135 = vadd.f32 0.0, %v3134
        %v3136 = vpop.f32.mrb[0].mxu0
        %3137 = vmatprep.mubr.f32.mxu0 0.0
        %3138 = vmatmul.mubr.f32.gmra.mrb[0].mxu0 %v2952
        %v3139 = vpop.f32.mrb[0].mxu0
        %v3140 = vadd.f32 0.0, %v3139
        %v3141 = vpop.f32.mrb[0].mxu0
        %3142 = vmatprep.mubr.f32.mxu0 0.0
        %3143 = vmatmul.mubr.f32.gmra.mrb[0].mxu0 %v2955
        %v3144 = vpop.f32.mrb[0].mxu0
        %v3145 = vadd.f32 0.0, %v3144
        %v3146 = vpop.f32.mrb[0].mxu0
        %3147 = vmatprep.mubr.f32.mxu0 0.0
        %3148 = vmatmul.mubr.f32.gmra.mrb[0].mxu0 %v2958
        %v3149 = vpop.f32.mrb[0].mxu0
        %v3150 = vadd.f32 0.0, %v3149
        %v3151 = vpop.f32.mrb[0].mxu0
        %3152 = vmatprep.mubr.f32.mxu0 0.0
        %3153 = vmatmul.mubr.f32.gmra.mrb[0].mxu0 %v2961
        %v3154 = vpop.f32.mrb[0].mxu0
        %v3155 = vadd.f32 0.0, %v3154
        %v3156 = vpop.f32.mrb[0].mxu0
        %3157 = vmatprep.mubr.f32.mxu0 0.0
        %3158 = vmatmul.mubr.f32.gmra.mrb[0].mxu0 %v2964
        %v3159 = vpop.f32.mrb[0].mxu0
        %v3160 = vadd.f32 0.0, %v3159
        %v3161 = vpop.f32.mrb[0].mxu0
        %3162 = vmatprep.mubr.f32.mxu0 0.0
        %3163 = vmatmul.mubr.f32.gmra.mrb[0].mxu0 %v2967
        %v3164 = vpop.f32.mrb[0].mxu0
        %v3165 = vadd.f32 0.0, %v3164
        %v3166 = vpop.f32.mrb[0].mxu0
        %3167 = vmatprep.mubr.f32.mxu0 0.0
        %3168 = vmatmul.mubr.f32.gmra.mrb[0].mxu0 %v2970
        %v3169 = vpop.f32.mrb[0].mxu0
        %v3170 = vadd.f32 0.0, %v3169
        %v3171 = vpop.f32.mrb[0].mxu0
        %3172 = vmatprep.mubr.f32.mxu0 0.0
        %3173 = vmatmul.mubr.f32.gmra.mrb[0].mxu0 %v2973
        %v3174 = vpop.f32.mrb[0].mxu0
        %v3175 = vadd.f32 0.0, %v3174
        %v3176 = vpop.f32.mrb[0].mxu0
        %3177 = vmatprep.mubr.f32.mxu0 0.0
        %3178 = vmatmul.mubr.f32.gmra.mrb[0].mxu0 %v2976
        %v3179 = vpop.f32.mrb[0].mxu0
        %v3180 = vadd.f32 0.0, %v3179
        %v3181 = vpop.f32.mrb[0].mxu0
        %3182 = vmatprep.mubr.f32.mxu0 0.0
        %3183 = vmatmul.mubr.f32.gmra.mrb[0].mxu0 %v2979
        %v3184 = vpop.f32.mrb[0].mxu0
        %v3185 = vadd.f32 0.0, %v3184
        %v3186 = vpop.f32.mrb[0].mxu0
        %3187 = vmatprep.mubr.f32.mxu0 0.0
        %3188 = vmatmul.mubr.f32.gmra.mrb[0].mxu0 %v2982
        %v3189 = vpop.f32.mrb[0].mxu0
        %v3190 = vadd.f32 0.0, %v3189
        %v3191 = vpop.f32.mrb[0].mxu0
        %3192 = vmatprep.mubr.f32.mxu0 0.0
        %3193 = vmatmul.mubr.f32.gmra.mrb[0].mxu0 %v2985
        %v3194 = vpop.f32.mrb[0].mxu0
        %v3195 = vadd.f32 0.0, %v3194
        %v3196 = vpop.f32.mrb[0].mxu0
        %3197 = vmatprep.mubr.f32.mxu0 0.0
        %3198 = vmatmul.mubr.f32.gmra.mrb[0].mxu0 %v2988
        %v3199 = vpop.f32.mrb[0].mxu0
        %v3200 = vadd.f32 0.0, %v3199
        %v3201 = vpop.f32.mrb[0].mxu0
        %3202 = vmatprep.mubr.f32.mxu0 0.0
        %3203 = vmatmul.mubr.f32.gmra.mrb[0].mxu0 %v2991
        %v3204 = vpop.f32.mrb[0].mxu0
        %v3205 = vadd.f32 0.0, %v3204
        %v3206 = vpop.f32.mrb[0].mxu0
        %3207 = vmatprep.mubr.f32.mxu0 0.0
        %3208 = vmatmul.mubr.f32.gmra.mrb[0].mxu0 %v2994
        %v3209 = vpop.f32.mrb[0].mxu0
        %v3210 = vadd.f32 0.0, %v3209
        %v3211 = vpop.f32.mrb[0].mxu0
        %3212 = vmatprep.mubr.f32.mxu0 0.0
        %3213 = vmatmul.mubr.f32.gmra.mrb[0].mxu0 %v2997
        %v3214 = vpop.f32.mrb[0].mxu0
        %v3215 = vadd.f32 0.0, %v3214
        %v3216 = vpop.f32.mrb[0].mxu0
        %3217 = vmatprep.mubr.f32.mxu0 0.0
        %3218 = vmatmul.mubr.f32.gmra.mrb[0].mxu0 %v3000
        %v3219 = vpop.f32.mrb[0].mxu0
        %v3220 = vadd.f32 0.0, %v3219
        %v3221 = vpop.f32.mrb[0].mxu0
        %3222 = vmatprep.mubr.f32.mxu0 0.0
        %3223 = vmatmul.mubr.f32.gmra.mrb[0].mxu0 %v3003
        %v3224 = vpop.f32.mrb[0].mxu0
        %v3225 = vadd.f32 0.0, %v3224
        %v3226 = vpop.f32.mrb[0].mxu0
        %3227 = vmatprep.mubr.f32.mxu0 0.0
        %3228 = vmatmul.mubr.f32.gmra.mrb[0].mxu0 %v3006
        %v3229 = vpop.f32.mrb[0].mxu0
        %v3230 = vadd.f32 0.0, %v3229
        %v3231 = vpop.f32.mrb[0].mxu0
        %3232 = vdwg.mxu0
        %v3233 = vadd.f32 %v2846, %v3075
        %v3234 = vadd.f32 %v2847, %v3080
        %v3235 = vadd.f32 %v2848, %v3085
        %v3236 = vadd.f32 %v2849, %v3090
        %v3237 = vadd.f32 %v2850, %v3095
        %v3238 = vadd.f32 %v2851, %v3100
        %v3239 = vadd.f32 %v2852, %v3105
        %v3240 = vadd.f32 %v2853, %v3110
        %v3241 = vadd.f32 %v2854, %v3115
        %v3242 = vadd.f32 %v2855, %v3120
        %v3243 = vadd.f32 %v2856, %v3125
        %v3244 = vadd.f32 %v2857, %v3130
        %v3245 = vadd.f32 %v2858, %v3135
        %v3246 = vadd.f32 %v2859, %v3140
        %v3247 = vadd.f32 %v2860, %v3145
        %v3248 = vadd.f32 %v2861, %v3150
        %v3249 = vadd.f32 %v2862, %v3155
        %v3250 = vadd.f32 %v2863, %v3160
        %v3251 = vadd.f32 %v2864, %v3165
        %v3252 = vadd.f32 %v2865, %v3170
        %v3253 = vadd.f32 %v2866, %v3175
        %v3254 = vadd.f32 %v2867, %v3180
        %v3255 = vadd.f32 %v2868, %v3185
        %v3256 = vadd.f32 %v2869, %v3190
        %v3257 = vadd.f32 %v2870, %v3195
        %v3258 = vadd.f32 %v2871, %v3200
        %v3259 = vadd.f32 %v2872, %v3205
        %v3260 = vadd.f32 %v2873, %v3210
        %v3261 = vadd.f32 %v2874, %v3215
        %v3262 = vadd.f32 %v2875, %v3220
        %v3263 = vadd.f32 %v2876, %v3225
        %v3264 = vadd.f32 %v2877, %v3230
        %v3265 = vld [vmem:[%s2490 + $0x2] sm:$0xff]
        %v3266 = vld [vmem:[%s2490 + $0xa] sm:$0xff]
        %v3267 = vld [vmem:[%s2490 + $0x1a] sm:$0xff]
        %v3268 = vld [vmem:[%s2490 + $0x22] sm:$0xff]
        %v3269 = vld [vmem:[%s2490 + $0x32] sm:$0xff]
        %v3270 = vld [vmem:[%s2490 + $0x3a] sm:$0xff]
        %v3271 = vld [vmem:[%s2490 + $0x4a] sm:$0xff]
        %v3272 = vld [vmem:[%s2490 + $0x52] sm:$0xff]
        %v3273 = vld [vmem:[%s2490 + $0x62] sm:$0xff]
        %v3274 = vld [vmem:[%s2490 + $0x6a] sm:$0xff]
        %v3275 = vld [vmem:[%s2490 + $0x7a] sm:$0xff]
        %v3276 = vld [vmem:[%s2490 + $0x82] sm:$0xff]
        %v3277 = vld [vmem:[%s2490 + $0x92] sm:$0xff]
        %v3278 = vld [vmem:[%s2490 + $0x9a] sm:$0xff]
        %v3279 = vld [vmem:[%s2490 + $0xaa] sm:$0xff]
        %v3280 = vld [vmem:[%s2490 + $0xb2] sm:$0xff]
        %v3281 = vld [vmem:[%s2490 + $0xc2] sm:$0xff]
        %v3282 = vld [vmem:[%s2490 + $0xca] sm:$0xff]
        %v3283 = vld [vmem:[%s2490 + $0xda] sm:$0xff]
        %v3284 = vld [vmem:[%s2490 + $0xe2] sm:$0xff]
        %v3285 = vld [vmem:[%s2490 + $0xf2] sm:$0xff]
        %v3286 = vld [vmem:[%s2490 + $0xfa] sm:$0xff]
        %v3287 = vld [vmem:[%s2490 + $0x10a] sm:$0xff]
        %v3288 = vld [vmem:[%s2490 + $0x112] sm:$0xff]
        %v3289 = vld [vmem:[%s2490 + $0x122] sm:$0xff]
        %v3290 = vld [vmem:[%s2490 + $0x12a] sm:$0xff]
        %v3291 = vld [vmem:[%s2490 + $0x13a] sm:$0xff]
        %v3292 = vld [vmem:[%s2490 + $0x142] sm:$0xff]
        %v3293 = vld [vmem:[%s2490 + $0x152] sm:$0xff]
        %v3294 = vld [vmem:[%s2490 + $0x15a] sm:$0xff]
        %v3295 = vld [vmem:[%s2490 + $0x16a] sm:$0xff]
        %v3296 = vld [vmem:[%s2490 + $0x172] sm:$0xff]
        %s3297 = scalar_lea.vmem %s226, 64
        %v3298 = vld [vmem:[%s3297] sm:$0xff]
        %v3300 = vsel %vm298, %v3265, 0
        %v3303 = vsel %vm298, %v3266, 0
        %v3306 = vsel %vm298, %v3267, 0
        %v3309 = vsel %vm298, %v3268, 0
        %v3312 = vsel %vm298, %v3269, 0
        %v3315 = vsel %vm298, %v3270, 0
        %v3318 = vsel %vm298, %v3271, 0
        %v3321 = vsel %vm298, %v3272, 0
        %v3324 = vsel %vm298, %v3273, 0
        %v3327 = vsel %vm298, %v3274, 0
        %v3330 = vsel %vm298, %v3275, 0
        %v3333 = vsel %vm298, %v3276, 0
        %v3336 = vsel %vm298, %v3277, 0
        %v3339 = vsel %vm298, %v3278, 0
        %v3342 = vsel %vm298, %v3279, 0
        %v3345 = vsel %vm298, %v3280, 0
        %v3348 = vsel %vm298, %v3281, 0
        %v3351 = vsel %vm298, %v3282, 0
        %v3354 = vsel %vm298, %v3283, 0
        %v3357 = vsel %vm298, %v3284, 0
        %v3360 = vsel %vm298, %v3285, 0
        %v3363 = vsel %vm298, %v3286, 0
        %v3366 = vsel %vm298, %v3287, 0
        %v3369 = vsel %vm298, %v3288, 0
        %v3372 = vsel %vm298, %v3289, 0
        %v3375 = vsel %vm298, %v3290, 0
        %v3378 = vsel %vm298, %v3291, 0
        %v3381 = vsel %vm298, %v3292, 0
        %v3384 = vsel %vm298, %v3293, 0
        %v3387 = vsel %vm298, %v3294, 0
        %v3390 = vsel %vm298, %v3295, 0
        %v3393 = vsel %vm298, %v3296, 0
        %3395 = vmatprep.subr.mxu0 0.0
        %3396 = vmatpush1.msra.mxu0 %v3298
        %3397 = vmatprep.subr.mxu0 0.0
        %3398 = vmatpush1.msra.mxu0 0.0
        %3399 = vmatprep.subr.mxu0 0.0
        %3400 = vmatpush1.msra.mxu0 0.0
        %3401 = vmatprep.subr.mxu0 0.0
        %3402 = vmatpush1.msra.mxu0 0.0
        %3403 = vmatprep.subr.mxu0 0.0
        %3404 = vmatpush1.msra.mxu0 0.0
        %3405 = vmatprep.subr.mxu0 0.0
        %3406 = vmatpush1.msra.mxu0 0.0
        %3407 = vmatprep.subr.mxu0 0.0
        %3408 = vmatpush1.msra.mxu0 0.0
        %3409 = vmatprep.subr.mxu0 0.0
        %3410 = vmatpush1.msra.mxu0 0.0
        %3411 = vmatprep.subr.mxu0 0.0
        %3412 = vmatpush1.msra.mxu0 0.0
        %3413 = vmatprep.subr.mxu0 0.0
        %3414 = vmatpush1.msra.mxu0 0.0
        %3415 = vmatprep.subr.mxu0 0.0
        %3416 = vmatpush1.msra.mxu0 0.0
        %3417 = vmatprep.subr.mxu0 0.0
        %3418 = vmatpush1.msra.mxu0 0.0
        %3419 = vmatprep.subr.mxu0 0.0
        %3420 = vmatpush1.msra.mxu0 0.0
        %3421 = vmatprep.subr.mxu0 0.0
        %3422 = vmatpush1.msra.mxu0 0.0
        %3423 = vmatprep.subr.mxu0 0.0
        %3424 = vmatpush1.msra.mxu0 0.0
        %3425 = vmatprep.subr.mxu0 0.0
        %3426 = vmatpush1.msra.mxu0 0.0
        %3427 = vmatprep.subr.mxu0 0.0
        %3428 = vmatpush1.msra.mxu0 0.0
        %3429 = vmatprep.subr.mxu0 0.0
        %3430 = vmatpush1.msra.mxu0 0.0
        %3431 = vmatprep.subr.mxu0 0.0
        %3432 = vmatpush1.msra.mxu0 0.0
        %3433 = vmatprep.subr.mxu0 0.0
        %3434 = vmatpush1.msra.mxu0 0.0
        %3435 = vmatprep.subr.mxu0 0.0
        %3436 = vmatpush1.msra.mxu0 0.0
        %3437 = vmatprep.subr.mxu0 0.0
        %3438 = vmatpush1.msra.mxu0 0.0
        %3439 = vmatprep.subr.mxu0 0.0
        %3440 = vmatpush1.msra.mxu0 0.0
        %3441 = vmatprep.subr.mxu0 0.0
        %3442 = vmatpush1.msra.mxu0 0.0
        %3443 = vmatprep.subr.mxu0 0.0
        %3444 = vmatpush1.msra.mxu0 0.0
        %3445 = vmatprep.subr.mxu0 0.0
        %3446 = vmatpush1.msra.mxu0 0.0
        %3447 = vmatprep.subr.mxu0 0.0
        %3448 = vmatpush1.msra.mxu0 0.0
        %3449 = vmatprep.subr.mxu0 0.0
        %3450 = vmatpush1.msra.mxu0 0.0
        %3451 = vmatprep.subr.mxu0 0.0
        %3452 = vmatpush1.msra.mxu0 0.0
        %3453 = vmatprep.subr.mxu0 0.0
        %3454 = vmatpush1.msra.mxu0 0.0
        %3455 = vmatprep.subr.mxu0 0.0
        %3456 = vmatpush1.msra.mxu0 0.0
        %3457 = vmatprep.subr.mxu0 0.0
        %3458 = vmatpush1.msra.mxu0 0.0
        %3459 = vmatprep.mubr.f32.mxu0 0.0
        %3460 = vmatmul.mubr.f32.gmra.mrb[0].mxu0 %v3300
        %v3461 = vpop.f32.mrb[0].mxu0
        %v3462 = vadd.f32 0.0, %v3461
        %v3463 = vpop.f32.mrb[0].mxu0
        %3464 = vmatprep.mubr.f32.mxu0 0.0
        %3465 = vmatmul.mubr.f32.gmra.mrb[0].mxu0 %v3303
        %v3466 = vpop.f32.mrb[0].mxu0
        %v3467 = vadd.f32 0.0, %v3466
        %v3468 = vpop.f32.mrb[0].mxu0
        %3469 = vmatprep.mubr.f32.mxu0 0.0
        %3470 = vmatmul.mubr.f32.gmra.mrb[0].mxu0 %v3306
        %v3471 = vpop.f32.mrb[0].mxu0
        %v3472 = vadd.f32 0.0, %v3471
        %v3473 = vpop.f32.mrb[0].mxu0
        %3474 = vmatprep.mubr.f32.mxu0 0.0
        %3475 = vmatmul.mubr.f32.gmra.mrb[0].mxu0 %v3309
        %v3476 = vpop.f32.mrb[0].mxu0
        %v3477 = vadd.f32 0.0, %v3476
        %v3478 = vpop.f32.mrb[0].mxu0
        %3479 = vmatprep.mubr.f32.mxu0 0.0
        %3480 = vmatmul.mubr.f32.gmra.mrb[0].mxu0 %v3312
        %v3481 = vpop.f32.mrb[0].mxu0
        %v3482 = vadd.f32 0.0, %v3481
        %v3483 = vpop.f32.mrb[0].mxu0
        %3484 = vmatprep.mubr.f32.mxu0 0.0
        %3485 = vmatmul.mubr.f32.gmra.mrb[0].mxu0 %v3315
        %v3486 = vpop.f32.mrb[0].mxu0
        %v3487 = vadd.f32 0.0, %v3486
        %v3488 = vpop.f32.mrb[0].mxu0
        %3489 = vmatprep.mubr.f32.mxu0 0.0
        %3490 = vmatmul.mubr.f32.gmra.mrb[0].mxu0 %v3318
        %v3491 = vpop.f32.mrb[0].mxu0
        %v3492 = vadd.f32 0.0, %v3491
        %v3493 = vpop.f32.mrb[0].mxu0
        %3494 = vmatprep.mubr.f32.mxu0 0.0
        %3495 = vmatmul.mubr.f32.gmra.mrb[0].mxu0 %v3321
        %v3496 = vpop.f32.mrb[0].mxu0
        %v3497 = vadd.f32 0.0, %v3496
        %v3498 = vpop.f32.mrb[0].mxu0
        %3499 = vmatprep.mubr.f32.mxu0 0.0
        %3500 = vmatmul.mubr.f32.gmra.mrb[0].mxu0 %v3324
        %v3501 = vpop.f32.mrb[0].mxu0
        %v3502 = vadd.f32 0.0, %v3501
        %v3503 = vpop.f32.mrb[0].mxu0
        %3504 = vmatprep.mubr.f32.mxu0 0.0
        %3505 = vmatmul.mubr.f32.gmra.mrb[0].mxu0 %v3327
        %v3506 = vpop.f32.mrb[0].mxu0
        %v3507 = vadd.f32 0.0, %v3506
        %v3508 = vpop.f32.mrb[0].mxu0
        %3509 = vmatprep.mubr.f32.mxu0 0.0
        %3510 = vmatmul.mubr.f32.gmra.mrb[0].mxu0 %v3330
        %v3511 = vpop.f32.mrb[0].mxu0
        %v3512 = vadd.f32 0.0, %v3511
        %v3513 = vpop.f32.mrb[0].mxu0
        %3514 = vmatprep.mubr.f32.mxu0 0.0
        %3515 = vmatmul.mubr.f32.gmra.mrb[0].mxu0 %v3333
        %v3516 = vpop.f32.mrb[0].mxu0
        %v3517 = vadd.f32 0.0, %v3516
        %v3518 = vpop.f32.mrb[0].mxu0
        %3519 = vmatprep.mubr.f32.mxu0 0.0
        %3520 = vmatmul.mubr.f32.gmra.mrb[0].mxu0 %v3336
        %v3521 = vpop.f32.mrb[0].mxu0
        %v3522 = vadd.f32 0.0, %v3521
        %v3523 = vpop.f32.mrb[0].mxu0
        %3524 = vmatprep.mubr.f32.mxu0 0.0
        %3525 = vmatmul.mubr.f32.gmra.mrb[0].mxu0 %v3339
        %v3526 = vpop.f32.mrb[0].mxu0
        %v3527 = vadd.f32 0.0, %v3526
        %v3528 = vpop.f32.mrb[0].mxu0
        %3529 = vmatprep.mubr.f32.mxu0 0.0
        %3530 = vmatmul.mubr.f32.gmra.mrb[0].mxu0 %v3342
        %v3531 = vpop.f32.mrb[0].mxu0
        %v3532 = vadd.f32 0.0, %v3531
        %v3533 = vpop.f32.mrb[0].mxu0
        %3534 = vmatprep.mubr.f32.mxu0 0.0
        %3535 = vmatmul.mubr.f32.gmra.mrb[0].mxu0 %v3345
        %v3536 = vpop.f32.mrb[0].mxu0
        %v3537 = vadd.f32 0.0, %v3536
        %v3538 = vpop.f32.mrb[0].mxu0
        %3539 = vmatprep.mubr.f32.mxu0 0.0
        %3540 = vmatmul.mubr.f32.gmra.mrb[0].mxu0 %v3348
        %v3541 = vpop.f32.mrb[0].mxu0
        %v3542 = vadd.f32 0.0, %v3541
        %v3543 = vpop.f32.mrb[0].mxu0
        %3544 = vmatprep.mubr.f32.mxu0 0.0
        %3545 = vmatmul.mubr.f32.gmra.mrb[0].mxu0 %v3351
        %v3546 = vpop.f32.mrb[0].mxu0
        %v3547 = vadd.f32 0.0, %v3546
        %v3548 = vpop.f32.mrb[0].mxu0
        %3549 = vmatprep.mubr.f32.mxu0 0.0
        %3550 = vmatmul.mubr.f32.gmra.mrb[0].mxu0 %v3354
        %v3551 = vpop.f32.mrb[0].mxu0
        %v3552 = vadd.f32 0.0, %v3551
        %v3553 = vpop.f32.mrb[0].mxu0
        %3554 = vmatprep.mubr.f32.mxu0 0.0
        %3555 = vmatmul.mubr.f32.gmra.mrb[0].mxu0 %v3357
        %v3556 = vpop.f32.mrb[0].mxu0
        %v3557 = vadd.f32 0.0, %v3556
        %v3558 = vpop.f32.mrb[0].mxu0
        %3559 = vmatprep.mubr.f32.mxu0 0.0
        %3560 = vmatmul.mubr.f32.gmra.mrb[0].mxu0 %v3360
        %v3561 = vpop.f32.mrb[0].mxu0
        %v3562 = vadd.f32 0.0, %v3561
        %v3563 = vpop.f32.mrb[0].mxu0
        %3564 = vmatprep.mubr.f32.mxu0 0.0
        %3565 = vmatmul.mubr.f32.gmra.mrb[0].mxu0 %v3363
        %v3566 = vpop.f32.mrb[0].mxu0
        %v3567 = vadd.f32 0.0, %v3566
        %v3568 = vpop.f32.mrb[0].mxu0
        %3569 = vmatprep.mubr.f32.mxu0 0.0
        %3570 = vmatmul.mubr.f32.gmra.mrb[0].mxu0 %v3366
        %v3571 = vpop.f32.mrb[0].mxu0
        %v3572 = vadd.f32 0.0, %v3571
        %v3573 = vpop.f32.mrb[0].mxu0
        %3574 = vmatprep.mubr.f32.mxu0 0.0
        %3575 = vmatmul.mubr.f32.gmra.mrb[0].mxu0 %v3369
        %v3576 = vpop.f32.mrb[0].mxu0
        %v3577 = vadd.f32 0.0, %v3576
        %v3578 = vpop.f32.mrb[0].mxu0
        %3579 = vmatprep.mubr.f32.mxu0 0.0
        %3580 = vmatmul.mubr.f32.gmra.mrb[0].mxu0 %v3372
        %v3581 = vpop.f32.mrb[0].mxu0
        %v3582 = vadd.f32 0.0, %v3581
        %v3583 = vpop.f32.mrb[0].mxu0
        %3584 = vmatprep.mubr.f32.mxu0 0.0
        %3585 = vmatmul.mubr.f32.gmra.mrb[0].mxu0 %v3375
        %v3586 = vpop.f32.mrb[0].mxu0
        %v3587 = vadd.f32 0.0, %v3586
        %v3588 = vpop.f32.mrb[0].mxu0
        %3589 = vmatprep.mubr.f32.mxu0 0.0
        %3590 = vmatmul.mubr.f32.gmra.mrb[0].mxu0 %v3378
        %v3591 = vpop.f32.mrb[0].mxu0
        %v3592 = vadd.f32 0.0, %v3591
        %v3593 = vpop.f32.mrb[0].mxu0
        %3594 = vmatprep.mubr.f32.mxu0 0.0
        %3595 = vmatmul.mubr.f32.gmra.mrb[0].mxu0 %v3381
        %v3596 = vpop.f32.mrb[0].mxu0
        %v3597 = vadd.f32 0.0, %v3596
        %v3598 = vpop.f32.mrb[0].mxu0
        %3599 = vmatprep.mubr.f32.mxu0 0.0
        %3600 = vmatmul.mubr.f32.gmra.mrb[0].mxu0 %v3384
        %v3601 = vpop.f32.mrb[0].mxu0
        %v3602 = vadd.f32 0.0, %v3601
        %v3603 = vpop.f32.mrb[0].mxu0
        %3604 = vmatprep.mubr.f32.mxu0 0.0
        %3605 = vmatmul.mubr.f32.gmra.mrb[0].mxu0 %v3387
        %v3606 = vpop.f32.mrb[0].mxu0
        %v3607 = vadd.f32 0.0, %v3606
        %v3608 = vpop.f32.mrb[0].mxu0
        %3609 = vmatprep.mubr.f32.mxu0 0.0
        %3610 = vmatmul.mubr.f32.gmra.mrb[0].mxu0 %v3390
        %v3611 = vpop.f32.mrb[0].mxu0
        %v3612 = vadd.f32 0.0, %v3611
        %v3613 = vpop.f32.mrb[0].mxu0
        %3614 = vmatprep.mubr.f32.mxu0 0.0
        %3615 = vmatmul.mubr.f32.gmra.mrb[0].mxu0 %v3393
        %v3616 = vpop.f32.mrb[0].mxu0
        %v3617 = vadd.f32 0.0, %v3616
        %v3618 = vpop.f32.mrb[0].mxu0
        %3619 = vdwg.mxu0
        %v3620 = vadd.f32 %v3233, %v3462
        %v3621 = vadd.f32 %v3234, %v3467
        %v3622 = vadd.f32 %v3235, %v3472
        %v3623 = vadd.f32 %v3236, %v3477
        %v3624 = vadd.f32 %v3237, %v3482
        %v3625 = vadd.f32 %v3238, %v3487
        %v3626 = vadd.f32 %v3239, %v3492
        %v3627 = vadd.f32 %v3240, %v3497
        %v3628 = vadd.f32 %v3241, %v3502
        %v3629 = vadd.f32 %v3242, %v3507
        %v3630 = vadd.f32 %v3243, %v3512
        %v3631 = vadd.f32 %v3244, %v3517
        %v3632 = vadd.f32 %v3245, %v3522
        %v3633 = vadd.f32 %v3246, %v3527
        %v3634 = vadd.f32 %v3247, %v3532
        %v3635 = vadd.f32 %v3248, %v3537
        %v3636 = vadd.f32 %v3249, %v3542
        %v3637 = vadd.f32 %v3250, %v3547
        %v3638 = vadd.f32 %v3251, %v3552
        %v3639 = vadd.f32 %v3252, %v3557
        %v3640 = vadd.f32 %v3253, %v3562
        %v3641 = vadd.f32 %v3254, %v3567
        %v3642 = vadd.f32 %v3255, %v3572
        %v3643 = vadd.f32 %v3256, %v3577
        %v3644 = vadd.f32 %v3257, %v3582
        %v3645 = vadd.f32 %v3258, %v3587
        %v3646 = vadd.f32 %v3259, %v3592
        %v3647 = vadd.f32 %v3260, %v3597
        %v3648 = vadd.f32 %v3261, %v3602
        %v3649 = vadd.f32 %v3262, %v3607
        %v3650 = vadd.f32 %v3263, %v3612
        %v3651 = vadd.f32 %v3264, %v3617
        %v3652 = vld [vmem:[%s229] sm:$0x1]
        %v3654 = vlaneseq
        %v3655 = vshrl.u32 %v3654, 7
        %v3656 = vsub.s32 0, %v3655
        %v3657 = vrot.slane %v3652, %v3656
        %v3659 = vadd.f32 %v3620, %v3657
        %v3660 = vadd.f32 %v3621, %v3657
        %v3661 = vadd.f32 %v3622, %v3657
        %v3662 = vadd.f32 %v3623, %v3657
        %v3663 = vadd.f32 %v3624, %v3657
        %v3664 = vadd.f32 %v3625, %v3657
        %v3665 = vadd.f32 %v3626, %v3657
        %v3666 = vadd.f32 %v3627, %v3657
        %v3667 = vadd.f32 %v3628, %v3657
        %v3668 = vadd.f32 %v3629, %v3657
        %v3669 = vadd.f32 %v3630, %v3657
        %v3670 = vadd.f32 %v3631, %v3657
        %v3671 = vadd.f32 %v3632, %v3657
        %v3672 = vadd.f32 %v3633, %v3657
        %v3673 = vadd.f32 %v3634, %v3657
        %v3674 = vadd.f32 %v3635, %v3657
        %v3675 = vadd.f32 %v3636, %v3657
        %v3676 = vadd.f32 %v3637, %v3657
        %v3677 = vadd.f32 %v3638, %v3657
        %v3678 = vadd.f32 %v3639, %v3657
        %v3679 = vadd.f32 %v3640, %v3657
        %v3680 = vadd.f32 %v3641, %v3657
        %v3681 = vadd.f32 %v3642, %v3657
        %v3682 = vadd.f32 %v3643, %v3657
        %v3683 = vadd.f32 %v3644, %v3657
        %v3684 = vadd.f32 %v3645, %v3657
        %v3685 = vadd.f32 %v3646, %v3657
        %v3686 = vadd.f32 %v3647, %v3657
        %v3687 = vadd.f32 %v3648, %v3657
        %v3688 = vadd.f32 %v3649, %v3657
        %v3689 = vadd.f32 %v3650, %v3657
        %v3690 = vadd.f32 %v3651, %v3657
        %v3691 = vxor.u32 %v3659, 2147483648
        %v3692 = vxor.u32 %v3660, 2147483648
        %v3693 = vxor.u32 %v3661, 2147483648
        %v3694 = vxor.u32 %v3662, 2147483648
        %v3695 = vxor.u32 %v3663, 2147483648
        %v3696 = vxor.u32 %v3664, 2147483648
        %v3697 = vxor.u32 %v3665, 2147483648
        %v3698 = vxor.u32 %v3666, 2147483648
        %v3699 = vxor.u32 %v3667, 2147483648
        %v3700 = vxor.u32 %v3668, 2147483648
        %v3701 = vxor.u32 %v3669, 2147483648
        %v3702 = vxor.u32 %v3670, 2147483648
        %v3703 = vxor.u32 %v3671, 2147483648
        %v3704 = vxor.u32 %v3672, 2147483648
        %v3705 = vxor.u32 %v3673, 2147483648
        %v3706 = vxor.u32 %v3674, 2147483648
        %v3707 = vxor.u32 %v3675, 2147483648
        %v3708 = vxor.u32 %v3676, 2147483648
        %v3709 = vxor.u32 %v3677, 2147483648
        %v3710 = vxor.u32 %v3678, 2147483648
        %v3711 = vxor.u32 %v3679, 2147483648
        %v3712 = vxor.u32 %v3680, 2147483648
        %v3713 = vxor.u32 %v3681, 2147483648
        %v3714 = vxor.u32 %v3682, 2147483648
        %v3715 = vxor.u32 %v3683, 2147483648
        %v3716 = vxor.u32 %v3684, 2147483648
        %v3717 = vxor.u32 %v3685, 2147483648
        %v3718 = vxor.u32 %v3686, 2147483648
        %v3719 = vxor.u32 %v3687, 2147483648
        %v3720 = vxor.u32 %v3688, 2147483648
        %v3721 = vxor.u32 %v3689, 2147483648
        %v3722 = vxor.u32 %v3690, 2147483648
        %v3723 = vmul.f32 %v3691, 1.442695
        %v3724 = vpow.pop %v3723
        %v3725 = vmul.f32 %v3692, 1.442695
        %v3726 = vpow.pop %v3725
        %v3727 = vmul.f32 %v3693, 1.442695
        %v3728 = vpow.pop %v3727
        %v3729 = vmul.f32 %v3694, 1.442695
        %v3730 = vpow.pop %v3729
        %v3731 = vmul.f32 %v3695, 1.442695
        %v3732 = vpow.pop %v3731
        %v3733 = vmul.f32 %v3696, 1.442695
        %v3734 = vpow.pop %v3733
        %v3735 = vmul.f32 %v3697, 1.442695
        %v3736 = vpow.pop %v3735
        %v3737 = vmul.f32 %v3698, 1.442695
        %v3738 = vpow.pop %v3737
        %v3739 = vmul.f32 %v3699, 1.442695
        %v3740 = vpow.pop %v3739
        %v3741 = vmul.f32 %v3700, 1.442695
        %v3742 = vpow.pop %v3741
        %v3743 = vmul.f32 %v3701, 1.442695
        %v3744 = vpow.pop %v3743
        %v3745 = vmul.f32 %v3702, 1.442695
        %v3746 = vpow.pop %v3745
        %v3747 = vmul.f32 %v3703, 1.442695
        %v3748 = vpow.pop %v3747
        %v3749 = vmul.f32 %v3704, 1.442695
        %v3750 = vpow.pop %v3749
        %v3751 = vmul.f32 %v3705, 1.442695
        %v3752 = vpow.pop %v3751
        %v3753 = vmul.f32 %v3706, 1.442695
        %v3754 = vpow.pop %v3753
        %v3755 = vmul.f32 %v3707, 1.442695
        %v3756 = vpow.pop %v3755
        %v3757 = vmul.f32 %v3708, 1.442695
        %v3758 = vpow.pop %v3757
        %v3759 = vmul.f32 %v3709, 1.442695
        %v3760 = vpow.pop %v3759
        %v3761 = vmul.f32 %v3710, 1.442695
        %v3762 = vpow.pop %v3761
        %v3763 = vmul.f32 %v3711, 1.442695
        %v3764 = vpow.pop %v3763
        %v3765 = vmul.f32 %v3712, 1.442695
        %v3766 = vpow.pop %v3765
        %v3767 = vmul.f32 %v3713, 1.442695
        %v3768 = vpow.pop %v3767
        %v3769 = vmul.f32 %v3714, 1.442695
        %v3770 = vpow.pop %v3769
        %v3771 = vmul.f32 %v3715, 1.442695
        %v3772 = vpow.pop %v3771
        %v3773 = vmul.f32 %v3716, 1.442695
        %v3774 = vpow.pop %v3773
        %v3775 = vmul.f32 %v3717, 1.442695
        %v3776 = vpow.pop %v3775
        %v3777 = vmul.f32 %v3718, 1.442695
        %v3778 = vpow.pop %v3777
        %v3779 = vmul.f32 %v3719, 1.442695
        %v3780 = vpow.pop %v3779
        %v3781 = vmul.f32 %v3720, 1.442695
        %v3782 = vpow.pop %v3781
        %v3783 = vmul.f32 %v3721, 1.442695
        %v3784 = vpow.pop %v3783
        %v3785 = vmul.f32 %v3722, 1.442695
        %v3786 = vpow.pop %v3785
        %v3787 = vadd.f32 %v3724, 1.0
        %v3788 = vadd.f32 %v3726, 1.0
        %v3789 = vadd.f32 %v3728, 1.0
        %v3790 = vadd.f32 %v3730, 1.0
        %v3791 = vadd.f32 %v3732, 1.0
        %v3792 = vadd.f32 %v3734, 1.0
        %v3793 = vadd.f32 %v3736, 1.0
        %v3794 = vadd.f32 %v3738, 1.0
        %v3795 = vadd.f32 %v3740, 1.0
        %v3796 = vadd.f32 %v3742, 1.0
        %v3797 = vadd.f32 %v3744, 1.0
        %v3798 = vadd.f32 %v3746, 1.0
        %v3799 = vadd.f32 %v3748, 1.0
        %v3800 = vadd.f32 %v3750, 1.0
        %v3801 = vadd.f32 %v3752, 1.0
        %v3802 = vadd.f32 %v3754, 1.0
        %v3803 = vadd.f32 %v3756, 1.0
        %v3804 = vadd.f32 %v3758, 1.0
        %v3805 = vadd.f32 %v3760, 1.0
        %v3806 = vadd.f32 %v3762, 1.0
        %v3807 = vadd.f32 %v3764, 1.0
        %v3808 = vadd.f32 %v3766, 1.0
        %v3809 = vadd.f32 %v3768, 1.0
        %v3810 = vadd.f32 %v3770, 1.0
        %v3811 = vadd.f32 %v3772, 1.0
        %v3812 = vadd.f32 %v3774, 1.0
        %v3813 = vadd.f32 %v3776, 1.0
        %v3814 = vadd.f32 %v3778, 1.0
        %v3815 = vadd.f32 %v3780, 1.0
        %v3816 = vadd.f32 %v3782, 1.0
        %v3817 = vadd.f32 %v3784, 1.0
        %v3818 = vadd.f32 %v3786, 1.0
        %v3819 = vrcp.pop %v3787
        %v3820 = vmul.f32 1.0, %v3819
        %v3821 = vrcp.pop %v3788
        %v3822 = vmul.f32 1.0, %v3821
        %v3823 = vrcp.pop %v3789
        %v3824 = vmul.f32 1.0, %v3823
        %v3825 = vrcp.pop %v3790
        %v3826 = vmul.f32 1.0, %v3825
        %v3827 = vrcp.pop %v3791
        %v3828 = vmul.f32 1.0, %v3827
        %v3829 = vrcp.pop %v3792
        %v3830 = vmul.f32 1.0, %v3829
        %v3831 = vrcp.pop %v3793
        %v3832 = vmul.f32 1.0, %v3831
        %v3833 = vrcp.pop %v3794
        %v3834 = vmul.f32 1.0, %v3833
        %v3835 = vrcp.pop %v3795
        %v3836 = vmul.f32 1.0, %v3835
        %v3837 = vrcp.pop %v3796
        %v3838 = vmul.f32 1.0, %v3837
        %v3839 = vrcp.pop %v3797
        %v3840 = vmul.f32 1.0, %v3839
        %v3841 = vrcp.pop %v3798
        %v3842 = vmul.f32 1.0, %v3841
        %v3843 = vrcp.pop %v3799
        %v3844 = vmul.f32 1.0, %v3843
        %v3845 = vrcp.pop %v3800
        %v3846 = vmul.f32 1.0, %v3845
        %v3847 = vrcp.pop %v3801
        %v3848 = vmul.f32 1.0, %v3847
        %v3849 = vrcp.pop %v3802
        %v3850 = vmul.f32 1.0, %v3849
        %v3851 = vrcp.pop %v3803
        %v3852 = vmul.f32 1.0, %v3851
        %v3853 = vrcp.pop %v3804
        %v3854 = vmul.f32 1.0, %v3853
        %v3855 = vrcp.pop %v3805
        %v3856 = vmul.f32 1.0, %v3855
        %v3857 = vrcp.pop %v3806
        %v3858 = vmul.f32 1.0, %v3857
        %v3859 = vrcp.pop %v3807
        %v3860 = vmul.f32 1.0, %v3859
        %v3861 = vrcp.pop %v3808
        %v3862 = vmul.f32 1.0, %v3861
        %v3863 = vrcp.pop %v3809
        %v3864 = vmul.f32 1.0, %v3863
        %v3865 = vrcp.pop %v3810
        %v3866 = vmul.f32 1.0, %v3865
        %v3867 = vrcp.pop %v3811
        %v3868 = vmul.f32 1.0, %v3867
        %v3869 = vrcp.pop %v3812
        %v3870 = vmul.f32 1.0, %v3869
        %v3871 = vrcp.pop %v3813
        %v3872 = vmul.f32 1.0, %v3871
        %v3873 = vrcp.pop %v3814
        %v3874 = vmul.f32 1.0, %v3873
        %v3875 = vrcp.pop %v3815
        %v3876 = vmul.f32 1.0, %v3875
        %v3877 = vrcp.pop %v3816
        %v3878 = vmul.f32 1.0, %v3877
        %v3879 = vrcp.pop %v3817
        %v3880 = vmul.f32 1.0, %v3879
        %v3881 = vrcp.pop %v3818
        %v3882 = vmul.f32 1.0, %v3881
        %v3883 = vmul.f32 %v3659, %v3820
        %v3884 = vmul.f32 %v3660, %v3822
        %v3885 = vmul.f32 %v3661, %v3824
        %v3886 = vmul.f32 %v3662, %v3826
        %v3887 = vmul.f32 %v3663, %v3828
        %v3888 = vmul.f32 %v3664, %v3830
        %v3889 = vmul.f32 %v3665, %v3832
        %v3890 = vmul.f32 %v3666, %v3834
        %v3891 = vmul.f32 %v3667, %v3836
        %v3892 = vmul.f32 %v3668, %v3838
        %v3893 = vmul.f32 %v3669, %v3840
        %v3894 = vmul.f32 %v3670, %v3842
        %v3895 = vmul.f32 %v3671, %v3844
        %v3896 = vmul.f32 %v3672, %v3846
        %v3897 = vmul.f32 %v3673, %v3848
        %v3898 = vmul.f32 %v3674, %v3850
        %v3899 = vmul.f32 %v3675, %v3852
        %v3900 = vmul.f32 %v3676, %v3854
        %v3901 = vmul.f32 %v3677, %v3856
        %v3902 = vmul.f32 %v3678, %v3858
        %v3903 = vmul.f32 %v3679, %v3860
        %v3904 = vmul.f32 %v3680, %v3862
        %v3905 = vmul.f32 %v3681, %v3864
        %v3906 = vmul.f32 %v3682, %v3866
        %v3907 = vmul.f32 %v3683, %v3868
        %v3908 = vmul.f32 %v3684, %v3870
        %v3909 = vmul.f32 %v3685, %v3872
        %v3910 = vmul.f32 %v3686, %v3874
        %v3911 = vmul.f32 %v3687, %v3876
        %v3912 = vmul.f32 %v3688, %v3878
        %v3913 = vmul.f32 %v3689, %v3880
        %v3914 = vmul.f32 %v3690, %v3882
        %3915 = vst [vmem:[%s215] sm:$0xff] %v3883
        %3916 = vst [vmem:[%s215 + $0x8] sm:$0xff] %v3884
        %3917 = vst [vmem:[%s215 + $0x10] sm:$0xff] %v3885
        %3918 = vst [vmem:[%s215 + $0x18] sm:$0xff] %v3886
        %3919 = vst [vmem:[%s215 + $0x20] sm:$0xff] %v3887
        %3920 = vst [vmem:[%s215 + $0x28] sm:$0xff] %v3888
        %3921 = vst [vmem:[%s215 + $0x30] sm:$0xff] %v3889
        %3922 = vst [vmem:[%s215 + $0x38] sm:$0xff] %v3890
        %3923 = vst [vmem:[%s215 + $0x40] sm:$0xff] %v3891
        %3924 = vst [vmem:[%s215 + $0x48] sm:$0xff] %v3892
        %3925 = vst [vmem:[%s215 + $0x50] sm:$0xff] %v3893
        %3926 = vst [vmem:[%s215 + $0x58] sm:$0xff] %v3894
        %3927 = vst [vmem:[%s215 + $0x60] sm:$0xff] %v3895
        %3928 = vst [vmem:[%s215 + $0x68] sm:$0xff] %v3896
        %3929 = vst [vmem:[%s215 + $0x70] sm:$0xff] %v3897
        %3930 = vst [vmem:[%s215 + $0x78] sm:$0xff] %v3898
        %3931 = vst [vmem:[%s215 + $0x80] sm:$0xff] %v3899
        %3932 = vst [vmem:[%s215 + $0x88] sm:$0xff] %v3900
        %3933 = vst [vmem:[%s215 + $0x90] sm:$0xff] %v3901
        %3934 = vst [vmem:[%s215 + $0x98] sm:$0xff] %v3902
        %3935 = vst [vmem:[%s215 + $0xa0] sm:$0xff] %v3903
        %3936 = vst [vmem:[%s215 + $0xa8] sm:$0xff] %v3904
        %3937 = vst [vmem:[%s215 + $0xb0] sm:$0xff] %v3905
        %3938 = vst [vmem:[%s215 + $0xb8] sm:$0xff] %v3906
        %3939 = vst [vmem:[%s215 + $0xc0] sm:$0xff] %v3907
        %3940 = vst [vmem:[%s215 + $0xc8] sm:$0xff] %v3908
        %3941 = vst [vmem:[%s215 + $0xd0] sm:$0xff] %v3909
        %3942 = vst [vmem:[%s215 + $0xd8] sm:$0xff] %v3910
        %3943 = vst [vmem:[%s215 + $0xe0] sm:$0xff] %v3911
        %3944 = vst [vmem:[%s215 + $0xe8] sm:$0xff] %v3912
        %3945 = vst [vmem:[%s215 + $0xf0] sm:$0xff] %v3913
        %3946 = vst [vmem:[%s215 + $0xf8] sm:$0xff] %v3914
        %s3947 = sand.u32 %s128, 1
        %s3948 = scalar_lea.sflag [#allocation3], %s3947
        %s3949 = sand.u32 %s128, 1
        %s3950 = smul.addr %s3949, 256
        %s3951 = scalar_lea.vmem [#allocation2], %s3950
        // Predicated region
        $region33: #{tpu_custom_call.1} parent=31 // pred_check
          %p3952 = pneg %p138
        $region34: #{tpu_custom_call.1} parent=31 // pred_check_branch
          %3954 = sbr.rel (%p3952) target = $region36
        $region35: #{tpu_custom_call.1} parent=31 // pred_region
          %s3955 = smul.u32 16, %s24
          %s3957 = ssub.s32 4096, 4096
          %3958 = vsyncadd %s3948, %s3957
          %s3959 = smul.addr %s3955, 2
          %s3960 = sadd.s32 %s22, %s3959
          %s3961 = smul.addr %s23, 32
          %s3962 = sadd.s32 %s3960, %s3961
          %s3963 = smul.addr %s3962, 128
          %s3964 = scalar_lea.hbm %s3, %s3963
          %s3965 = sshll.u32 %s3951, 4
          %s3966 = int_to_ptr.vmem [resolvable:$true] %s3965
          %3971 = dma.vmem_to_hbm [thread:$0]  %s3966, 4096, %s3964, %s3948, 128, 128, 8
        $region36: #{tpu_custom_call.1} parent=31 // pred_fallthru
          _
      $region32: #{tpu_custom_call.1} parent=5 // pred_fallthru
        _
      %p3972 = scmp.le.s32.totalorder 2, %s12
      // Predicated region
      $region37: #{tpu_custom_call.1} parent=5 // pred_check
        %p3973 = pneg %p3972
      $region38: #{tpu_custom_call.1} parent=5 // pred_check_branch
        %3975 = sbr.rel (%p3973) target = $region40
      $region39: #{tpu_custom_call.1} parent=5 // pred_region
        %s3976 = ssub.s32 %s12, 2
        // Predicated region
        $region41: #{tpu_custom_call.1} parent=39 // pred_check
          %p3977 = pneg %p144
        $region42: #{tpu_custom_call.1} parent=39 // pred_check_branch
          %3979 = sbr.rel (%p3977) target = $region44
        $region43: #{tpu_custom_call.1} parent=39 // pred_region
          %s3980 = sand.u32 %s129, 1
          %s3981 = scalar_lea.sflag [#allocation3], %s3980
          %s3982 = sand.u32 %s129, 1
          %s3983 = smul.addr %s3982, 256
          %s3984 = scalar_lea.vmem [#allocation2], %s3983
          %3985 = dma.done %s3981, 4096
        $region44: #{tpu_custom_call.1} parent=39 // pred_fallthru
          _
      $region40: #{tpu_custom_call.1} parent=5 // pred_fallthru
        _
    $region6: #{tpu_custom_call.1} parent=1 // loop_footer
      %s16 = sadd.s32 1, %s12
    $region7: #{tpu_custom_call.1} parent=1 // loop_footer_branch
      %11 = sbr.rel target = $region3
    $region8: #{tpu_custom_call.1} parent=1 // loop_exit
      _
    %3986 = vsyncpa [#allocation3], 1
    %s3987 = scalar_lea.sflag [#allocation3], 1
    %3988 = vsyncpa %s3987, 1

</llo_original>
